<compile_context>
chip_gen: v6e
topology: v6e:2x2x1
jax: 0.10.0
libtpu: 0.0.40
codegen_flags: <defaults>
</compile_context>

<pallas_src>
import functools

import jax
import jax.numpy as jnp
from jax.experimental import pallas as pl
from jax.experimental.pallas import tpu as pltpu

_LN_EPS = 1e-5


# ---------------------------------------------------------------------------
# Kernels
# ---------------------------------------------------------------------------

def _layer_norm_f32(x, gamma, beta, eps):
    """torch LayerNorm subclass semantics: compute in f32, affine, cast back."""
    xf = x.astype(jnp.float32)
    mu = jnp.mean(xf, axis=-1, keepdims=True)
    xc = xf - mu
    var = jnp.mean(xc * xc, axis=-1, keepdims=True)
    normed = (xc * jax.lax.rsqrt(var + eps)) * gamma + beta
    return xf, normed.astype(x.dtype)


def _attn_block_kernel(x_ref, ln_g_ref, ln_b_ref, wqkv_ref, bqkv_ref,
                       wout_ref, bout_ref, o_ref, *, heads, dim_head, eps):
    """One batch element: y = x + out_proj(MHA(ln_1(x)))."""
    x = x_ref[0]                                   # (n, d), input dtype
    n, d = x.shape
    inner = heads * dim_head

    xf, h = _layer_norm_f32(x, ln_g_ref[...], ln_b_ref[...], eps)

    # Fused QKV projection; 1/sqrt(dh) already folded into the Q weight / bias.
    qkv = jnp.dot(h, wqkv_ref[...], preferred_element_type=jnp.float32)
    qkv = (qkv + bqkv_ref[...]).astype(x.dtype)    # (n, 3*inner)

    wout = wout_ref[...]                           # (inner, d), pre-transposed
    y = xf + bout_ref[...]                         # residual + out-proj bias (f32)

    nt_dims = (((1,), (1,)), ((), ()))             # q @ k^T without relayout
    for hh in range(heads):
        lo, hi = hh * dim_head, (hh + 1) * dim_head
        qh = qkv[:, lo:hi]                         # (n, dh), already scaled
        kh = qkv[:, inner + lo:inner + hi]
        vh = qkv[:, 2 * inner + lo:2 * inner + hi]

        dots = jax.lax.dot_general(qh, kh, nt_dims,
                                   preferred_element_type=jnp.float32)  # (n, n)
        m = jnp.max(dots, axis=-1, keepdims=True)
        e = jnp.exp(dots - m)
        inv_l = pl.reciprocal(jnp.sum(e, axis=-1, keepdims=True), approx=True)
        p = (e * inv_l).astype(vh.dtype)           # probabilities in input dtype

        ctx = jnp.dot(p, vh, preferred_element_type=jnp.float32).astype(x.dtype)
        # Head merge absorbed into the output projection: ctx_h @ W_out[h].
        y = y + jnp.dot(ctx, wout[lo:hi, :], preferred_element_type=jnp.float32)

    o_ref[0] = y.astype(o_ref.dtype)


def _mlp_block_kernel(x_ref, ln_g_ref, ln_b_ref, wfc_ref, bfc_ref,
                      wproj_ref, bproj_ref, o_ref, *, eps):
    """Token tile: y = x + c_proj(QuickGELU(c_fc(ln_2(x))))."""
    x = x_ref[...]                                 # (tm, d)
    xf, h = _layer_norm_f32(x, ln_g_ref[...], ln_b_ref[...], eps)

    a = jnp.dot(h, wfc_ref[...], preferred_element_type=jnp.float32)
    a = a + bfc_ref[...]
    a = (a * jax.nn.sigmoid(1.702 * a)).astype(x.dtype)   # QuickGELU

    y = jnp.dot(a, wproj_ref[...], preferred_element_type=jnp.float32)
    y = y + bproj_ref[...]
    o_ref[...] = (xf + y).astype(o_ref.dtype)


# ---------------------------------------------------------------------------
# Wrappers
# ---------------------------------------------------------------------------

def _attention_block(x, p, heads):
    b, n, d = x.shape
    dh = d // heads
    kernel = functools.partial(_attn_block_kernel,
                               heads=heads, dim_head=dh, eps=_LN_EPS)
    return pl.pallas_call(
        kernel,
        out_shape=jax.ShapeDtypeStruct((b, n, d), x.dtype),
        grid_spec=pltpu.PrefetchScalarGridSpec(
            num_scalar_prefetch=0,
            grid=(b,),
            in_specs=[
                pl.BlockSpec((1, n, d), lambda i: (i, 0, 0)),     # x
                pl.BlockSpec((1, d), lambda i: (0, 0)),           # ln1 gamma
                pl.BlockSpec((1, d), lambda i: (0, 0)),           # ln1 beta
                pl.BlockSpec((d, 3 * d), lambda i: (0, 0)),       # W_qkv (pre-T, scaled)
                pl.BlockSpec((1, 3 * d), lambda i: (0, 0)),       # b_qkv (scaled)
                pl.BlockSpec((d, d), lambda i: (0, 0)),           # W_out (pre-T)
                pl.BlockSpec((1, d), lambda i: (0, 0)),           # b_out
            ],
            out_specs=pl.BlockSpec((1, n, d), lambda i: (i, 0, 0)),
        ),
        compiler_params=pltpu.CompilerParams(
            dimension_semantics=("parallel",)),
    )(x, p['ln1_g'], p['ln1_b'], p['wqkv'], p['bqkv'], p['wout'], p['bout'])


def _pick_token_tile(tokens):
    for tm in (512, 256, 128, 64, 32, 16, 8):
        if tokens % tm == 0:
            return tm
    return tokens


def _mlp_block(x2d, p):
    tokens, d = x2d.shape
    dff = p['wfc'].shape[1]
    tm = _pick_token_tile(tokens)
    kernel = functools.partial(_mlp_block_kernel, eps=_LN_EPS)
    return pl.pallas_call(
        kernel,
        out_shape=jax.ShapeDtypeStruct((tokens, d), x2d.dtype),
        grid_spec=pltpu.PrefetchScalarGridSpec(
            num_scalar_prefetch=0,
            grid=(tokens // tm,),
            in_specs=[
                pl.BlockSpec((tm, d), lambda i: (i, 0)),          # x tile
                pl.BlockSpec((1, d), lambda i: (0, 0)),           # ln2 gamma
                pl.BlockSpec((1, d), lambda i: (0, 0)),           # ln2 beta
                pl.BlockSpec((d, dff), lambda i: (0, 0)),         # W_fc (pre-T)
                pl.BlockSpec((1, dff), lambda i: (0, 0)),         # b_fc
                pl.BlockSpec((dff, d), lambda i: (0, 0)),         # W_proj (pre-T)
                pl.BlockSpec((1, d), lambda i: (0, 0)),           # b_proj
            ],
            out_specs=pl.BlockSpec((tm, d), lambda i: (i, 0)),
        ),
        compiler_params=pltpu.CompilerParams(
            dimension_semantics=("parallel",)),
    )(x2d, p['ln2_g'], p['ln2_b'], p['wfc'], p['bfc'], p['wproj'], p['bproj'])


def prepare_layer_params(raw, heads):
    """One-time host-side layout prep: transpose weights, fold the attention scale."""
    d = raw['ln1_g'].shape[0]
    dh = d // heads
    scale = float(dh) ** (-0.5)

    wqkv_t = jnp.transpose(raw['w_in'])                      # (d, 3d)
    wqkv_t = jnp.concatenate([wqkv_t[:, :d] * scale, wqkv_t[:, d:]], axis=1)
    bqkv = jnp.concatenate([raw['b_in'][:d] * scale, raw['b_in'][d:]])

    return dict(
        ln1_g=raw['ln1_g'].reshape(1, d), ln1_b=raw['ln1_b'].reshape(1, d),
        wqkv=wqkv_t, bqkv=bqkv.reshape(1, 3 * d),
        wout=jnp.transpose(raw['w_out']),                    # (d, d) = (inner, d)
        bout=raw['b_out'].reshape(1, d),
        ln2_g=raw['ln2_g'].reshape(1, d), ln2_b=raw['ln2_b'].reshape(1, d),
        wfc=jnp.transpose(raw['w_fc']), bfc=raw['b_fc'].reshape(1, 4 * d),
        wproj=jnp.transpose(raw['w_proj']), bproj=raw['b_proj'].reshape(1, d),
    )


def transformer_forward(x_lnd, prepared_layers, heads):
    """x_lnd: (seq, batch, width) - same layout the torch module consumes."""
    seq, batch, d = x_lnd.shape
    x = jnp.transpose(x_lnd, (1, 0, 2))                      # (batch, seq, d)
    for p in prepared_layers:
        x = _attention_block(x, p, heads)
        x = _mlp_block(x.reshape(batch * seq, d), p).reshape(batch, seq, d)
    return jnp.transpose(x, (1, 0, 2))


# ---------------------------------------------------------------------------
# Pure-JAX reference (mirrors the PyTorch forward, raw torch-layout params)
# ---------------------------------------------------------------------------

def _layer_norm_ref(x, g, b, eps=_LN_EPS):
    xf = x.astype(jnp.float32)
    mu = xf.mean(-1, keepdims=True)
    var = ((xf - mu) ** 2).mean(-1, keepdims=True)
    return (((xf - mu) * jax.lax.rsqrt(var + eps)) * g + b).astype(x.dtype)


def transformer_reference(x, raw_layers, heads):
    L, N, D = x.shape
    dh = D // heads
    scale = float(dh) ** (-0.5)
    for p in raw_layers:
        h = _layer_norm_ref(x, p['ln1_g'], p['ln1_b'])
        qkv = jnp.einsum('lnd,ed->lne', h, p['w_in']) + p['b_in']
        q, k, v = jnp.split(qkv, 3, axis=-1)
        q = q.reshape(L, N, heads, dh) * scale
        k = k.reshape(L, N, heads, dh)
        v = v.reshape(L, N, heads, dh)
        dots = jnp.einsum('inhd,jnhd->nhij', q, k)
        attn = jax.nn.softmax(dots, axis=-1)
        ctx = jnp.einsum('nhij,jnhd->inhd', attn, v).reshape(L, N, D)
        x = x + (jnp.einsum('lnd,od->lno', ctx, p['w_out']) + p['b_out'])
        h2 = _layer_norm_ref(x, p['ln2_g'], p['ln2_b'])
        a = jnp.einsum('lnd,fd->lnf', h2, p['w_fc']) + p['b_fc']
        a = a * jax.nn.sigmoid(1.702 * a)
        x = x + (jnp.einsum('lnf,df->lnd', a, p['w_proj']) + p['b_proj'])
    return x


# ---------------------------------------------------------------------------
# Demo
# ---------------------------------------------------------------------------

if __name__ == "__main__":
    # Small but TPU-friendly shapes: lane-dense width, dim_head = 128.
    width, heads, layers = 256, 2, 2
    seq, batch = 16, 2
    dff = 4 * width

    key = jax.random.PRNGKey(0)
    key, kx = jax.random.split(key)
    x = jax.random.normal(kx, (seq, batch, width), dtype=jnp.float32)

    raw_layers = []
    for _ in range(layers):
        key, *ks = jax.random.split(key, 11)
        b_in = 1.0 / (width ** 0.5)
        b_ff = 1.0 / (dff ** 0.5)
        raw_layers.append(dict(
            ln1_g=1.0 + 0.1 * jax.random.normal(ks[0], (width,), jnp.float32),
            ln1_b=0.1 * jax.random.normal(ks[1], (width,), jnp.float32),
            w_in=jax.random.uniform(ks[2], (3 * width, width), jnp.float32, -b_in, b_in),
            b_in=jax.random.uniform(ks[3], (3 * width,), jnp.float32, -b_in, b_in),
            w_out=jax.random.uniform(ks[4], (width, width), jnp.float32, -b_in, b_in),
            b_out=jax.random.uniform(ks[5], (width,), jnp.float32, -b_in, b_in),
            ln2_g=1.0 + 0.1 * jax.random.normal(ks[6], (width,), jnp.float32),
            ln2_b=0.1 * jax.random.normal(ks[7], (width,), jnp.float32),
            w_fc=jax.random.uniform(ks[8], (dff, width), jnp.float32, -b_in, b_in),
            b_fc=jax.random.uniform(ks[8], (dff,), jnp.float32, -b_in, b_in),
            w_proj=jax.random.uniform(ks[9], (width, dff), jnp.float32, -b_ff, b_ff),
            b_proj=jax.random.uniform(ks[9], (width,), jnp.float32, -b_ff, b_ff),
        ))

    prepared = [prepare_layer_params(r, heads) for r in raw_layers]

    fwd = jax.jit(lambda xx, pp: transformer_forward(xx, pp, heads))
    y = jax.block_until_ready(fwd(x, prepared))

    y_ref = transformer_reference(x, raw_layers, heads)
    assert y.shape == (seq, batch, width)
    assert jnp.allclose(y, y_ref, atol=2e-2, rtol=2e-2), "mismatch vs reference"

    print("KERNEL_OK")
</pallas_src>

<mosaic_0001>
module attributes {stable_mosaic.version = 11 : i64} {
  func.func @_mlp_block_kernel(%arg0: i32, %arg1: memref<32x256xf32, #tpu.memory_space<vmem>>, %arg2: memref<1x256xf32, #tpu.memory_space<vmem>>, %arg3: memref<1x256xf32, #tpu.memory_space<vmem>>, %arg4: memref<256x1024xf32, #tpu.memory_space<vmem>>, %arg5: memref<1x1024xf32, #tpu.memory_space<vmem>>, %arg6: memref<1024x256xf32, #tpu.memory_space<vmem>>, %arg7: memref<1x256xf32, #tpu.memory_space<vmem>>, %arg8: memref<32x256xf32, #tpu.memory_space<vmem>>) attributes {dimension_semantics = [#tpu.dimension_semantics<parallel>], iteration_bounds = array<i64: 1>, scalar_prefetch = 0 : i64, scratch_operands = 0 : i64, tpu.core_type = #tpu.core_type<tc>, window_params = [{transform_indices = @transform_0, window_bounds = array<i64: 32, 256>}, {pipeline_mode = #tpu.pipeline_mode<synchronous>, transform_indices = @transform_1, window_bounds = array<i64: 1, 256>}, {pipeline_mode = #tpu.pipeline_mode<synchronous>, transform_indices = @transform_2, window_bounds = array<i64: 1, 256>}, {pipeline_mode = #tpu.pipeline_mode<synchronous>, transform_indices = @transform_3, window_bounds = array<i64: 256, 1024>}, {pipeline_mode = #tpu.pipeline_mode<synchronous>, transform_indices = @transform_4, window_bounds = array<i64: 1, 1024>}, {pipeline_mode = #tpu.pipeline_mode<synchronous>, transform_indices = @transform_5, window_bounds = array<i64: 1024, 256>}, {pipeline_mode = #tpu.pipeline_mode<synchronous>, transform_indices = @transform_6, window_bounds = array<i64: 1, 256>}, {transform_indices = @transform_7, window_bounds = array<i64: 32, 256>}]} {
    %c0 = arith.constant 0 : index
    %c0_0 = arith.constant 0 : index
    %0 = vector.load %arg1[%c0, %c0_0] : memref<32x256xf32, #tpu.memory_space<vmem>>, vector<32x256xf32>
    %c0_1 = arith.constant 0 : index
    %c0_2 = arith.constant 0 : index
    %1 = vector.load %arg2[%c0_1, %c0_2] : memref<1x256xf32, #tpu.memory_space<vmem>>, vector<1x256xf32>
    %c0_3 = arith.constant 0 : index
    %c0_4 = arith.constant 0 : index
    %2 = vector.load %arg3[%c0_3, %c0_4] : memref<1x256xf32, #tpu.memory_space<vmem>>, vector<1x256xf32>
    %cst = arith.constant dense<0.000000e+00> : vector<32xf32>
    %3 = vector.multi_reduction <add>, %0, %cst [1] : vector<32x256xf32> to vector<32xf32>
    %4 = vector.shape_cast %3 : vector<32xf32> to vector<32x1xf32>
    %cst_5 = arith.constant 2.560000e+02 : f32
    %5 = vector.broadcast %cst_5 : f32 to vector<32x1xf32>
    %6 = arith.divf %4, %5 : vector<32x1xf32>
    %7 = vector.broadcast %6 : vector<32x1xf32> to vector<32x256xf32>
    %8 = arith.subf %0, %7 : vector<32x256xf32>
    %9 = arith.mulf %8, %8 : vector<32x256xf32>
    %cst_6 = arith.constant dense<0.000000e+00> : vector<32xf32>
    %10 = vector.multi_reduction <add>, %9, %cst_6 [1] : vector<32x256xf32> to vector<32xf32>
    %11 = vector.shape_cast %10 : vector<32xf32> to vector<32x1xf32>
    %cst_7 = arith.constant 2.560000e+02 : f32
    %12 = vector.broadcast %cst_7 : f32 to vector<32x1xf32>
    %13 = arith.divf %11, %12 : vector<32x1xf32>
    %cst_8 = arith.constant 9.99999974E-6 : f32
    %14 = vector.broadcast %cst_8 : f32 to vector<32x1xf32>
    %15 = arith.addf %13, %14 : vector<32x1xf32>
    %16 = math.rsqrt %15 : vector<32x1xf32>
    %17 = vector.broadcast %16 : vector<32x1xf32> to vector<32x256xf32>
    %18 = arith.mulf %8, %17 : vector<32x256xf32>
    %19 = vector.broadcast %1 : vector<1x256xf32> to vector<32x256xf32>
    %20 = arith.mulf %18, %19 : vector<32x256xf32>
    %21 = vector.broadcast %2 : vector<1x256xf32> to vector<32x256xf32>
    %22 = arith.addf %20, %21 : vector<32x256xf32>
    %c0_9 = arith.constant 0 : index
    %c0_10 = arith.constant 0 : index
    %23 = vector.load %arg4[%c0_9, %c0_10] : memref<256x1024xf32, #tpu.memory_space<vmem>>, vector<256x1024xf32>
    %cst_11 = arith.constant dense<0.000000e+00> : vector<32x1024xf32>
    %24 = tpu.matmul %22, %23, %cst_11 {dimension_numbers = #tpu.dot_dimension_numbers<[1], [0], [0], [1], [0, 0, 1, 1], [], []>} : vector<32x256xf32>, vector<256x1024xf32>, vector<32x1024xf32> -> vector<32x1024xf32>
    %c0_12 = arith.constant 0 : index
    %c0_13 = arith.constant 0 : index
    %25 = vector.load %arg5[%c0_12, %c0_13] : memref<1x1024xf32, #tpu.memory_space<vmem>>, vector<1x1024xf32>
    %26 = vector.broadcast %25 : vector<1x1024xf32> to vector<32x1024xf32>
    %27 = arith.addf %24, %26 : vector<32x1024xf32>
    %cst_14 = arith.constant 1.702000e+00 : f32
    %28 = vector.broadcast %cst_14 : f32 to vector<32x1024xf32>
    %29 = arith.mulf %28, %27 : vector<32x1024xf32>
    %30 = arith.negf %29 : vector<32x1024xf32>
    %31 = math.exp %30 : vector<32x1024xf32>
    %cst_15 = arith.constant 1.000000e+00 : f32
    %32 = vector.broadcast %cst_15 : f32 to vector<32x1024xf32>
    %33 = arith.addf %32, %31 : vector<32x1024xf32>
    %34 = arith.divf %32, %33 : vector<32x1024xf32>
    %35 = arith.mulf %27, %34 : vector<32x1024xf32>
    %c0_16 = arith.constant 0 : index
    %c0_17 = arith.constant 0 : index
    %36 = vector.load %arg6[%c0_16, %c0_17] : memref<1024x256xf32, #tpu.memory_space<vmem>>, vector<1024x256xf32>
    %cst_18 = arith.constant dense<0.000000e+00> : vector<32x256xf32>
    %37 = tpu.matmul %35, %36, %cst_18 {dimension_numbers = #tpu.dot_dimension_numbers<[1], [0], [0], [1], [0, 0, 1, 1], [], []>} : vector<32x1024xf32>, vector<1024x256xf32>, vector<32x256xf32> -> vector<32x256xf32>
    %c0_19 = arith.constant 0 : index
    %c0_20 = arith.constant 0 : index
    %38 = vector.load %arg7[%c0_19, %c0_20] : memref<1x256xf32, #tpu.memory_space<vmem>>, vector<1x256xf32>
    %39 = vector.broadcast %38 : vector<1x256xf32> to vector<32x256xf32>
    %40 = arith.addf %37, %39 : vector<32x256xf32>
    %41 = arith.addf %0, %40 : vector<32x256xf32>
    %c0_21 = arith.constant 0 : index
    %c0_22 = arith.constant 0 : index
    %42 = vector.load %arg8[%c0_21, %c0_22] : memref<32x256xf32, #tpu.memory_space<vmem>>, vector<32x256xf32>
    tpu.vector_store %arg8[%c0_21, %c0_22], %41 {strides = array<i32>} : memref<32x256xf32, #tpu.memory_space<vmem>>, vector<32x256xf32>,
    return
  }
  func.func @transform_0(%arg0: i32) -> (i32, i32) {
    %c0_i32 = arith.constant 0 : i32
    %c0_i32_0 = arith.constant 0 : i32
    return %arg0, %c0_i32 : i32, i32
  }
  func.func @transform_1(%arg0: i32) -> (i32, i32) {
    %c0_i32 = arith.constant 0 : i32
    %c0_i32_0 = arith.constant 0 : i32
    %c0_i32_1 = arith.constant 0 : i32
    return %c0_i32, %c0_i32_0 : i32, i32
  }
  func.func @transform_2(%arg0: i32) -> (i32, i32) {
    %c0_i32 = arith.constant 0 : i32
    %c0_i32_0 = arith.constant 0 : i32
    %c0_i32_1 = arith.constant 0 : i32
    return %c0_i32, %c0_i32_0 : i32, i32
  }
  func.func @transform_3(%arg0: i32) -> (i32, i32) {
    %c0_i32 = arith.constant 0 : i32
    %c0_i32_0 = arith.constant 0 : i32
    %c0_i32_1 = arith.constant 0 : i32
    return %c0_i32, %c0_i32_0 : i32, i32
  }
  func.func @transform_4(%arg0: i32) -> (i32, i32) {
    %c0_i32 = arith.constant 0 : i32
    %c0_i32_0 = arith.constant 0 : i32
    %c0_i32_1 = arith.constant 0 : i32
    return %c0_i32, %c0_i32_0 : i32, i32
  }
  func.func @transform_5(%arg0: i32) -> (i32, i32) {
    %c0_i32 = arith.constant 0 : i32
    %c0_i32_0 = arith.constant 0 : i32
    %c0_i32_1 = arith.constant 0 : i32
    return %c0_i32, %c0_i32_0 : i32, i32
  }
  func.func @transform_6(%arg0: i32) -> (i32, i32) {
    %c0_i32 = arith.constant 0 : i32
    %c0_i32_0 = arith.constant 0 : i32
    %c0_i32_1 = arith.constant 0 : i32
    return %c0_i32, %c0_i32_0 : i32, i32
  }
  func.func @transform_7(%arg0: i32) -> (i32, i32) {
    %c0_i32 = arith.constant 0 : i32
    %c0_i32_0 = arith.constant 0 : i32
    return %arg0, %c0_i32 : i32, i32
  }
}

module attributes {stable_mosaic.version = 11 : i64} {
  func.func @_attn_block_kernel(%arg0: i32, %arg1: memref<1x16x256xf32, #tpu.memory_space<vmem>>, %arg2: memref<1x256xf32, #tpu.memory_space<vmem>>, %arg3: memref<1x256xf32, #tpu.memory_space<vmem>>, %arg4: memref<256x768xf32, #tpu.memory_space<vmem>>, %arg5: memref<1x768xf32, #tpu.memory_space<vmem>>, %arg6: memref<256x256xf32, #tpu.memory_space<vmem>>, %arg7: memref<1x256xf32, #tpu.memory_space<vmem>>, %arg8: memref<1x16x256xf32, #tpu.memory_space<vmem>>) attributes {dimension_semantics = [#tpu.dimension_semantics<parallel>], iteration_bounds = array<i64: 2>, scalar_prefetch = 0 : i64, scratch_operands = 0 : i64, tpu.core_type = #tpu.core_type<tc>, window_params = [{transform_indices = @transform_0, window_bounds = array<i64: 1, 16, 256>}, {pipeline_mode = #tpu.pipeline_mode<synchronous>, transform_indices = @transform_1, window_bounds = array<i64: 1, 256>}, {pipeline_mode = #tpu.pipeline_mode<synchronous>, transform_indices = @transform_2, window_bounds = array<i64: 1, 256>}, {pipeline_mode = #tpu.pipeline_mode<synchronous>, transform_indices = @transform_3, window_bounds = array<i64: 256, 768>}, {pipeline_mode = #tpu.pipeline_mode<synchronous>, transform_indices = @transform_4, window_bounds = array<i64: 1, 768>}, {pipeline_mode = #tpu.pipeline_mode<synchronous>, transform_indices = @transform_5, window_bounds = array<i64: 256, 256>}, {pipeline_mode = #tpu.pipeline_mode<synchronous>, transform_indices = @transform_6, window_bounds = array<i64: 1, 256>}, {transform_indices = @transform_7, window_bounds = array<i64: 1, 16, 256>}]} {
    %c0 = arith.constant 0 : index
    %c0_0 = arith.constant 0 : index
    %c0_1 = arith.constant 0 : index
    %0 = vector.load %arg1[%c0, %c0_0, %c0_1] : memref<1x16x256xf32, #tpu.memory_space<vmem>>, vector<1x16x256xf32>
    %1 = vector.shape_cast %0 : vector<1x16x256xf32> to vector<16x256xf32>
    %c0_2 = arith.constant 0 : index
    %c0_3 = arith.constant 0 : index
    %2 = vector.load %arg2[%c0_2, %c0_3] : memref<1x256xf32, #tpu.memory_space<vmem>>, vector<1x256xf32>
    %c0_4 = arith.constant 0 : index
    %c0_5 = arith.constant 0 : index
    %3 = vector.load %arg3[%c0_4, %c0_5] : memref<1x256xf32, #tpu.memory_space<vmem>>, vector<1x256xf32>
    %cst = arith.constant dense<0.000000e+00> : vector<16xf32>
    %4 = vector.multi_reduction <add>, %1, %cst [1] : vector<16x256xf32> to vector<16xf32>
    %5 = vector.shape_cast %4 : vector<16xf32> to vector<16x1xf32>
    %cst_6 = arith.constant 2.560000e+02 : f32
    %6 = vector.broadcast %cst_6 : f32 to vector<16x1xf32>
    %7 = arith.divf %5, %6 : vector<16x1xf32>
    %8 = vector.broadcast %7 : vector<16x1xf32> to vector<16x256xf32>
    %9 = arith.subf %1, %8 : vector<16x256xf32>
    %10 = arith.mulf %9, %9 : vector<16x256xf32>
    %cst_7 = arith.constant dense<0.000000e+00> : vector<16xf32>
    %11 = vector.multi_reduction <add>, %10, %cst_7 [1] : vector<16x256xf32> to vector<16xf32>
    %12 = vector.shape_cast %11 : vector<16xf32> to vector<16x1xf32>
    %cst_8 = arith.constant 2.560000e+02 : f32
    %13 = vector.broadcast %cst_8 : f32 to vector<16x1xf32>
    %14 = arith.divf %12, %13 : vector<16x1xf32>
    %cst_9 = arith.constant 9.99999974E-6 : f32
    %15 = vector.broadcast %cst_9 : f32 to vector<16x1xf32>
    %16 = arith.addf %14, %15 : vector<16x1xf32>
    %17 = math.rsqrt %16 : vector<16x1xf32>
    %18 = vector.broadcast %17 : vector<16x1xf32> to vector<16x256xf32>
    %19 = arith.mulf %9, %18 : vector<16x256xf32>
    %20 = vector.broadcast %2 : vector<1x256xf32> to vector<16x256xf32>
    %21 = arith.mulf %19, %20 : vector<16x256xf32>
    %22 = vector.broadcast %3 : vector<1x256xf32> to vector<16x256xf32>
    %23 = arith.addf %21, %22 : vector<16x256xf32>
    %c0_10 = arith.constant 0 : index
    %c0_11 = arith.constant 0 : index
    %24 = vector.load %arg4[%c0_10, %c0_11] : memref<256x768xf32, #tpu.memory_space<vmem>>, vector<256x768xf32>
    %cst_12 = arith.constant dense<0.000000e+00> : vector<16x768xf32>
    %25 = tpu.matmul %23, %24, %cst_12 {dimension_numbers = #tpu.dot_dimension_numbers<[1], [0], [0], [1], [0, 0, 1, 1], [], []>} : vector<16x256xf32>, vector<256x768xf32>, vector<16x768xf32> -> vector<16x768xf32>
    %c0_13 = arith.constant 0 : index
    %c0_14 = arith.constant 0 : index
    %26 = vector.load %arg5[%c0_13, %c0_14] : memref<1x768xf32, #tpu.memory_space<vmem>>, vector<1x768xf32>
    %27 = vector.broadcast %26 : vector<1x768xf32> to vector<16x768xf32>
    %28 = arith.addf %25, %27 : vector<16x768xf32>
    %c0_15 = arith.constant 0 : index
    %c0_16 = arith.constant 0 : index
    %29 = vector.load %arg6[%c0_15, %c0_16] : memref<256x256xf32, #tpu.memory_space<vmem>>, vector<256x256xf32>
    %c0_17 = arith.constant 0 : index
    %c0_18 = arith.constant 0 : index
    %30 = vector.load %arg7[%c0_17, %c0_18] : memref<1x256xf32, #tpu.memory_space<vmem>>, vector<1x256xf32>
    %31 = vector.broadcast %30 : vector<1x256xf32> to vector<16x256xf32>
    %32 = arith.addf %1, %31 : vector<16x256xf32>
    %33 = vector.extract_strided_slice %28 {offsets = [0, 0], sizes = [16, 128], strides = [1, 1]} : vector<16x768xf32> to vector<16x128xf32>
    %34 = vector.extract_strided_slice %28 {offsets = [0, 256], sizes = [16, 128], strides = [1, 1]} : vector<16x768xf32> to vector<16x128xf32>
    %35 = vector.extract_strided_slice %28 {offsets = [0, 512], sizes = [16, 128], strides = [1, 1]} : vector<16x768xf32> to vector<16x128xf32>
    %cst_19 = arith.constant dense<0.000000e+00> : vector<16x16xf32>
    %36 = tpu.matmul %33, %34, %cst_19 {dimension_numbers = #tpu.dot_dimension_numbers<[1], [1], [0], [0], [0, 0, 1, 0], [], []>} : vector<16x128xf32>, vector<16x128xf32>, vector<16x16xf32> -> vector<16x16xf32>
    %cst_20 = arith.constant dense<0xFF800000> : vector<16xf32>
    %37 = vector.multi_reduction <maximumf>, %36, %cst_20 [1] : vector<16x16xf32> to vector<16xf32>
    %38 = vector.shape_cast %37 : vector<16xf32> to vector<16x1xf32>
    %39 = vector.broadcast %38 : vector<16x1xf32> to vector<16x16xf32>
    %40 = arith.subf %36, %39 : vector<16x16xf32>
    %41 = math.exp %40 : vector<16x16xf32>
    %cst_21 = arith.constant dense<0.000000e+00> : vector<16xf32>
    %42 = vector.multi_reduction <add>, %41, %cst_21 [1] : vector<16x16xf32> to vector<16xf32>
    %43 = vector.shape_cast %42 : vector<16xf32> to vector<16x1xf32>
    %44 = tpu.reciprocal %43 {approx = true} : vector<16x1xf32> -> vector<16x1xf32>
    %45 = vector.broadcast %44 : vector<16x1xf32> to vector<16x16xf32>
    %46 = arith.mulf %41, %45 : vector<16x16xf32>
    %cst_22 = arith.constant dense<0.000000e+00> : vector<16x128xf32>
    %47 = tpu.matmul %46, %35, %cst_22 {dimension_numbers = #tpu.dot_dimension_numbers<[1], [0], [0], [1], [0, 0, 1, 1], [], []>} : vector<16x16xf32>, vector<16x128xf32>, vector<16x128xf32> -> vector<16x128xf32>
    %48 = vector.extract_strided_slice %29 {offsets = [0, 0], sizes = [128, 256], strides = [1, 1]} : vector<256x256xf32> to vector<128x256xf32>
    %cst_23 = arith.constant dense<0.000000e+00> : vector<16x256xf32>
    %49 = tpu.matmul %47, %48, %cst_23 {dimension_numbers = #tpu.dot_dimension_numbers<[1], [0], [0], [1], [0, 0, 1, 1], [], []>} : vector<16x128xf32>, vector<128x256xf32>, vector<16x256xf32> -> vector<16x256xf32>
    %50 = arith.addf %32, %49 : vector<16x256xf32>
    %51 = vector.extract_strided_slice %28 {offsets = [0, 128], sizes = [16, 128], strides = [1, 1]} : vector<16x768xf32> to vector<16x128xf32>
    %52 = vector.extract_strided_slice %28 {offsets = [0, 384], sizes = [16, 128], strides = [1, 1]} : vector<16x768xf32> to vector<16x128xf32>
    %53 = vector.extract_strided_slice %28 {offsets = [0, 640], sizes = [16, 128], strides = [1, 1]} : vector<16x768xf32> to vector<16x128xf32>
    %cst_24 = arith.constant dense<0.000000e+00> : vector<16x16xf32>
    %54 = tpu.matmul %51, %52, %cst_24 {dimension_numbers = #tpu.dot_dimension_numbers<[1], [1], [0], [0], [0, 0, 1, 0], [], []>} : vector<16x128xf32>, vector<16x128xf32>, vector<16x16xf32> -> vector<16x16xf32>
    %cst_25 = arith.constant dense<0xFF800000> : vector<16xf32>
    %55 = vector.multi_reduction <maximumf>, %54, %cst_25 [1] : vector<16x16xf32> to vector<16xf32>
    %56 = vector.shape_cast %55 : vector<16xf32> to vector<16x1xf32>
    %57 = vector.broadcast %56 : vector<16x1xf32> to vector<16x16xf32>
    %58 = arith.subf %54, %57 : vector<16x16xf32>
    %59 = math.exp %58 : vector<16x16xf32>
    %cst_26 = arith.constant dense<0.000000e+00> : vector<16xf32>
    %60 = vector.multi_reduction <add>, %59, %cst_26 [1] : vector<16x16xf32> to vector<16xf32>
    %61 = vector.shape_cast %60 : vector<16xf32> to vector<16x1xf32>
    %62 = tpu.reciprocal %61 {approx = true} : vector<16x1xf32> -> vector<16x1xf32>
    %63 = vector.broadcast %62 : vector<16x1xf32> to vector<16x16xf32>
    %64 = arith.mulf %59, %63 : vector<16x16xf32>
    %cst_27 = arith.constant dense<0.000000e+00> : vector<16x128xf32>
    %65 = tpu.matmul %64, %53, %cst_27 {dimension_numbers = #tpu.dot_dimension_numbers<[1], [0], [0], [1], [0, 0, 1, 1], [], []>} : vector<16x16xf32>, vector<16x128xf32>, vector<16x128xf32> -> vector<16x128xf32>
    %66 = vector.extract_strided_slice %29 {offsets = [128, 0], sizes = [128, 256], strides = [1, 1]} : vector<256x256xf32> to vector<128x256xf32>
    %cst_28 = arith.constant dense<0.000000e+00> : vector<16x256xf32>
    %67 = tpu.matmul %65, %66, %cst_28 {dimension_numbers = #tpu.dot_dimension_numbers<[1], [0], [0], [1], [0, 0, 1, 1], [], []>} : vector<16x128xf32>, vector<128x256xf32>, vector<16x256xf32> -> vector<16x256xf32>
    %68 = arith.addf %50, %67 : vector<16x256xf32>
    %c0_29 = arith.constant 0 : index
    %c0_30 = arith.constant 0 : index
    %c0_31 = arith.constant 0 : index
    %69 = vector.load %arg8[%c0_29, %c0_30, %c0_31] : memref<1x16x256xf32, #tpu.memory_space<vmem>>, vector<1x16x256xf32>
    %70 = vector.shape_cast %69 : vector<1x16x256xf32> to vector<16x256xf32>
    %71 = vector.shape_cast %68 : vector<16x256xf32> to vector<1x16x256xf32>
    tpu.vector_store %arg8[%c0_29, %c0_30, %c0_31], %71 {strides = array<i32>} : memref<1x16x256xf32, #tpu.memory_space<vmem>>, vector<1x16x256xf32>,
    return
  }
  func.func @transform_0(%arg0: i32) -> (i32, i32, i32) {
    %c0_i32 = arith.constant 0 : i32
    %c0_i32_0 = arith.constant 0 : i32
    %c0_i32_1 = arith.constant 0 : i32
    return %arg0, %c0_i32, %c0_i32_0 : i32, i32, i32
  }
  func.func @transform_1(%arg0: i32) -> (i32, i32) {
    %c0_i32 = arith.constant 0 : i32
    %c0_i32_0 = arith.constant 0 : i32
    %c0_i32_1 = arith.constant 0 : i32
    return %c0_i32, %c0_i32_0 : i32, i32
  }
  func.func @transform_2(%arg0: i32) -> (i32, i32) {
    %c0_i32 = arith.constant 0 : i32
    %c0_i32_0 = arith.constant 0 : i32
    %c0_i32_1 = arith.constant 0 : i32
    return %c0_i32, %c0_i32_0 : i32, i32
  }
  func.func @transform_3(%arg0: i32) -> (i32, i32) {
    %c0_i32 = arith.constant 0 : i32
    %c0_i32_0 = arith.constant 0 : i32
    %c0_i32_1 = arith.constant 0 : i32
    return %c0_i32, %c0_i32_0 : i32, i32
  }
  func.func @transform_4(%arg0: i32) -> (i32, i32) {
    %c0_i32 = arith.constant 0 : i32
    %c0_i32_0 = arith.constant 0 : i32
    %c0_i32_1 = arith.constant 0 : i32
    return %c0_i32, %c0_i32_0 : i32, i32
  }
  func.func @transform_5(%arg0: i32) -> (i32, i32) {
    %c0_i32 = arith.constant 0 : i32
    %c0_i32_0 = arith.constant 0 : i32
    %c0_i32_1 = arith.constant 0 : i32
    return %c0_i32, %c0_i32_0 : i32, i32
  }
  func.func @transform_6(%arg0: i32) -> (i32, i32) {
    %c0_i32 = arith.constant 0 : i32
    %c0_i32_0 = arith.constant 0 : i32
    %c0_i32_1 = arith.constant 0 : i32
    return %c0_i32, %c0_i32_0 : i32, i32
  }
  func.func @transform_7(%arg0: i32) -> (i32, i32, i32) {
    %c0_i32 = arith.constant 0 : i32
    %c0_i32_0 = arith.constant 0 : i32
    %c0_i32_1 = arith.constant 0 : i32
    return %arg0, %c0_i32, %c0_i32_0 : i32, i32, i32
  }
}

module attributes {stable_mosaic.version = 11 : i64} {
  func.func @_attn_block_kernel(%arg0: i32, %arg1: memref<1x16x256xf32, #tpu.memory_space<vmem>>, %arg2: memref<1x256xf32, #tpu.memory_space<vmem>>, %arg3: memref<1x256xf32, #tpu.memory_space<vmem>>, %arg4: memref<256x768xf32, #tpu.memory_space<vmem>>, %arg5: memref<1x768xf32, #tpu.memory_space<vmem>>, %arg6: memref<256x256xf32, #tpu.memory_space<vmem>>, %arg7: memref<1x256xf32, #tpu.memory_space<vmem>>, %arg8: memref<1x16x256xf32, #tpu.memory_space<vmem>>) attributes {dimension_semantics = [#tpu.dimension_semantics<parallel>], iteration_bounds = array<i64: 2>, scalar_prefetch = 0 : i64, scratch_operands = 0 : i64, tpu.core_type = #tpu.core_type<tc>, window_params = [{transform_indices = @transform_0, window_bounds = array<i64: 1, 16, 256>}, {pipeline_mode = #tpu.pipeline_mode<synchronous>, transform_indices = @transform_1, window_bounds = array<i64: 1, 256>}, {pipeline_mode = #tpu.pipeline_mode<synchronous>, transform_indices = @transform_2, window_bounds = array<i64: 1, 256>}, {pipeline_mode = #tpu.pipeline_mode<synchronous>, transform_indices = @transform_3, window_bounds = array<i64: 256, 768>}, {pipeline_mode = #tpu.pipeline_mode<synchronous>, transform_indices = @transform_4, window_bounds = array<i64: 1, 768>}, {pipeline_mode = #tpu.pipeline_mode<synchronous>, transform_indices = @transform_5, window_bounds = array<i64: 256, 256>}, {pipeline_mode = #tpu.pipeline_mode<synchronous>, transform_indices = @transform_6, window_bounds = array<i64: 1, 256>}, {transform_indices = @transform_7, window_bounds = array<i64: 1, 16, 256>}]} {
    %c0 = arith.constant 0 : index
    %c0_0 = arith.constant 0 : index
    %c0_1 = arith.constant 0 : index
    %0 = vector.load %arg1[%c0, %c0_0, %c0_1] : memref<1x16x256xf32, #tpu.memory_space<vmem>>, vector<1x16x256xf32>
    %1 = vector.shape_cast %0 : vector<1x16x256xf32> to vector<16x256xf32>
    %c0_2 = arith.constant 0 : index
    %c0_3 = arith.constant 0 : index
    %2 = vector.load %arg2[%c0_2, %c0_3] : memref<1x256xf32, #tpu.memory_space<vmem>>, vector<1x256xf32>
    %c0_4 = arith.constant 0 : index
    %c0_5 = arith.constant 0 : index
    %3 = vector.load %arg3[%c0_4, %c0_5] : memref<1x256xf32, #tpu.memory_space<vmem>>, vector<1x256xf32>
    %cst = arith.constant dense<0.000000e+00> : vector<16xf32>
    %4 = vector.multi_reduction <add>, %1, %cst [1] : vector<16x256xf32> to vector<16xf32>
    %5 = vector.shape_cast %4 : vector<16xf32> to vector<16x1xf32>
    %cst_6 = arith.constant 2.560000e+02 : f32
    %6 = vector.broadcast %cst_6 : f32 to vector<16x1xf32>
    %7 = arith.divf %5, %6 : vector<16x1xf32>
    %8 = vector.broadcast %7 : vector<16x1xf32> to vector<16x256xf32>
    %9 = arith.subf %1, %8 : vector<16x256xf32>
    %10 = arith.mulf %9, %9 : vector<16x256xf32>
    %cst_7 = arith.constant dense<0.000000e+00> : vector<16xf32>
    %11 = vector.multi_reduction <add>, %10, %cst_7 [1] : vector<16x256xf32> to vector<16xf32>
    %12 = vector.shape_cast %11 : vector<16xf32> to vector<16x1xf32>
    %cst_8 = arith.constant 2.560000e+02 : f32
    %13 = vector.broadcast %cst_8 : f32 to vector<16x1xf32>
    %14 = arith.divf %12, %13 : vector<16x1xf32>
    %cst_9 = arith.constant 9.99999974E-6 : f32
    %15 = vector.broadcast %cst_9 : f32 to vector<16x1xf32>
    %16 = arith.addf %14, %15 : vector<16x1xf32>
    %17 = math.rsqrt %16 : vector<16x1xf32>
    %18 = vector.broadcast %17 : vector<16x1xf32> to vector<16x256xf32>
    %19 = arith.mulf %9, %18 : vector<16x256xf32>
    %20 = vector.broadcast %2 : vector<1x256xf32> to vector<16x256xf32>
    %21 = arith.mulf %19, %20 : vector<16x256xf32>
    %22 = vector.broadcast %3 : vector<1x256xf32> to vector<16x256xf32>
    %23 = arith.addf %21, %22 : vector<16x256xf32>
    %c0_10 = arith.constant 0 : index
    %c0_11 = arith.constant 0 : index
    %24 = vector.load %arg4[%c0_10, %c0_11] : memref<256x768xf32, #tpu.memory_space<vmem>>, vector<256x768xf32>
    %cst_12 = arith.constant dense<0.000000e+00> : vector<16x768xf32>
    %25 = tpu.matmul %23, %24, %cst_12 {dimension_numbers = #tpu.dot_dimension_numbers<[1], [0], [0], [1], [0, 0, 1, 1], [], []>} : vector<16x256xf32>, vector<256x768xf32>, vector<16x768xf32> -> vector<16x768xf32>
    %c0_13 = arith.constant 0 : index
    %c0_14 = arith.constant 0 : index
    %26 = vector.load %arg5[%c0_13, %c0_14] : memref<1x768xf32, #tpu.memory_space<vmem>>, vector<1x768xf32>
    %27 = vector.broadcast %26 : vector<1x768xf32> to vector<16x768xf32>
    %28 = arith.addf %25, %27 : vector<16x768xf32>
    %c0_15 = arith.constant 0 : index
    %c0_16 = arith.constant 0 : index
    %29 = vector.load %arg6[%c0_15, %c0_16] : memref<256x256xf32, #tpu.memory_space<vmem>>, vector<256x256xf32>
    %c0_17 = arith.constant 0 : index
    %c0_18 = arith.constant 0 : index
    %30 = vector.load %arg7[%c0_17, %c0_18] : memref<1x256xf32, #tpu.memory_space<vmem>>, vector<1x256xf32>
    %31 = vector.broadcast %30 : vector<1x256xf32> to vector<16x256xf32>
    %32 = arith.addf %1, %31 : vector<16x256xf32>
    %33 = vector.extract_strided_slice %28 {offsets = [0, 0], sizes = [16, 128], strides = [1, 1]} : vector<16x768xf32> to vector<16x128xf32>
    %34 = vector.extract_strided_slice %28 {offsets = [0, 256], sizes = [16, 128], strides = [1, 1]} : vector<16x768xf32> to vector<16x128xf32>
    %35 = vector.extract_strided_slice %28 {offsets = [0, 512], sizes = [16, 128], strides = [1, 1]} : vector<16x768xf32> to vector<16x128xf32>
    %cst_19 = arith.constant dense<0.000000e+00> : vector<16x16xf32>
    %36 = tpu.matmul %33, %34, %cst_19 {dimension_numbers = #tpu.dot_dimension_numbers<[1], [1], [0], [0], [0, 0, 1, 0], [], []>} : vector<16x128xf32>, vector<16x128xf32>, vector<16x16xf32> -> vector<16x16xf32>
    %cst_20 = arith.constant dense<0xFF800000> : vector<16xf32>
    %37 = vector.multi_reduction <maximumf>, %36, %cst_20 [1] : vector<16x16xf32> to vector<16xf32>
    %38 = vector.shape_cast %37 : vector<16xf32> to vector<16x1xf32>
    %39 = vector.broadcast %38 : vector<16x1xf32> to vector<16x16xf32>
    %40 = arith.subf %36, %39 : vector<16x16xf32>
    %41 = math.exp %40 : vector<16x16xf32>
    %cst_21 = arith.constant dense<0.000000e+00> : vector<16xf32>
    %42 = vector.multi_reduction <add>, %41, %cst_21 [1] : vector<16x16xf32> to vector<16xf32>
    %43 = vector.shape_cast %42 : vector<16xf32> to vector<16x1xf32>
    %44 = tpu.reciprocal %43 {approx = true} : vector<16x1xf32> -> vector<16x1xf32>
    %45 = vector.broadcast %44 : vector<16x1xf32> to vector<16x16xf32>
    %46 = arith.mulf %41, %45 : vector<16x16xf32>
    %cst_22 = arith.constant dense<0.000000e+00> : vector<16x128xf32>
    %47 = tpu.matmul %46, %35, %cst_22 {dimension_numbers = #tpu.dot_dimension_numbers<[1], [0], [0], [1], [0, 0, 1, 1], [], []>} : vector<16x16xf32>, vector<16x128xf32>, vector<16x128xf32> -> vector<16x128xf32>
    %48 = vector.extract_strided_slice %29 {offsets = [0, 0], sizes = [128, 256], strides = [1, 1]} : vector<256x256xf32> to vector<128x256xf32>
    %cst_23 = arith.constant dense<0.000000e+00> : vector<16x256xf32>
    %49 = tpu.matmul %47, %48, %cst_23 {dimension_numbers = #tpu.dot_dimension_numbers<[1], [0], [0], [1], [0, 0, 1, 1], [], []>} : vector<16x128xf32>, vector<128x256xf32>, vector<16x256xf32> -> vector<16x256xf32>
    %50 = arith.addf %32, %49 : vector<16x256xf32>
    %51 = vector.extract_strided_slice %28 {offsets = [0, 128], sizes = [16, 128], strides = [1, 1]} : vector<16x768xf32> to vector<16x128xf32>
    %52 = vector.extract_strided_slice %28 {offsets = [0, 384], sizes = [16, 128], strides = [1, 1]} : vector<16x768xf32> to vector<16x128xf32>
    %53 = vector.extract_strided_slice %28 {offsets = [0, 640], sizes = [16, 128], strides = [1, 1]} : vector<16x768xf32> to vector<16x128xf32>
    %cst_24 = arith.constant dense<0.000000e+00> : vector<16x16xf32>
    %54 = tpu.matmul %51, %52, %cst_24 {dimension_numbers = #tpu.dot_dimension_numbers<[1], [1], [0], [0], [0, 0, 1, 0], [], []>} : vector<16x128xf32>, vector<16x128xf32>, vector<16x16xf32> -> vector<16x16xf32>
    %cst_25 = arith.constant dense<0xFF800000> : vector<16xf32>
    %55 = vector.multi_reduction <maximumf>, %54, %cst_25 [1] : vector<16x16xf32> to vector<16xf32>
    %56 = vector.shape_cast %55 : vector<16xf32> to vector<16x1xf32>
    %57 = vector.broadcast %56 : vector<16x1xf32> to vector<16x16xf32>
    %58 = arith.subf %54, %57 : vector<16x16xf32>
    %59 = math.exp %58 : vector<16x16xf32>
    %cst_26 = arith.constant dense<0.000000e+00> : vector<16xf32>
    %60 = vector.multi_reduction <add>, %59, %cst_26 [1] : vector<16x16xf32> to vector<16xf32>
    %61 = vector.shape_cast %60 : vector<16xf32> to vector<16x1xf32>
    %62 = tpu.reciprocal %61 {approx = true} : vector<16x1xf32> -> vector<16x1xf32>
    %63 = vector.broadcast %62 : vector<16x1xf32> to vector<16x16xf32>
    %64 = arith.mulf %59, %63 : vector<16x16xf32>
    %cst_27 = arith.constant dense<0.000000e+00> : vector<16x128xf32>
    %65 = tpu.matmul %64, %53, %cst_27 {dimension_numbers = #tpu.dot_dimension_numbers<[1], [0], [0], [1], [0, 0, 1, 1], [], []>} : vector<16x16xf32>, vector<16x128xf32>, vector<16x128xf32> -> vector<16x128xf32>
    %66 = vector.extract_strided_slice %29 {offsets = [128, 0], sizes = [128, 256], strides = [1, 1]} : vector<256x256xf32> to vector<128x256xf32>
    %cst_28 = arith.constant dense<0.000000e+00> : vector<16x256xf32>
    %67 = tpu.matmul %65, %66, %cst_28 {dimension_numbers = #tpu.dot_dimension_numbers<[1], [0], [0], [1], [0, 0, 1, 1], [], []>} : vector<16x128xf32>, vector<128x256xf32>, vector<16x256xf32> -> vector<16x256xf32>
    %68 = arith.addf %50, %67 : vector<16x256xf32>
    %c0_29 = arith.constant 0 : index
    %c0_30 = arith.constant 0 : index
    %c0_31 = arith.constant 0 : index
    %69 = vector.load %arg8[%c0_29, %c0_30, %c0_31] : memref<1x16x256xf32, #tpu.memory_space<vmem>>, vector<1x16x256xf32>
    %70 = vector.shape_cast %69 : vector<1x16x256xf32> to vector<16x256xf32>
    %71 = vector.shape_cast %68 : vector<16x256xf32> to vector<1x16x256xf32>
    tpu.vector_store %arg8[%c0_29, %c0_30, %c0_31], %71 {strides = array<i32>} : memref<1x16x256xf32, #tpu.memory_space<vmem>>, vector<1x16x256xf32>,
    return
  }
  func.func @transform_0(%arg0: i32) -> (i32, i32, i32) {
    %c0_i32 = arith.constant 0 : i32
    %c0_i32_0 = arith.constant 0 : i32
    %c0_i32_1 = arith.constant 0 : i32
    return %arg0, %c0_i32, %c0_i32_0 : i32, i32, i32
  }
  func.func @transform_1(%arg0: i32) -> (i32, i32) {
    %c0_i32 = arith.constant 0 : i32
    %c0_i32_0 = arith.constant 0 : i32
    %c0_i32_1 = arith.constant 0 : i32
    return %c0_i32, %c0_i32_0 : i32, i32
  }
  func.func @transform_2(%arg0: i32) -> (i32, i32) {
    %c0_i32 = arith.constant 0 : i32
    %c0_i32_0 = arith.constant 0 : i32
    %c0_i32_1 = arith.constant 0 : i32
    return %c0_i32, %c0_i32_0 : i32, i32
  }
  func.func @transform_3(%arg0: i32) -> (i32, i32) {
    %c0_i32 = arith.constant 0 : i32
    %c0_i32_0 = arith.constant 0 : i32
    %c0_i32_1 = arith.constant 0 : i32
    return %c0_i32, %c0_i32_0 : i32, i32
  }
  func.func @transform_4(%arg0: i32) -> (i32, i32) {
    %c0_i32 = arith.constant 0 : i32
    %c0_i32_0 = arith.constant 0 : i32
    %c0_i32_1 = arith.constant 0 : i32
    return %c0_i32, %c0_i32_0 : i32, i32
  }
  func.func @transform_5(%arg0: i32) -> (i32, i32) {
    %c0_i32 = arith.constant 0 : i32
    %c0_i32_0 = arith.constant 0 : i32
    %c0_i32_1 = arith.constant 0 : i32
    return %c0_i32, %c0_i32_0 : i32, i32
  }
  func.func @transform_6(%arg0: i32) -> (i32, i32) {
    %c0_i32 = arith.constant 0 : i32
    %c0_i32_0 = arith.constant 0 : i32
    %c0_i32_1 = arith.constant 0 : i32
    return %c0_i32, %c0_i32_0 : i32, i32
  }
  func.func @transform_7(%arg0: i32) -> (i32, i32, i32) {
    %c0_i32 = arith.constant 0 : i32
    %c0_i32_0 = arith.constant 0 : i32
    %c0_i32_1 = arith.constant 0 : i32
    return %arg0, %c0_i32, %c0_i32_0 : i32, i32, i32
  }
}

module attributes {stable_mosaic.version = 11 : i64} {
  func.func @_mlp_block_kernel(%arg0: i32, %arg1: memref<32x256xf32, #tpu.memory_space<vmem>>, %arg2: memref<1x256xf32, #tpu.memory_space<vmem>>, %arg3: memref<1x256xf32, #tpu.memory_space<vmem>>, %arg4: memref<256x1024xf32, #tpu.memory_space<vmem>>, %arg5: memref<1x1024xf32, #tpu.memory_space<vmem>>, %arg6: memref<1024x256xf32, #tpu.memory_space<vmem>>, %arg7: memref<1x256xf32, #tpu.memory_space<vmem>>, %arg8: memref<32x256xf32, #tpu.memory_space<vmem>>) attributes {dimension_semantics = [#tpu.dimension_semantics<parallel>], iteration_bounds = array<i64: 1>, scalar_prefetch = 0 : i64, scratch_operands = 0 : i64, tpu.core_type = #tpu.core_type<tc>, window_params = [{transform_indices = @transform_0, window_bounds = array<i64: 32, 256>}, {pipeline_mode = #tpu.pipeline_mode<synchronous>, transform_indices = @transform_1, window_bounds = array<i64: 1, 256>}, {pipeline_mode = #tpu.pipeline_mode<synchronous>, transform_indices = @transform_2, window_bounds = array<i64: 1, 256>}, {pipeline_mode = #tpu.pipeline_mode<synchronous>, transform_indices = @transform_3, window_bounds = array<i64: 256, 1024>}, {pipeline_mode = #tpu.pipeline_mode<synchronous>, transform_indices = @transform_4, window_bounds = array<i64: 1, 1024>}, {pipeline_mode = #tpu.pipeline_mode<synchronous>, transform_indices = @transform_5, window_bounds = array<i64: 1024, 256>}, {pipeline_mode = #tpu.pipeline_mode<synchronous>, transform_indices = @transform_6, window_bounds = array<i64: 1, 256>}, {transform_indices = @transform_7, window_bounds = array<i64: 32, 256>}]} {
    %c0 = arith.constant 0 : index
    %c0_0 = arith.constant 0 : index
    %0 = vector.load %arg1[%c0, %c0_0] : memref<32x256xf32, #tpu.memory_space<vmem>>, vector<32x256xf32>
    %c0_1 = arith.constant 0 : index
    %c0_2 = arith.constant 0 : index
    %1 = vector.load %arg2[%c0_1, %c0_2] : memref<1x256xf32, #tpu.memory_space<vmem>>, vector<1x256xf32>
    %c0_3 = arith.constant 0 : index
    %c0_4 = arith.constant 0 : index
    %2 = vector.load %arg3[%c0_3, %c0_4] : memref<1x256xf32, #tpu.memory_space<vmem>>, vector<1x256xf32>
    %cst = arith.constant dense<0.000000e+00> : vector<32xf32>
    %3 = vector.multi_reduction <add>, %0, %cst [1] : vector<32x256xf32> to vector<32xf32>
    %4 = vector.shape_cast %3 : vector<32xf32> to vector<32x1xf32>
    %cst_5 = arith.constant 2.560000e+02 : f32
    %5 = vector.broadcast %cst_5 : f32 to vector<32x1xf32>
    %6 = arith.divf %4, %5 : vector<32x1xf32>
    %7 = vector.broadcast %6 : vector<32x1xf32> to vector<32x256xf32>
    %8 = arith.subf %0, %7 : vector<32x256xf32>
    %9 = arith.mulf %8, %8 : vector<32x256xf32>
    %cst_6 = arith.constant dense<0.000000e+00> : vector<32xf32>
    %10 = vector.multi_reduction <add>, %9, %cst_6 [1] : vector<32x256xf32> to vector<32xf32>
    %11 = vector.shape_cast %10 : vector<32xf32> to vector<32x1xf32>
    %cst_7 = arith.constant 2.560000e+02 : f32
    %12 = vector.broadcast %cst_7 : f32 to vector<32x1xf32>
    %13 = arith.divf %11, %12 : vector<32x1xf32>
    %cst_8 = arith.constant 9.99999974E-6 : f32
    %14 = vector.broadcast %cst_8 : f32 to vector<32x1xf32>
    %15 = arith.addf %13, %14 : vector<32x1xf32>
    %16 = math.rsqrt %15 : vector<32x1xf32>
    %17 = vector.broadcast %16 : vector<32x1xf32> to vector<32x256xf32>
    %18 = arith.mulf %8, %17 : vector<32x256xf32>
    %19 = vector.broadcast %1 : vector<1x256xf32> to vector<32x256xf32>
    %20 = arith.mulf %18, %19 : vector<32x256xf32>
    %21 = vector.broadcast %2 : vector<1x256xf32> to vector<32x256xf32>
    %22 = arith.addf %20, %21 : vector<32x256xf32>
    %c0_9 = arith.constant 0 : index
    %c0_10 = arith.constant 0 : index
    %23 = vector.load %arg4[%c0_9, %c0_10] : memref<256x1024xf32, #tpu.memory_space<vmem>>, vector<256x1024xf32>
    %cst_11 = arith.constant dense<0.000000e+00> : vector<32x1024xf32>
    %24 = tpu.matmul %22, %23, %cst_11 {dimension_numbers = #tpu.dot_dimension_numbers<[1], [0], [0], [1], [0, 0, 1, 1], [], []>} : vector<32x256xf32>, vector<256x1024xf32>, vector<32x1024xf32> -> vector<32x1024xf32>
    %c0_12 = arith.constant 0 : index
    %c0_13 = arith.constant 0 : index
    %25 = vector.load %arg5[%c0_12, %c0_13] : memref<1x1024xf32, #tpu.memory_space<vmem>>, vector<1x1024xf32>
    %26 = vector.broadcast %25 : vector<1x1024xf32> to vector<32x1024xf32>
    %27 = arith.addf %24, %26 : vector<32x1024xf32>
    %cst_14 = arith.constant 1.702000e+00 : f32
    %28 = vector.broadcast %cst_14 : f32 to vector<32x1024xf32>
    %29 = arith.mulf %28, %27 : vector<32x1024xf32>
    %30 = arith.negf %29 : vector<32x1024xf32>
    %31 = math.exp %30 : vector<32x1024xf32>
    %cst_15 = arith.constant 1.000000e+00 : f32
    %32 = vector.broadcast %cst_15 : f32 to vector<32x1024xf32>
    %33 = arith.addf %32, %31 : vector<32x1024xf32>
    %34 = arith.divf %32, %33 : vector<32x1024xf32>
    %35 = arith.mulf %27, %34 : vector<32x1024xf32>
    %c0_16 = arith.constant 0 : index
    %c0_17 = arith.constant 0 : index
    %36 = vector.load %arg6[%c0_16, %c0_17] : memref<1024x256xf32, #tpu.memory_space<vmem>>, vector<1024x256xf32>
    %cst_18 = arith.constant dense<0.000000e+00> : vector<32x256xf32>
    %37 = tpu.matmul %35, %36, %cst_18 {dimension_numbers = #tpu.dot_dimension_numbers<[1], [0], [0], [1], [0, 0, 1, 1], [], []>} : vector<32x1024xf32>, vector<1024x256xf32>, vector<32x256xf32> -> vector<32x256xf32>
    %c0_19 = arith.constant 0 : index
    %c0_20 = arith.constant 0 : index
    %38 = vector.load %arg7[%c0_19, %c0_20] : memref<1x256xf32, #tpu.memory_space<vmem>>, vector<1x256xf32>
    %39 = vector.broadcast %38 : vector<1x256xf32> to vector<32x256xf32>
    %40 = arith.addf %37, %39 : vector<32x256xf32>
    %41 = arith.addf %0, %40 : vector<32x256xf32>
    %c0_21 = arith.constant 0 : index
    %c0_22 = arith.constant 0 : index
    %42 = vector.load %arg8[%c0_21, %c0_22] : memref<32x256xf32, #tpu.memory_space<vmem>>, vector<32x256xf32>
    tpu.vector_store %arg8[%c0_21, %c0_22], %41 {strides = array<i32>} : memref<32x256xf32, #tpu.memory_space<vmem>>, vector<32x256xf32>,
    return
  }
  func.func @transform_0(%arg0: i32) -> (i32, i32) {
    %c0_i32 = arith.constant 0 : i32
    %c0_i32_0 = arith.constant 0 : i32
    return %arg0, %c0_i32 : i32, i32
  }
  func.func @transform_1(%arg0: i32) -> (i32, i32) {
    %c0_i32 = arith.constant 0 : i32
    %c0_i32_0 = arith.constant 0 : i32
    %c0_i32_1 = arith.constant 0 : i32
    return %c0_i32, %c0_i32_0 : i32, i32
  }
  func.func @transform_2(%arg0: i32) -> (i32, i32) {
    %c0_i32 = arith.constant 0 : i32
    %c0_i32_0 = arith.constant 0 : i32
    %c0_i32_1 = arith.constant 0 : i32
    return %c0_i32, %c0_i32_0 : i32, i32
  }
  func.func @transform_3(%arg0: i32) -> (i32, i32) {
    %c0_i32 = arith.constant 0 : i32
    %c0_i32_0 = arith.constant 0 : i32
    %c0_i32_1 = arith.constant 0 : i32
    return %c0_i32, %c0_i32_0 : i32, i32
  }
  func.func @transform_4(%arg0: i32) -> (i32, i32) {
    %c0_i32 = arith.constant 0 : i32
    %c0_i32_0 = arith.constant 0 : i32
    %c0_i32_1 = arith.constant 0 : i32
    return %c0_i32, %c0_i32_0 : i32, i32
  }
  func.func @transform_5(%arg0: i32) -> (i32, i32) {
    %c0_i32 = arith.constant 0 : i32
    %c0_i32_0 = arith.constant 0 : i32
    %c0_i32_1 = arith.constant 0 : i32
    return %c0_i32, %c0_i32_0 : i32, i32
  }
  func.func @transform_6(%arg0: i32) -> (i32, i32) {
    %c0_i32 = arith.constant 0 : i32
    %c0_i32_0 = arith.constant 0 : i32
    %c0_i32_1 = arith.constant 0 : i32
    return %c0_i32, %c0_i32_0 : i32, i32
  }
  func.func @transform_7(%arg0: i32) -> (i32, i32) {
    %c0_i32 = arith.constant 0 : i32
    %c0_i32_0 = arith.constant 0 : i32
    return %arg0, %c0_i32 : i32, i32
  }
}

</mosaic_0001>

<llo_original>
// kernel: _lambda_.4
$region0: #{_lambda_.4}
  #allocation0 [shape = 'u32[]', space=smem, size = 0x4, offset = 0x4, fixed_abs, tag = 'smem constant byte address 0x4 - core index']
  #allocation1 [shape = 'u32[144,128]{1,0:T(1,128)}', space=vmem, size = 0x12000, scoped, tag = 'internal scratch']
  %s0 = inlined_call_operand.vmem [shape: f32[2,16,256], index: 0, kind: input, shape index: {}]
  %s1 = inlined_call_operand.hbm [shape: f32[1,256], index: 1, kind: input, shape index: {}]
  %s2 = inlined_call_operand.hbm [shape: f32[1,256], index: 2, kind: input, shape index: {}]
  %s3 = inlined_call_operand.hbm [shape: f32[256,768], index: 3, kind: input, shape index: {}]
  %s4 = inlined_call_operand.hbm [shape: f32[1,768], index: 4, kind: input, shape index: {}]
  %s5 = inlined_call_operand.hbm [shape: f32[256,256], index: 5, kind: input, shape index: {}]
  %s6 = inlined_call_operand.hbm [shape: f32[1,256], index: 6, kind: input, shape index: {}]
  %s7 = inlined_call_operand.vmem [shape: f32[2,16,256], index: 7, kind: output, shape index: {}]
  %s8 = sld [smem:[#allocation0]]
  $region85: #{_lambda_.4} parent=0
    _
  %s10 = ssub.s32 1, %s8
  %s11 = scalar_select 0, %s10, %s8
  $region1: #{_lambda_.4} parent=0
    #allocation2 [shape = 'u8[1024]{0}', space=vmem, size = 0x400, scoped, tag = 'input window, operand 1, single buffered']
    #allocation3 [shape = 's32[2]{0}', space=sflag, size = 0x8, scoped, tag = 'scoped memory for _lambda_.4']
    #allocation4 [shape = 'u8[1024]{0}', space=vmem, size = 0x400, scoped, tag = 'input window, operand 2, single buffered']
    #allocation5 [shape = 's32[1]{0}', space=sflag, size = 0x4, scoped, tag = 'scoped memory for _lambda_.4']
    #allocation6 [shape = 'u8[786432]{0}', space=vmem, size = 0xc0000, scoped, tag = 'input window, operand 3, single buffered']
    #allocation7 [shape = 'u8[3072]{0}', space=vmem, size = 0xc00, scoped, tag = 'input window, operand 4, single buffered']
    #allocation8 [shape = 's32[1]{0}', space=sflag, size = 0x4, scoped, tag = 'scoped memory for _lambda_.4']
    #allocation9 [shape = 'u8[262144]{0}', space=vmem, size = 0x40000, scoped, tag = 'input window, operand 5, single buffered']
    #allocation10 [shape = 'u8[1024]{0}', space=vmem, size = 0x400, scoped, tag = 'input window, operand 6, single buffered']
    #allocation11 [shape = 's32[1]{0}', space=sflag, size = 0x4, scoped, tag = 'scoped memory for _lambda_.4']
    %12 = vsyncpa [#allocation3], 0
    %13 = vsyncpa [#allocation5], 0
    %14 = vsyncpa [#allocation8], 0
    %15 = vsyncpa [#allocation11], 0
    loop: start=0, step=1, limit=4
    $region2: #{_lambda_.4} parent=1 // loop_pre_header
      _
    $region3: #{_lambda_.4} parent=1 // loop_header
      %s17 = sphi 0, %s21
      %p18 = scmp.ge.s32.totalorder %s17, 4
      %s27 = sphi 0, %s29
      %s30 = sphi 0, %s27
      %s31 = sphi 0, %s30
      %s47 = sphi 0, %s31
      %s51 = sphi 0, %s51
      %s53 = sphi 0, %s51
      %s54 = sphi 0, %s53
      %s68 = sphi 0, %s54
      %s72 = sphi 0, %s72
      %s74 = sphi 0, %s72
      %s75 = sphi 0, %s74
      %s89 = sphi 0, %s75
      %s93 = sphi 0, %s93
      %s95 = sphi 0, %s93
      %s96 = sphi 0, %s95
      %s110 = sphi 0, %s96
      %s114 = sphi 0, %s114
      %s116 = sphi 0, %s114
      %s117 = sphi 0, %s116
      %s131 = sphi 0, %s117
      %s135 = sphi 0, %s135
      %s137 = sphi 0, %s135
      %s138 = sphi 0, %s137
      %s152 = sphi 0, %s138
      %s156 = sphi 0, %s156
      %s158 = sphi 0, %s156
      %s159 = sphi 0, %s158
      %s173 = sphi 0, %s159
      %s179 = sphi 0, %s181
      %s182 = sphi 0, %s179
      %s183 = sphi 0, %s182
      %s199 = sphi 0, %s183
    $region4: #{_lambda_.4} parent=1 // loop_header_branch
      %20 = sbr.rel (%p18) target = $region8
    $region5: #{_lambda_.4} parent=1 // loop_body
      %s22 = ssub.s32 %s17, 1
      %s23 = ssub.s32 %s17, 2
      %s24 = sadd.s32 %s17, 1
      %s25 = ssub.s32 %s17, %s24
      %p26 = scmp.eq.s32.totalorder %s25, 0
      %s28 = sadd.s32 %s27, 1
      %s29 = scalar_select %p26, %s27, %s28
      %p32 = pneg %p26
      %p33 = scmp.eq.s32.totalorder %s17, 1
      %p34 = por %p32, %p33
      %p35 = scmp.ne.s32.totalorder %s27, %s30
      %p36 = scmp.eq.s32.totalorder %s17, 0
      %p37 = por %p35, %p36
      %p38 = scmp.ne.s32.totalorder %s27, %s30
      %p39 = scmp.eq.s32.totalorder %s22, 1
      %p40 = por %p38, %p39
      %p41 = scmp.ne.s32.totalorder %s30, %s31
      %p42 = scmp.eq.s32.totalorder %s22, 0
      %p43 = por %p41, %p42
      %p44 = scmp.ne.s32.totalorder %s30, %s31
      %p45 = scmp.eq.s32.totalorder %s23, 1
      %p46 = por %p44, %p45
      %p48 = scmp.ne.s32.totalorder %s31, %s47
      %p49 = scmp.eq.s32.totalorder %s23, 0
      %p50 = por %p48, %p49
      %s52 = sadd.s32 %s51, 1
      %p55 = scmp.eq.s32.totalorder %s17, 1
      %p56 = scmp.ne.s32.totalorder %s51, %s53
      %p57 = scmp.eq.s32.totalorder %s17, 0
      %p58 = por %p56, %p57
      %p59 = scmp.ne.s32.totalorder %s51, %s53
      %p60 = scmp.eq.s32.totalorder %s22, 1
      %p61 = por %p59, %p60
      %p62 = scmp.ne.s32.totalorder %s53, %s54
      %p63 = scmp.eq.s32.totalorder %s22, 0
      %p64 = por %p62, %p63
      %p65 = scmp.ne.s32.totalorder %s53, %s54
      %p66 = scmp.eq.s32.totalorder %s23, 1
      %p67 = por %p65, %p66
      %p69 = scmp.ne.s32.totalorder %s54, %s68
      %p70 = scmp.eq.s32.totalorder %s23, 0
      %p71 = por %p69, %p70
      %s73 = sadd.s32 %s72, 1
      %p76 = scmp.eq.s32.totalorder %s17, 1
      %p77 = scmp.ne.s32.totalorder %s72, %s74
      %p78 = scmp.eq.s32.totalorder %s17, 0
      %p79 = por %p77, %p78
      %p80 = scmp.ne.s32.totalorder %s72, %s74
      %p81 = scmp.eq.s32.totalorder %s22, 1
      %p82 = por %p80, %p81
      %p83 = scmp.ne.s32.totalorder %s74, %s75
      %p84 = scmp.eq.s32.totalorder %s22, 0
      %p85 = por %p83, %p84
      %p86 = scmp.ne.s32.totalorder %s74, %s75
      %p87 = scmp.eq.s32.totalorder %s23, 1
      %p88 = por %p86, %p87
      %p90 = scmp.ne.s32.totalorder %s75, %s89
      %p91 = scmp.eq.s32.totalorder %s23, 0
      %p92 = por %p90, %p91
      %s94 = sadd.s32 %s93, 1
      %p97 = scmp.eq.s32.totalorder %s17, 1
      %p98 = scmp.ne.s32.totalorder %s93, %s95
      %p99 = scmp.eq.s32.totalorder %s17, 0
      %p100 = por %p98, %p99
      %p101 = scmp.ne.s32.totalorder %s93, %s95
      %p102 = scmp.eq.s32.totalorder %s22, 1
      %p103 = por %p101, %p102
      %p104 = scmp.ne.s32.totalorder %s95, %s96
      %p105 = scmp.eq.s32.totalorder %s22, 0
      %p106 = por %p104, %p105
      %p107 = scmp.ne.s32.totalorder %s95, %s96
      %p108 = scmp.eq.s32.totalorder %s23, 1
      %p109 = por %p107, %p108
      %p111 = scmp.ne.s32.totalorder %s96, %s110
      %p112 = scmp.eq.s32.totalorder %s23, 0
      %p113 = por %p111, %p112
      %s115 = sadd.s32 %s114, 1
      %p118 = scmp.eq.s32.totalorder %s17, 1
      %p119 = scmp.ne.s32.totalorder %s114, %s116
      %p120 = scmp.eq.s32.totalorder %s17, 0
      %p121 = por %p119, %p120
      %p122 = scmp.ne.s32.totalorder %s114, %s116
      %p123 = scmp.eq.s32.totalorder %s22, 1
      %p124 = por %p122, %p123
      %p125 = scmp.ne.s32.totalorder %s116, %s117
      %p126 = scmp.eq.s32.totalorder %s22, 0
      %p127 = por %p125, %p126
      %p128 = scmp.ne.s32.totalorder %s116, %s117
      %p129 = scmp.eq.s32.totalorder %s23, 1
      %p130 = por %p128, %p129
      %p132 = scmp.ne.s32.totalorder %s117, %s131
      %p133 = scmp.eq.s32.totalorder %s23, 0
      %p134 = por %p132, %p133
      %s136 = sadd.s32 %s135, 1
      %p139 = scmp.eq.s32.totalorder %s17, 1
      %p140 = scmp.ne.s32.totalorder %s135, %s137
      %p141 = scmp.eq.s32.totalorder %s17, 0
      %p142 = por %p140, %p141
      %p143 = scmp.ne.s32.totalorder %s135, %s137
      %p144 = scmp.eq.s32.totalorder %s22, 1
      %p145 = por %p143, %p144
      %p146 = scmp.ne.s32.totalorder %s137, %s138
      %p147 = scmp.eq.s32.totalorder %s22, 0
      %p148 = por %p146, %p147
      %p149 = scmp.ne.s32.totalorder %s137, %s138
      %p150 = scmp.eq.s32.totalorder %s23, 1
      %p151 = por %p149, %p150
      %p153 = scmp.ne.s32.totalorder %s138, %s152
      %p154 = scmp.eq.s32.totalorder %s23, 0
      %p155 = por %p153, %p154
      %s157 = sadd.s32 %s156, 1
      %p160 = scmp.eq.s32.totalorder %s17, 1
      %p161 = scmp.ne.s32.totalorder %s156, %s158
      %p162 = scmp.eq.s32.totalorder %s17, 0
      %p163 = por %p161, %p162
      %p164 = scmp.ne.s32.totalorder %s156, %s158
      %p165 = scmp.eq.s32.totalorder %s22, 1
      %p166 = por %p164, %p165
      %p167 = scmp.ne.s32.totalorder %s158, %s159
      %p168 = scmp.eq.s32.totalorder %s22, 0
      %p169 = por %p167, %p168
      %p170 = scmp.ne.s32.totalorder %s158, %s159
      %p171 = scmp.eq.s32.totalorder %s23, 1
      %p172 = por %p170, %p171
      %p174 = scmp.ne.s32.totalorder %s159, %s173
      %p175 = scmp.eq.s32.totalorder %s23, 0
      %p176 = por %p174, %p175
      %s177 = ssub.s32 %s17, %s24
      %p178 = scmp.eq.s32.totalorder %s177, 0
      %s180 = sadd.s32 %s179, 1
      %s181 = scalar_select %p178, %s179, %s180
      %p184 = pneg %p178
      %p185 = scmp.eq.s32.totalorder %s17, 1
      %p186 = por %p184, %p185
      %p187 = scmp.ne.s32.totalorder %s179, %s182
      %p188 = scmp.eq.s32.totalorder %s17, 0
      %p189 = por %p187, %p188
      %p190 = scmp.ne.s32.totalorder %s179, %s182
      %p191 = scmp.eq.s32.totalorder %s22, 1
      %p192 = por %p190, %p191
      %p193 = scmp.ne.s32.totalorder %s182, %s183
      %p194 = scmp.eq.s32.totalorder %s22, 0
      %p195 = por %p193, %p194
      %p196 = scmp.ne.s32.totalorder %s182, %s183
      %p197 = scmp.eq.s32.totalorder %s23, 1
      %p198 = por %p196, %p197
      %p200 = scmp.ne.s32.totalorder %s183, %s199
      %p201 = scmp.eq.s32.totalorder %s23, 0
      %p202 = por %p200, %p201
      %p203 = scmp.le.s32.totalorder 1, %s17
      %p204 = scmp.lt.s32.totalorder %s17, 3
      %p205 = pnand %p203, %p204
      %p206 = pneg %p205
      // Predicated region
      $region9: #{_lambda_.4} parent=5 // pred_check
        _
      $region10: #{_lambda_.4} parent=5 // pred_check_branch
        %208 = sbr.rel (%p205) target = $region12
      $region11: #{_lambda_.4} parent=5 // pred_region
        %s209 = ssub.s32 %s17, 1
        // Predicated region
        $region13: #{_lambda_.4} parent=11 // pred_check
          %p210 = pneg %p64
        $region14: #{_lambda_.4} parent=11 // pred_check_branch
          %212 = sbr.rel (%p210) target = $region16
        $region15: #{_lambda_.4} parent=11 // pred_region
          %s214 = ssub.s32 32, 32
          %215 = vsyncadd [#allocation3], %s214
          %s217 = sshll.u32 [#allocation2], 4
          %s218 = int_to_ptr.vmem [resolvable:$true] %s217
          %220 = dma.hbm_to_vmem [thread:$0]  %s1, 32, %s218, [#allocation3]
        $region16: #{_lambda_.4} parent=11 // pred_fallthru
          _
        // Predicated region
        $region17: #{_lambda_.4} parent=11 // pred_check
          %p221 = pneg %p85
        $region18: #{_lambda_.4} parent=11 // pred_check_branch
          %223 = sbr.rel (%p221) target = $region20
        $region19: #{_lambda_.4} parent=11 // pred_region
          %s225 = ssub.s32 32, 32
          %226 = vsyncadd [#allocation5], %s225
          %s228 = sshll.u32 [#allocation4], 4
          %s229 = int_to_ptr.vmem [resolvable:$true] %s228
          %231 = dma.hbm_to_vmem [thread:$0]  %s2, 32, %s229, [#allocation5]
        $region20: #{_lambda_.4} parent=11 // pred_fallthru
          _
        // Predicated region
        $region21: #{_lambda_.4} parent=11 // pred_check
          %p232 = pneg %p106
        $region22: #{_lambda_.4} parent=11 // pred_check_branch
          %234 = sbr.rel (%p232) target = $region24
        $region23: #{_lambda_.4} parent=11 // pred_region
          %s236 = ssub.s32 24576, 24576
          %237 = vsyncadd [#allocation5], %s236
          %s238 = sshll.u32 [#allocation6], 4
          %s239 = int_to_ptr.vmem [resolvable:$true] %s238
          %244 = dma.hbm_to_vmem [thread:$0]  %s3, 24576, %s239, [#allocation5], 768, 768, 48
        $region24: #{_lambda_.4} parent=11 // pred_fallthru
          _
        // Predicated region
        $region25: #{_lambda_.4} parent=11 // pred_check
          %p245 = pneg %p127
        $region26: #{_lambda_.4} parent=11 // pred_check_branch
          %247 = sbr.rel (%p245) target = $region28
        $region27: #{_lambda_.4} parent=11 // pred_region
          %s249 = ssub.s32 96, 96
          %250 = vsyncadd [#allocation8], %s249
          %s252 = sshll.u32 [#allocation7], 4
          %s253 = int_to_ptr.vmem [resolvable:$true] %s252
          %255 = dma.hbm_to_vmem [thread:$0]  %s4, 96, %s253, [#allocation8]
        $region28: #{_lambda_.4} parent=11 // pred_fallthru
          _
        // Predicated region
        $region29: #{_lambda_.4} parent=11 // pred_check
          %p256 = pneg %p148
        $region30: #{_lambda_.4} parent=11 // pred_check_branch
          %258 = sbr.rel (%p256) target = $region32
        $region31: #{_lambda_.4} parent=11 // pred_region
          %s260 = ssub.s32 8192, 8192
          %261 = vsyncadd [#allocation8], %s260
          %s262 = sshll.u32 [#allocation9], 4
          %s263 = int_to_ptr.vmem [resolvable:$true] %s262
          %268 = dma.hbm_to_vmem [thread:$0]  %s5, 8192, %s263, [#allocation8], 256, 256, 16
        $region32: #{_lambda_.4} parent=11 // pred_fallthru
          _
        // Predicated region
        $region33: #{_lambda_.4} parent=11 // pred_check
          %p269 = pneg %p169
        $region34: #{_lambda_.4} parent=11 // pred_check_branch
          %271 = sbr.rel (%p269) target = $region36
        $region35: #{_lambda_.4} parent=11 // pred_region
          %s273 = ssub.s32 32, 32
          %274 = vsyncadd [#allocation11], %s273
          %s276 = sshll.u32 [#allocation10], 4
          %s277 = int_to_ptr.vmem [resolvable:$true] %s276
          %279 = dma.hbm_to_vmem [thread:$0]  %s6, 32, %s277, [#allocation11]
        $region36: #{_lambda_.4} parent=11 // pred_fallthru
          _
      $region12: #{_lambda_.4} parent=5 // pred_fallthru
        _
      %p280 = scmp.lt.s32.totalorder %s17, 2
      // Predicated region
      $region37: #{_lambda_.4} parent=5 // pred_check
        %p281 = pneg %p280
      $region38: #{_lambda_.4} parent=5 // pred_check_branch
        %283 = sbr.rel (%p281) target = $region40
      $region39: #{_lambda_.4} parent=5 // pred_region
        // Predicated region
        $region41: #{_lambda_.4} parent=39 // pred_check
          %p284 = pneg %p37
        $region42: #{_lambda_.4} parent=39 // pred_check_branch
          %286 = sbr.rel (%p284) target = $region44
        $region43: #{_lambda_.4} parent=39 // pred_region
          %p287 = scmp.lt.s32.totalorder %s17, 1
          %s288 = scalar_select %p287, %s17, 1
          %s289 = smul.addr %s288, 4
          %s290 = smul.addr %s289, 8
          %s291 = scalar_lea.vmem %s0, %s290
        $region44: #{_lambda_.4} parent=39 // pred_fallthru
          _
      $region40: #{_lambda_.4} parent=5 // pred_fallthru
        _
      %p292 = scmp.le.s32.totalorder 1, %s17
      %p293 = scmp.lt.s32.totalorder %s17, 3
      %p294 = pnand %p292, %p293
      %p295 = pneg %p294
      // Predicated region
      $region45: #{_lambda_.4} parent=5 // pred_check
        _
      $region46: #{_lambda_.4} parent=5 // pred_check_branch
        %297 = sbr.rel (%p294) target = $region48
      $region47: #{_lambda_.4} parent=5 // pred_region
        %s298 = ssub.s32 %s17, 1
        // Predicated region
        $region49: #{_lambda_.4} parent=47 // pred_check
          %p299 = pneg %p64
        $region50: #{_lambda_.4} parent=47 // pred_check_branch
          %301 = sbr.rel (%p299) target = $region52
        $region51: #{_lambda_.4} parent=47 // pred_region
          %302 = dma.done [#allocation3], 32
        $region52: #{_lambda_.4} parent=47 // pred_fallthru
          _
        // Predicated region
        $region53: #{_lambda_.4} parent=47 // pred_check
          %p303 = pneg %p85
        $region54: #{_lambda_.4} parent=47 // pred_check_branch
          %305 = sbr.rel (%p303) target = $region56
        $region55: #{_lambda_.4} parent=47 // pred_region
          %306 = dma.done [#allocation5], 32
        $region56: #{_lambda_.4} parent=47 // pred_fallthru
          _
        // Predicated region
        $region57: #{_lambda_.4} parent=47 // pred_check
          %p307 = pneg %p106
        $region58: #{_lambda_.4} parent=47 // pred_check_branch
          %309 = sbr.rel (%p307) target = $region60
        $region59: #{_lambda_.4} parent=47 // pred_region
          %310 = dma.done [#allocation5], 24576
        $region60: #{_lambda_.4} parent=47 // pred_fallthru
          _
        // Predicated region
        $region61: #{_lambda_.4} parent=47 // pred_check
          %p311 = pneg %p127
        $region62: #{_lambda_.4} parent=47 // pred_check_branch
          %313 = sbr.rel (%p311) target = $region64
        $region63: #{_lambda_.4} parent=47 // pred_region
          %314 = dma.done [#allocation8], 96
        $region64: #{_lambda_.4} parent=47 // pred_fallthru
          _
        // Predicated region
        $region65: #{_lambda_.4} parent=47 // pred_check
          %p315 = pneg %p148
        $region66: #{_lambda_.4} parent=47 // pred_check_branch
          %317 = sbr.rel (%p315) target = $region68
        $region67: #{_lambda_.4} parent=47 // pred_region
          %318 = dma.done [#allocation8], 8192
        $region68: #{_lambda_.4} parent=47 // pred_fallthru
          _
        // Predicated region
        $region69: #{_lambda_.4} parent=47 // pred_check
          %p319 = pneg %p169
        $region70: #{_lambda_.4} parent=47 // pred_check_branch
          %321 = sbr.rel (%p319) target = $region72
        $region71: #{_lambda_.4} parent=47 // pred_region
          %322 = dma.done [#allocation11], 32
        $region72: #{_lambda_.4} parent=47 // pred_fallthru
          _
        %p323 = scmp.lt.s32.totalorder %s22, 1
        %s324 = scalar_select %p323, %s22, 1
        %s325 = smul.addr %s324, 4
        %s326 = smul.addr %s325, 8
        %s327 = scalar_lea.vmem %s0, %s326
        %p328 = pneg %p43
        %p329 = pneg %p40
        %p330 = pneg %p64
        %p331 = pneg %p61
        %p332 = pneg %p85
        %p333 = pneg %p82
        %p334 = pneg %p106
        %p335 = pneg %p103
        %p336 = pneg %p127
        %p337 = pneg %p124
        %p338 = pneg %p148
        %p339 = pneg %p145
        %p340 = pneg %p169
        %p341 = pneg %p166
        %p342 = pneg %p195
        %p343 = pneg %p192
        %p344 = scmp.lt.s32.totalorder %s22, 1
        %s345 = scalar_select %p344, %s22, 1
        %s346 = smul.addr %s345, 4
        %s347 = smul.addr %s346, 8
        %s348 = scalar_lea.vmem %s7, %s347
        %p349 = scmp.lt.s32.totalorder %s22, 1
        %s350 = scalar_select %p349, %s22, 1
        %s351 = smul.addr %s350, 4
        %s352 = smul.addr %s351, 8
        %s353 = scalar_lea.vmem %s0, %s352
        %p354 = scmp.lt.s32.totalorder %s22, 1
        %s355 = scalar_select %p354, %s22, 1
        %s356 = smul.addr %s355, 4
        %s357 = smul.addr %s356, 8
        %s358 = scalar_lea.vmem %s7, %s357
        %v359 = vld [vmem:[%s353] sm:$0xff]
        %v360 = vld [vmem:[%s353 + $0x8] sm:$0xff]
        %v361 = vld [vmem:[%s353 + $0x10] sm:$0xff]
        %v362 = vld [vmem:[%s353 + $0x18] sm:$0xff]
        %v363 = vld [vmem:[#allocation2] sm:$0x3]
        %v364 = vld [vmem:[#allocation4] sm:$0x3]
        %v365 = vadd.f32 %v359, %v360
        %366 = vadd.xlane.f32.xlu0 %v365
        %v367 = vpop.xlane.xlu0 %366
        %v368 = vadd.f32 %v361, %v362
        %369 = vadd.xlane.f32.xlu0 %v368
        %v370 = vpop.xlane.xlu0 %369
        %v371 = vrcp.pop 256.0
        %v372 = vmul.f32 %v367, %v371
        %v373 = vmul.f32 %v370, %v371
        %v374 = vsub.f32 %v359, %v372
        %v375 = vsub.f32 %v360, %v372
        %v376 = vsub.f32 %v361, %v373
        %v377 = vsub.f32 %v362, %v373
        %v378 = vmul.f32 %v374, %v374
        %v379 = vmul.f32 %v375, %v375
        %v380 = vmul.f32 %v376, %v376
        %v381 = vmul.f32 %v377, %v377
        %v382 = vadd.f32 %v378, %v379
        %383 = vadd.xlane.f32.xlu0 %v382
        %v384 = vpop.xlane.xlu0 %383
        %v385 = vadd.f32 %v380, %v381
        %386 = vadd.xlane.f32.xlu0 %v385
        %v387 = vpop.xlane.xlu0 %386
        %v388 = vmul.f32 %v384, %v371
        %v389 = vmul.f32 %v387, %v371
        %v390 = vadd.f32 %v388, 1e-05
        %v391 = vadd.f32 %v389, 1e-05
        %v392 = vrsqrt.pop %v390
        %v393 = vrsqrt.pop %v391
        %v394 = vmul.f32 %v374, %v392
        %v395 = vmul.f32 %v375, %v392
        %v396 = vmul.f32 %v376, %v393
        %v397 = vmul.f32 %v377, %v393
        %v399 = vlaneseq
        %v400 = vshrl.u32 %v399, 7
        %v401 = vsub.s32 0, %v400
        %v402 = vrot.slane %v363, %v401
        %v403 = vlaneseq
        %v404 = vshrl.u32 %v403, 7
        %v405 = vsub.s32 1, %v404
        %v406 = vrot.slane %v363, %v405
        %v409 = vmul.f32 %v394, %v402
        %v410 = vmul.f32 %v395, %v406
        %v411 = vmul.f32 %v396, %v402
        %v412 = vmul.f32 %v397, %v406
        %v414 = vlaneseq
        %v415 = vshrl.u32 %v414, 7
        %v416 = vsub.s32 0, %v415
        %v417 = vrot.slane %v364, %v416
        %v418 = vlaneseq
        %v419 = vshrl.u32 %v418, 7
        %v420 = vsub.s32 1, %v419
        %v421 = vrot.slane %v364, %v420
        %v424 = vadd.f32 %v409, %v417
        %v425 = vadd.f32 %v410, %v421
        %v426 = vadd.f32 %v411, %v417
        %v427 = vadd.f32 %v412, %v421
        %v428 = vld [vmem:[#allocation6] sm:$0xff]
        %v429 = vld [vmem:[#allocation6 + $0x8] sm:$0xff]
        %v430 = vld [vmem:[#allocation6 + $0x10] sm:$0xff]
        %v431 = vld [vmem:[#allocation6 + $0x18] sm:$0xff]
        %v432 = vld [vmem:[#allocation6 + $0x20] sm:$0xff]
        %v433 = vld [vmem:[#allocation6 + $0x28] sm:$0xff]
        %v434 = vld [vmem:[#allocation6 + $0x30] sm:$0xff]
        %v435 = vld [vmem:[#allocation6 + $0x38] sm:$0xff]
        %v436 = vld [vmem:[#allocation6 + $0x40] sm:$0xff]
        %v437 = vld [vmem:[#allocation6 + $0x48] sm:$0xff]
        %v438 = vld [vmem:[#allocation6 + $0x50] sm:$0xff]
        %v439 = vld [vmem:[#allocation6 + $0x58] sm:$0xff]
        %v440 = vld [vmem:[#allocation6 + $0x60] sm:$0xff]
        %v441 = vld [vmem:[#allocation6 + $0x68] sm:$0xff]
        %v442 = vld [vmem:[#allocation6 + $0x70] sm:$0xff]
        %v443 = vld [vmem:[#allocation6 + $0x78] sm:$0xff]
        %v444 = vld [vmem:[#allocation6 + $0x80] sm:$0xff]
        %v445 = vld [vmem:[#allocation6 + $0x88] sm:$0xff]
        %v446 = vld [vmem:[#allocation6 + $0x90] sm:$0xff]
        %v447 = vld [vmem:[#allocation6 + $0x98] sm:$0xff]
        %v448 = vld [vmem:[#allocation6 + $0xa0] sm:$0xff]
        %v449 = vld [vmem:[#allocation6 + $0xa8] sm:$0xff]
        %v450 = vld [vmem:[#allocation6 + $0xb0] sm:$0xff]
        %v451 = vld [vmem:[#allocation6 + $0xb8] sm:$0xff]
        %v452 = vld [vmem:[#allocation6 + $0xc0] sm:$0xff]
        %v453 = vld [vmem:[#allocation6 + $0xc8] sm:$0xff]
        %v454 = vld [vmem:[#allocation6 + $0xd0] sm:$0xff]
        %v455 = vld [vmem:[#allocation6 + $0xd8] sm:$0xff]
        %v456 = vld [vmem:[#allocation6 + $0xe0] sm:$0xff]
        %v457 = vld [vmem:[#allocation6 + $0xe8] sm:$0xff]
        %v458 = vld [vmem:[#allocation6 + $0xf0] sm:$0xff]
        %v459 = vld [vmem:[#allocation6 + $0xf8] sm:$0xff]
        %v460 = vld [vmem:[#allocation6 + $0x100] sm:$0xff]
        %v461 = vld [vmem:[#allocation6 + $0x108] sm:$0xff]
        %v462 = vld [vmem:[#allocation6 + $0x110] sm:$0xff]
        %v463 = vld [vmem:[#allocation6 + $0x118] sm:$0xff]
        %v464 = vld [vmem:[#allocation6 + $0x120] sm:$0xff]
        %v465 = vld [vmem:[#allocation6 + $0x128] sm:$0xff]
        %v466 = vld [vmem:[#allocation6 + $0x130] sm:$0xff]
        %v467 = vld [vmem:[#allocation6 + $0x138] sm:$0xff]
        %v468 = vld [vmem:[#allocation6 + $0x140] sm:$0xff]
        %v469 = vld [vmem:[#allocation6 + $0x148] sm:$0xff]
        %v470 = vld [vmem:[#allocation6 + $0x150] sm:$0xff]
        %v471 = vld [vmem:[#allocation6 + $0x158] sm:$0xff]
        %v472 = vld [vmem:[#allocation6 + $0x160] sm:$0xff]
        %v473 = vld [vmem:[#allocation6 + $0x168] sm:$0xff]
        %v474 = vld [vmem:[#allocation6 + $0x170] sm:$0xff]
        %v475 = vld [vmem:[#allocation6 + $0x178] sm:$0xff]
        %v476 = vld [vmem:[#allocation6 + $0x180] sm:$0xff]
        %v477 = vld [vmem:[#allocation6 + $0x188] sm:$0xff]
        %v478 = vld [vmem:[#allocation6 + $0x190] sm:$0xff]
        %v479 = vld [vmem:[#allocation6 + $0x198] sm:$0xff]
        %v480 = vld [vmem:[#allocation6 + $0x1a0] sm:$0xff]
        %v481 = vld [vmem:[#allocation6 + $0x1a8] sm:$0xff]
        %v482 = vld [vmem:[#allocation6 + $0x1b0] sm:$0xff]
        %v483 = vld [vmem:[#allocation6 + $0x1b8] sm:$0xff]
        %v484 = vld [vmem:[#allocation6 + $0x1c0] sm:$0xff]
        %v485 = vld [vmem:[#allocation6 + $0x1c8] sm:$0xff]
        %v486 = vld [vmem:[#allocation6 + $0x1d0] sm:$0xff]
        %v487 = vld [vmem:[#allocation6 + $0x1d8] sm:$0xff]
        %v488 = vld [vmem:[#allocation6 + $0x1e0] sm:$0xff]
        %v489 = vld [vmem:[#allocation6 + $0x1e8] sm:$0xff]
        %v490 = vld [vmem:[#allocation6 + $0x1f0] sm:$0xff]
        %v491 = vld [vmem:[#allocation6 + $0x1f8] sm:$0xff]
        %v492 = vld [vmem:[#allocation6 + $0x200] sm:$0xff]
        %v493 = vld [vmem:[#allocation6 + $0x208] sm:$0xff]
        %v494 = vld [vmem:[#allocation6 + $0x210] sm:$0xff]
        %v495 = vld [vmem:[#allocation6 + $0x218] sm:$0xff]
        %v496 = vld [vmem:[#allocation6 + $0x220] sm:$0xff]
        %v497 = vld [vmem:[#allocation6 + $0x228] sm:$0xff]
        %v498 = vld [vmem:[#allocation6 + $0x230] sm:$0xff]
        %v499 = vld [vmem:[#allocation6 + $0x238] sm:$0xff]
        %v500 = vld [vmem:[#allocation6 + $0x240] sm:$0xff]
        %v501 = vld [vmem:[#allocation6 + $0x248] sm:$0xff]
        %v502 = vld [vmem:[#allocation6 + $0x250] sm:$0xff]
        %v503 = vld [vmem:[#allocation6 + $0x258] sm:$0xff]
        %v504 = vld [vmem:[#allocation6 + $0x260] sm:$0xff]
        %v505 = vld [vmem:[#allocation6 + $0x268] sm:$0xff]
        %v506 = vld [vmem:[#allocation6 + $0x270] sm:$0xff]
        %v507 = vld [vmem:[#allocation6 + $0x278] sm:$0xff]
        %v508 = vld [vmem:[#allocation6 + $0x280] sm:$0xff]
        %v509 = vld [vmem:[#allocation6 + $0x288] sm:$0xff]
        %v510 = vld [vmem:[#allocation6 + $0x290] sm:$0xff]
        %v511 = vld [vmem:[#allocation6 + $0x298] sm:$0xff]
        %v512 = vld [vmem:[#allocation6 + $0x2a0] sm:$0xff]
        %v513 = vld [vmem:[#allocation6 + $0x2a8] sm:$0xff]
        %v514 = vld [vmem:[#allocation6 + $0x2b0] sm:$0xff]
        %v515 = vld [vmem:[#allocation6 + $0x2b8] sm:$0xff]
        %v516 = vld [vmem:[#allocation6 + $0x2c0] sm:$0xff]
        %v517 = vld [vmem:[#allocation6 + $0x2c8] sm:$0xff]
        %v518 = vld [vmem:[#allocation6 + $0x2d0] sm:$0xff]
        %v519 = vld [vmem:[#allocation6 + $0x2d8] sm:$0xff]
        %v520 = vld [vmem:[#allocation6 + $0x2e0] sm:$0xff]
        %v521 = vld [vmem:[#allocation6 + $0x2e8] sm:$0xff]
        %v522 = vld [vmem:[#allocation6 + $0x2f0] sm:$0xff]
        %v523 = vld [vmem:[#allocation6 + $0x2f8] sm:$0xff]
        %v524 = vld [vmem:[#allocation6 + $0x300] sm:$0xff]
        %v525 = vld [vmem:[#allocation6 + $0x308] sm:$0xff]
        %v526 = vld [vmem:[#allocation6 + $0x310] sm:$0xff]
        %v527 = vld [vmem:[#allocation6 + $0x318] sm:$0xff]
        %v528 = vld [vmem:[#allocation6 + $0x320] sm:$0xff]
        %v529 = vld [vmem:[#allocation6 + $0x328] sm:$0xff]
        %v530 = vld [vmem:[#allocation6 + $0x330] sm:$0xff]
        %v531 = vld [vmem:[#allocation6 + $0x338] sm:$0xff]
        %v532 = vld [vmem:[#allocation6 + $0x340] sm:$0xff]
        %v533 = vld [vmem:[#allocation6 + $0x348] sm:$0xff]
        %v534 = vld [vmem:[#allocation6 + $0x350] sm:$0xff]
        %v535 = vld [vmem:[#allocation6 + $0x358] sm:$0xff]
        %v536 = vld [vmem:[#allocation6 + $0x360] sm:$0xff]
        %v537 = vld [vmem:[#allocation6 + $0x368] sm:$0xff]
        %v538 = vld [vmem:[#allocation6 + $0x370] sm:$0xff]
        %v539 = vld [vmem:[#allocation6 + $0x378] sm:$0xff]
        %v540 = vld [vmem:[#allocation6 + $0x380] sm:$0xff]
        %v541 = vld [vmem:[#allocation6 + $0x388] sm:$0xff]
        %v542 = vld [vmem:[#allocation6 + $0x390] sm:$0xff]
        %v543 = vld [vmem:[#allocation6 + $0x398] sm:$0xff]
        %v544 = vld [vmem:[#allocation6 + $0x3a0] sm:$0xff]
        %v545 = vld [vmem:[#allocation6 + $0x3a8] sm:$0xff]
        %v546 = vld [vmem:[#allocation6 + $0x3b0] sm:$0xff]
        %v547 = vld [vmem:[#allocation6 + $0x3b8] sm:$0xff]
        %v548 = vld [vmem:[#allocation6 + $0x3c0] sm:$0xff]
        %v549 = vld [vmem:[#allocation6 + $0x3c8] sm:$0xff]
        %v550 = vld [vmem:[#allocation6 + $0x3d0] sm:$0xff]
        %v551 = vld [vmem:[#allocation6 + $0x3d8] sm:$0xff]
        %v552 = vld [vmem:[#allocation6 + $0x3e0] sm:$0xff]
        %v553 = vld [vmem:[#allocation6 + $0x3e8] sm:$0xff]
        %v554 = vld [vmem:[#allocation6 + $0x3f0] sm:$0xff]
        %v555 = vld [vmem:[#allocation6 + $0x3f8] sm:$0xff]
        %v556 = vld [vmem:[#allocation6 + $0x400] sm:$0xff]
        %v557 = vld [vmem:[#allocation6 + $0x408] sm:$0xff]
        %v558 = vld [vmem:[#allocation6 + $0x410] sm:$0xff]
        %v559 = vld [vmem:[#allocation6 + $0x418] sm:$0xff]
        %v560 = vld [vmem:[#allocation6 + $0x420] sm:$0xff]
        %v561 = vld [vmem:[#allocation6 + $0x428] sm:$0xff]
        %v562 = vld [vmem:[#allocation6 + $0x430] sm:$0xff]
        %v563 = vld [vmem:[#allocation6 + $0x438] sm:$0xff]
        %v564 = vld [vmem:[#allocation6 + $0x440] sm:$0xff]
        %v565 = vld [vmem:[#allocation6 + $0x448] sm:$0xff]
        %v566 = vld [vmem:[#allocation6 + $0x450] sm:$0xff]
        %v567 = vld [vmem:[#allocation6 + $0x458] sm:$0xff]
        %v568 = vld [vmem:[#allocation6 + $0x460] sm:$0xff]
        %v569 = vld [vmem:[#allocation6 + $0x468] sm:$0xff]
        %v570 = vld [vmem:[#allocation6 + $0x470] sm:$0xff]
        %v571 = vld [vmem:[#allocation6 + $0x478] sm:$0xff]
        %v572 = vld [vmem:[#allocation6 + $0x480] sm:$0xff]
        %v573 = vld [vmem:[#allocation6 + $0x488] sm:$0xff]
        %v574 = vld [vmem:[#allocation6 + $0x490] sm:$0xff]
        %v575 = vld [vmem:[#allocation6 + $0x498] sm:$0xff]
        %v576 = vld [vmem:[#allocation6 + $0x4a0] sm:$0xff]
        %v577 = vld [vmem:[#allocation6 + $0x4a8] sm:$0xff]
        %v578 = vld [vmem:[#allocation6 + $0x4b0] sm:$0xff]
        %v579 = vld [vmem:[#allocation6 + $0x4b8] sm:$0xff]
        %v580 = vld [vmem:[#allocation6 + $0x4c0] sm:$0xff]
        %v581 = vld [vmem:[#allocation6 + $0x4c8] sm:$0xff]
        %v582 = vld [vmem:[#allocation6 + $0x4d0] sm:$0xff]
        %v583 = vld [vmem:[#allocation6 + $0x4d8] sm:$0xff]
        %v584 = vld [vmem:[#allocation6 + $0x4e0] sm:$0xff]
        %v585 = vld [vmem:[#allocation6 + $0x4e8] sm:$0xff]
        %v586 = vld [vmem:[#allocation6 + $0x4f0] sm:$0xff]
        %v587 = vld [vmem:[#allocation6 + $0x4f8] sm:$0xff]
        %v588 = vld [vmem:[#allocation6 + $0x500] sm:$0xff]
        %v589 = vld [vmem:[#allocation6 + $0x508] sm:$0xff]
        %v590 = vld [vmem:[#allocation6 + $0x510] sm:$0xff]
        %v591 = vld [vmem:[#allocation6 + $0x518] sm:$0xff]
        %v592 = vld [vmem:[#allocation6 + $0x520] sm:$0xff]
        %v593 = vld [vmem:[#allocation6 + $0x528] sm:$0xff]
        %v594 = vld [vmem:[#allocation6 + $0x530] sm:$0xff]
        %v595 = vld [vmem:[#allocation6 + $0x538] sm:$0xff]
        %v596 = vld [vmem:[#allocation6 + $0x540] sm:$0xff]
        %v597 = vld [vmem:[#allocation6 + $0x548] sm:$0xff]
        %v598 = vld [vmem:[#allocation6 + $0x550] sm:$0xff]
        %v599 = vld [vmem:[#allocation6 + $0x558] sm:$0xff]
        %v600 = vld [vmem:[#allocation6 + $0x560] sm:$0xff]
        %v601 = vld [vmem:[#allocation6 + $0x568] sm:$0xff]
        %v602 = vld [vmem:[#allocation6 + $0x570] sm:$0xff]
        %v603 = vld [vmem:[#allocation6 + $0x578] sm:$0xff]
        %v604 = vld [vmem:[#allocation6 + $0x580] sm:$0xff]
        %v605 = vld [vmem:[#allocation6 + $0x588] sm:$0xff]
        %v606 = vld [vmem:[#allocation6 + $0x590] sm:$0xff]
        %v607 = vld [vmem:[#allocation6 + $0x598] sm:$0xff]
        %v608 = vld [vmem:[#allocation6 + $0x5a0] sm:$0xff]
        %v609 = vld [vmem:[#allocation6 + $0x5a8] sm:$0xff]
        %v610 = vld [vmem:[#allocation6 + $0x5b0] sm:$0xff]
        %v611 = vld [vmem:[#allocation6 + $0x5b8] sm:$0xff]
        %v612 = vld [vmem:[#allocation6 + $0x5c0] sm:$0xff]
        %v613 = vld [vmem:[#allocation6 + $0x5c8] sm:$0xff]
        %v614 = vld [vmem:[#allocation6 + $0x5d0] sm:$0xff]
        %v615 = vld [vmem:[#allocation6 + $0x5d8] sm:$0xff]
        %v616 = vld [vmem:[#allocation6 + $0x5e0] sm:$0xff]
        %v617 = vld [vmem:[#allocation6 + $0x5e8] sm:$0xff]
        %v618 = vld [vmem:[#allocation6 + $0x5f0] sm:$0xff]
        %v619 = vld [vmem:[#allocation6 + $0x5f8] sm:$0xff]
        %v620 = vld [vmem:[#allocation7] sm:$0x3f]
        %v622 = vlaneseq
        %v623 = vshrl.u32 %v622, 7
        %v624 = vsub.s32 0, %v623
        %v625 = vrot.slane %v620, %v624
        %v626 = vlaneseq
        %v627 = vshrl.u32 %v626, 7
        %v628 = vsub.s32 1, %v627
        %v629 = vrot.slane %v620, %v628
        %v630 = vlaneseq
        %v631 = vshrl.u32 %v630, 7
        %v632 = vsub.s32 2, %v631
        %v633 = vrot.slane %v620, %v632
        %v634 = vlaneseq
        %v635 = vshrl.u32 %v634, 7
        %v636 = vsub.s32 3, %v635
        %v637 = vrot.slane %v620, %v636
        %v638 = vlaneseq
        %v639 = vshrl.u32 %v638, 7
        %v640 = vsub.s32 4, %v639
        %v641 = vrot.slane %v620, %v640
        %v642 = vlaneseq
        %v643 = vshrl.u32 %v642, 7
        %v644 = vsub.s32 5, %v643
        %v645 = vrot.slane %v620, %v644
        %652 = vmatprep.subr.mxu0 %v519
        %653 = vmatpush1.msra.mxu0 %v518
        %654 = vmatprep.subr.mxu0 %v513
        %655 = vmatpush1.msra.mxu0 %v512
        %656 = vmatprep.subr.mxu0 %v507
        %657 = vmatpush1.msra.mxu0 %v506
        %658 = vmatprep.subr.mxu0 %v501
        %659 = vmatpush1.msra.mxu0 %v500
        %660 = vmatprep.subr.mxu0 %v495
        %661 = vmatpush1.msra.mxu0 %v494
        %662 = vmatprep.subr.mxu0 %v489
        %663 = vmatpush1.msra.mxu0 %v488
        %664 = vmatprep.subr.mxu0 %v483
        %665 = vmatpush1.msra.mxu0 %v482
        %666 = vmatprep.subr.mxu0 %v477
        %667 = vmatpush1.msra.mxu0 %v476
        %668 = vmatprep.subr.mxu0 %v471
        %669 = vmatpush1.msra.mxu0 %v470
        %670 = vmatprep.subr.mxu0 %v465
        %671 = vmatpush1.msra.mxu0 %v464
        %672 = vmatprep.subr.mxu0 %v459
        %673 = vmatpush1.msra.mxu0 %v458
        %674 = vmatprep.subr.mxu0 %v453
        %675 = vmatpush1.msra.mxu0 %v452
        %676 = vmatprep.subr.mxu0 %v447
        %677 = vmatpush1.msra.mxu0 %v446
        %678 = vmatprep.subr.mxu0 %v441
        %679 = vmatpush1.msra.mxu0 %v440
        %680 = vmatprep.subr.mxu0 %v435
        %681 = vmatpush1.msra.mxu0 %v434
        %682 = vmatprep.subr.mxu0 %v429
        %683 = vmatpush1.msra.mxu0 %v428
        %684 = vmatprep.subr.mxu0 %v615
        %685 = vmatpush2.msra.mxu0 %v614
        %686 = vmatprep.subr.mxu0 %v609
        %687 = vmatpush2.msra.mxu0 %v608
        %688 = vmatprep.subr.mxu0 %v603
        %689 = vmatpush2.msra.mxu0 %v602
        %690 = vmatprep.subr.mxu0 %v597
        %691 = vmatpush2.msra.mxu0 %v596
        %692 = vmatprep.subr.mxu0 %v591
        %693 = vmatpush2.msra.mxu0 %v590
        %694 = vmatprep.subr.mxu0 %v585
        %695 = vmatpush2.msra.mxu0 %v584
        %696 = vmatprep.subr.mxu0 %v579
        %697 = vmatpush2.msra.mxu0 %v578
        %698 = vmatprep.subr.mxu0 %v573
        %699 = vmatpush2.msra.mxu0 %v572
        %700 = vmatprep.subr.mxu0 %v567
        %701 = vmatpush2.msra.mxu0 %v566
        %702 = vmatprep.subr.mxu0 %v561
        %703 = vmatpush2.msra.mxu0 %v560
        %704 = vmatprep.subr.mxu0 %v555
        %705 = vmatpush2.msra.mxu0 %v554
        %706 = vmatprep.subr.mxu0 %v549
        %707 = vmatpush2.msra.mxu0 %v548
        %708 = vmatprep.subr.mxu0 %v543
        %709 = vmatpush2.msra.mxu0 %v542
        %710 = vmatprep.subr.mxu0 %v537
        %711 = vmatpush2.msra.mxu0 %v536
        %712 = vmatprep.subr.mxu0 %v531
        %713 = vmatpush2.msra.mxu0 %v530
        %714 = vmatprep.subr.mxu0 %v525
        %715 = vmatpush2.msra.mxu0 %v524
        %716 = vmatprep.mubr.f32.mxu0 %v425
        %717 = vmatmul.mubr.f32.gmra.mxu0 %v424
        %v718 = vpop.f32.mrf.mxu0
        %v719 = vadd.f32 %v625, %v718
        %v720 = vpop.f32.mrf.mxu0
        %v721 = vadd.f32 %v629, %v720
        %722 = vmatprep.mubr.f32.mxu0 %v427
        %723 = vmatmul.mubr.f32.gmra.mxu0 %v426
        %v724 = vpop.f32.mrf.mxu0
        %v725 = vadd.f32 %v625, %v724
        %v726 = vpop.f32.mrf.mxu0
        %v727 = vadd.f32 %v629, %v726
        %728 = vdwg.mxu0
        %729 = vmatprep.subr.mxu0 %v521
        %730 = vmatpush1.msra.mxu0 %v520
        %731 = vmatprep.subr.mxu0 %v515
        %732 = vmatpush1.msra.mxu0 %v514
        %733 = vmatprep.subr.mxu0 %v509
        %734 = vmatpush1.msra.mxu0 %v508
        %735 = vmatprep.subr.mxu0 %v503
        %736 = vmatpush1.msra.mxu0 %v502
        %737 = vmatprep.subr.mxu0 %v497
        %738 = vmatpush1.msra.mxu0 %v496
        %739 = vmatprep.subr.mxu0 %v491
        %740 = vmatpush1.msra.mxu0 %v490
        %741 = vmatprep.subr.mxu0 %v485
        %742 = vmatpush1.msra.mxu0 %v484
        %743 = vmatprep.subr.mxu0 %v479
        %744 = vmatpush1.msra.mxu0 %v478
        %745 = vmatprep.subr.mxu0 %v473
        %746 = vmatpush1.msra.mxu0 %v472
        %747 = vmatprep.subr.mxu0 %v467
        %748 = vmatpush1.msra.mxu0 %v466
        %749 = vmatprep.subr.mxu0 %v461
        %750 = vmatpush1.msra.mxu0 %v460
        %751 = vmatprep.subr.mxu0 %v455
        %752 = vmatpush1.msra.mxu0 %v454
        %753 = vmatprep.subr.mxu0 %v449
        %754 = vmatpush1.msra.mxu0 %v448
        %755 = vmatprep.subr.mxu0 %v443
        %756 = vmatpush1.msra.mxu0 %v442
        %757 = vmatprep.subr.mxu0 %v437
        %758 = vmatpush1.msra.mxu0 %v436
        %759 = vmatprep.subr.mxu0 %v431
        %760 = vmatpush1.msra.mxu0 %v430
        %761 = vmatprep.subr.mxu0 %v617
        %762 = vmatpush2.msra.mxu0 %v616
        %763 = vmatprep.subr.mxu0 %v611
        %764 = vmatpush2.msra.mxu0 %v610
        %765 = vmatprep.subr.mxu0 %v605
        %766 = vmatpush2.msra.mxu0 %v604
        %767 = vmatprep.subr.mxu0 %v599
        %768 = vmatpush2.msra.mxu0 %v598
        %769 = vmatprep.subr.mxu0 %v593
        %770 = vmatpush2.msra.mxu0 %v592
        %771 = vmatprep.subr.mxu0 %v587
        %772 = vmatpush2.msra.mxu0 %v586
        %773 = vmatprep.subr.mxu0 %v581
        %774 = vmatpush2.msra.mxu0 %v580
        %775 = vmatprep.subr.mxu0 %v575
        %776 = vmatpush2.msra.mxu0 %v574
        %777 = vmatprep.subr.mxu0 %v569
        %778 = vmatpush2.msra.mxu0 %v568
        %779 = vmatprep.subr.mxu0 %v563
        %780 = vmatpush2.msra.mxu0 %v562
        %781 = vmatprep.subr.mxu0 %v557
        %782 = vmatpush2.msra.mxu0 %v556
        %783 = vmatprep.subr.mxu0 %v551
        %784 = vmatpush2.msra.mxu0 %v550
        %785 = vmatprep.subr.mxu0 %v545
        %786 = vmatpush2.msra.mxu0 %v544
        %787 = vmatprep.subr.mxu0 %v539
        %788 = vmatpush2.msra.mxu0 %v538
        %789 = vmatprep.subr.mxu0 %v533
        %790 = vmatpush2.msra.mxu0 %v532
        %791 = vmatprep.subr.mxu0 %v527
        %792 = vmatpush2.msra.mxu0 %v526
        %793 = vmatprep.mubr.f32.mxu0 %v425
        %794 = vmatmul.mubr.f32.gmra.mxu0 %v424
        %v795 = vpop.f32.mrf.mxu0
        %v796 = vadd.f32 %v633, %v795
        %v797 = vpop.f32.mrf.mxu0
        %v798 = vadd.f32 %v637, %v797
        %799 = vmatprep.mubr.f32.mxu0 %v427
        %800 = vmatmul.mubr.f32.gmra.mxu0 %v426
        %v801 = vpop.f32.mrf.mxu0
        %v802 = vadd.f32 %v633, %v801
        %v803 = vpop.f32.mrf.mxu0
        %v804 = vadd.f32 %v637, %v803
        %805 = vdwg.mxu0
        %806 = vmatprep.subr.mxu0 %v523
        %807 = vmatpush1.msra.mxu0 %v522
        %808 = vmatprep.subr.mxu0 %v517
        %809 = vmatpush1.msra.mxu0 %v516
        %810 = vmatprep.subr.mxu0 %v511
        %811 = vmatpush1.msra.mxu0 %v510
        %812 = vmatprep.subr.mxu0 %v505
        %813 = vmatpush1.msra.mxu0 %v504
        %814 = vmatprep.subr.mxu0 %v499
        %815 = vmatpush1.msra.mxu0 %v498
        %816 = vmatprep.subr.mxu0 %v493
        %817 = vmatpush1.msra.mxu0 %v492
        %818 = vmatprep.subr.mxu0 %v487
        %819 = vmatpush1.msra.mxu0 %v486
        %820 = vmatprep.subr.mxu0 %v481
        %821 = vmatpush1.msra.mxu0 %v480
        %822 = vmatprep.subr.mxu0 %v475
        %823 = vmatpush1.msra.mxu0 %v474
        %824 = vmatprep.subr.mxu0 %v469
        %825 = vmatpush1.msra.mxu0 %v468
        %826 = vmatprep.subr.mxu0 %v463
        %827 = vmatpush1.msra.mxu0 %v462
        %828 = vmatprep.subr.mxu0 %v457
        %829 = vmatpush1.msra.mxu0 %v456
        %830 = vmatprep.subr.mxu0 %v451
        %831 = vmatpush1.msra.mxu0 %v450
        %832 = vmatprep.subr.mxu0 %v445
        %833 = vmatpush1.msra.mxu0 %v444
        %834 = vmatprep.subr.mxu0 %v439
        %835 = vmatpush1.msra.mxu0 %v438
        %836 = vmatprep.subr.mxu0 %v433
        %837 = vmatpush1.msra.mxu0 %v432
        %838 = vmatprep.subr.mxu0 %v619
        %839 = vmatpush2.msra.mxu0 %v618
        %840 = vmatprep.subr.mxu0 %v613
        %841 = vmatpush2.msra.mxu0 %v612
        %842 = vmatprep.subr.mxu0 %v607
        %843 = vmatpush2.msra.mxu0 %v606
        %844 = vmatprep.subr.mxu0 %v601
        %845 = vmatpush2.msra.mxu0 %v600
        %846 = vmatprep.subr.mxu0 %v595
        %847 = vmatpush2.msra.mxu0 %v594
        %848 = vmatprep.subr.mxu0 %v589
        %849 = vmatpush2.msra.mxu0 %v588
        %850 = vmatprep.subr.mxu0 %v583
        %851 = vmatpush2.msra.mxu0 %v582
        %852 = vmatprep.subr.mxu0 %v577
        %853 = vmatpush2.msra.mxu0 %v576
        %854 = vmatprep.subr.mxu0 %v571
        %855 = vmatpush2.msra.mxu0 %v570
        %856 = vmatprep.subr.mxu0 %v565
        %857 = vmatpush2.msra.mxu0 %v564
        %858 = vmatprep.subr.mxu0 %v559
        %859 = vmatpush2.msra.mxu0 %v558
        %860 = vmatprep.subr.mxu0 %v553
        %861 = vmatpush2.msra.mxu0 %v552
        %862 = vmatprep.subr.mxu0 %v547
        %863 = vmatpush2.msra.mxu0 %v546
        %864 = vmatprep.subr.mxu0 %v541
        %865 = vmatpush2.msra.mxu0 %v540
        %866 = vmatprep.subr.mxu0 %v535
        %867 = vmatpush2.msra.mxu0 %v534
        %868 = vmatprep.subr.mxu0 %v529
        %869 = vmatpush2.msra.mxu0 %v528
        %870 = vmatprep.mubr.f32.mxu0 %v425
        %871 = vmatmul.mubr.f32.gmra.mxu0 %v424
        %v872 = vpop.f32.mrf.mxu0
        %v873 = vadd.f32 %v641, %v872
        %v874 = vpop.f32.mrf.mxu0
        %v875 = vadd.f32 %v645, %v874
        %876 = vmatprep.mubr.f32.mxu0 %v427
        %877 = vmatmul.mubr.f32.gmra.mxu0 %v426
        %v878 = vpop.f32.mrf.mxu0
        %v879 = vadd.f32 %v641, %v878
        %v880 = vpop.f32.mrf.mxu0
        %v881 = vadd.f32 %v645, %v880
        %882 = vdwg.mxu0
        %v883 = vld [vmem:[#allocation9] sm:$0xff]
        %v884 = vld [vmem:[#allocation9 + $0x8] sm:$0xff]
        %v885 = vld [vmem:[#allocation9 + $0x10] sm:$0xff]
        %v886 = vld [vmem:[#allocation9 + $0x18] sm:$0xff]
        %v887 = vld [vmem:[#allocation9 + $0x20] sm:$0xff]
        %v888 = vld [vmem:[#allocation9 + $0x28] sm:$0xff]
        %v889 = vld [vmem:[#allocation9 + $0x30] sm:$0xff]
        %v890 = vld [vmem:[#allocation9 + $0x38] sm:$0xff]
        %v891 = vld [vmem:[#allocation9 + $0x40] sm:$0xff]
        %v892 = vld [vmem:[#allocation9 + $0x48] sm:$0xff]
        %v893 = vld [vmem:[#allocation9 + $0x50] sm:$0xff]
        %v894 = vld [vmem:[#allocation9 + $0x58] sm:$0xff]
        %v895 = vld [vmem:[#allocation9 + $0x60] sm:$0xff]
        %v896 = vld [vmem:[#allocation9 + $0x68] sm:$0xff]
        %v897 = vld [vmem:[#allocation9 + $0x70] sm:$0xff]
        %v898 = vld [vmem:[#allocation9 + $0x78] sm:$0xff]
        %v899 = vld [vmem:[#allocation9 + $0x80] sm:$0xff]
        %v900 = vld [vmem:[#allocation9 + $0x88] sm:$0xff]
        %v901 = vld [vmem:[#allocation9 + $0x90] sm:$0xff]
        %v902 = vld [vmem:[#allocation9 + $0x98] sm:$0xff]
        %v903 = vld [vmem:[#allocation9 + $0xa0] sm:$0xff]
        %v904 = vld [vmem:[#allocation9 + $0xa8] sm:$0xff]
        %v905 = vld [vmem:[#allocation9 + $0xb0] sm:$0xff]
        %v906 = vld [vmem:[#allocation9 + $0xb8] sm:$0xff]
        %v907 = vld [vmem:[#allocation9 + $0xc0] sm:$0xff]
        %v908 = vld [vmem:[#allocation9 + $0xc8] sm:$0xff]
        %v909 = vld [vmem:[#allocation9 + $0xd0] sm:$0xff]
        %v910 = vld [vmem:[#allocation9 + $0xd8] sm:$0xff]
        %v911 = vld [vmem:[#allocation9 + $0xe0] sm:$0xff]
        %v912 = vld [vmem:[#allocation9 + $0xe8] sm:$0xff]
        %v913 = vld [vmem:[#allocation9 + $0xf0] sm:$0xff]
        %v914 = vld [vmem:[#allocation9 + $0xf8] sm:$0xff]
        %v915 = vld [vmem:[#allocation9 + $0x100] sm:$0xff]
        %v916 = vld [vmem:[#allocation9 + $0x108] sm:$0xff]
        %v917 = vld [vmem:[#allocation9 + $0x110] sm:$0xff]
        %v918 = vld [vmem:[#allocation9 + $0x118] sm:$0xff]
        %v919 = vld [vmem:[#allocation9 + $0x120] sm:$0xff]
        %v920 = vld [vmem:[#allocation9 + $0x128] sm:$0xff]
        %v921 = vld [vmem:[#allocation9 + $0x130] sm:$0xff]
        %v922 = vld [vmem:[#allocation9 + $0x138] sm:$0xff]
        %v923 = vld [vmem:[#allocation9 + $0x140] sm:$0xff]
        %v924 = vld [vmem:[#allocation9 + $0x148] sm:$0xff]
        %v925 = vld [vmem:[#allocation9 + $0x150] sm:$0xff]
        %v926 = vld [vmem:[#allocation9 + $0x158] sm:$0xff]
        %v927 = vld [vmem:[#allocation9 + $0x160] sm:$0xff]
        %v928 = vld [vmem:[#allocation9 + $0x168] sm:$0xff]
        %v929 = vld [vmem:[#allocation9 + $0x170] sm:$0xff]
        %v930 = vld [vmem:[#allocation9 + $0x178] sm:$0xff]
        %v931 = vld [vmem:[#allocation9 + $0x180] sm:$0xff]
        %v932 = vld [vmem:[#allocation9 + $0x188] sm:$0xff]
        %v933 = vld [vmem:[#allocation9 + $0x190] sm:$0xff]
        %v934 = vld [vmem:[#allocation9 + $0x198] sm:$0xff]
        %v935 = vld [vmem:[#allocation9 + $0x1a0] sm:$0xff]
        %v936 = vld [vmem:[#allocation9 + $0x1a8] sm:$0xff]
        %v937 = vld [vmem:[#allocation9 + $0x1b0] sm:$0xff]
        %v938 = vld [vmem:[#allocation9 + $0x1b8] sm:$0xff]
        %v939 = vld [vmem:[#allocation9 + $0x1c0] sm:$0xff]
        %v940 = vld [vmem:[#allocation9 + $0x1c8] sm:$0xff]
        %v941 = vld [vmem:[#allocation9 + $0x1d0] sm:$0xff]
        %v942 = vld [vmem:[#allocation9 + $0x1d8] sm:$0xff]
        %v943 = vld [vmem:[#allocation9 + $0x1e0] sm:$0xff]
        %v944 = vld [vmem:[#allocation9 + $0x1e8] sm:$0xff]
        %v945 = vld [vmem:[#allocation9 + $0x1f0] sm:$0xff]
        %v946 = vld [vmem:[#allocation9 + $0x1f8] sm:$0xff]
        %v947 = vld [vmem:[#allocation10] sm:$0x3]
        %v949 = vlaneseq
        %v950 = vshrl.u32 %v949, 7
        %v951 = vsub.s32 0, %v950
        %v952 = vrot.slane %v947, %v951
        %v953 = vlaneseq
        %v954 = vshrl.u32 %v953, 7
        %v955 = vsub.s32 1, %v954
        %v956 = vrot.slane %v947, %v955
        %v959 = vadd.f32 %v359, %v952
        %v960 = vadd.f32 %v360, %v956
        %v961 = vadd.f32 %v361, %v952
        %v962 = vadd.f32 %v362, %v956
        %963 = vmatprep.subr.mxu0 0.0
        %964 = vmatpush1.xpose.msra.mxu0 0.0
        %965 = vmatprep.subr.mxu0 0.0
        %966 = vmatpush1.xpose.msra.mxu0 0.0
        %967 = vmatprep.subr.mxu0 0.0
        %968 = vmatpush1.xpose.msra.mxu0 0.0
        %969 = vmatprep.subr.mxu0 0.0
        %970 = vmatpush1.xpose.msra.mxu0 0.0
        %971 = vmatprep.subr.mxu0 0.0
        %972 = vmatpush1.xpose.msra.mxu0 0.0
        %973 = vmatprep.subr.mxu0 0.0
        %974 = vmatpush1.xpose.msra.mxu0 0.0
        %975 = vmatprep.subr.mxu0 0.0
        %976 = vmatpush1.xpose.msra.mxu0 0.0
        %977 = vmatprep.subr.mxu0 0.0
        %978 = vmatpush1.xpose.msra.mxu0 0.0
        %979 = vmatprep.subr.mxu0 0.0
        %980 = vmatpush1.xpose.msra.mxu0 0.0
        %981 = vmatprep.subr.mxu0 0.0
        %982 = vmatpush1.xpose.msra.mxu0 0.0
        %983 = vmatprep.subr.mxu0 0.0
        %984 = vmatpush1.xpose.msra.mxu0 0.0
        %985 = vmatprep.subr.mxu0 0.0
        %986 = vmatpush1.xpose.msra.mxu0 0.0
        %987 = vmatprep.subr.mxu0 0.0
        %988 = vmatpush1.xpose.msra.mxu0 0.0
        %989 = vmatprep.subr.mxu0 0.0
        %990 = vmatpush1.xpose.msra.mxu0 0.0
        %991 = vmatprep.subr.mxu0 0.0
        %992 = vmatpush1.xpose.msra.mxu0 %v802
        %993 = vmatprep.subr.mxu0 0.0
        %994 = vmatpush1.xpose.msra.mxu0 %v796
        %995 = vmatprep.subr.mxu0 0.0
        %996 = vmatpush2.xpose.msra.mxu0 0.0
        %997 = vmatprep.subr.mxu0 0.0
        %998 = vmatpush2.xpose.msra.mxu0 0.0
        %999 = vmatprep.subr.mxu0 0.0
        %1000 = vmatpush2.xpose.msra.mxu0 0.0
        %1001 = vmatprep.subr.mxu0 0.0
        %1002 = vmatpush2.xpose.msra.mxu0 0.0
        %1003 = vmatprep.subr.mxu0 0.0
        %1004 = vmatpush2.xpose.msra.mxu0 0.0
        %1005 = vmatprep.subr.mxu0 0.0
        %1006 = vmatpush2.xpose.msra.mxu0 0.0
        %1007 = vmatprep.subr.mxu0 0.0
        %1008 = vmatpush2.xpose.msra.mxu0 0.0
        %1009 = vmatprep.subr.mxu0 0.0
        %1010 = vmatpush2.xpose.msra.mxu0 0.0
        %1011 = vmatprep.subr.mxu0 0.0
        %1012 = vmatpush2.xpose.msra.mxu0 0.0
        %1013 = vmatprep.subr.mxu0 0.0
        %1014 = vmatpush2.xpose.msra.mxu0 0.0
        %1015 = vmatprep.subr.mxu0 0.0
        %1016 = vmatpush2.xpose.msra.mxu0 0.0
        %1017 = vmatprep.subr.mxu0 0.0
        %1018 = vmatpush2.xpose.msra.mxu0 0.0
        %1019 = vmatprep.subr.mxu0 0.0
        %1020 = vmatpush2.xpose.msra.mxu0 0.0
        %1021 = vmatprep.subr.mxu0 0.0
        %1022 = vmatpush2.xpose.msra.mxu0 0.0
        %1023 = vmatprep.subr.mxu0 0.0
        %1024 = vmatpush2.xpose.msra.mxu0 0.0
        %1025 = vmatprep.subr.mxu0 0.0
        %1026 = vmatpush2.xpose.msra.mxu0 0.0
        %1027 = vmatprep.mubr.f32.mxu0 0.0
        %1028 = vmatmul.mubr.f32.gmra.mxu0 %v719
        %v1029 = vpop.f32.mrf.mxu0
        %v1030 = vadd.f32 0.0, %v1029
        %v1031 = vpop.f32.mrf.mxu0
        %1032 = vmatprep.mubr.f32.mxu0 0.0
        %1033 = vmatmul.mubr.f32.gmra.mxu0 %v725
        %v1034 = vpop.f32.mrf.mxu0
        %v1035 = vadd.f32 0.0, %v1034
        %v1036 = vpop.f32.mrf.mxu0
        %1037 = vdwg.mxu0
        %vm1038 = vcmask 130048
        %v1039 = vsel %vm1038, %v1030, -inf
        %1040 = vmax.xlane.f32.xlu0 %v1039
        %v1041 = vpop.xlane.xlu0 %1040
        %v1042 = vsel %vm1038, %v1035, -inf
        %1043 = vmax.xlane.f32.xlu0 %v1042
        %v1044 = vpop.xlane.xlu0 %1043
        %v1045 = vsub.f32 %v1030, %v1041
        %v1046 = vsub.f32 %v1035, %v1044
        %v1047 = vmul.f32 %v1045, 1.442695
        %v1048 = vpow.pop %v1047
        %v1049 = vmul.f32 %v1046, 1.442695
        %v1050 = vpow.pop %v1049
        %v1051 = vsel %vm1038, %v1048, 0.0
        %1052 = vadd.xlane.f32.xlu0 %v1051
        %v1053 = vpop.xlane.xlu0 %1052
        %v1054 = vsel %vm1038, %v1050, 0.0
        %1055 = vadd.xlane.f32.xlu0 %v1054
        %v1056 = vpop.xlane.xlu0 %1055
        %v1057 = vrcp.pop %v1053
        %v1058 = vrcp.pop %v1056
        %v1059 = vmul.f32 %v1048, %v1057
        %v1060 = vmul.f32 %v1050, %v1058
        %v1062 = vsel %vm1038, %v1059, 0
        %v1065 = vsel %vm1038, %v1060, 0
        %1067 = vmatprep.subr.mxu0 0.0
        %1068 = vmatpush1.msra.mxu0 0.0
        %1069 = vmatprep.subr.mxu0 0.0
        %1070 = vmatpush1.msra.mxu0 0.0
        %1071 = vmatprep.subr.mxu0 0.0
        %1072 = vmatpush1.msra.mxu0 0.0
        %1073 = vmatprep.subr.mxu0 0.0
        %1074 = vmatpush1.msra.mxu0 0.0
        %1075 = vmatprep.subr.mxu0 0.0
        %1076 = vmatpush1.msra.mxu0 0.0
        %1077 = vmatprep.subr.mxu0 0.0
        %1078 = vmatpush1.msra.mxu0 0.0
        %1079 = vmatprep.subr.mxu0 0.0
        %1080 = vmatpush1.msra.mxu0 0.0
        %1081 = vmatprep.subr.mxu0 0.0
        %1082 = vmatpush1.msra.mxu0 0.0
        %1083 = vmatprep.subr.mxu0 0.0
        %1084 = vmatpush1.msra.mxu0 0.0
        %1085 = vmatprep.subr.mxu0 0.0
        %1086 = vmatpush1.msra.mxu0 0.0
        %1087 = vmatprep.subr.mxu0 0.0
        %1088 = vmatpush1.msra.mxu0 0.0
        %1089 = vmatprep.subr.mxu0 0.0
        %1090 = vmatpush1.msra.mxu0 0.0
        %1091 = vmatprep.subr.mxu0 0.0
        %1092 = vmatpush1.msra.mxu0 0.0
        %1093 = vmatprep.subr.mxu0 0.0
        %1094 = vmatpush1.msra.mxu0 0.0
        %1095 = vmatprep.subr.mxu0 0.0
        %1096 = vmatpush1.msra.mxu0 %v879
        %1097 = vmatprep.subr.mxu0 0.0
        %1098 = vmatpush1.msra.mxu0 %v873
        %1099 = vmatprep.subr.mxu0 0.0
        %1100 = vmatpush2.msra.mxu0 0.0
        %1101 = vmatprep.subr.mxu0 0.0
        %1102 = vmatpush2.msra.mxu0 0.0
        %1103 = vmatprep.subr.mxu0 0.0
        %1104 = vmatpush2.msra.mxu0 0.0
        %1105 = vmatprep.subr.mxu0 0.0
        %1106 = vmatpush2.msra.mxu0 0.0
        %1107 = vmatprep.subr.mxu0 0.0
        %1108 = vmatpush2.msra.mxu0 0.0
        %1109 = vmatprep.subr.mxu0 0.0
        %1110 = vmatpush2.msra.mxu0 0.0
        %1111 = vmatprep.subr.mxu0 0.0
        %1112 = vmatpush2.msra.mxu0 0.0
        %1113 = vmatprep.subr.mxu0 0.0
        %1114 = vmatpush2.msra.mxu0 0.0
        %1115 = vmatprep.subr.mxu0 0.0
        %1116 = vmatpush2.msra.mxu0 0.0
        %1117 = vmatprep.subr.mxu0 0.0
        %1118 = vmatpush2.msra.mxu0 0.0
        %1119 = vmatprep.subr.mxu0 0.0
        %1120 = vmatpush2.msra.mxu0 0.0
        %1121 = vmatprep.subr.mxu0 0.0
        %1122 = vmatpush2.msra.mxu0 0.0
        %1123 = vmatprep.subr.mxu0 0.0
        %1124 = vmatpush2.msra.mxu0 0.0
        %1125 = vmatprep.subr.mxu0 0.0
        %1126 = vmatpush2.msra.mxu0 0.0
        %1127 = vmatprep.subr.mxu0 0.0
        %1128 = vmatpush2.msra.mxu0 0.0
        %1129 = vmatprep.subr.mxu0 0.0
        %1130 = vmatpush2.msra.mxu0 0.0
        %1131 = vmatprep.mubr.f32.mxu0 0.0
        %1132 = vmatmul.mubr.f32.gmra.mxu0 %v1062
        %v1133 = vpop.f32.mrf.mxu0
        %v1134 = vadd.f32 0.0, %v1133
        %v1135 = vpop.f32.mrf.mxu0
        %1136 = vmatprep.mubr.f32.mxu0 0.0
        %1137 = vmatmul.mubr.f32.gmra.mxu0 %v1065
        %v1138 = vpop.f32.mrf.mxu0
        %v1139 = vadd.f32 0.0, %v1138
        %v1140 = vpop.f32.mrf.mxu0
        %1141 = vdwg.mxu0
        %1142 = vmatprep.subr.mxu0 %v914
        %1143 = vmatpush1.msra.mxu0 %v913
        %1144 = vmatprep.subr.mxu0 %v912
        %1145 = vmatpush1.msra.mxu0 %v911
        %1146 = vmatprep.subr.mxu0 %v910
        %1147 = vmatpush1.msra.mxu0 %v909
        %1148 = vmatprep.subr.mxu0 %v908
        %1149 = vmatpush1.msra.mxu0 %v907
        %1150 = vmatprep.subr.mxu0 %v906
        %1151 = vmatpush1.msra.mxu0 %v905
        %1152 = vmatprep.subr.mxu0 %v904
        %1153 = vmatpush1.msra.mxu0 %v903
        %1154 = vmatprep.subr.mxu0 %v902
        %1155 = vmatpush1.msra.mxu0 %v901
        %1156 = vmatprep.subr.mxu0 %v900
        %1157 = vmatpush1.msra.mxu0 %v899
        %1158 = vmatprep.subr.mxu0 %v898
        %1159 = vmatpush1.msra.mxu0 %v897
        %1160 = vmatprep.subr.mxu0 %v896
        %1161 = vmatpush1.msra.mxu0 %v895
        %1162 = vmatprep.subr.mxu0 %v894
        %1163 = vmatpush1.msra.mxu0 %v893
        %1164 = vmatprep.subr.mxu0 %v892
        %1165 = vmatpush1.msra.mxu0 %v891
        %1166 = vmatprep.subr.mxu0 %v890
        %1167 = vmatpush1.msra.mxu0 %v889
        %1168 = vmatprep.subr.mxu0 %v888
        %1169 = vmatpush1.msra.mxu0 %v887
        %1170 = vmatprep.subr.mxu0 %v886
        %1171 = vmatpush1.msra.mxu0 %v885
        %1172 = vmatprep.subr.mxu0 %v884
        %1173 = vmatpush1.msra.mxu0 %v883
        %1174 = vmatprep.subr.mxu0 0.0
        %1175 = vmatpush2.msra.mxu0 0.0
        %1176 = vmatprep.subr.mxu0 0.0
        %1177 = vmatpush2.msra.mxu0 0.0
        %1178 = vmatprep.subr.mxu0 0.0
        %1179 = vmatpush2.msra.mxu0 0.0
        %1180 = vmatprep.subr.mxu0 0.0
        %1181 = vmatpush2.msra.mxu0 0.0
        %1182 = vmatprep.subr.mxu0 0.0
        %1183 = vmatpush2.msra.mxu0 0.0
        %1184 = vmatprep.subr.mxu0 0.0
        %1185 = vmatpush2.msra.mxu0 0.0
        %1186 = vmatprep.subr.mxu0 0.0
        %1187 = vmatpush2.msra.mxu0 0.0
        %1188 = vmatprep.subr.mxu0 0.0
        %1189 = vmatpush2.msra.mxu0 0.0
        %1190 = vmatprep.subr.mxu0 0.0
        %1191 = vmatpush2.msra.mxu0 0.0
        %1192 = vmatprep.subr.mxu0 0.0
        %1193 = vmatpush2.msra.mxu0 0.0
        %1194 = vmatprep.subr.mxu0 0.0
        %1195 = vmatpush2.msra.mxu0 0.0
        %1196 = vmatprep.subr.mxu0 0.0
        %1197 = vmatpush2.msra.mxu0 0.0
        %1198 = vmatprep.subr.mxu0 0.0
        %1199 = vmatpush2.msra.mxu0 0.0
        %1200 = vmatprep.subr.mxu0 0.0
        %1201 = vmatpush2.msra.mxu0 0.0
        %1202 = vmatprep.subr.mxu0 0.0
        %1203 = vmatpush2.msra.mxu0 0.0
        %1204 = vmatprep.subr.mxu0 0.0
        %1205 = vmatpush2.msra.mxu0 0.0
        %1206 = vmatprep.mubr.f32.mxu0 0.0
        %1207 = vmatmul.mubr.f32.gmra.mxu0 %v1134
        %v1208 = vpop.f32.mrf.mxu0
        %v1209 = vadd.f32 0.0, %v1208
        %v1210 = vpop.f32.mrf.mxu0
        %v1211 = vadd.f32 0.0, %v1210
        %1212 = vmatprep.mubr.f32.mxu0 0.0
        %1213 = vmatmul.mubr.f32.gmra.mxu0 %v1139
        %v1214 = vpop.f32.mrf.mxu0
        %v1215 = vadd.f32 0.0, %v1214
        %v1216 = vpop.f32.mrf.mxu0
        %v1217 = vadd.f32 0.0, %v1216
        %1218 = vdwg.mxu0
        %v1219 = vadd.f32 %v959, %v1209
        %v1220 = vadd.f32 %v960, %v1211
        %v1221 = vadd.f32 %v961, %v1215
        %v1222 = vadd.f32 %v962, %v1217
        %1223 = vmatprep.subr.mxu0 0.0
        %1224 = vmatpush1.xpose.msra.mxu0 0.0
        %1225 = vmatprep.subr.mxu0 0.0
        %1226 = vmatpush1.xpose.msra.mxu0 0.0
        %1227 = vmatprep.subr.mxu0 0.0
        %1228 = vmatpush1.xpose.msra.mxu0 0.0
        %1229 = vmatprep.subr.mxu0 0.0
        %1230 = vmatpush1.xpose.msra.mxu0 0.0
        %1231 = vmatprep.subr.mxu0 0.0
        %1232 = vmatpush1.xpose.msra.mxu0 0.0
        %1233 = vmatprep.subr.mxu0 0.0
        %1234 = vmatpush1.xpose.msra.mxu0 0.0
        %1235 = vmatprep.subr.mxu0 0.0
        %1236 = vmatpush1.xpose.msra.mxu0 0.0
        %1237 = vmatprep.subr.mxu0 0.0
        %1238 = vmatpush1.xpose.msra.mxu0 0.0
        %1239 = vmatprep.subr.mxu0 0.0
        %1240 = vmatpush1.xpose.msra.mxu0 0.0
        %1241 = vmatprep.subr.mxu0 0.0
        %1242 = vmatpush1.xpose.msra.mxu0 0.0
        %1243 = vmatprep.subr.mxu0 0.0
        %1244 = vmatpush1.xpose.msra.mxu0 0.0
        %1245 = vmatprep.subr.mxu0 0.0
        %1246 = vmatpush1.xpose.msra.mxu0 0.0
        %1247 = vmatprep.subr.mxu0 0.0
        %1248 = vmatpush1.xpose.msra.mxu0 0.0
        %1249 = vmatprep.subr.mxu0 0.0
        %1250 = vmatpush1.xpose.msra.mxu0 0.0
        %1251 = vmatprep.subr.mxu0 0.0
        %1252 = vmatpush1.xpose.msra.mxu0 %v804
        %1253 = vmatprep.subr.mxu0 0.0
        %1254 = vmatpush1.xpose.msra.mxu0 %v798
        %1255 = vmatprep.subr.mxu0 0.0
        %1256 = vmatpush2.xpose.msra.mxu0 0.0
        %1257 = vmatprep.subr.mxu0 0.0
        %1258 = vmatpush2.xpose.msra.mxu0 0.0
        %1259 = vmatprep.subr.mxu0 0.0
        %1260 = vmatpush2.xpose.msra.mxu0 0.0
        %1261 = vmatprep.subr.mxu0 0.0
        %1262 = vmatpush2.xpose.msra.mxu0 0.0
        %1263 = vmatprep.subr.mxu0 0.0
        %1264 = vmatpush2.xpose.msra.mxu0 0.0
        %1265 = vmatprep.subr.mxu0 0.0
        %1266 = vmatpush2.xpose.msra.mxu0 0.0
        %1267 = vmatprep.subr.mxu0 0.0
        %1268 = vmatpush2.xpose.msra.mxu0 0.0
        %1269 = vmatprep.subr.mxu0 0.0
        %1270 = vmatpush2.xpose.msra.mxu0 0.0
        %1271 = vmatprep.subr.mxu0 0.0
        %1272 = vmatpush2.xpose.msra.mxu0 0.0
        %1273 = vmatprep.subr.mxu0 0.0
        %1274 = vmatpush2.xpose.msra.mxu0 0.0
        %1275 = vmatprep.subr.mxu0 0.0
        %1276 = vmatpush2.xpose.msra.mxu0 0.0
        %1277 = vmatprep.subr.mxu0 0.0
        %1278 = vmatpush2.xpose.msra.mxu0 0.0
        %1279 = vmatprep.subr.mxu0 0.0
        %1280 = vmatpush2.xpose.msra.mxu0 0.0
        %1281 = vmatprep.subr.mxu0 0.0
        %1282 = vmatpush2.xpose.msra.mxu0 0.0
        %1283 = vmatprep.subr.mxu0 0.0
        %1284 = vmatpush2.xpose.msra.mxu0 0.0
        %1285 = vmatprep.subr.mxu0 0.0
        %1286 = vmatpush2.xpose.msra.mxu0 0.0
        %1287 = vmatprep.mubr.f32.mxu0 0.0
        %1288 = vmatmul.mubr.f32.gmra.mxu0 %v721
        %v1289 = vpop.f32.mrf.mxu0
        %v1290 = vadd.f32 0.0, %v1289
        %v1291 = vpop.f32.mrf.mxu0
        %1292 = vmatprep.mubr.f32.mxu0 0.0
        %1293 = vmatmul.mubr.f32.gmra.mxu0 %v727
        %v1294 = vpop.f32.mrf.mxu0
        %v1295 = vadd.f32 0.0, %v1294
        %v1296 = vpop.f32.mrf.mxu0
        %1297 = vdwg.mxu0
        %v1298 = vsel %vm1038, %v1290, -inf
        %1299 = vmax.xlane.f32.xlu0 %v1298
        %v1300 = vpop.xlane.xlu0 %1299
        %v1301 = vsel %vm1038, %v1295, -inf
        %1302 = vmax.xlane.f32.xlu0 %v1301
        %v1303 = vpop.xlane.xlu0 %1302
        %v1304 = vsub.f32 %v1290, %v1300
        %v1305 = vsub.f32 %v1295, %v1303
        %v1306 = vmul.f32 %v1304, 1.442695
        %v1307 = vpow.pop %v1306
        %v1308 = vmul.f32 %v1305, 1.442695
        %v1309 = vpow.pop %v1308
        %v1310 = vsel %vm1038, %v1307, 0.0
        %1311 = vadd.xlane.f32.xlu0 %v1310
        %v1312 = vpop.xlane.xlu0 %1311
        %v1313 = vsel %vm1038, %v1309, 0.0
        %1314 = vadd.xlane.f32.xlu0 %v1313
        %v1315 = vpop.xlane.xlu0 %1314
        %v1316 = vrcp.pop %v1312
        %v1317 = vrcp.pop %v1315
        %v1318 = vmul.f32 %v1307, %v1316
        %v1319 = vmul.f32 %v1309, %v1317
        %v1321 = vsel %vm1038, %v1318, 0
        %v1324 = vsel %vm1038, %v1319, 0
        %1326 = vmatprep.subr.mxu0 0.0
        %1327 = vmatpush1.msra.mxu0 0.0
        %1328 = vmatprep.subr.mxu0 0.0
        %1329 = vmatpush1.msra.mxu0 0.0
        %1330 = vmatprep.subr.mxu0 0.0
        %1331 = vmatpush1.msra.mxu0 0.0
        %1332 = vmatprep.subr.mxu0 0.0
        %1333 = vmatpush1.msra.mxu0 0.0
        %1334 = vmatprep.subr.mxu0 0.0
        %1335 = vmatpush1.msra.mxu0 0.0
        %1336 = vmatprep.subr.mxu0 0.0
        %1337 = vmatpush1.msra.mxu0 0.0
        %1338 = vmatprep.subr.mxu0 0.0
        %1339 = vmatpush1.msra.mxu0 0.0
        %1340 = vmatprep.subr.mxu0 0.0
        %1341 = vmatpush1.msra.mxu0 0.0
        %1342 = vmatprep.subr.mxu0 0.0
        %1343 = vmatpush1.msra.mxu0 0.0
        %1344 = vmatprep.subr.mxu0 0.0
        %1345 = vmatpush1.msra.mxu0 0.0
        %1346 = vmatprep.subr.mxu0 0.0
        %1347 = vmatpush1.msra.mxu0 0.0
        %1348 = vmatprep.subr.mxu0 0.0
        %1349 = vmatpush1.msra.mxu0 0.0
        %1350 = vmatprep.subr.mxu0 0.0
        %1351 = vmatpush1.msra.mxu0 0.0
        %1352 = vmatprep.subr.mxu0 0.0
        %1353 = vmatpush1.msra.mxu0 0.0
        %1354 = vmatprep.subr.mxu0 0.0
        %1355 = vmatpush1.msra.mxu0 %v881
        %1356 = vmatprep.subr.mxu0 0.0
        %1357 = vmatpush1.msra.mxu0 %v875
        %1358 = vmatprep.subr.mxu0 0.0
        %1359 = vmatpush2.msra.mxu0 0.0
        %1360 = vmatprep.subr.mxu0 0.0
        %1361 = vmatpush2.msra.mxu0 0.0
        %1362 = vmatprep.subr.mxu0 0.0
        %1363 = vmatpush2.msra.mxu0 0.0
        %1364 = vmatprep.subr.mxu0 0.0
        %1365 = vmatpush2.msra.mxu0 0.0
        %1366 = vmatprep.subr.mxu0 0.0
        %1367 = vmatpush2.msra.mxu0 0.0
        %1368 = vmatprep.subr.mxu0 0.0
        %1369 = vmatpush2.msra.mxu0 0.0
        %1370 = vmatprep.subr.mxu0 0.0
        %1371 = vmatpush2.msra.mxu0 0.0
        %1372 = vmatprep.subr.mxu0 0.0
        %1373 = vmatpush2.msra.mxu0 0.0
        %1374 = vmatprep.subr.mxu0 0.0
        %1375 = vmatpush2.msra.mxu0 0.0
        %1376 = vmatprep.subr.mxu0 0.0
        %1377 = vmatpush2.msra.mxu0 0.0
        %1378 = vmatprep.subr.mxu0 0.0
        %1379 = vmatpush2.msra.mxu0 0.0
        %1380 = vmatprep.subr.mxu0 0.0
        %1381 = vmatpush2.msra.mxu0 0.0
        %1382 = vmatprep.subr.mxu0 0.0
        %1383 = vmatpush2.msra.mxu0 0.0
        %1384 = vmatprep.subr.mxu0 0.0
        %1385 = vmatpush2.msra.mxu0 0.0
        %1386 = vmatprep.subr.mxu0 0.0
        %1387 = vmatpush2.msra.mxu0 0.0
        %1388 = vmatprep.subr.mxu0 0.0
        %1389 = vmatpush2.msra.mxu0 0.0
        %1390 = vmatprep.mubr.f32.mxu0 0.0
        %1391 = vmatmul.mubr.f32.gmra.mxu0 %v1321
        %v1392 = vpop.f32.mrf.mxu0
        %v1393 = vadd.f32 0.0, %v1392
        %v1394 = vpop.f32.mrf.mxu0
        %1395 = vmatprep.mubr.f32.mxu0 0.0
        %1396 = vmatmul.mubr.f32.gmra.mxu0 %v1324
        %v1397 = vpop.f32.mrf.mxu0
        %v1398 = vadd.f32 0.0, %v1397
        %v1399 = vpop.f32.mrf.mxu0
        %1400 = vdwg.mxu0
        %1401 = vmatprep.subr.mxu0 %v946
        %1402 = vmatpush1.msra.mxu0 %v945
        %1403 = vmatprep.subr.mxu0 %v944
        %1404 = vmatpush1.msra.mxu0 %v943
        %1405 = vmatprep.subr.mxu0 %v942
        %1406 = vmatpush1.msra.mxu0 %v941
        %1407 = vmatprep.subr.mxu0 %v940
        %1408 = vmatpush1.msra.mxu0 %v939
        %1409 = vmatprep.subr.mxu0 %v938
        %1410 = vmatpush1.msra.mxu0 %v937
        %1411 = vmatprep.subr.mxu0 %v936
        %1412 = vmatpush1.msra.mxu0 %v935
        %1413 = vmatprep.subr.mxu0 %v934
        %1414 = vmatpush1.msra.mxu0 %v933
        %1415 = vmatprep.subr.mxu0 %v932
        %1416 = vmatpush1.msra.mxu0 %v931
        %1417 = vmatprep.subr.mxu0 %v930
        %1418 = vmatpush1.msra.mxu0 %v929
        %1419 = vmatprep.subr.mxu0 %v928
        %1420 = vmatpush1.msra.mxu0 %v927
        %1421 = vmatprep.subr.mxu0 %v926
        %1422 = vmatpush1.msra.mxu0 %v925
        %1423 = vmatprep.subr.mxu0 %v924
        %1424 = vmatpush1.msra.mxu0 %v923
        %1425 = vmatprep.subr.mxu0 %v922
        %1426 = vmatpush1.msra.mxu0 %v921
        %1427 = vmatprep.subr.mxu0 %v920
        %1428 = vmatpush1.msra.mxu0 %v919
        %1429 = vmatprep.subr.mxu0 %v918
        %1430 = vmatpush1.msra.mxu0 %v917
        %1431 = vmatprep.subr.mxu0 %v916
        %1432 = vmatpush1.msra.mxu0 %v915
        %1433 = vmatprep.subr.mxu0 0.0
        %1434 = vmatpush2.msra.mxu0 0.0
        %1435 = vmatprep.subr.mxu0 0.0
        %1436 = vmatpush2.msra.mxu0 0.0
        %1437 = vmatprep.subr.mxu0 0.0
        %1438 = vmatpush2.msra.mxu0 0.0
        %1439 = vmatprep.subr.mxu0 0.0
        %1440 = vmatpush2.msra.mxu0 0.0
        %1441 = vmatprep.subr.mxu0 0.0
        %1442 = vmatpush2.msra.mxu0 0.0
        %1443 = vmatprep.subr.mxu0 0.0
        %1444 = vmatpush2.msra.mxu0 0.0
        %1445 = vmatprep.subr.mxu0 0.0
        %1446 = vmatpush2.msra.mxu0 0.0
        %1447 = vmatprep.subr.mxu0 0.0
        %1448 = vmatpush2.msra.mxu0 0.0
        %1449 = vmatprep.subr.mxu0 0.0
        %1450 = vmatpush2.msra.mxu0 0.0
        %1451 = vmatprep.subr.mxu0 0.0
        %1452 = vmatpush2.msra.mxu0 0.0
        %1453 = vmatprep.subr.mxu0 0.0
        %1454 = vmatpush2.msra.mxu0 0.0
        %1455 = vmatprep.subr.mxu0 0.0
        %1456 = vmatpush2.msra.mxu0 0.0
        %1457 = vmatprep.subr.mxu0 0.0
        %1458 = vmatpush2.msra.mxu0 0.0
        %1459 = vmatprep.subr.mxu0 0.0
        %1460 = vmatpush2.msra.mxu0 0.0
        %1461 = vmatprep.subr.mxu0 0.0
        %1462 = vmatpush2.msra.mxu0 0.0
        %1463 = vmatprep.subr.mxu0 0.0
        %1464 = vmatpush2.msra.mxu0 0.0
        %1465 = vmatprep.mubr.f32.mxu0 0.0
        %1466 = vmatmul.mubr.f32.gmra.mxu0 %v1393
        %v1467 = vpop.f32.mrf.mxu0
        %v1468 = vadd.f32 0.0, %v1467
        %v1469 = vpop.f32.mrf.mxu0
        %v1470 = vadd.f32 0.0, %v1469
        %1471 = vmatprep.mubr.f32.mxu0 0.0
        %1472 = vmatmul.mubr.f32.gmra.mxu0 %v1398
        %v1473 = vpop.f32.mrf.mxu0
        %v1474 = vadd.f32 0.0, %v1473
        %v1475 = vpop.f32.mrf.mxu0
        %v1476 = vadd.f32 0.0, %v1475
        %1477 = vdwg.mxu0
        %v1478 = vadd.f32 %v1219, %v1468
        %v1479 = vadd.f32 %v1220, %v1470
        %v1480 = vadd.f32 %v1221, %v1474
        %v1481 = vadd.f32 %v1222, %v1476
        %1482 = vst [vmem:[%s358] sm:$0xff] %v1478
        %1483 = vst [vmem:[%s358 + $0x8] sm:$0xff] %v1479
        %1484 = vst [vmem:[%s358 + $0x10] sm:$0xff] %v1480
        %1485 = vst [vmem:[%s358 + $0x18] sm:$0xff] %v1481
        %p1486 = scmp.lt.s32.totalorder %s22, 1
        %s1487 = scalar_select %p1486, %s22, 1
        %s1488 = smul.addr %s1487, 4
        %s1489 = smul.addr %s1488, 8
        %s1490 = scalar_lea.vmem %s7, %s1489
        // Predicated region
        $region73: #{_lambda_.4} parent=47 // pred_check
          %p1491 = pneg %p192
        $region74: #{_lambda_.4} parent=47 // pred_check_branch
          %1493 = sbr.rel (%p1491) target = $region76
        $region75: #{_lambda_.4} parent=47 // pred_region
          _
        $region76: #{_lambda_.4} parent=47 // pred_fallthru
          _
      $region48: #{_lambda_.4} parent=5 // pred_fallthru
        _
      %p1494 = scmp.le.s32.totalorder 2, %s17
      // Predicated region
      $region77: #{_lambda_.4} parent=5 // pred_check
        %p1495 = pneg %p1494
      $region78: #{_lambda_.4} parent=5 // pred_check_branch
        %1497 = sbr.rel (%p1495) target = $region80
      $region79: #{_lambda_.4} parent=5 // pred_region
        %s1498 = ssub.s32 %s17, 2
        // Predicated region
        $region81: #{_lambda_.4} parent=79 // pred_check
          %p1499 = pneg %p198
        $region82: #{_lambda_.4} parent=79 // pred_check_branch
          %1501 = sbr.rel (%p1499) target = $region84
        $region83: #{_lambda_.4} parent=79 // pred_region
          %p1502 = scmp.lt.s32.totalorder %s23, 1
          %s1503 = scalar_select %p1502, %s23, 1
          %s1504 = smul.addr %s1503, 4
          %s1505 = smul.addr %s1504, 8
          %s1506 = scalar_lea.vmem %s7, %s1505
        $region84: #{_lambda_.4} parent=79 // pred_fallthru
          _
      $region80: #{_lambda_.4} parent=5 // pred_fallthru
        _
    $region6: #{_lambda_.4} parent=1 // loop_footer
      %s21 = sadd.s32 1, %s17
    $region7: #{_lambda_.4} parent=1 // loop_footer_branch
      %16 = sbr.rel target = $region3
    $region8: #{_lambda_.4} parent=1 // loop_exit
      _
    %1507 = vsyncpa [#allocation3], 1
    %s1508 = scalar_lea.sflag [#allocation3], 1
    %1509 = vsyncpa %s1508, 1
    %1510 = vsyncpa [#allocation5], 1
    %1511 = vsyncpa [#allocation8], 1
    %1512 = vsyncpa [#allocation11], 1

// kernel: _lambda_.5
$region0: #{_lambda_.5}
  #allocation0 [shape = 'u32[]', space=smem, size = 0x4, offset = 0x4, fixed_abs, tag = 'smem constant byte address 0x4 - core index']
  #allocation1 [shape = 'u32[144,128]{1,0:T(1,128)}', space=vmem, size = 0x12000, scoped, tag = 'internal scratch']
  %s0 = inlined_call_operand.vmem [shape: f32[32,256], index: 0, kind: input, shape index: {}]
  %s1 = inlined_call_operand.vmem [shape: f32[1,256], index: 1, kind: input, shape index: {}]
  %s2 = inlined_call_operand.vmem [shape: f32[1,256], index: 2, kind: input, shape index: {}]
  %s3 = inlined_call_operand.vmem [shape: f32[256,1024], index: 3, kind: input, shape index: {}]
  %s4 = inlined_call_operand.vmem [shape: f32[1,1024], index: 4, kind: input, shape index: {}]
  %s5 = inlined_call_operand.hbm [shape: f32[1024,256], index: 5, kind: input, shape index: {}]
  %s6 = inlined_call_operand.vmem [shape: f32[1,256], index: 6, kind: input, shape index: {}]
  %s7 = inlined_call_operand.vmem [shape: f32[32,256], index: 7, kind: output, shape index: {}]
  %s8 = sld [smem:[#allocation0]]
  $region42: #{_lambda_.5} parent=0
    _
  %s10 = ssub.s32 1, %s8
  %s11 = scalar_select 0, %s10, %s8
  $region1: #{_lambda_.5} parent=0
    #allocation2 [shape = 'u8[1048576]{0}', space=vmem, size = 0x100000, scoped, tag = 'input window, operand 5, single buffered']
    #allocation3 [shape = 's32[1]{0}', space=sflag, size = 0x4, scoped, tag = 'scoped memory for _lambda_.5']
    %12 = vsyncpa [#allocation3], 0
    // Predicated region
    $region2: #{_lambda_.5} parent=1 // pred_check
      _
    $region3: #{_lambda_.5} parent=1 // pred_check_branch
      %14 = sbr.rel (0) target = $region5
    $region4: #{_lambda_.5} parent=1 // pred_region
      _
    $region5: #{_lambda_.5} parent=1 // pred_fallthru
      _
    // Predicated region
    $region6: #{_lambda_.5} parent=1 // pred_check
      _
    $region7: #{_lambda_.5} parent=1 // pred_check_branch
      %16 = sbr.rel (0) target = $region9
    $region8: #{_lambda_.5} parent=1 // pred_region
      _
    $region9: #{_lambda_.5} parent=1 // pred_fallthru
      _
    // Predicated region
    $region10: #{_lambda_.5} parent=1 // pred_check
      _
    $region11: #{_lambda_.5} parent=1 // pred_check_branch
      %18 = sbr.rel (0) target = $region13
    $region12: #{_lambda_.5} parent=1 // pred_region
      _
    $region13: #{_lambda_.5} parent=1 // pred_fallthru
      _
    // Predicated region
    $region14: #{_lambda_.5} parent=1 // pred_check
      _
    $region15: #{_lambda_.5} parent=1 // pred_check_branch
      %20 = sbr.rel (0) target = $region17
    $region16: #{_lambda_.5} parent=1 // pred_region
      _
    $region17: #{_lambda_.5} parent=1 // pred_fallthru
      _
    // Predicated region
    $region18: #{_lambda_.5} parent=1 // pred_check
      _
    $region19: #{_lambda_.5} parent=1 // pred_check_branch
      %22 = sbr.rel (0) target = $region21
    $region20: #{_lambda_.5} parent=1 // pred_region
      _
    $region21: #{_lambda_.5} parent=1 // pred_fallthru
      _
    // Predicated region
    $region22: #{_lambda_.5} parent=1 // pred_check
      _
    $region23: #{_lambda_.5} parent=1 // pred_check_branch
      %24 = sbr.rel (0) target = $region25
    $region24: #{_lambda_.5} parent=1 // pred_region
      %s26 = ssub.s32 32768, 32768
      %27 = vsyncadd [#allocation3], %s26
      %s28 = sshll.u32 [#allocation2], 4
      %s29 = int_to_ptr.vmem [resolvable:$true] %s28
      %34 = dma.hbm_to_vmem [thread:$0]  %s5, 32768, %s29, [#allocation3], 256, 256, 16
    $region25: #{_lambda_.5} parent=1 // pred_fallthru
      _
    // Predicated region
    $region26: #{_lambda_.5} parent=1 // pred_check
      _
    $region27: #{_lambda_.5} parent=1 // pred_check_branch
      %36 = sbr.rel (0) target = $region29
    $region28: #{_lambda_.5} parent=1 // pred_region
      _
    $region29: #{_lambda_.5} parent=1 // pred_fallthru
      _
    // Predicated region
    $region30: #{_lambda_.5} parent=1 // pred_check
      _
    $region31: #{_lambda_.5} parent=1 // pred_check_branch
      %38 = sbr.rel (0) target = $region33
    $region32: #{_lambda_.5} parent=1 // pred_region
      %39 = dma.done [#allocation3], 32768
    $region33: #{_lambda_.5} parent=1 // pred_fallthru
      _
    %v40 = vld [vmem:[%s0] sm:$0xff]
    %v41 = vld [vmem:[%s0 + $0x8] sm:$0xff]
    %v42 = vld [vmem:[%s0 + $0x10] sm:$0xff]
    %v43 = vld [vmem:[%s0 + $0x18] sm:$0xff]
    %v44 = vld [vmem:[%s0 + $0x20] sm:$0xff]
    %v45 = vld [vmem:[%s0 + $0x28] sm:$0xff]
    %v46 = vld [vmem:[%s0 + $0x30] sm:$0xff]
    %v47 = vld [vmem:[%s0 + $0x38] sm:$0xff]
    %v48 = vld [vmem:[%s1] sm:$0x3]
    %v49 = vld [vmem:[%s2] sm:$0x3]
    %v50 = vadd.f32 %v40, %v41
    %51 = vadd.xlane.f32.xlu0 %v50
    %v52 = vpop.xlane.xlu0 %51
    %v53 = vadd.f32 %v42, %v43
    %54 = vadd.xlane.f32.xlu0 %v53
    %v55 = vpop.xlane.xlu0 %54
    %v56 = vadd.f32 %v44, %v45
    %57 = vadd.xlane.f32.xlu0 %v56
    %v58 = vpop.xlane.xlu0 %57
    %v59 = vadd.f32 %v46, %v47
    %60 = vadd.xlane.f32.xlu0 %v59
    %v61 = vpop.xlane.xlu0 %60
    %v62 = vrcp.pop 256.0
    %v63 = vmul.f32 %v52, %v62
    %v64 = vmul.f32 %v55, %v62
    %v65 = vmul.f32 %v58, %v62
    %v66 = vmul.f32 %v61, %v62
    %v67 = vsub.f32 %v40, %v63
    %v68 = vsub.f32 %v41, %v63
    %v69 = vsub.f32 %v42, %v64
    %v70 = vsub.f32 %v43, %v64
    %v71 = vsub.f32 %v44, %v65
    %v72 = vsub.f32 %v45, %v65
    %v73 = vsub.f32 %v46, %v66
    %v74 = vsub.f32 %v47, %v66
    %v75 = vmul.f32 %v67, %v67
    %v76 = vmul.f32 %v68, %v68
    %v77 = vmul.f32 %v69, %v69
    %v78 = vmul.f32 %v70, %v70
    %v79 = vmul.f32 %v71, %v71
    %v80 = vmul.f32 %v72, %v72
    %v81 = vmul.f32 %v73, %v73
    %v82 = vmul.f32 %v74, %v74
    %v83 = vadd.f32 %v75, %v76
    %84 = vadd.xlane.f32.xlu0 %v83
    %v85 = vpop.xlane.xlu0 %84
    %v86 = vadd.f32 %v77, %v78
    %87 = vadd.xlane.f32.xlu0 %v86
    %v88 = vpop.xlane.xlu0 %87
    %v89 = vadd.f32 %v79, %v80
    %90 = vadd.xlane.f32.xlu0 %v89
    %v91 = vpop.xlane.xlu0 %90
    %v92 = vadd.f32 %v81, %v82
    %93 = vadd.xlane.f32.xlu0 %v92
    %v94 = vpop.xlane.xlu0 %93
    %v95 = vmul.f32 %v85, %v62
    %v96 = vmul.f32 %v88, %v62
    %v97 = vmul.f32 %v91, %v62
    %v98 = vmul.f32 %v94, %v62
    %v99 = vadd.f32 %v95, 1e-05
    %v100 = vadd.f32 %v96, 1e-05
    %v101 = vadd.f32 %v97, 1e-05
    %v102 = vadd.f32 %v98, 1e-05
    %v103 = vrsqrt.pop %v99
    %v104 = vrsqrt.pop %v100
    %v105 = vrsqrt.pop %v101
    %v106 = vrsqrt.pop %v102
    %v107 = vmul.f32 %v67, %v103
    %v108 = vmul.f32 %v68, %v103
    %v109 = vmul.f32 %v69, %v104
    %v110 = vmul.f32 %v70, %v104
    %v111 = vmul.f32 %v71, %v105
    %v112 = vmul.f32 %v72, %v105
    %v113 = vmul.f32 %v73, %v106
    %v114 = vmul.f32 %v74, %v106
    %v116 = vlaneseq
    %v117 = vshrl.u32 %v116, 7
    %v118 = vsub.s32 0, %v117
    %v119 = vrot.slane %v48, %v118
    %v120 = vlaneseq
    %v121 = vshrl.u32 %v120, 7
    %v122 = vsub.s32 1, %v121
    %v123 = vrot.slane %v48, %v122
    %v126 = vmul.f32 %v107, %v119
    %v127 = vmul.f32 %v108, %v123
    %v128 = vmul.f32 %v109, %v119
    %v129 = vmul.f32 %v110, %v123
    %v130 = vmul.f32 %v111, %v119
    %v131 = vmul.f32 %v112, %v123
    %v132 = vmul.f32 %v113, %v119
    %v133 = vmul.f32 %v114, %v123
    %v135 = vlaneseq
    %v136 = vshrl.u32 %v135, 7
    %v137 = vsub.s32 0, %v136
    %v138 = vrot.slane %v49, %v137
    %v139 = vlaneseq
    %v140 = vshrl.u32 %v139, 7
    %v141 = vsub.s32 1, %v140
    %v142 = vrot.slane %v49, %v141
    %v145 = vadd.f32 %v126, %v138
    %v146 = vadd.f32 %v127, %v142
    %v147 = vadd.f32 %v128, %v138
    %v148 = vadd.f32 %v129, %v142
    %v149 = vadd.f32 %v130, %v138
    %v150 = vadd.f32 %v131, %v142
    %v151 = vadd.f32 %v132, %v138
    %v152 = vadd.f32 %v133, %v142
    %v153 = vld [vmem:[%s3] sm:$0xff]
    %v154 = vld [vmem:[%s3 + $0x8] sm:$0xff]
    %v155 = vld [vmem:[%s3 + $0x10] sm:$0xff]
    %v156 = vld [vmem:[%s3 + $0x18] sm:$0xff]
    %v157 = vld [vmem:[%s3 + $0x20] sm:$0xff]
    %v158 = vld [vmem:[%s3 + $0x28] sm:$0xff]
    %v159 = vld [vmem:[%s3 + $0x30] sm:$0xff]
    %v160 = vld [vmem:[%s3 + $0x38] sm:$0xff]
    %v161 = vld [vmem:[%s3 + $0x40] sm:$0xff]
    %v162 = vld [vmem:[%s3 + $0x48] sm:$0xff]
    %v163 = vld [vmem:[%s3 + $0x50] sm:$0xff]
    %v164 = vld [vmem:[%s3 + $0x58] sm:$0xff]
    %v165 = vld [vmem:[%s3 + $0x60] sm:$0xff]
    %v166 = vld [vmem:[%s3 + $0x68] sm:$0xff]
    %v167 = vld [vmem:[%s3 + $0x70] sm:$0xff]
    %v168 = vld [vmem:[%s3 + $0x78] sm:$0xff]
    %v169 = vld [vmem:[%s3 + $0x80] sm:$0xff]
    %v170 = vld [vmem:[%s3 + $0x88] sm:$0xff]
    %v171 = vld [vmem:[%s3 + $0x90] sm:$0xff]
    %v172 = vld [vmem:[%s3 + $0x98] sm:$0xff]
    %v173 = vld [vmem:[%s3 + $0xa0] sm:$0xff]
    %v174 = vld [vmem:[%s3 + $0xa8] sm:$0xff]
    %v175 = vld [vmem:[%s3 + $0xb0] sm:$0xff]
    %v176 = vld [vmem:[%s3 + $0xb8] sm:$0xff]
    %v177 = vld [vmem:[%s3 + $0xc0] sm:$0xff]
    %v178 = vld [vmem:[%s3 + $0xc8] sm:$0xff]
    %v179 = vld [vmem:[%s3 + $0xd0] sm:$0xff]
    %v180 = vld [vmem:[%s3 + $0xd8] sm:$0xff]
    %v181 = vld [vmem:[%s3 + $0xe0] sm:$0xff]
    %v182 = vld [vmem:[%s3 + $0xe8] sm:$0xff]
    %v183 = vld [vmem:[%s3 + $0xf0] sm:$0xff]
    %v184 = vld [vmem:[%s3 + $0xf8] sm:$0xff]
    %v185 = vld [vmem:[%s3 + $0x100] sm:$0xff]
    %v186 = vld [vmem:[%s3 + $0x108] sm:$0xff]
    %v187 = vld [vmem:[%s3 + $0x110] sm:$0xff]
    %v188 = vld [vmem:[%s3 + $0x118] sm:$0xff]
    %v189 = vld [vmem:[%s3 + $0x120] sm:$0xff]
    %v190 = vld [vmem:[%s3 + $0x128] sm:$0xff]
    %v191 = vld [vmem:[%s3 + $0x130] sm:$0xff]
    %v192 = vld [vmem:[%s3 + $0x138] sm:$0xff]
    %v193 = vld [vmem:[%s3 + $0x140] sm:$0xff]
    %v194 = vld [vmem:[%s3 + $0x148] sm:$0xff]
    %v195 = vld [vmem:[%s3 + $0x150] sm:$0xff]
    %v196 = vld [vmem:[%s3 + $0x158] sm:$0xff]
    %v197 = vld [vmem:[%s3 + $0x160] sm:$0xff]
    %v198 = vld [vmem:[%s3 + $0x168] sm:$0xff]
    %v199 = vld [vmem:[%s3 + $0x170] sm:$0xff]
    %v200 = vld [vmem:[%s3 + $0x178] sm:$0xff]
    %v201 = vld [vmem:[%s3 + $0x180] sm:$0xff]
    %v202 = vld [vmem:[%s3 + $0x188] sm:$0xff]
    %v203 = vld [vmem:[%s3 + $0x190] sm:$0xff]
    %v204 = vld [vmem:[%s3 + $0x198] sm:$0xff]
    %v205 = vld [vmem:[%s3 + $0x1a0] sm:$0xff]
    %v206 = vld [vmem:[%s3 + $0x1a8] sm:$0xff]
    %v207 = vld [vmem:[%s3 + $0x1b0] sm:$0xff]
    %v208 = vld [vmem:[%s3 + $0x1b8] sm:$0xff]
    %v209 = vld [vmem:[%s3 + $0x1c0] sm:$0xff]
    %v210 = vld [vmem:[%s3 + $0x1c8] sm:$0xff]
    %v211 = vld [vmem:[%s3 + $0x1d0] sm:$0xff]
    %v212 = vld [vmem:[%s3 + $0x1d8] sm:$0xff]
    %v213 = vld [vmem:[%s3 + $0x1e0] sm:$0xff]
    %v214 = vld [vmem:[%s3 + $0x1e8] sm:$0xff]
    %v215 = vld [vmem:[%s3 + $0x1f0] sm:$0xff]
    %v216 = vld [vmem:[%s3 + $0x1f8] sm:$0xff]
    %v217 = vld [vmem:[%s3 + $0x200] sm:$0xff]
    %v218 = vld [vmem:[%s3 + $0x208] sm:$0xff]
    %v219 = vld [vmem:[%s3 + $0x210] sm:$0xff]
    %v220 = vld [vmem:[%s3 + $0x218] sm:$0xff]
    %v221 = vld [vmem:[%s3 + $0x220] sm:$0xff]
    %v222 = vld [vmem:[%s3 + $0x228] sm:$0xff]
    %v223 = vld [vmem:[%s3 + $0x230] sm:$0xff]
    %v224 = vld [vmem:[%s3 + $0x238] sm:$0xff]
    %v225 = vld [vmem:[%s3 + $0x240] sm:$0xff]
    %v226 = vld [vmem:[%s3 + $0x248] sm:$0xff]
    %v227 = vld [vmem:[%s3 + $0x250] sm:$0xff]
    %v228 = vld [vmem:[%s3 + $0x258] sm:$0xff]
    %v229 = vld [vmem:[%s3 + $0x260] sm:$0xff]
    %v230 = vld [vmem:[%s3 + $0x268] sm:$0xff]
    %v231 = vld [vmem:[%s3 + $0x270] sm:$0xff]
    %v232 = vld [vmem:[%s3 + $0x278] sm:$0xff]
    %v233 = vld [vmem:[%s3 + $0x280] sm:$0xff]
    %v234 = vld [vmem:[%s3 + $0x288] sm:$0xff]
    %v235 = vld [vmem:[%s3 + $0x290] sm:$0xff]
    %v236 = vld [vmem:[%s3 + $0x298] sm:$0xff]
    %v237 = vld [vmem:[%s3 + $0x2a0] sm:$0xff]
    %v238 = vld [vmem:[%s3 + $0x2a8] sm:$0xff]
    %v239 = vld [vmem:[%s3 + $0x2b0] sm:$0xff]
    %v240 = vld [vmem:[%s3 + $0x2b8] sm:$0xff]
    %v241 = vld [vmem:[%s3 + $0x2c0] sm:$0xff]
    %v242 = vld [vmem:[%s3 + $0x2c8] sm:$0xff]
    %v243 = vld [vmem:[%s3 + $0x2d0] sm:$0xff]
    %v244 = vld [vmem:[%s3 + $0x2d8] sm:$0xff]
    %v245 = vld [vmem:[%s3 + $0x2e0] sm:$0xff]
    %v246 = vld [vmem:[%s3 + $0x2e8] sm:$0xff]
    %v247 = vld [vmem:[%s3 + $0x2f0] sm:$0xff]
    %v248 = vld [vmem:[%s3 + $0x2f8] sm:$0xff]
    %v249 = vld [vmem:[%s3 + $0x300] sm:$0xff]
    %v250 = vld [vmem:[%s3 + $0x308] sm:$0xff]
    %v251 = vld [vmem:[%s3 + $0x310] sm:$0xff]
    %v252 = vld [vmem:[%s3 + $0x318] sm:$0xff]
    %v253 = vld [vmem:[%s3 + $0x320] sm:$0xff]
    %v254 = vld [vmem:[%s3 + $0x328] sm:$0xff]
    %v255 = vld [vmem:[%s3 + $0x330] sm:$0xff]
    %v256 = vld [vmem:[%s3 + $0x338] sm:$0xff]
    %v257 = vld [vmem:[%s3 + $0x340] sm:$0xff]
    %v258 = vld [vmem:[%s3 + $0x348] sm:$0xff]
    %v259 = vld [vmem:[%s3 + $0x350] sm:$0xff]
    %v260 = vld [vmem:[%s3 + $0x358] sm:$0xff]
    %v261 = vld [vmem:[%s3 + $0x360] sm:$0xff]
    %v262 = vld [vmem:[%s3 + $0x368] sm:$0xff]
    %v263 = vld [vmem:[%s3 + $0x370] sm:$0xff]
    %v264 = vld [vmem:[%s3 + $0x378] sm:$0xff]
    %v265 = vld [vmem:[%s3 + $0x380] sm:$0xff]
    %v266 = vld [vmem:[%s3 + $0x388] sm:$0xff]
    %v267 = vld [vmem:[%s3 + $0x390] sm:$0xff]
    %v268 = vld [vmem:[%s3 + $0x398] sm:$0xff]
    %v269 = vld [vmem:[%s3 + $0x3a0] sm:$0xff]
    %v270 = vld [vmem:[%s3 + $0x3a8] sm:$0xff]
    %v271 = vld [vmem:[%s3 + $0x3b0] sm:$0xff]
    %v272 = vld [vmem:[%s3 + $0x3b8] sm:$0xff]
    %v273 = vld [vmem:[%s3 + $0x3c0] sm:$0xff]
    %v274 = vld [vmem:[%s3 + $0x3c8] sm:$0xff]
    %v275 = vld [vmem:[%s3 + $0x3d0] sm:$0xff]
    %v276 = vld [vmem:[%s3 + $0x3d8] sm:$0xff]
    %v277 = vld [vmem:[%s3 + $0x3e0] sm:$0xff]
    %v278 = vld [vmem:[%s3 + $0x3e8] sm:$0xff]
    %v279 = vld [vmem:[%s3 + $0x3f0] sm:$0xff]
    %v280 = vld [vmem:[%s3 + $0x3f8] sm:$0xff]
    %v281 = vld [vmem:[%s3 + $0x400] sm:$0xff]
    %v282 = vld [vmem:[%s3 + $0x408] sm:$0xff]
    %v283 = vld [vmem:[%s3 + $0x410] sm:$0xff]
    %v284 = vld [vmem:[%s3 + $0x418] sm:$0xff]
    %v285 = vld [vmem:[%s3 + $0x420] sm:$0xff]
    %v286 = vld [vmem:[%s3 + $0x428] sm:$0xff]
    %v287 = vld [vmem:[%s3 + $0x430] sm:$0xff]
    %v288 = vld [vmem:[%s3 + $0x438] sm:$0xff]
    %v289 = vld [vmem:[%s3 + $0x440] sm:$0xff]
    %v290 = vld [vmem:[%s3 + $0x448] sm:$0xff]
    %v291 = vld [vmem:[%s3 + $0x450] sm:$0xff]
    %v292 = vld [vmem:[%s3 + $0x458] sm:$0xff]
    %v293 = vld [vmem:[%s3 + $0x460] sm:$0xff]
    %v294 = vld [vmem:[%s3 + $0x468] sm:$0xff]
    %v295 = vld [vmem:[%s3 + $0x470] sm:$0xff]
    %v296 = vld [vmem:[%s3 + $0x478] sm:$0xff]
    %v297 = vld [vmem:[%s3 + $0x480] sm:$0xff]
    %v298 = vld [vmem:[%s3 + $0x488] sm:$0xff]
    %v299 = vld [vmem:[%s3 + $0x490] sm:$0xff]
    %v300 = vld [vmem:[%s3 + $0x498] sm:$0xff]
    %v301 = vld [vmem:[%s3 + $0x4a0] sm:$0xff]
    %v302 = vld [vmem:[%s3 + $0x4a8] sm:$0xff]
    %v303 = vld [vmem:[%s3 + $0x4b0] sm:$0xff]
    %v304 = vld [vmem:[%s3 + $0x4b8] sm:$0xff]
    %v305 = vld [vmem:[%s3 + $0x4c0] sm:$0xff]
    %v306 = vld [vmem:[%s3 + $0x4c8] sm:$0xff]
    %v307 = vld [vmem:[%s3 + $0x4d0] sm:$0xff]
    %v308 = vld [vmem:[%s3 + $0x4d8] sm:$0xff]
    %v309 = vld [vmem:[%s3 + $0x4e0] sm:$0xff]
    %v310 = vld [vmem:[%s3 + $0x4e8] sm:$0xff]
    %v311 = vld [vmem:[%s3 + $0x4f0] sm:$0xff]
    %v312 = vld [vmem:[%s3 + $0x4f8] sm:$0xff]
    %v313 = vld [vmem:[%s3 + $0x500] sm:$0xff]
    %v314 = vld [vmem:[%s3 + $0x508] sm:$0xff]
    %v315 = vld [vmem:[%s3 + $0x510] sm:$0xff]
    %v316 = vld [vmem:[%s3 + $0x518] sm:$0xff]
    %v317 = vld [vmem:[%s3 + $0x520] sm:$0xff]
    %v318 = vld [vmem:[%s3 + $0x528] sm:$0xff]
    %v319 = vld [vmem:[%s3 + $0x530] sm:$0xff]
    %v320 = vld [vmem:[%s3 + $0x538] sm:$0xff]
    %v321 = vld [vmem:[%s3 + $0x540] sm:$0xff]
    %v322 = vld [vmem:[%s3 + $0x548] sm:$0xff]
    %v323 = vld [vmem:[%s3 + $0x550] sm:$0xff]
    %v324 = vld [vmem:[%s3 + $0x558] sm:$0xff]
    %v325 = vld [vmem:[%s3 + $0x560] sm:$0xff]
    %v326 = vld [vmem:[%s3 + $0x568] sm:$0xff]
    %v327 = vld [vmem:[%s3 + $0x570] sm:$0xff]
    %v328 = vld [vmem:[%s3 + $0x578] sm:$0xff]
    %v329 = vld [vmem:[%s3 + $0x580] sm:$0xff]
    %v330 = vld [vmem:[%s3 + $0x588] sm:$0xff]
    %v331 = vld [vmem:[%s3 + $0x590] sm:$0xff]
    %v332 = vld [vmem:[%s3 + $0x598] sm:$0xff]
    %v333 = vld [vmem:[%s3 + $0x5a0] sm:$0xff]
    %v334 = vld [vmem:[%s3 + $0x5a8] sm:$0xff]
    %v335 = vld [vmem:[%s3 + $0x5b0] sm:$0xff]
    %v336 = vld [vmem:[%s3 + $0x5b8] sm:$0xff]
    %v337 = vld [vmem:[%s3 + $0x5c0] sm:$0xff]
    %v338 = vld [vmem:[%s3 + $0x5c8] sm:$0xff]
    %v339 = vld [vmem:[%s3 + $0x5d0] sm:$0xff]
    %v340 = vld [vmem:[%s3 + $0x5d8] sm:$0xff]
    %v341 = vld [vmem:[%s3 + $0x5e0] sm:$0xff]
    %v342 = vld [vmem:[%s3 + $0x5e8] sm:$0xff]
    %v343 = vld [vmem:[%s3 + $0x5f0] sm:$0xff]
    %v344 = vld [vmem:[%s3 + $0x5f8] sm:$0xff]
    %v345 = vld [vmem:[%s3 + $0x600] sm:$0xff]
    %v346 = vld [vmem:[%s3 + $0x608] sm:$0xff]
    %v347 = vld [vmem:[%s3 + $0x610] sm:$0xff]
    %v348 = vld [vmem:[%s3 + $0x618] sm:$0xff]
    %v349 = vld [vmem:[%s3 + $0x620] sm:$0xff]
    %v350 = vld [vmem:[%s3 + $0x628] sm:$0xff]
    %v351 = vld [vmem:[%s3 + $0x630] sm:$0xff]
    %v352 = vld [vmem:[%s3 + $0x638] sm:$0xff]
    %v353 = vld [vmem:[%s3 + $0x640] sm:$0xff]
    %v354 = vld [vmem:[%s3 + $0x648] sm:$0xff]
    %v355 = vld [vmem:[%s3 + $0x650] sm:$0xff]
    %v356 = vld [vmem:[%s3 + $0x658] sm:$0xff]
    %v357 = vld [vmem:[%s3 + $0x660] sm:$0xff]
    %v358 = vld [vmem:[%s3 + $0x668] sm:$0xff]
    %v359 = vld [vmem:[%s3 + $0x670] sm:$0xff]
    %v360 = vld [vmem:[%s3 + $0x678] sm:$0xff]
    %v361 = vld [vmem:[%s3 + $0x680] sm:$0xff]
    %v362 = vld [vmem:[%s3 + $0x688] sm:$0xff]
    %v363 = vld [vmem:[%s3 + $0x690] sm:$0xff]
    %v364 = vld [vmem:[%s3 + $0x698] sm:$0xff]
    %v365 = vld [vmem:[%s3 + $0x6a0] sm:$0xff]
    %v366 = vld [vmem:[%s3 + $0x6a8] sm:$0xff]
    %v367 = vld [vmem:[%s3 + $0x6b0] sm:$0xff]
    %v368 = vld [vmem:[%s3 + $0x6b8] sm:$0xff]
    %v369 = vld [vmem:[%s3 + $0x6c0] sm:$0xff]
    %v370 = vld [vmem:[%s3 + $0x6c8] sm:$0xff]
    %v371 = vld [vmem:[%s3 + $0x6d0] sm:$0xff]
    %v372 = vld [vmem:[%s3 + $0x6d8] sm:$0xff]
    %v373 = vld [vmem:[%s3 + $0x6e0] sm:$0xff]
    %v374 = vld [vmem:[%s3 + $0x6e8] sm:$0xff]
    %v375 = vld [vmem:[%s3 + $0x6f0] sm:$0xff]
    %v376 = vld [vmem:[%s3 + $0x6f8] sm:$0xff]
    %v377 = vld [vmem:[%s3 + $0x700] sm:$0xff]
    %v378 = vld [vmem:[%s3 + $0x708] sm:$0xff]
    %v379 = vld [vmem:[%s3 + $0x710] sm:$0xff]
    %v380 = vld [vmem:[%s3 + $0x718] sm:$0xff]
    %v381 = vld [vmem:[%s3 + $0x720] sm:$0xff]
    %v382 = vld [vmem:[%s3 + $0x728] sm:$0xff]
    %v383 = vld [vmem:[%s3 + $0x730] sm:$0xff]
    %v384 = vld [vmem:[%s3 + $0x738] sm:$0xff]
    %v385 = vld [vmem:[%s3 + $0x740] sm:$0xff]
    %v386 = vld [vmem:[%s3 + $0x748] sm:$0xff]
    %v387 = vld [vmem:[%s3 + $0x750] sm:$0xff]
    %v388 = vld [vmem:[%s3 + $0x758] sm:$0xff]
    %v389 = vld [vmem:[%s3 + $0x760] sm:$0xff]
    %v390 = vld [vmem:[%s3 + $0x768] sm:$0xff]
    %v391 = vld [vmem:[%s3 + $0x770] sm:$0xff]
    %v392 = vld [vmem:[%s3 + $0x778] sm:$0xff]
    %v393 = vld [vmem:[%s3 + $0x780] sm:$0xff]
    %v394 = vld [vmem:[%s3 + $0x788] sm:$0xff]
    %v395 = vld [vmem:[%s3 + $0x790] sm:$0xff]
    %v396 = vld [vmem:[%s3 + $0x798] sm:$0xff]
    %v397 = vld [vmem:[%s3 + $0x7a0] sm:$0xff]
    %v398 = vld [vmem:[%s3 + $0x7a8] sm:$0xff]
    %v399 = vld [vmem:[%s3 + $0x7b0] sm:$0xff]
    %v400 = vld [vmem:[%s3 + $0x7b8] sm:$0xff]
    %v401 = vld [vmem:[%s3 + $0x7c0] sm:$0xff]
    %v402 = vld [vmem:[%s3 + $0x7c8] sm:$0xff]
    %v403 = vld [vmem:[%s3 + $0x7d0] sm:$0xff]
    %v404 = vld [vmem:[%s3 + $0x7d8] sm:$0xff]
    %v405 = vld [vmem:[%s3 + $0x7e0] sm:$0xff]
    %v406 = vld [vmem:[%s3 + $0x7e8] sm:$0xff]
    %v407 = vld [vmem:[%s3 + $0x7f0] sm:$0xff]
    %v408 = vld [vmem:[%s3 + $0x7f8] sm:$0xff]
    %v409 = vld [vmem:[%s4] sm:$0xff]
    %v411 = vlaneseq
    %v412 = vshrl.u32 %v411, 7
    %v413 = vsub.s32 0, %v412
    %v414 = vrot.slane %v409, %v413
    %v415 = vlaneseq
    %v416 = vshrl.u32 %v415, 7
    %v417 = vsub.s32 1, %v416
    %v418 = vrot.slane %v409, %v417
    %v419 = vlaneseq
    %v420 = vshrl.u32 %v419, 7
    %v421 = vsub.s32 2, %v420
    %v422 = vrot.slane %v409, %v421
    %v423 = vlaneseq
    %v424 = vshrl.u32 %v423, 7
    %v425 = vsub.s32 3, %v424
    %v426 = vrot.slane %v409, %v425
    %v427 = vlaneseq
    %v428 = vshrl.u32 %v427, 7
    %v429 = vsub.s32 4, %v428
    %v430 = vrot.slane %v409, %v429
    %v431 = vlaneseq
    %v432 = vshrl.u32 %v431, 7
    %v433 = vsub.s32 5, %v432
    %v434 = vrot.slane %v409, %v433
    %v435 = vlaneseq
    %v436 = vshrl.u32 %v435, 7
    %v437 = vsub.s32 6, %v436
    %v438 = vrot.slane %v409, %v437
    %v439 = vlaneseq
    %v440 = vshrl.u32 %v439, 7
    %v441 = vsub.s32 7, %v440
    %v442 = vrot.slane %v409, %v441
    %451 = vmatprep.subr.mxu0 %v274
    %452 = vmatpush1.msra.mxu0 %v273
    %453 = vmatprep.subr.mxu0 %v266
    %454 = vmatpush1.msra.mxu0 %v265
    %455 = vmatprep.subr.mxu0 %v258
    %456 = vmatpush1.msra.mxu0 %v257
    %457 = vmatprep.subr.mxu0 %v250
    %458 = vmatpush1.msra.mxu0 %v249
    %459 = vmatprep.subr.mxu0 %v242
    %460 = vmatpush1.msra.mxu0 %v241
    %461 = vmatprep.subr.mxu0 %v234
    %462 = vmatpush1.msra.mxu0 %v233
    %463 = vmatprep.subr.mxu0 %v226
    %464 = vmatpush1.msra.mxu0 %v225
    %465 = vmatprep.subr.mxu0 %v218
    %466 = vmatpush1.msra.mxu0 %v217
    %467 = vmatprep.subr.mxu0 %v210
    %468 = vmatpush1.msra.mxu0 %v209
    %469 = vmatprep.subr.mxu0 %v202
    %470 = vmatpush1.msra.mxu0 %v201
    %471 = vmatprep.subr.mxu0 %v194
    %472 = vmatpush1.msra.mxu0 %v193
    %473 = vmatprep.subr.mxu0 %v186
    %474 = vmatpush1.msra.mxu0 %v185
    %475 = vmatprep.subr.mxu0 %v178
    %476 = vmatpush1.msra.mxu0 %v177
    %477 = vmatprep.subr.mxu0 %v170
    %478 = vmatpush1.msra.mxu0 %v169
    %479 = vmatprep.subr.mxu0 %v162
    %480 = vmatpush1.msra.mxu0 %v161
    %481 = vmatprep.subr.mxu0 %v154
    %482 = vmatpush1.msra.mxu0 %v153
    %483 = vmatprep.subr.mxu0 %v402
    %484 = vmatpush2.msra.mxu0 %v401
    %485 = vmatprep.subr.mxu0 %v394
    %486 = vmatpush2.msra.mxu0 %v393
    %487 = vmatprep.subr.mxu0 %v386
    %488 = vmatpush2.msra.mxu0 %v385
    %489 = vmatprep.subr.mxu0 %v378
    %490 = vmatpush2.msra.mxu0 %v377
    %491 = vmatprep.subr.mxu0 %v370
    %492 = vmatpush2.msra.mxu0 %v369
    %493 = vmatprep.subr.mxu0 %v362
    %494 = vmatpush2.msra.mxu0 %v361
    %495 = vmatprep.subr.mxu0 %v354
    %496 = vmatpush2.msra.mxu0 %v353
    %497 = vmatprep.subr.mxu0 %v346
    %498 = vmatpush2.msra.mxu0 %v345
    %499 = vmatprep.subr.mxu0 %v338
    %500 = vmatpush2.msra.mxu0 %v337
    %501 = vmatprep.subr.mxu0 %v330
    %502 = vmatpush2.msra.mxu0 %v329
    %503 = vmatprep.subr.mxu0 %v322
    %504 = vmatpush2.msra.mxu0 %v321
    %505 = vmatprep.subr.mxu0 %v314
    %506 = vmatpush2.msra.mxu0 %v313
    %507 = vmatprep.subr.mxu0 %v306
    %508 = vmatpush2.msra.mxu0 %v305
    %509 = vmatprep.subr.mxu0 %v298
    %510 = vmatpush2.msra.mxu0 %v297
    %511 = vmatprep.subr.mxu0 %v290
    %512 = vmatpush2.msra.mxu0 %v289
    %513 = vmatprep.subr.mxu0 %v282
    %514 = vmatpush2.msra.mxu0 %v281
    %515 = vmatprep.mubr.f32.mxu0 %v146
    %516 = vmatmul.mubr.f32.gmra.mxu0 %v145
    %v517 = vpop.f32.mrf.mxu0
    %v518 = vadd.f32 %v414, %v517
    %v519 = vpop.f32.mrf.mxu0
    %v520 = vadd.f32 %v418, %v519
    %521 = vmatprep.mubr.f32.mxu0 %v148
    %522 = vmatmul.mubr.f32.gmra.mxu0 %v147
    %v523 = vpop.f32.mrf.mxu0
    %v524 = vadd.f32 %v414, %v523
    %v525 = vpop.f32.mrf.mxu0
    %v526 = vadd.f32 %v418, %v525
    %527 = vmatprep.mubr.f32.mxu0 %v150
    %528 = vmatmul.mubr.f32.gmra.mxu0 %v149
    %v529 = vpop.f32.mrf.mxu0
    %v530 = vadd.f32 %v414, %v529
    %v531 = vpop.f32.mrf.mxu0
    %v532 = vadd.f32 %v418, %v531
    %533 = vmatprep.mubr.f32.mxu0 %v152
    %534 = vmatmul.mubr.f32.gmra.mxu0 %v151
    %v535 = vpop.f32.mrf.mxu0
    %v536 = vadd.f32 %v414, %v535
    %v537 = vpop.f32.mrf.mxu0
    %v538 = vadd.f32 %v418, %v537
    %539 = vdwg.mxu0
    %540 = vmatprep.subr.mxu0 %v276
    %541 = vmatpush1.msra.mxu0 %v275
    %542 = vmatprep.subr.mxu0 %v268
    %543 = vmatpush1.msra.mxu0 %v267
    %544 = vmatprep.subr.mxu0 %v260
    %545 = vmatpush1.msra.mxu0 %v259
    %546 = vmatprep.subr.mxu0 %v252
    %547 = vmatpush1.msra.mxu0 %v251
    %548 = vmatprep.subr.mxu0 %v244
    %549 = vmatpush1.msra.mxu0 %v243
    %550 = vmatprep.subr.mxu0 %v236
    %551 = vmatpush1.msra.mxu0 %v235
    %552 = vmatprep.subr.mxu0 %v228
    %553 = vmatpush1.msra.mxu0 %v227
    %554 = vmatprep.subr.mxu0 %v220
    %555 = vmatpush1.msra.mxu0 %v219
    %556 = vmatprep.subr.mxu0 %v212
    %557 = vmatpush1.msra.mxu0 %v211
    %558 = vmatprep.subr.mxu0 %v204
    %559 = vmatpush1.msra.mxu0 %v203
    %560 = vmatprep.subr.mxu0 %v196
    %561 = vmatpush1.msra.mxu0 %v195
    %562 = vmatprep.subr.mxu0 %v188
    %563 = vmatpush1.msra.mxu0 %v187
    %564 = vmatprep.subr.mxu0 %v180
    %565 = vmatpush1.msra.mxu0 %v179
    %566 = vmatprep.subr.mxu0 %v172
    %567 = vmatpush1.msra.mxu0 %v171
    %568 = vmatprep.subr.mxu0 %v164
    %569 = vmatpush1.msra.mxu0 %v163
    %570 = vmatprep.subr.mxu0 %v156
    %571 = vmatpush1.msra.mxu0 %v155
    %572 = vmatprep.subr.mxu0 %v404
    %573 = vmatpush2.msra.mxu0 %v403
    %574 = vmatprep.subr.mxu0 %v396
    %575 = vmatpush2.msra.mxu0 %v395
    %576 = vmatprep.subr.mxu0 %v388
    %577 = vmatpush2.msra.mxu0 %v387
    %578 = vmatprep.subr.mxu0 %v380
    %579 = vmatpush2.msra.mxu0 %v379
    %580 = vmatprep.subr.mxu0 %v372
    %581 = vmatpush2.msra.mxu0 %v371
    %582 = vmatprep.subr.mxu0 %v364
    %583 = vmatpush2.msra.mxu0 %v363
    %584 = vmatprep.subr.mxu0 %v356
    %585 = vmatpush2.msra.mxu0 %v355
    %586 = vmatprep.subr.mxu0 %v348
    %587 = vmatpush2.msra.mxu0 %v347
    %588 = vmatprep.subr.mxu0 %v340
    %589 = vmatpush2.msra.mxu0 %v339
    %590 = vmatprep.subr.mxu0 %v332
    %591 = vmatpush2.msra.mxu0 %v331
    %592 = vmatprep.subr.mxu0 %v324
    %593 = vmatpush2.msra.mxu0 %v323
    %594 = vmatprep.subr.mxu0 %v316
    %595 = vmatpush2.msra.mxu0 %v315
    %596 = vmatprep.subr.mxu0 %v308
    %597 = vmatpush2.msra.mxu0 %v307
    %598 = vmatprep.subr.mxu0 %v300
    %599 = vmatpush2.msra.mxu0 %v299
    %600 = vmatprep.subr.mxu0 %v292
    %601 = vmatpush2.msra.mxu0 %v291
    %602 = vmatprep.subr.mxu0 %v284
    %603 = vmatpush2.msra.mxu0 %v283
    %604 = vmatprep.mubr.f32.mxu0 %v146
    %605 = vmatmul.mubr.f32.gmra.mxu0 %v145
    %v606 = vpop.f32.mrf.mxu0
    %v607 = vadd.f32 %v422, %v606
    %v608 = vpop.f32.mrf.mxu0
    %v609 = vadd.f32 %v426, %v608
    %610 = vmatprep.mubr.f32.mxu0 %v148
    %611 = vmatmul.mubr.f32.gmra.mxu0 %v147
    %v612 = vpop.f32.mrf.mxu0
    %v613 = vadd.f32 %v422, %v612
    %v614 = vpop.f32.mrf.mxu0
    %v615 = vadd.f32 %v426, %v614
    %616 = vmatprep.mubr.f32.mxu0 %v150
    %617 = vmatmul.mubr.f32.gmra.mxu0 %v149
    %v618 = vpop.f32.mrf.mxu0
    %v619 = vadd.f32 %v422, %v618
    %v620 = vpop.f32.mrf.mxu0
    %v621 = vadd.f32 %v426, %v620
    %622 = vmatprep.mubr.f32.mxu0 %v152
    %623 = vmatmul.mubr.f32.gmra.mxu0 %v151
    %v624 = vpop.f32.mrf.mxu0
    %v625 = vadd.f32 %v422, %v624
    %v626 = vpop.f32.mrf.mxu0
    %v627 = vadd.f32 %v426, %v626
    %628 = vdwg.mxu0
    %629 = vmatprep.subr.mxu0 %v278
    %630 = vmatpush1.msra.mxu0 %v277
    %631 = vmatprep.subr.mxu0 %v270
    %632 = vmatpush1.msra.mxu0 %v269
    %633 = vmatprep.subr.mxu0 %v262
    %634 = vmatpush1.msra.mxu0 %v261
    %635 = vmatprep.subr.mxu0 %v254
    %636 = vmatpush1.msra.mxu0 %v253
    %637 = vmatprep.subr.mxu0 %v246
    %638 = vmatpush1.msra.mxu0 %v245
    %639 = vmatprep.subr.mxu0 %v238
    %640 = vmatpush1.msra.mxu0 %v237
    %641 = vmatprep.subr.mxu0 %v230
    %642 = vmatpush1.msra.mxu0 %v229
    %643 = vmatprep.subr.mxu0 %v222
    %644 = vmatpush1.msra.mxu0 %v221
    %645 = vmatprep.subr.mxu0 %v214
    %646 = vmatpush1.msra.mxu0 %v213
    %647 = vmatprep.subr.mxu0 %v206
    %648 = vmatpush1.msra.mxu0 %v205
    %649 = vmatprep.subr.mxu0 %v198
    %650 = vmatpush1.msra.mxu0 %v197
    %651 = vmatprep.subr.mxu0 %v190
    %652 = vmatpush1.msra.mxu0 %v189
    %653 = vmatprep.subr.mxu0 %v182
    %654 = vmatpush1.msra.mxu0 %v181
    %655 = vmatprep.subr.mxu0 %v174
    %656 = vmatpush1.msra.mxu0 %v173
    %657 = vmatprep.subr.mxu0 %v166
    %658 = vmatpush1.msra.mxu0 %v165
    %659 = vmatprep.subr.mxu0 %v158
    %660 = vmatpush1.msra.mxu0 %v157
    %661 = vmatprep.subr.mxu0 %v406
    %662 = vmatpush2.msra.mxu0 %v405
    %663 = vmatprep.subr.mxu0 %v398
    %664 = vmatpush2.msra.mxu0 %v397
    %665 = vmatprep.subr.mxu0 %v390
    %666 = vmatpush2.msra.mxu0 %v389
    %667 = vmatprep.subr.mxu0 %v382
    %668 = vmatpush2.msra.mxu0 %v381
    %669 = vmatprep.subr.mxu0 %v374
    %670 = vmatpush2.msra.mxu0 %v373
    %671 = vmatprep.subr.mxu0 %v366
    %672 = vmatpush2.msra.mxu0 %v365
    %673 = vmatprep.subr.mxu0 %v358
    %674 = vmatpush2.msra.mxu0 %v357
    %675 = vmatprep.subr.mxu0 %v350
    %676 = vmatpush2.msra.mxu0 %v349
    %677 = vmatprep.subr.mxu0 %v342
    %678 = vmatpush2.msra.mxu0 %v341
    %679 = vmatprep.subr.mxu0 %v334
    %680 = vmatpush2.msra.mxu0 %v333
    %681 = vmatprep.subr.mxu0 %v326
    %682 = vmatpush2.msra.mxu0 %v325
    %683 = vmatprep.subr.mxu0 %v318
    %684 = vmatpush2.msra.mxu0 %v317
    %685 = vmatprep.subr.mxu0 %v310
    %686 = vmatpush2.msra.mxu0 %v309
    %687 = vmatprep.subr.mxu0 %v302
    %688 = vmatpush2.msra.mxu0 %v301
    %689 = vmatprep.subr.mxu0 %v294
    %690 = vmatpush2.msra.mxu0 %v293
    %691 = vmatprep.subr.mxu0 %v286
    %692 = vmatpush2.msra.mxu0 %v285
    %693 = vmatprep.mubr.f32.mxu0 %v146
    %694 = vmatmul.mubr.f32.gmra.mxu0 %v145
    %v695 = vpop.f32.mrf.mxu0
    %v696 = vadd.f32 %v430, %v695
    %v697 = vpop.f32.mrf.mxu0
    %v698 = vadd.f32 %v434, %v697
    %699 = vmatprep.mubr.f32.mxu0 %v148
    %700 = vmatmul.mubr.f32.gmra.mxu0 %v147
    %v701 = vpop.f32.mrf.mxu0
    %v702 = vadd.f32 %v430, %v701
    %v703 = vpop.f32.mrf.mxu0
    %v704 = vadd.f32 %v434, %v703
    %705 = vmatprep.mubr.f32.mxu0 %v150
    %706 = vmatmul.mubr.f32.gmra.mxu0 %v149
    %v707 = vpop.f32.mrf.mxu0
    %v708 = vadd.f32 %v430, %v707
    %v709 = vpop.f32.mrf.mxu0
    %v710 = vadd.f32 %v434, %v709
    %711 = vmatprep.mubr.f32.mxu0 %v152
    %712 = vmatmul.mubr.f32.gmra.mxu0 %v151
    %v713 = vpop.f32.mrf.mxu0
    %v714 = vadd.f32 %v430, %v713
    %v715 = vpop.f32.mrf.mxu0
    %v716 = vadd.f32 %v434, %v715
    %717 = vdwg.mxu0
    %718 = vmatprep.subr.mxu0 %v280
    %719 = vmatpush1.msra.mxu0 %v279
    %720 = vmatprep.subr.mxu0 %v272
    %721 = vmatpush1.msra.mxu0 %v271
    %722 = vmatprep.subr.mxu0 %v264
    %723 = vmatpush1.msra.mxu0 %v263
    %724 = vmatprep.subr.mxu0 %v256
    %725 = vmatpush1.msra.mxu0 %v255
    %726 = vmatprep.subr.mxu0 %v248
    %727 = vmatpush1.msra.mxu0 %v247
    %728 = vmatprep.subr.mxu0 %v240
    %729 = vmatpush1.msra.mxu0 %v239
    %730 = vmatprep.subr.mxu0 %v232
    %731 = vmatpush1.msra.mxu0 %v231
    %732 = vmatprep.subr.mxu0 %v224
    %733 = vmatpush1.msra.mxu0 %v223
    %734 = vmatprep.subr.mxu0 %v216
    %735 = vmatpush1.msra.mxu0 %v215
    %736 = vmatprep.subr.mxu0 %v208
    %737 = vmatpush1.msra.mxu0 %v207
    %738 = vmatprep.subr.mxu0 %v200
    %739 = vmatpush1.msra.mxu0 %v199
    %740 = vmatprep.subr.mxu0 %v192
    %741 = vmatpush1.msra.mxu0 %v191
    %742 = vmatprep.subr.mxu0 %v184
    %743 = vmatpush1.msra.mxu0 %v183
    %744 = vmatprep.subr.mxu0 %v176
    %745 = vmatpush1.msra.mxu0 %v175
    %746 = vmatprep.subr.mxu0 %v168
    %747 = vmatpush1.msra.mxu0 %v167
    %748 = vmatprep.subr.mxu0 %v160
    %749 = vmatpush1.msra.mxu0 %v159
    %750 = vmatprep.subr.mxu0 %v408
    %751 = vmatpush2.msra.mxu0 %v407
    %752 = vmatprep.subr.mxu0 %v400
    %753 = vmatpush2.msra.mxu0 %v399
    %754 = vmatprep.subr.mxu0 %v392
    %755 = vmatpush2.msra.mxu0 %v391
    %756 = vmatprep.subr.mxu0 %v384
    %757 = vmatpush2.msra.mxu0 %v383
    %758 = vmatprep.subr.mxu0 %v376
    %759 = vmatpush2.msra.mxu0 %v375
    %760 = vmatprep.subr.mxu0 %v368
    %761 = vmatpush2.msra.mxu0 %v367
    %762 = vmatprep.subr.mxu0 %v360
    %763 = vmatpush2.msra.mxu0 %v359
    %764 = vmatprep.subr.mxu0 %v352
    %765 = vmatpush2.msra.mxu0 %v351
    %766 = vmatprep.subr.mxu0 %v344
    %767 = vmatpush2.msra.mxu0 %v343
    %768 = vmatprep.subr.mxu0 %v336
    %769 = vmatpush2.msra.mxu0 %v335
    %770 = vmatprep.subr.mxu0 %v328
    %771 = vmatpush2.msra.mxu0 %v327
    %772 = vmatprep.subr.mxu0 %v320
    %773 = vmatpush2.msra.mxu0 %v319
    %774 = vmatprep.subr.mxu0 %v312
    %775 = vmatpush2.msra.mxu0 %v311
    %776 = vmatprep.subr.mxu0 %v304
    %777 = vmatpush2.msra.mxu0 %v303
    %778 = vmatprep.subr.mxu0 %v296
    %779 = vmatpush2.msra.mxu0 %v295
    %780 = vmatprep.subr.mxu0 %v288
    %781 = vmatpush2.msra.mxu0 %v287
    %782 = vmatprep.mubr.f32.mxu0 %v146
    %783 = vmatmul.mubr.f32.gmra.mxu0 %v145
    %v784 = vpop.f32.mrf.mxu0
    %v785 = vadd.f32 %v438, %v784
    %v786 = vpop.f32.mrf.mxu0
    %v787 = vadd.f32 %v442, %v786
    %788 = vmatprep.mubr.f32.mxu0 %v148
    %789 = vmatmul.mubr.f32.gmra.mxu0 %v147
    %v790 = vpop.f32.mrf.mxu0
    %v791 = vadd.f32 %v438, %v790
    %v792 = vpop.f32.mrf.mxu0
    %v793 = vadd.f32 %v442, %v792
    %794 = vmatprep.mubr.f32.mxu0 %v150
    %795 = vmatmul.mubr.f32.gmra.mxu0 %v149
    %v796 = vpop.f32.mrf.mxu0
    %v797 = vadd.f32 %v438, %v796
    %v798 = vpop.f32.mrf.mxu0
    %v799 = vadd.f32 %v442, %v798
    %800 = vmatprep.mubr.f32.mxu0 %v152
    %801 = vmatmul.mubr.f32.gmra.mxu0 %v151
    %v802 = vpop.f32.mrf.mxu0
    %v803 = vadd.f32 %v438, %v802
    %v804 = vpop.f32.mrf.mxu0
    %v805 = vadd.f32 %v442, %v804
    %806 = vdwg.mxu0
    %v807 = vmul.f32 %v518, 1.702
    %v808 = vmul.f32 %v520, 1.702
    %v809 = vmul.f32 %v607, 1.702
    %v810 = vmul.f32 %v609, 1.702
    %v811 = vmul.f32 %v696, 1.702
    %v812 = vmul.f32 %v698, 1.702
    %v813 = vmul.f32 %v785, 1.702
    %v814 = vmul.f32 %v787, 1.702
    %v815 = vmul.f32 %v524, 1.702
    %v816 = vmul.f32 %v526, 1.702
    %v817 = vmul.f32 %v613, 1.702
    %v818 = vmul.f32 %v615, 1.702
    %v819 = vmul.f32 %v702, 1.702
    %v820 = vmul.f32 %v704, 1.702
    %v821 = vmul.f32 %v791, 1.702
    %v822 = vmul.f32 %v793, 1.702
    %v823 = vmul.f32 %v530, 1.702
    %v824 = vmul.f32 %v532, 1.702
    %v825 = vmul.f32 %v619, 1.702
    %v826 = vmul.f32 %v621, 1.702
    %v827 = vmul.f32 %v708, 1.702
    %v828 = vmul.f32 %v710, 1.702
    %v829 = vmul.f32 %v797, 1.702
    %v830 = vmul.f32 %v799, 1.702
    %v831 = vmul.f32 %v536, 1.702
    %v832 = vmul.f32 %v538, 1.702
    %v833 = vmul.f32 %v625, 1.702
    %v834 = vmul.f32 %v627, 1.702
    %v835 = vmul.f32 %v714, 1.702
    %v836 = vmul.f32 %v716, 1.702
    %v837 = vmul.f32 %v803, 1.702
    %v838 = vmul.f32 %v805, 1.702
    %v839 = vxor.u32 %v807, 2147483648
    %v840 = vxor.u32 %v808, 2147483648
    %v841 = vxor.u32 %v809, 2147483648
    %v842 = vxor.u32 %v810, 2147483648
    %v843 = vxor.u32 %v811, 2147483648
    %v844 = vxor.u32 %v812, 2147483648
    %v845 = vxor.u32 %v813, 2147483648
    %v846 = vxor.u32 %v814, 2147483648
    %v847 = vxor.u32 %v815, 2147483648
    %v848 = vxor.u32 %v816, 2147483648
    %v849 = vxor.u32 %v817, 2147483648
    %v850 = vxor.u32 %v818, 2147483648
    %v851 = vxor.u32 %v819, 2147483648
    %v852 = vxor.u32 %v820, 2147483648
    %v853 = vxor.u32 %v821, 2147483648
    %v854 = vxor.u32 %v822, 2147483648
    %v855 = vxor.u32 %v823, 2147483648
    %v856 = vxor.u32 %v824, 2147483648
    %v857 = vxor.u32 %v825, 2147483648
    %v858 = vxor.u32 %v826, 2147483648
    %v859 = vxor.u32 %v827, 2147483648
    %v860 = vxor.u32 %v828, 2147483648
    %v861 = vxor.u32 %v829, 2147483648
    %v862 = vxor.u32 %v830, 2147483648
    %v863 = vxor.u32 %v831, 2147483648
    %v864 = vxor.u32 %v832, 2147483648
    %v865 = vxor.u32 %v833, 2147483648
    %v866 = vxor.u32 %v834, 2147483648
    %v867 = vxor.u32 %v835, 2147483648
    %v868 = vxor.u32 %v836, 2147483648
    %v869 = vxor.u32 %v837, 2147483648
    %v870 = vxor.u32 %v838, 2147483648
    %v871 = vmul.f32 %v839, 1.442695
    %v872 = vpow.pop %v871
    %v873 = vmul.f32 %v840, 1.442695
    %v874 = vpow.pop %v873
    %v875 = vmul.f32 %v841, 1.442695
    %v876 = vpow.pop %v875
    %v877 = vmul.f32 %v842, 1.442695
    %v878 = vpow.pop %v877
    %v879 = vmul.f32 %v843, 1.442695
    %v880 = vpow.pop %v879
    %v881 = vmul.f32 %v844, 1.442695
    %v882 = vpow.pop %v881
    %v883 = vmul.f32 %v845, 1.442695
    %v884 = vpow.pop %v883
    %v885 = vmul.f32 %v846, 1.442695
    %v886 = vpow.pop %v885
    %v887 = vmul.f32 %v847, 1.442695
    %v888 = vpow.pop %v887
    %v889 = vmul.f32 %v848, 1.442695
    %v890 = vpow.pop %v889
    %v891 = vmul.f32 %v849, 1.442695
    %v892 = vpow.pop %v891
    %v893 = vmul.f32 %v850, 1.442695
    %v894 = vpow.pop %v893
    %v895 = vmul.f32 %v851, 1.442695
    %v896 = vpow.pop %v895
    %v897 = vmul.f32 %v852, 1.442695
    %v898 = vpow.pop %v897
    %v899 = vmul.f32 %v853, 1.442695
    %v900 = vpow.pop %v899
    %v901 = vmul.f32 %v854, 1.442695
    %v902 = vpow.pop %v901
    %v903 = vmul.f32 %v855, 1.442695
    %v904 = vpow.pop %v903
    %v905 = vmul.f32 %v856, 1.442695
    %v906 = vpow.pop %v905
    %v907 = vmul.f32 %v857, 1.442695
    %v908 = vpow.pop %v907
    %v909 = vmul.f32 %v858, 1.442695
    %v910 = vpow.pop %v909
    %v911 = vmul.f32 %v859, 1.442695
    %v912 = vpow.pop %v911
    %v913 = vmul.f32 %v860, 1.442695
    %v914 = vpow.pop %v913
    %v915 = vmul.f32 %v861, 1.442695
    %v916 = vpow.pop %v915
    %v917 = vmul.f32 %v862, 1.442695
    %v918 = vpow.pop %v917
    %v919 = vmul.f32 %v863, 1.442695
    %v920 = vpow.pop %v919
    %v921 = vmul.f32 %v864, 1.442695
    %v922 = vpow.pop %v921
    %v923 = vmul.f32 %v865, 1.442695
    %v924 = vpow.pop %v923
    %v925 = vmul.f32 %v866, 1.442695
    %v926 = vpow.pop %v925
    %v927 = vmul.f32 %v867, 1.442695
    %v928 = vpow.pop %v927
    %v929 = vmul.f32 %v868, 1.442695
    %v930 = vpow.pop %v929
    %v931 = vmul.f32 %v869, 1.442695
    %v932 = vpow.pop %v931
    %v933 = vmul.f32 %v870, 1.442695
    %v934 = vpow.pop %v933
    %v935 = vadd.f32 %v872, 1.0
    %v936 = vadd.f32 %v874, 1.0
    %v937 = vadd.f32 %v876, 1.0
    %v938 = vadd.f32 %v878, 1.0
    %v939 = vadd.f32 %v880, 1.0
    %v940 = vadd.f32 %v882, 1.0
    %v941 = vadd.f32 %v884, 1.0
    %v942 = vadd.f32 %v886, 1.0
    %v943 = vadd.f32 %v888, 1.0
    %v944 = vadd.f32 %v890, 1.0
    %v945 = vadd.f32 %v892, 1.0
    %v946 = vadd.f32 %v894, 1.0
    %v947 = vadd.f32 %v896, 1.0
    %v948 = vadd.f32 %v898, 1.0
    %v949 = vadd.f32 %v900, 1.0
    %v950 = vadd.f32 %v902, 1.0
    %v951 = vadd.f32 %v904, 1.0
    %v952 = vadd.f32 %v906, 1.0
    %v953 = vadd.f32 %v908, 1.0
    %v954 = vadd.f32 %v910, 1.0
    %v955 = vadd.f32 %v912, 1.0
    %v956 = vadd.f32 %v914, 1.0
    %v957 = vadd.f32 %v916, 1.0
    %v958 = vadd.f32 %v918, 1.0
    %v959 = vadd.f32 %v920, 1.0
    %v960 = vadd.f32 %v922, 1.0
    %v961 = vadd.f32 %v924, 1.0
    %v962 = vadd.f32 %v926, 1.0
    %v963 = vadd.f32 %v928, 1.0
    %v964 = vadd.f32 %v930, 1.0
    %v965 = vadd.f32 %v932, 1.0
    %v966 = vadd.f32 %v934, 1.0
    %v967 = vrcp.pop %v935
    %v968 = vmul.f32 1.0, %v967
    %v969 = vrcp.pop %v936
    %v970 = vmul.f32 1.0, %v969
    %v971 = vrcp.pop %v937
    %v972 = vmul.f32 1.0, %v971
    %v973 = vrcp.pop %v938
    %v974 = vmul.f32 1.0, %v973
    %v975 = vrcp.pop %v939
    %v976 = vmul.f32 1.0, %v975
    %v977 = vrcp.pop %v940
    %v978 = vmul.f32 1.0, %v977
    %v979 = vrcp.pop %v941
    %v980 = vmul.f32 1.0, %v979
    %v981 = vrcp.pop %v942
    %v982 = vmul.f32 1.0, %v981
    %v983 = vrcp.pop %v943
    %v984 = vmul.f32 1.0, %v983
    %v985 = vrcp.pop %v944
    %v986 = vmul.f32 1.0, %v985
    %v987 = vrcp.pop %v945
    %v988 = vmul.f32 1.0, %v987
    %v989 = vrcp.pop %v946
    %v990 = vmul.f32 1.0, %v989
    %v991 = vrcp.pop %v947
    %v992 = vmul.f32 1.0, %v991
    %v993 = vrcp.pop %v948
    %v994 = vmul.f32 1.0, %v993
    %v995 = vrcp.pop %v949
    %v996 = vmul.f32 1.0, %v995
    %v997 = vrcp.pop %v950
    %v998 = vmul.f32 1.0, %v997
    %v999 = vrcp.pop %v951
    %v1000 = vmul.f32 1.0, %v999
    %v1001 = vrcp.pop %v952
    %v1002 = vmul.f32 1.0, %v1001
    %v1003 = vrcp.pop %v953
    %v1004 = vmul.f32 1.0, %v1003
    %v1005 = vrcp.pop %v954
    %v1006 = vmul.f32 1.0, %v1005
    %v1007 = vrcp.pop %v955
    %v1008 = vmul.f32 1.0, %v1007
    %v1009 = vrcp.pop %v956
    %v1010 = vmul.f32 1.0, %v1009
    %v1011 = vrcp.pop %v957
    %v1012 = vmul.f32 1.0, %v1011
    %v1013 = vrcp.pop %v958
    %v1014 = vmul.f32 1.0, %v1013
    %v1015 = vrcp.pop %v959
    %v1016 = vmul.f32 1.0, %v1015
    %v1017 = vrcp.pop %v960
    %v1018 = vmul.f32 1.0, %v1017
    %v1019 = vrcp.pop %v961
    %v1020 = vmul.f32 1.0, %v1019
    %v1021 = vrcp.pop %v962
    %v1022 = vmul.f32 1.0, %v1021
    %v1023 = vrcp.pop %v963
    %v1024 = vmul.f32 1.0, %v1023
    %v1025 = vrcp.pop %v964
    %v1026 = vmul.f32 1.0, %v1025
    %v1027 = vrcp.pop %v965
    %v1028 = vmul.f32 1.0, %v1027
    %v1029 = vrcp.pop %v966
    %v1030 = vmul.f32 1.0, %v1029
    %v1031 = vmul.f32 %v518, %v968
    %v1032 = vmul.f32 %v520, %v970
    %v1033 = vmul.f32 %v607, %v972
    %v1034 = vmul.f32 %v609, %v974
    %v1035 = vmul.f32 %v696, %v976
    %v1036 = vmul.f32 %v698, %v978
    %v1037 = vmul.f32 %v785, %v980
    %v1038 = vmul.f32 %v787, %v982
    %v1039 = vmul.f32 %v524, %v984
    %v1040 = vmul.f32 %v526, %v986
    %v1041 = vmul.f32 %v613, %v988
    %v1042 = vmul.f32 %v615, %v990
    %v1043 = vmul.f32 %v702, %v992
    %v1044 = vmul.f32 %v704, %v994
    %v1045 = vmul.f32 %v791, %v996
    %v1046 = vmul.f32 %v793, %v998
    %v1047 = vmul.f32 %v530, %v1000
    %v1048 = vmul.f32 %v532, %v1002
    %v1049 = vmul.f32 %v619, %v1004
    %v1050 = vmul.f32 %v621, %v1006
    %v1051 = vmul.f32 %v708, %v1008
    %v1052 = vmul.f32 %v710, %v1010
    %v1053 = vmul.f32 %v797, %v1012
    %v1054 = vmul.f32 %v799, %v1014
    %v1055 = vmul.f32 %v536, %v1016
    %v1056 = vmul.f32 %v538, %v1018
    %v1057 = vmul.f32 %v625, %v1020
    %v1058 = vmul.f32 %v627, %v1022
    %v1059 = vmul.f32 %v714, %v1024
    %v1060 = vmul.f32 %v716, %v1026
    %v1061 = vmul.f32 %v803, %v1028
    %v1062 = vmul.f32 %v805, %v1030
    %v1063 = vld [vmem:[#allocation2] sm:$0xff]
    %v1064 = vld [vmem:[#allocation2 + $0x8] sm:$0xff]
    %v1065 = vld [vmem:[#allocation2 + $0x10] sm:$0xff]
    %v1066 = vld [vmem:[#allocation2 + $0x18] sm:$0xff]
    %v1067 = vld [vmem:[#allocation2 + $0x20] sm:$0xff]
    %v1068 = vld [vmem:[#allocation2 + $0x28] sm:$0xff]
    %v1069 = vld [vmem:[#allocation2 + $0x30] sm:$0xff]
    %v1070 = vld [vmem:[#allocation2 + $0x38] sm:$0xff]
    %v1071 = vld [vmem:[#allocation2 + $0x40] sm:$0xff]
    %v1072 = vld [vmem:[#allocation2 + $0x48] sm:$0xff]
    %v1073 = vld [vmem:[#allocation2 + $0x50] sm:$0xff]
    %v1074 = vld [vmem:[#allocation2 + $0x58] sm:$0xff]
    %v1075 = vld [vmem:[#allocation2 + $0x60] sm:$0xff]
    %v1076 = vld [vmem:[#allocation2 + $0x68] sm:$0xff]
    %v1077 = vld [vmem:[#allocation2 + $0x70] sm:$0xff]
    %v1078 = vld [vmem:[#allocation2 + $0x78] sm:$0xff]
    %v1079 = vld [vmem:[#allocation2 + $0x80] sm:$0xff]
    %v1080 = vld [vmem:[#allocation2 + $0x88] sm:$0xff]
    %v1081 = vld [vmem:[#allocation2 + $0x90] sm:$0xff]
    %v1082 = vld [vmem:[#allocation2 + $0x98] sm:$0xff]
    %v1083 = vld [vmem:[#allocation2 + $0xa0] sm:$0xff]
    %v1084 = vld [vmem:[#allocation2 + $0xa8] sm:$0xff]
    %v1085 = vld [vmem:[#allocation2 + $0xb0] sm:$0xff]
    %v1086 = vld [vmem:[#allocation2 + $0xb8] sm:$0xff]
    %v1087 = vld [vmem:[#allocation2 + $0xc0] sm:$0xff]
    %v1088 = vld [vmem:[#allocation2 + $0xc8] sm:$0xff]
    %v1089 = vld [vmem:[#allocation2 + $0xd0] sm:$0xff]
    %v1090 = vld [vmem:[#allocation2 + $0xd8] sm:$0xff]
    %v1091 = vld [vmem:[#allocation2 + $0xe0] sm:$0xff]
    %v1092 = vld [vmem:[#allocation2 + $0xe8] sm:$0xff]
    %v1093 = vld [vmem:[#allocation2 + $0xf0] sm:$0xff]
    %v1094 = vld [vmem:[#allocation2 + $0xf8] sm:$0xff]
    %v1095 = vld [vmem:[#allocation2 + $0x100] sm:$0xff]
    %v1096 = vld [vmem:[#allocation2 + $0x108] sm:$0xff]
    %v1097 = vld [vmem:[#allocation2 + $0x110] sm:$0xff]
    %v1098 = vld [vmem:[#allocation2 + $0x118] sm:$0xff]
    %v1099 = vld [vmem:[#allocation2 + $0x120] sm:$0xff]
    %v1100 = vld [vmem:[#allocation2 + $0x128] sm:$0xff]
    %v1101 = vld [vmem:[#allocation2 + $0x130] sm:$0xff]
    %v1102 = vld [vmem:[#allocation2 + $0x138] sm:$0xff]
    %v1103 = vld [vmem:[#allocation2 + $0x140] sm:$0xff]
    %v1104 = vld [vmem:[#allocation2 + $0x148] sm:$0xff]
    %v1105 = vld [vmem:[#allocation2 + $0x150] sm:$0xff]
    %v1106 = vld [vmem:[#allocation2 + $0x158] sm:$0xff]
    %v1107 = vld [vmem:[#allocation2 + $0x160] sm:$0xff]
    %v1108 = vld [vmem:[#allocation2 + $0x168] sm:$0xff]
    %v1109 = vld [vmem:[#allocation2 + $0x170] sm:$0xff]
    %v1110 = vld [vmem:[#allocation2 + $0x178] sm:$0xff]
    %v1111 = vld [vmem:[#allocation2 + $0x180] sm:$0xff]
    %v1112 = vld [vmem:[#allocation2 + $0x188] sm:$0xff]
    %v1113 = vld [vmem:[#allocation2 + $0x190] sm:$0xff]
    %v1114 = vld [vmem:[#allocation2 + $0x198] sm:$0xff]
    %v1115 = vld [vmem:[#allocation2 + $0x1a0] sm:$0xff]
    %v1116 = vld [vmem:[#allocation2 + $0x1a8] sm:$0xff]
    %v1117 = vld [vmem:[#allocation2 + $0x1b0] sm:$0xff]
    %v1118 = vld [vmem:[#allocation2 + $0x1b8] sm:$0xff]
    %v1119 = vld [vmem:[#allocation2 + $0x1c0] sm:$0xff]
    %v1120 = vld [vmem:[#allocation2 + $0x1c8] sm:$0xff]
    %v1121 = vld [vmem:[#allocation2 + $0x1d0] sm:$0xff]
    %v1122 = vld [vmem:[#allocation2 + $0x1d8] sm:$0xff]
    %v1123 = vld [vmem:[#allocation2 + $0x1e0] sm:$0xff]
    %v1124 = vld [vmem:[#allocation2 + $0x1e8] sm:$0xff]
    %v1125 = vld [vmem:[#allocation2 + $0x1f0] sm:$0xff]
    %v1126 = vld [vmem:[#allocation2 + $0x1f8] sm:$0xff]
    %v1127 = vld [vmem:[#allocation2 + $0x200] sm:$0xff]
    %v1128 = vld [vmem:[#allocation2 + $0x208] sm:$0xff]
    %v1129 = vld [vmem:[#allocation2 + $0x210] sm:$0xff]
    %v1130 = vld [vmem:[#allocation2 + $0x218] sm:$0xff]
    %v1131 = vld [vmem:[#allocation2 + $0x220] sm:$0xff]
    %v1132 = vld [vmem:[#allocation2 + $0x228] sm:$0xff]
    %v1133 = vld [vmem:[#allocation2 + $0x230] sm:$0xff]
    %v1134 = vld [vmem:[#allocation2 + $0x238] sm:$0xff]
    %v1135 = vld [vmem:[#allocation2 + $0x240] sm:$0xff]
    %v1136 = vld [vmem:[#allocation2 + $0x248] sm:$0xff]
    %v1137 = vld [vmem:[#allocation2 + $0x250] sm:$0xff]
    %v1138 = vld [vmem:[#allocation2 + $0x258] sm:$0xff]
    %v1139 = vld [vmem:[#allocation2 + $0x260] sm:$0xff]
    %v1140 = vld [vmem:[#allocation2 + $0x268] sm:$0xff]
    %v1141 = vld [vmem:[#allocation2 + $0x270] sm:$0xff]
    %v1142 = vld [vmem:[#allocation2 + $0x278] sm:$0xff]
    %v1143 = vld [vmem:[#allocation2 + $0x280] sm:$0xff]
    %v1144 = vld [vmem:[#allocation2 + $0x288] sm:$0xff]
    %v1145 = vld [vmem:[#allocation2 + $0x290] sm:$0xff]
    %v1146 = vld [vmem:[#allocation2 + $0x298] sm:$0xff]
    %v1147 = vld [vmem:[#allocation2 + $0x2a0] sm:$0xff]
    %v1148 = vld [vmem:[#allocation2 + $0x2a8] sm:$0xff]
    %v1149 = vld [vmem:[#allocation2 + $0x2b0] sm:$0xff]
    %v1150 = vld [vmem:[#allocation2 + $0x2b8] sm:$0xff]
    %v1151 = vld [vmem:[#allocation2 + $0x2c0] sm:$0xff]
    %v1152 = vld [vmem:[#allocation2 + $0x2c8] sm:$0xff]
    %v1153 = vld [vmem:[#allocation2 + $0x2d0] sm:$0xff]
    %v1154 = vld [vmem:[#allocation2 + $0x2d8] sm:$0xff]
    %v1155 = vld [vmem:[#allocation2 + $0x2e0] sm:$0xff]
    %v1156 = vld [vmem:[#allocation2 + $0x2e8] sm:$0xff]
    %v1157 = vld [vmem:[#allocation2 + $0x2f0] sm:$0xff]
    %v1158 = vld [vmem:[#allocation2 + $0x2f8] sm:$0xff]
    %v1159 = vld [vmem:[#allocation2 + $0x300] sm:$0xff]
    %v1160 = vld [vmem:[#allocation2 + $0x308] sm:$0xff]
    %v1161 = vld [vmem:[#allocation2 + $0x310] sm:$0xff]
    %v1162 = vld [vmem:[#allocation2 + $0x318] sm:$0xff]
    %v1163 = vld [vmem:[#allocation2 + $0x320] sm:$0xff]
    %v1164 = vld [vmem:[#allocation2 + $0x328] sm:$0xff]
    %v1165 = vld [vmem:[#allocation2 + $0x330] sm:$0xff]
    %v1166 = vld [vmem:[#allocation2 + $0x338] sm:$0xff]
    %v1167 = vld [vmem:[#allocation2 + $0x340] sm:$0xff]
    %v1168 = vld [vmem:[#allocation2 + $0x348] sm:$0xff]
    %v1169 = vld [vmem:[#allocation2 + $0x350] sm:$0xff]
    %v1170 = vld [vmem:[#allocation2 + $0x358] sm:$0xff]
    %v1171 = vld [vmem:[#allocation2 + $0x360] sm:$0xff]
    %v1172 = vld [vmem:[#allocation2 + $0x368] sm:$0xff]
    %v1173 = vld [vmem:[#allocation2 + $0x370] sm:$0xff]
    %v1174 = vld [vmem:[#allocation2 + $0x378] sm:$0xff]
    %v1175 = vld [vmem:[#allocation2 + $0x380] sm:$0xff]
    %v1176 = vld [vmem:[#allocation2 + $0x388] sm:$0xff]
    %v1177 = vld [vmem:[#allocation2 + $0x390] sm:$0xff]
    %v1178 = vld [vmem:[#allocation2 + $0x398] sm:$0xff]
    %v1179 = vld [vmem:[#allocation2 + $0x3a0] sm:$0xff]
    %v1180 = vld [vmem:[#allocation2 + $0x3a8] sm:$0xff]
    %v1181 = vld [vmem:[#allocation2 + $0x3b0] sm:$0xff]
    %v1182 = vld [vmem:[#allocation2 + $0x3b8] sm:$0xff]
    %v1183 = vld [vmem:[#allocation2 + $0x3c0] sm:$0xff]
    %v1184 = vld [vmem:[#allocation2 + $0x3c8] sm:$0xff]
    %v1185 = vld [vmem:[#allocation2 + $0x3d0] sm:$0xff]
    %v1186 = vld [vmem:[#allocation2 + $0x3d8] sm:$0xff]
    %v1187 = vld [vmem:[#allocation2 + $0x3e0] sm:$0xff]
    %v1188 = vld [vmem:[#allocation2 + $0x3e8] sm:$0xff]
    %v1189 = vld [vmem:[#allocation2 + $0x3f0] sm:$0xff]
    %v1190 = vld [vmem:[#allocation2 + $0x3f8] sm:$0xff]
    %v1191 = vld [vmem:[#allocation2 + $0x400] sm:$0xff]
    %v1192 = vld [vmem:[#allocation2 + $0x408] sm:$0xff]
    %v1193 = vld [vmem:[#allocation2 + $0x410] sm:$0xff]
    %v1194 = vld [vmem:[#allocation2 + $0x418] sm:$0xff]
    %v1195 = vld [vmem:[#allocation2 + $0x420] sm:$0xff]
    %v1196 = vld [vmem:[#allocation2 + $0x428] sm:$0xff]
    %v1197 = vld [vmem:[#allocation2 + $0x430] sm:$0xff]
    %v1198 = vld [vmem:[#allocation2 + $0x438] sm:$0xff]
    %v1199 = vld [vmem:[#allocation2 + $0x440] sm:$0xff]
    %v1200 = vld [vmem:[#allocation2 + $0x448] sm:$0xff]
    %v1201 = vld [vmem:[#allocation2 + $0x450] sm:$0xff]
    %v1202 = vld [vmem:[#allocation2 + $0x458] sm:$0xff]
    %v1203 = vld [vmem:[#allocation2 + $0x460] sm:$0xff]
    %v1204 = vld [vmem:[#allocation2 + $0x468] sm:$0xff]
    %v1205 = vld [vmem:[#allocation2 + $0x470] sm:$0xff]
    %v1206 = vld [vmem:[#allocation2 + $0x478] sm:$0xff]
    %v1207 = vld [vmem:[#allocation2 + $0x480] sm:$0xff]
    %v1208 = vld [vmem:[#allocation2 + $0x488] sm:$0xff]
    %v1209 = vld [vmem:[#allocation2 + $0x490] sm:$0xff]
    %v1210 = vld [vmem:[#allocation2 + $0x498] sm:$0xff]
    %v1211 = vld [vmem:[#allocation2 + $0x4a0] sm:$0xff]
    %v1212 = vld [vmem:[#allocation2 + $0x4a8] sm:$0xff]
    %v1213 = vld [vmem:[#allocation2 + $0x4b0] sm:$0xff]
    %v1214 = vld [vmem:[#allocation2 + $0x4b8] sm:$0xff]
    %v1215 = vld [vmem:[#allocation2 + $0x4c0] sm:$0xff]
    %v1216 = vld [vmem:[#allocation2 + $0x4c8] sm:$0xff]
    %v1217 = vld [vmem:[#allocation2 + $0x4d0] sm:$0xff]
    %v1218 = vld [vmem:[#allocation2 + $0x4d8] sm:$0xff]
    %v1219 = vld [vmem:[#allocation2 + $0x4e0] sm:$0xff]
    %v1220 = vld [vmem:[#allocation2 + $0x4e8] sm:$0xff]
    %v1221 = vld [vmem:[#allocation2 + $0x4f0] sm:$0xff]
    %v1222 = vld [vmem:[#allocation2 + $0x4f8] sm:$0xff]
    %v1223 = vld [vmem:[#allocation2 + $0x500] sm:$0xff]
    %v1224 = vld [vmem:[#allocation2 + $0x508] sm:$0xff]
    %v1225 = vld [vmem:[#allocation2 + $0x510] sm:$0xff]
    %v1226 = vld [vmem:[#allocation2 + $0x518] sm:$0xff]
    %v1227 = vld [vmem:[#allocation2 + $0x520] sm:$0xff]
    %v1228 = vld [vmem:[#allocation2 + $0x528] sm:$0xff]
    %v1229 = vld [vmem:[#allocation2 + $0x530] sm:$0xff]
    %v1230 = vld [vmem:[#allocation2 + $0x538] sm:$0xff]
    %v1231 = vld [vmem:[#allocation2 + $0x540] sm:$0xff]
    %v1232 = vld [vmem:[#allocation2 + $0x548] sm:$0xff]
    %v1233 = vld [vmem:[#allocation2 + $0x550] sm:$0xff]
    %v1234 = vld [vmem:[#allocation2 + $0x558] sm:$0xff]
    %v1235 = vld [vmem:[#allocation2 + $0x560] sm:$0xff]
    %v1236 = vld [vmem:[#allocation2 + $0x568] sm:$0xff]
    %v1237 = vld [vmem:[#allocation2 + $0x570] sm:$0xff]
    %v1238 = vld [vmem:[#allocation2 + $0x578] sm:$0xff]
    %v1239 = vld [vmem:[#allocation2 + $0x580] sm:$0xff]
    %v1240 = vld [vmem:[#allocation2 + $0x588] sm:$0xff]
    %v1241 = vld [vmem:[#allocation2 + $0x590] sm:$0xff]
    %v1242 = vld [vmem:[#allocation2 + $0x598] sm:$0xff]
    %v1243 = vld [vmem:[#allocation2 + $0x5a0] sm:$0xff]
    %v1244 = vld [vmem:[#allocation2 + $0x5a8] sm:$0xff]
    %v1245 = vld [vmem:[#allocation2 + $0x5b0] sm:$0xff]
    %v1246 = vld [vmem:[#allocation2 + $0x5b8] sm:$0xff]
    %v1247 = vld [vmem:[#allocation2 + $0x5c0] sm:$0xff]
    %v1248 = vld [vmem:[#allocation2 + $0x5c8] sm:$0xff]
    %v1249 = vld [vmem:[#allocation2 + $0x5d0] sm:$0xff]
    %v1250 = vld [vmem:[#allocation2 + $0x5d8] sm:$0xff]
    %v1251 = vld [vmem:[#allocation2 + $0x5e0] sm:$0xff]
    %v1252 = vld [vmem:[#allocation2 + $0x5e8] sm:$0xff]
    %v1253 = vld [vmem:[#allocation2 + $0x5f0] sm:$0xff]
    %v1254 = vld [vmem:[#allocation2 + $0x5f8] sm:$0xff]
    %v1255 = vld [vmem:[#allocation2 + $0x600] sm:$0xff]
    %v1256 = vld [vmem:[#allocation2 + $0x608] sm:$0xff]
    %v1257 = vld [vmem:[#allocation2 + $0x610] sm:$0xff]
    %v1258 = vld [vmem:[#allocation2 + $0x618] sm:$0xff]
    %v1259 = vld [vmem:[#allocation2 + $0x620] sm:$0xff]
    %v1260 = vld [vmem:[#allocation2 + $0x628] sm:$0xff]
    %v1261 = vld [vmem:[#allocation2 + $0x630] sm:$0xff]
    %v1262 = vld [vmem:[#allocation2 + $0x638] sm:$0xff]
    %v1263 = vld [vmem:[#allocation2 + $0x640] sm:$0xff]
    %v1264 = vld [vmem:[#allocation2 + $0x648] sm:$0xff]
    %v1265 = vld [vmem:[#allocation2 + $0x650] sm:$0xff]
    %v1266 = vld [vmem:[#allocation2 + $0x658] sm:$0xff]
    %v1267 = vld [vmem:[#allocation2 + $0x660] sm:$0xff]
    %v1268 = vld [vmem:[#allocation2 + $0x668] sm:$0xff]
    %v1269 = vld [vmem:[#allocation2 + $0x670] sm:$0xff]
    %v1270 = vld [vmem:[#allocation2 + $0x678] sm:$0xff]
    %v1271 = vld [vmem:[#allocation2 + $0x680] sm:$0xff]
    %v1272 = vld [vmem:[#allocation2 + $0x688] sm:$0xff]
    %v1273 = vld [vmem:[#allocation2 + $0x690] sm:$0xff]
    %v1274 = vld [vmem:[#allocation2 + $0x698] sm:$0xff]
    %v1275 = vld [vmem:[#allocation2 + $0x6a0] sm:$0xff]
    %v1276 = vld [vmem:[#allocation2 + $0x6a8] sm:$0xff]
    %v1277 = vld [vmem:[#allocation2 + $0x6b0] sm:$0xff]
    %v1278 = vld [vmem:[#allocation2 + $0x6b8] sm:$0xff]
    %v1279 = vld [vmem:[#allocation2 + $0x6c0] sm:$0xff]
    %v1280 = vld [vmem:[#allocation2 + $0x6c8] sm:$0xff]
    %v1281 = vld [vmem:[#allocation2 + $0x6d0] sm:$0xff]
    %v1282 = vld [vmem:[#allocation2 + $0x6d8] sm:$0xff]
    %v1283 = vld [vmem:[#allocation2 + $0x6e0] sm:$0xff]
    %v1284 = vld [vmem:[#allocation2 + $0x6e8] sm:$0xff]
    %v1285 = vld [vmem:[#allocation2 + $0x6f0] sm:$0xff]
    %v1286 = vld [vmem:[#allocation2 + $0x6f8] sm:$0xff]
    %v1287 = vld [vmem:[#allocation2 + $0x700] sm:$0xff]
    %v1288 = vld [vmem:[#allocation2 + $0x708] sm:$0xff]
    %v1289 = vld [vmem:[#allocation2 + $0x710] sm:$0xff]
    %v1290 = vld [vmem:[#allocation2 + $0x718] sm:$0xff]
    %v1291 = vld [vmem:[#allocation2 + $0x720] sm:$0xff]
    %v1292 = vld [vmem:[#allocation2 + $0x728] sm:$0xff]
    %v1293 = vld [vmem:[#allocation2 + $0x730] sm:$0xff]
    %v1294 = vld [vmem:[#allocation2 + $0x738] sm:$0xff]
    %v1295 = vld [vmem:[#allocation2 + $0x740] sm:$0xff]
    %v1296 = vld [vmem:[#allocation2 + $0x748] sm:$0xff]
    %v1297 = vld [vmem:[#allocation2 + $0x750] sm:$0xff]
    %v1298 = vld [vmem:[#allocation2 + $0x758] sm:$0xff]
    %v1299 = vld [vmem:[#allocation2 + $0x760] sm:$0xff]
    %v1300 = vld [vmem:[#allocation2 + $0x768] sm:$0xff]
    %v1301 = vld [vmem:[#allocation2 + $0x770] sm:$0xff]
    %v1302 = vld [vmem:[#allocation2 + $0x778] sm:$0xff]
    %v1303 = vld [vmem:[#allocation2 + $0x780] sm:$0xff]
    %v1304 = vld [vmem:[#allocation2 + $0x788] sm:$0xff]
    %v1305 = vld [vmem:[#allocation2 + $0x790] sm:$0xff]
    %v1306 = vld [vmem:[#allocation2 + $0x798] sm:$0xff]
    %v1307 = vld [vmem:[#allocation2 + $0x7a0] sm:$0xff]
    %v1308 = vld [vmem:[#allocation2 + $0x7a8] sm:$0xff]
    %v1309 = vld [vmem:[#allocation2 + $0x7b0] sm:$0xff]
    %v1310 = vld [vmem:[#allocation2 + $0x7b8] sm:$0xff]
    %v1311 = vld [vmem:[#allocation2 + $0x7c0] sm:$0xff]
    %v1312 = vld [vmem:[#allocation2 + $0x7c8] sm:$0xff]
    %v1313 = vld [vmem:[#allocation2 + $0x7d0] sm:$0xff]
    %v1314 = vld [vmem:[#allocation2 + $0x7d8] sm:$0xff]
    %v1315 = vld [vmem:[#allocation2 + $0x7e0] sm:$0xff]
    %v1316 = vld [vmem:[#allocation2 + $0x7e8] sm:$0xff]
    %v1317 = vld [vmem:[#allocation2 + $0x7f0] sm:$0xff]
    %v1318 = vld [vmem:[#allocation2 + $0x7f8] sm:$0xff]
    %v1319 = vld [vmem:[%s6] sm:$0x3]
    %v1321 = vlaneseq
    %v1322 = vshrl.u32 %v1321, 7
    %v1323 = vsub.s32 0, %v1322
    %v1324 = vrot.slane %v1319, %v1323
    %v1325 = vlaneseq
    %v1326 = vshrl.u32 %v1325, 7
    %v1327 = vsub.s32 1, %v1326
    %v1328 = vrot.slane %v1319, %v1327
    %1331 = vmatprep.subr.mxu0 %v1094
    %1332 = vmatpush1.msra.mxu0 %v1093
    %1333 = vmatprep.subr.mxu0 %v1092
    %1334 = vmatpush1.msra.mxu0 %v1091
    %1335 = vmatprep.subr.mxu0 %v1090
    %1336 = vmatpush1.msra.mxu0 %v1089
    %1337 = vmatprep.subr.mxu0 %v1088
    %1338 = vmatpush1.msra.mxu0 %v1087
    %1339 = vmatprep.subr.mxu0 %v1086
    %1340 = vmatpush1.msra.mxu0 %v1085
    %1341 = vmatprep.subr.mxu0 %v1084
    %1342 = vmatpush1.msra.mxu0 %v1083
    %1343 = vmatprep.subr.mxu0 %v1082
    %1344 = vmatpush1.msra.mxu0 %v1081
    %1345 = vmatprep.subr.mxu0 %v1080
    %1346 = vmatpush1.msra.mxu0 %v1079
    %1347 = vmatprep.subr.mxu0 %v1078
    %1348 = vmatpush1.msra.mxu0 %v1077
    %1349 = vmatprep.subr.mxu0 %v1076
    %1350 = vmatpush1.msra.mxu0 %v1075
    %1351 = vmatprep.subr.mxu0 %v1074
    %1352 = vmatpush1.msra.mxu0 %v1073
    %1353 = vmatprep.subr.mxu0 %v1072
    %1354 = vmatpush1.msra.mxu0 %v1071
    %1355 = vmatprep.subr.mxu0 %v1070
    %1356 = vmatpush1.msra.mxu0 %v1069
    %1357 = vmatprep.subr.mxu0 %v1068
    %1358 = vmatpush1.msra.mxu0 %v1067
    %1359 = vmatprep.subr.mxu0 %v1066
    %1360 = vmatpush1.msra.mxu0 %v1065
    %1361 = vmatprep.subr.mxu0 %v1064
    %1362 = vmatpush1.msra.mxu0 %v1063
    %1363 = vmatprep.subr.mxu0 %v1126
    %1364 = vmatpush2.msra.mxu0 %v1125
    %1365 = vmatprep.subr.mxu0 %v1124
    %1366 = vmatpush2.msra.mxu0 %v1123
    %1367 = vmatprep.subr.mxu0 %v1122
    %1368 = vmatpush2.msra.mxu0 %v1121
    %1369 = vmatprep.subr.mxu0 %v1120
    %1370 = vmatpush2.msra.mxu0 %v1119
    %1371 = vmatprep.subr.mxu0 %v1118
    %1372 = vmatpush2.msra.mxu0 %v1117
    %1373 = vmatprep.subr.mxu0 %v1116
    %1374 = vmatpush2.msra.mxu0 %v1115
    %1375 = vmatprep.subr.mxu0 %v1114
    %1376 = vmatpush2.msra.mxu0 %v1113
    %1377 = vmatprep.subr.mxu0 %v1112
    %1378 = vmatpush2.msra.mxu0 %v1111
    %1379 = vmatprep.subr.mxu0 %v1110
    %1380 = vmatpush2.msra.mxu0 %v1109
    %1381 = vmatprep.subr.mxu0 %v1108
    %1382 = vmatpush2.msra.mxu0 %v1107
    %1383 = vmatprep.subr.mxu0 %v1106
    %1384 = vmatpush2.msra.mxu0 %v1105
    %1385 = vmatprep.subr.mxu0 %v1104
    %1386 = vmatpush2.msra.mxu0 %v1103
    %1387 = vmatprep.subr.mxu0 %v1102
    %1388 = vmatpush2.msra.mxu0 %v1101
    %1389 = vmatprep.subr.mxu0 %v1100
    %1390 = vmatpush2.msra.mxu0 %v1099
    %1391 = vmatprep.subr.mxu0 %v1098
    %1392 = vmatpush2.msra.mxu0 %v1097
    %1393 = vmatprep.subr.mxu0 %v1096
    %1394 = vmatpush2.msra.mxu0 %v1095
    %1395 = vmatprep.mubr.f32.mxu0 %v1032
    %1396 = vmatmul.mubr.f32.gmra.mxu0 %v1031
    %v1397 = vpop.f32.mrf.mxu0
    %v1398 = vadd.f32 %v1324, %v1397
    %v1399 = vpop.f32.mrf.mxu0
    %v1400 = vadd.f32 %v1328, %v1399
    %1401 = vmatprep.mubr.f32.mxu0 %v1040
    %1402 = vmatmul.mubr.f32.gmra.mxu0 %v1039
    %v1403 = vpop.f32.mrf.mxu0
    %v1404 = vadd.f32 %v1324, %v1403
    %v1405 = vpop.f32.mrf.mxu0
    %v1406 = vadd.f32 %v1328, %v1405
    %1407 = vmatprep.mubr.f32.mxu0 %v1048
    %1408 = vmatmul.mubr.f32.gmra.mxu0 %v1047
    %v1409 = vpop.f32.mrf.mxu0
    %v1410 = vadd.f32 %v1324, %v1409
    %v1411 = vpop.f32.mrf.mxu0
    %v1412 = vadd.f32 %v1328, %v1411
    %1413 = vmatprep.mubr.f32.mxu0 %v1056
    %1414 = vmatmul.mubr.f32.gmra.mxu0 %v1055
    %v1415 = vpop.f32.mrf.mxu0
    %v1416 = vadd.f32 %v1324, %v1415
    %v1417 = vpop.f32.mrf.mxu0
    %v1418 = vadd.f32 %v1328, %v1417
    %1419 = vdwg.mxu0
    %1420 = vmatprep.subr.mxu0 %v1158
    %1421 = vmatpush1.msra.mxu0 %v1157
    %1422 = vmatprep.subr.mxu0 %v1156
    %1423 = vmatpush1.msra.mxu0 %v1155
    %1424 = vmatprep.subr.mxu0 %v1154
    %1425 = vmatpush1.msra.mxu0 %v1153
    %1426 = vmatprep.subr.mxu0 %v1152
    %1427 = vmatpush1.msra.mxu0 %v1151
    %1428 = vmatprep.subr.mxu0 %v1150
    %1429 = vmatpush1.msra.mxu0 %v1149
    %1430 = vmatprep.subr.mxu0 %v1148
    %1431 = vmatpush1.msra.mxu0 %v1147
    %1432 = vmatprep.subr.mxu0 %v1146
    %1433 = vmatpush1.msra.mxu0 %v1145
    %1434 = vmatprep.subr.mxu0 %v1144
    %1435 = vmatpush1.msra.mxu0 %v1143
    %1436 = vmatprep.subr.mxu0 %v1142
    %1437 = vmatpush1.msra.mxu0 %v1141
    %1438 = vmatprep.subr.mxu0 %v1140
    %1439 = vmatpush1.msra.mxu0 %v1139
    %1440 = vmatprep.subr.mxu0 %v1138
    %1441 = vmatpush1.msra.mxu0 %v1137
    %1442 = vmatprep.subr.mxu0 %v1136
    %1443 = vmatpush1.msra.mxu0 %v1135
    %1444 = vmatprep.subr.mxu0 %v1134
    %1445 = vmatpush1.msra.mxu0 %v1133
    %1446 = vmatprep.subr.mxu0 %v1132
    %1447 = vmatpush1.msra.mxu0 %v1131
    %1448 = vmatprep.subr.mxu0 %v1130
    %1449 = vmatpush1.msra.mxu0 %v1129
    %1450 = vmatprep.subr.mxu0 %v1128
    %1451 = vmatpush1.msra.mxu0 %v1127
    %1452 = vmatprep.subr.mxu0 %v1190
    %1453 = vmatpush2.msra.mxu0 %v1189
    %1454 = vmatprep.subr.mxu0 %v1188
    %1455 = vmatpush2.msra.mxu0 %v1187
    %1456 = vmatprep.subr.mxu0 %v1186
    %1457 = vmatpush2.msra.mxu0 %v1185
    %1458 = vmatprep.subr.mxu0 %v1184
    %1459 = vmatpush2.msra.mxu0 %v1183
    %1460 = vmatprep.subr.mxu0 %v1182
    %1461 = vmatpush2.msra.mxu0 %v1181
    %1462 = vmatprep.subr.mxu0 %v1180
    %1463 = vmatpush2.msra.mxu0 %v1179
    %1464 = vmatprep.subr.mxu0 %v1178
    %1465 = vmatpush2.msra.mxu0 %v1177
    %1466 = vmatprep.subr.mxu0 %v1176
    %1467 = vmatpush2.msra.mxu0 %v1175
    %1468 = vmatprep.subr.mxu0 %v1174
    %1469 = vmatpush2.msra.mxu0 %v1173
    %1470 = vmatprep.subr.mxu0 %v1172
    %1471 = vmatpush2.msra.mxu0 %v1171
    %1472 = vmatprep.subr.mxu0 %v1170
    %1473 = vmatpush2.msra.mxu0 %v1169
    %1474 = vmatprep.subr.mxu0 %v1168
    %1475 = vmatpush2.msra.mxu0 %v1167
    %1476 = vmatprep.subr.mxu0 %v1166
    %1477 = vmatpush2.msra.mxu0 %v1165
    %1478 = vmatprep.subr.mxu0 %v1164
    %1479 = vmatpush2.msra.mxu0 %v1163
    %1480 = vmatprep.subr.mxu0 %v1162
    %1481 = vmatpush2.msra.mxu0 %v1161
    %1482 = vmatprep.subr.mxu0 %v1160
    %1483 = vmatpush2.msra.mxu0 %v1159
    %1484 = vmatprep.mubr.f32.mxu0 %v1034
    %1485 = vmatmul.mubr.f32.gmra.mxu0 %v1033
    %v1486 = vpop.f32.mrf.mxu0
    %v1487 = vadd.f32 %v1398, %v1486
    %v1488 = vpop.f32.mrf.mxu0
    %v1489 = vadd.f32 %v1400, %v1488
    %1490 = vmatprep.mubr.f32.mxu0 %v1042
    %1491 = vmatmul.mubr.f32.gmra.mxu0 %v1041
    %v1492 = vpop.f32.mrf.mxu0
    %v1493 = vadd.f32 %v1404, %v1492
    %v1494 = vpop.f32.mrf.mxu0
    %v1495 = vadd.f32 %v1406, %v1494
    %1496 = vmatprep.mubr.f32.mxu0 %v1050
    %1497 = vmatmul.mubr.f32.gmra.mxu0 %v1049
    %v1498 = vpop.f32.mrf.mxu0
    %v1499 = vadd.f32 %v1410, %v1498
    %v1500 = vpop.f32.mrf.mxu0
    %v1501 = vadd.f32 %v1412, %v1500
    %1502 = vmatprep.mubr.f32.mxu0 %v1058
    %1503 = vmatmul.mubr.f32.gmra.mxu0 %v1057
    %v1504 = vpop.f32.mrf.mxu0
    %v1505 = vadd.f32 %v1416, %v1504
    %v1506 = vpop.f32.mrf.mxu0
    %v1507 = vadd.f32 %v1418, %v1506
    %1508 = vdwg.mxu0
    %1509 = vmatprep.subr.mxu0 %v1222
    %1510 = vmatpush1.msra.mxu0 %v1221
    %1511 = vmatprep.subr.mxu0 %v1220
    %1512 = vmatpush1.msra.mxu0 %v1219
    %1513 = vmatprep.subr.mxu0 %v1218
    %1514 = vmatpush1.msra.mxu0 %v1217
    %1515 = vmatprep.subr.mxu0 %v1216
    %1516 = vmatpush1.msra.mxu0 %v1215
    %1517 = vmatprep.subr.mxu0 %v1214
    %1518 = vmatpush1.msra.mxu0 %v1213
    %1519 = vmatprep.subr.mxu0 %v1212
    %1520 = vmatpush1.msra.mxu0 %v1211
    %1521 = vmatprep.subr.mxu0 %v1210
    %1522 = vmatpush1.msra.mxu0 %v1209
    %1523 = vmatprep.subr.mxu0 %v1208
    %1524 = vmatpush1.msra.mxu0 %v1207
    %1525 = vmatprep.subr.mxu0 %v1206
    %1526 = vmatpush1.msra.mxu0 %v1205
    %1527 = vmatprep.subr.mxu0 %v1204
    %1528 = vmatpush1.msra.mxu0 %v1203
    %1529 = vmatprep.subr.mxu0 %v1202
    %1530 = vmatpush1.msra.mxu0 %v1201
    %1531 = vmatprep.subr.mxu0 %v1200
    %1532 = vmatpush1.msra.mxu0 %v1199
    %1533 = vmatprep.subr.mxu0 %v1198
    %1534 = vmatpush1.msra.mxu0 %v1197
    %1535 = vmatprep.subr.mxu0 %v1196
    %1536 = vmatpush1.msra.mxu0 %v1195
    %1537 = vmatprep.subr.mxu0 %v1194
    %1538 = vmatpush1.msra.mxu0 %v1193
    %1539 = vmatprep.subr.mxu0 %v1192
    %1540 = vmatpush1.msra.mxu0 %v1191
    %1541 = vmatprep.subr.mxu0 %v1254
    %1542 = vmatpush2.msra.mxu0 %v1253
    %1543 = vmatprep.subr.mxu0 %v1252
    %1544 = vmatpush2.msra.mxu0 %v1251
    %1545 = vmatprep.subr.mxu0 %v1250
    %1546 = vmatpush2.msra.mxu0 %v1249
    %1547 = vmatprep.subr.mxu0 %v1248
    %1548 = vmatpush2.msra.mxu0 %v1247
    %1549 = vmatprep.subr.mxu0 %v1246
    %1550 = vmatpush2.msra.mxu0 %v1245
    %1551 = vmatprep.subr.mxu0 %v1244
    %1552 = vmatpush2.msra.mxu0 %v1243
    %1553 = vmatprep.subr.mxu0 %v1242
    %1554 = vmatpush2.msra.mxu0 %v1241
    %1555 = vmatprep.subr.mxu0 %v1240
    %1556 = vmatpush2.msra.mxu0 %v1239
    %1557 = vmatprep.subr.mxu0 %v1238
    %1558 = vmatpush2.msra.mxu0 %v1237
    %1559 = vmatprep.subr.mxu0 %v1236
    %1560 = vmatpush2.msra.mxu0 %v1235
    %1561 = vmatprep.subr.mxu0 %v1234
    %1562 = vmatpush2.msra.mxu0 %v1233
    %1563 = vmatprep.subr.mxu0 %v1232
    %1564 = vmatpush2.msra.mxu0 %v1231
    %1565 = vmatprep.subr.mxu0 %v1230
    %1566 = vmatpush2.msra.mxu0 %v1229
    %1567 = vmatprep.subr.mxu0 %v1228
    %1568 = vmatpush2.msra.mxu0 %v1227
    %1569 = vmatprep.subr.mxu0 %v1226
    %1570 = vmatpush2.msra.mxu0 %v1225
    %1571 = vmatprep.subr.mxu0 %v1224
    %1572 = vmatpush2.msra.mxu0 %v1223
    %1573 = vmatprep.mubr.f32.mxu0 %v1036
    %1574 = vmatmul.mubr.f32.gmra.mxu0 %v1035
    %v1575 = vpop.f32.mrf.mxu0
    %v1576 = vadd.f32 %v1487, %v1575
    %v1577 = vpop.f32.mrf.mxu0
    %v1578 = vadd.f32 %v1489, %v1577
    %1579 = vmatprep.mubr.f32.mxu0 %v1044
    %1580 = vmatmul.mubr.f32.gmra.mxu0 %v1043
    %v1581 = vpop.f32.mrf.mxu0
    %v1582 = vadd.f32 %v1493, %v1581
    %v1583 = vpop.f32.mrf.mxu0
    %v1584 = vadd.f32 %v1495, %v1583
    %1585 = vmatprep.mubr.f32.mxu0 %v1052
    %1586 = vmatmul.mubr.f32.gmra.mxu0 %v1051
    %v1587 = vpop.f32.mrf.mxu0
    %v1588 = vadd.f32 %v1499, %v1587
    %v1589 = vpop.f32.mrf.mxu0
    %v1590 = vadd.f32 %v1501, %v1589
    %1591 = vmatprep.mubr.f32.mxu0 %v1060
    %1592 = vmatmul.mubr.f32.gmra.mxu0 %v1059
    %v1593 = vpop.f32.mrf.mxu0
    %v1594 = vadd.f32 %v1505, %v1593
    %v1595 = vpop.f32.mrf.mxu0
    %v1596 = vadd.f32 %v1507, %v1595
    %1597 = vdwg.mxu0
    %1598 = vmatprep.subr.mxu0 %v1286
    %1599 = vmatpush1.msra.mxu0 %v1285
    %1600 = vmatprep.subr.mxu0 %v1284
    %1601 = vmatpush1.msra.mxu0 %v1283
    %1602 = vmatprep.subr.mxu0 %v1282
    %1603 = vmatpush1.msra.mxu0 %v1281
    %1604 = vmatprep.subr.mxu0 %v1280
    %1605 = vmatpush1.msra.mxu0 %v1279
    %1606 = vmatprep.subr.mxu0 %v1278
    %1607 = vmatpush1.msra.mxu0 %v1277
    %1608 = vmatprep.subr.mxu0 %v1276
    %1609 = vmatpush1.msra.mxu0 %v1275
    %1610 = vmatprep.subr.mxu0 %v1274
    %1611 = vmatpush1.msra.mxu0 %v1273
    %1612 = vmatprep.subr.mxu0 %v1272
    %1613 = vmatpush1.msra.mxu0 %v1271
    %1614 = vmatprep.subr.mxu0 %v1270
    %1615 = vmatpush1.msra.mxu0 %v1269
    %1616 = vmatprep.subr.mxu0 %v1268
    %1617 = vmatpush1.msra.mxu0 %v1267
    %1618 = vmatprep.subr.mxu0 %v1266
    %1619 = vmatpush1.msra.mxu0 %v1265
    %1620 = vmatprep.subr.mxu0 %v1264
    %1621 = vmatpush1.msra.mxu0 %v1263
    %1622 = vmatprep.subr.mxu0 %v1262
    %1623 = vmatpush1.msra.mxu0 %v1261
    %1624 = vmatprep.subr.mxu0 %v1260
    %1625 = vmatpush1.msra.mxu0 %v1259
    %1626 = vmatprep.subr.mxu0 %v1258
    %1627 = vmatpush1.msra.mxu0 %v1257
    %1628 = vmatprep.subr.mxu0 %v1256
    %1629 = vmatpush1.msra.mxu0 %v1255
    %1630 = vmatprep.subr.mxu0 %v1318
    %1631 = vmatpush2.msra.mxu0 %v1317
    %1632 = vmatprep.subr.mxu0 %v1316
    %1633 = vmatpush2.msra.mxu0 %v1315
    %1634 = vmatprep.subr.mxu0 %v1314
    %1635 = vmatpush2.msra.mxu0 %v1313
    %1636 = vmatprep.subr.mxu0 %v1312
    %1637 = vmatpush2.msra.mxu0 %v1311
    %1638 = vmatprep.subr.mxu0 %v1310
    %1639 = vmatpush2.msra.mxu0 %v1309
    %1640 = vmatprep.subr.mxu0 %v1308
    %1641 = vmatpush2.msra.mxu0 %v1307
    %1642 = vmatprep.subr.mxu0 %v1306
    %1643 = vmatpush2.msra.mxu0 %v1305
    %1644 = vmatprep.subr.mxu0 %v1304
    %1645 = vmatpush2.msra.mxu0 %v1303
    %1646 = vmatprep.subr.mxu0 %v1302
    %1647 = vmatpush2.msra.mxu0 %v1301
    %1648 = vmatprep.subr.mxu0 %v1300
    %1649 = vmatpush2.msra.mxu0 %v1299
    %1650 = vmatprep.subr.mxu0 %v1298
    %1651 = vmatpush2.msra.mxu0 %v1297
    %1652 = vmatprep.subr.mxu0 %v1296
    %1653 = vmatpush2.msra.mxu0 %v1295
    %1654 = vmatprep.subr.mxu0 %v1294
    %1655 = vmatpush2.msra.mxu0 %v1293
    %1656 = vmatprep.subr.mxu0 %v1292
    %1657 = vmatpush2.msra.mxu0 %v1291
    %1658 = vmatprep.subr.mxu0 %v1290
    %1659 = vmatpush2.msra.mxu0 %v1289
    %1660 = vmatprep.subr.mxu0 %v1288
    %1661 = vmatpush2.msra.mxu0 %v1287
    %1662 = vmatprep.mubr.f32.mxu0 %v1038
    %1663 = vmatmul.mubr.f32.gmra.mxu0 %v1037
    %v1664 = vpop.f32.mrf.mxu0
    %v1665 = vadd.f32 %v1576, %v1664
    %v1666 = vpop.f32.mrf.mxu0
    %v1667 = vadd.f32 %v1578, %v1666
    %1668 = vmatprep.mubr.f32.mxu0 %v1046
    %1669 = vmatmul.mubr.f32.gmra.mxu0 %v1045
    %v1670 = vpop.f32.mrf.mxu0
    %v1671 = vadd.f32 %v1582, %v1670
    %v1672 = vpop.f32.mrf.mxu0
    %v1673 = vadd.f32 %v1584, %v1672
    %1674 = vmatprep.mubr.f32.mxu0 %v1054
    %1675 = vmatmul.mubr.f32.gmra.mxu0 %v1053
    %v1676 = vpop.f32.mrf.mxu0
    %v1677 = vadd.f32 %v1588, %v1676
    %v1678 = vpop.f32.mrf.mxu0
    %v1679 = vadd.f32 %v1590, %v1678
    %1680 = vmatprep.mubr.f32.mxu0 %v1062
    %1681 = vmatmul.mubr.f32.gmra.mxu0 %v1061
    %v1682 = vpop.f32.mrf.mxu0
    %v1683 = vadd.f32 %v1594, %v1682
    %v1684 = vpop.f32.mrf.mxu0
    %v1685 = vadd.f32 %v1596, %v1684
    %1686 = vdwg.mxu0
    %v1687 = vadd.f32 %v40, %v1665
    %v1688 = vadd.f32 %v41, %v1667
    %v1689 = vadd.f32 %v42, %v1671
    %v1690 = vadd.f32 %v43, %v1673
    %v1691 = vadd.f32 %v44, %v1677
    %v1692 = vadd.f32 %v45, %v1679
    %v1693 = vadd.f32 %v46, %v1683
    %v1694 = vadd.f32 %v47, %v1685
    %1695 = vst [vmem:[%s7] sm:$0xff] %v1687
    %1696 = vst [vmem:[%s7 + $0x8] sm:$0xff] %v1688
    %1697 = vst [vmem:[%s7 + $0x10] sm:$0xff] %v1689
    %1698 = vst [vmem:[%s7 + $0x18] sm:$0xff] %v1690
    %1699 = vst [vmem:[%s7 + $0x20] sm:$0xff] %v1691
    %1700 = vst [vmem:[%s7 + $0x28] sm:$0xff] %v1692
    %1701 = vst [vmem:[%s7 + $0x30] sm:$0xff] %v1693
    %1702 = vst [vmem:[%s7 + $0x38] sm:$0xff] %v1694
    // Predicated region
    $region34: #{_lambda_.5} parent=1 // pred_check
      _
    $region35: #{_lambda_.5} parent=1 // pred_check_branch
      %1704 = sbr.rel (0) target = $region37
    $region36: #{_lambda_.5} parent=1 // pred_region
      _
    $region37: #{_lambda_.5} parent=1 // pred_fallthru
      _
    // Predicated region
    $region38: #{_lambda_.5} parent=1 // pred_check
      _
    $region39: #{_lambda_.5} parent=1 // pred_check_branch
      %1706 = sbr.rel (0) target = $region41
    $region40: #{_lambda_.5} parent=1 // pred_region
      _
    $region41: #{_lambda_.5} parent=1 // pred_fallthru
      _
    %1707 = vsyncpa [#allocation3], 1

// kernel: _lambda_.6
$region0: #{_lambda_.6}
  #allocation0 [shape = 'u32[]', space=smem, size = 0x4, offset = 0x4, fixed_abs, tag = 'smem constant byte address 0x4 - core index']
  #allocation1 [shape = 'u32[144,128]{1,0:T(1,128)}', space=vmem, size = 0x12000, scoped, tag = 'internal scratch']
  %s0 = inlined_call_operand.vmem [shape: f32[2,16,256], index: 0, kind: input, shape index: {}]
  %s1 = inlined_call_operand.vmem [shape: f32[1,256], index: 1, kind: input, shape index: {}]
  %s2 = inlined_call_operand.vmem [shape: f32[1,256], index: 2, kind: input, shape index: {}]
  %s3 = inlined_call_operand.vmem [shape: f32[256,768], index: 3, kind: input, shape index: {}]
  %s4 = inlined_call_operand.vmem [shape: f32[1,768], index: 4, kind: input, shape index: {}]
  %s5 = inlined_call_operand.vmem [shape: f32[256,256], index: 5, kind: input, shape index: {}]
  %s6 = inlined_call_operand.vmem [shape: f32[1,256], index: 6, kind: input, shape index: {}]
  %s7 = inlined_call_operand.vmem [shape: f32[2,16,256], index: 7, kind: output, shape index: {}]
  %s8 = sld [smem:[#allocation0]]
  $region61: #{_lambda_.6} parent=0
    _
  %s10 = ssub.s32 1, %s8
  %s11 = scalar_select 0, %s10, %s8
  loop: start=0, step=1, limit=4
  $region2: #{_lambda_.6} parent=0 // loop_pre_header
    _
  $region3: #{_lambda_.6} parent=0 // loop_header
    %s13 = sphi 0, %s17
    %p14 = scmp.ge.s32.totalorder %s13, 4
    %s23 = sphi 0, %s25
    %s26 = sphi 0, %s23
    %s27 = sphi 0, %s26
    %s43 = sphi 0, %s27
    %s47 = sphi 0, %s47
    %s49 = sphi 0, %s47
    %s50 = sphi 0, %s49
    %s64 = sphi 0, %s50
    %s68 = sphi 0, %s68
    %s70 = sphi 0, %s68
    %s71 = sphi 0, %s70
    %s85 = sphi 0, %s71
    %s89 = sphi 0, %s89
    %s91 = sphi 0, %s89
    %s92 = sphi 0, %s91
    %s106 = sphi 0, %s92
    %s110 = sphi 0, %s110
    %s112 = sphi 0, %s110
    %s113 = sphi 0, %s112
    %s127 = sphi 0, %s113
    %s131 = sphi 0, %s131
    %s133 = sphi 0, %s131
    %s134 = sphi 0, %s133
    %s148 = sphi 0, %s134
    %s152 = sphi 0, %s152
    %s154 = sphi 0, %s152
    %s155 = sphi 0, %s154
    %s169 = sphi 0, %s155
    %s175 = sphi 0, %s177
    %s178 = sphi 0, %s175
    %s179 = sphi 0, %s178
    %s195 = sphi 0, %s179
  $region4: #{_lambda_.6} parent=0 // loop_header_branch
    %16 = sbr.rel (%p14) target = $region8
  $region5: #{_lambda_.6} parent=0 // loop_body
    %s18 = ssub.s32 %s13, 1
    %s19 = ssub.s32 %s13, 2
    %s20 = sadd.s32 %s13, 1
    %s21 = ssub.s32 %s13, %s20
    %p22 = scmp.eq.s32.totalorder %s21, 0
    %s24 = sadd.s32 %s23, 1
    %s25 = scalar_select %p22, %s23, %s24
    %p28 = pneg %p22
    %p29 = scmp.eq.s32.totalorder %s13, 1
    %p30 = por %p28, %p29
    %p31 = scmp.ne.s32.totalorder %s23, %s26
    %p32 = scmp.eq.s32.totalorder %s13, 0
    %p33 = por %p31, %p32
    %p34 = scmp.ne.s32.totalorder %s23, %s26
    %p35 = scmp.eq.s32.totalorder %s18, 1
    %p36 = por %p34, %p35
    %p37 = scmp.ne.s32.totalorder %s26, %s27
    %p38 = scmp.eq.s32.totalorder %s18, 0
    %p39 = por %p37, %p38
    %p40 = scmp.ne.s32.totalorder %s26, %s27
    %p41 = scmp.eq.s32.totalorder %s19, 1
    %p42 = por %p40, %p41
    %p44 = scmp.ne.s32.totalorder %s27, %s43
    %p45 = scmp.eq.s32.totalorder %s19, 0
    %p46 = por %p44, %p45
    %s48 = sadd.s32 %s47, 1
    %p51 = scmp.eq.s32.totalorder %s13, 1
    %p52 = scmp.ne.s32.totalorder %s47, %s49
    %p53 = scmp.eq.s32.totalorder %s13, 0
    %p54 = por %p52, %p53
    %p55 = scmp.ne.s32.totalorder %s47, %s49
    %p56 = scmp.eq.s32.totalorder %s18, 1
    %p57 = por %p55, %p56
    %p58 = scmp.ne.s32.totalorder %s49, %s50
    %p59 = scmp.eq.s32.totalorder %s18, 0
    %p60 = por %p58, %p59
    %p61 = scmp.ne.s32.totalorder %s49, %s50
    %p62 = scmp.eq.s32.totalorder %s19, 1
    %p63 = por %p61, %p62
    %p65 = scmp.ne.s32.totalorder %s50, %s64
    %p66 = scmp.eq.s32.totalorder %s19, 0
    %p67 = por %p65, %p66
    %s69 = sadd.s32 %s68, 1
    %p72 = scmp.eq.s32.totalorder %s13, 1
    %p73 = scmp.ne.s32.totalorder %s68, %s70
    %p74 = scmp.eq.s32.totalorder %s13, 0
    %p75 = por %p73, %p74
    %p76 = scmp.ne.s32.totalorder %s68, %s70
    %p77 = scmp.eq.s32.totalorder %s18, 1
    %p78 = por %p76, %p77
    %p79 = scmp.ne.s32.totalorder %s70, %s71
    %p80 = scmp.eq.s32.totalorder %s18, 0
    %p81 = por %p79, %p80
    %p82 = scmp.ne.s32.totalorder %s70, %s71
    %p83 = scmp.eq.s32.totalorder %s19, 1
    %p84 = por %p82, %p83
    %p86 = scmp.ne.s32.totalorder %s71, %s85
    %p87 = scmp.eq.s32.totalorder %s19, 0
    %p88 = por %p86, %p87
    %s90 = sadd.s32 %s89, 1
    %p93 = scmp.eq.s32.totalorder %s13, 1
    %p94 = scmp.ne.s32.totalorder %s89, %s91
    %p95 = scmp.eq.s32.totalorder %s13, 0
    %p96 = por %p94, %p95
    %p97 = scmp.ne.s32.totalorder %s89, %s91
    %p98 = scmp.eq.s32.totalorder %s18, 1
    %p99 = por %p97, %p98
    %p100 = scmp.ne.s32.totalorder %s91, %s92
    %p101 = scmp.eq.s32.totalorder %s18, 0
    %p102 = por %p100, %p101
    %p103 = scmp.ne.s32.totalorder %s91, %s92
    %p104 = scmp.eq.s32.totalorder %s19, 1
    %p105 = por %p103, %p104
    %p107 = scmp.ne.s32.totalorder %s92, %s106
    %p108 = scmp.eq.s32.totalorder %s19, 0
    %p109 = por %p107, %p108
    %s111 = sadd.s32 %s110, 1
    %p114 = scmp.eq.s32.totalorder %s13, 1
    %p115 = scmp.ne.s32.totalorder %s110, %s112
    %p116 = scmp.eq.s32.totalorder %s13, 0
    %p117 = por %p115, %p116
    %p118 = scmp.ne.s32.totalorder %s110, %s112
    %p119 = scmp.eq.s32.totalorder %s18, 1
    %p120 = por %p118, %p119
    %p121 = scmp.ne.s32.totalorder %s112, %s113
    %p122 = scmp.eq.s32.totalorder %s18, 0
    %p123 = por %p121, %p122
    %p124 = scmp.ne.s32.totalorder %s112, %s113
    %p125 = scmp.eq.s32.totalorder %s19, 1
    %p126 = por %p124, %p125
    %p128 = scmp.ne.s32.totalorder %s113, %s127
    %p129 = scmp.eq.s32.totalorder %s19, 0
    %p130 = por %p128, %p129
    %s132 = sadd.s32 %s131, 1
    %p135 = scmp.eq.s32.totalorder %s13, 1
    %p136 = scmp.ne.s32.totalorder %s131, %s133
    %p137 = scmp.eq.s32.totalorder %s13, 0
    %p138 = por %p136, %p137
    %p139 = scmp.ne.s32.totalorder %s131, %s133
    %p140 = scmp.eq.s32.totalorder %s18, 1
    %p141 = por %p139, %p140
    %p142 = scmp.ne.s32.totalorder %s133, %s134
    %p143 = scmp.eq.s32.totalorder %s18, 0
    %p144 = por %p142, %p143
    %p145 = scmp.ne.s32.totalorder %s133, %s134
    %p146 = scmp.eq.s32.totalorder %s19, 1
    %p147 = por %p145, %p146
    %p149 = scmp.ne.s32.totalorder %s134, %s148
    %p150 = scmp.eq.s32.totalorder %s19, 0
    %p151 = por %p149, %p150
    %s153 = sadd.s32 %s152, 1
    %p156 = scmp.eq.s32.totalorder %s13, 1
    %p157 = scmp.ne.s32.totalorder %s152, %s154
    %p158 = scmp.eq.s32.totalorder %s13, 0
    %p159 = por %p157, %p158
    %p160 = scmp.ne.s32.totalorder %s152, %s154
    %p161 = scmp.eq.s32.totalorder %s18, 1
    %p162 = por %p160, %p161
    %p163 = scmp.ne.s32.totalorder %s154, %s155
    %p164 = scmp.eq.s32.totalorder %s18, 0
    %p165 = por %p163, %p164
    %p166 = scmp.ne.s32.totalorder %s154, %s155
    %p167 = scmp.eq.s32.totalorder %s19, 1
    %p168 = por %p166, %p167
    %p170 = scmp.ne.s32.totalorder %s155, %s169
    %p171 = scmp.eq.s32.totalorder %s19, 0
    %p172 = por %p170, %p171
    %s173 = ssub.s32 %s13, %s20
    %p174 = scmp.eq.s32.totalorder %s173, 0
    %s176 = sadd.s32 %s175, 1
    %s177 = scalar_select %p174, %s175, %s176
    %p180 = pneg %p174
    %p181 = scmp.eq.s32.totalorder %s13, 1
    %p182 = por %p180, %p181
    %p183 = scmp.ne.s32.totalorder %s175, %s178
    %p184 = scmp.eq.s32.totalorder %s13, 0
    %p185 = por %p183, %p184
    %p186 = scmp.ne.s32.totalorder %s175, %s178
    %p187 = scmp.eq.s32.totalorder %s18, 1
    %p188 = por %p186, %p187
    %p189 = scmp.ne.s32.totalorder %s178, %s179
    %p190 = scmp.eq.s32.totalorder %s18, 0
    %p191 = por %p189, %p190
    %p192 = scmp.ne.s32.totalorder %s178, %s179
    %p193 = scmp.eq.s32.totalorder %s19, 1
    %p194 = por %p192, %p193
    %p196 = scmp.ne.s32.totalorder %s179, %s195
    %p197 = scmp.eq.s32.totalorder %s19, 0
    %p198 = por %p196, %p197
    %p199 = scmp.le.s32.totalorder 1, %s13
    %p200 = scmp.lt.s32.totalorder %s13, 3
    %p201 = pnand %p199, %p200
    %p202 = pneg %p201
    // Predicated region
    $region9: #{_lambda_.6} parent=5 // pred_check
      _
    $region10: #{_lambda_.6} parent=5 // pred_check_branch
      %204 = sbr.rel (%p201) target = $region12
    $region11: #{_lambda_.6} parent=5 // pred_region
      %s205 = ssub.s32 %s13, 1
      // Predicated region
      $region13: #{_lambda_.6} parent=11 // pred_check
        %p206 = pneg %p60
      $region14: #{_lambda_.6} parent=11 // pred_check_branch
        %208 = sbr.rel (%p206) target = $region16
      $region15: #{_lambda_.6} parent=11 // pred_region
        _
      $region16: #{_lambda_.6} parent=11 // pred_fallthru
        _
      // Predicated region
      $region17: #{_lambda_.6} parent=11 // pred_check
        %p209 = pneg %p81
      $region18: #{_lambda_.6} parent=11 // pred_check_branch
        %211 = sbr.rel (%p209) target = $region20
      $region19: #{_lambda_.6} parent=11 // pred_region
        _
      $region20: #{_lambda_.6} parent=11 // pred_fallthru
        _
      // Predicated region
      $region21: #{_lambda_.6} parent=11 // pred_check
        %p212 = pneg %p102
      $region22: #{_lambda_.6} parent=11 // pred_check_branch
        %214 = sbr.rel (%p212) target = $region24
      $region23: #{_lambda_.6} parent=11 // pred_region
        _
      $region24: #{_lambda_.6} parent=11 // pred_fallthru
        _
      // Predicated region
      $region25: #{_lambda_.6} parent=11 // pred_check
        %p215 = pneg %p123
      $region26: #{_lambda_.6} parent=11 // pred_check_branch
        %217 = sbr.rel (%p215) target = $region28
      $region27: #{_lambda_.6} parent=11 // pred_region
        _
      $region28: #{_lambda_.6} parent=11 // pred_fallthru
        _
      // Predicated region
      $region29: #{_lambda_.6} parent=11 // pred_check
        %p218 = pneg %p144
      $region30: #{_lambda_.6} parent=11 // pred_check_branch
        %220 = sbr.rel (%p218) target = $region32
      $region31: #{_lambda_.6} parent=11 // pred_region
        _
      $region32: #{_lambda_.6} parent=11 // pred_fallthru
        _
      // Predicated region
      $region33: #{_lambda_.6} parent=11 // pred_check
        %p221 = pneg %p165
      $region34: #{_lambda_.6} parent=11 // pred_check_branch
        %223 = sbr.rel (%p221) target = $region36
      $region35: #{_lambda_.6} parent=11 // pred_region
        _
      $region36: #{_lambda_.6} parent=11 // pred_fallthru
        _
    $region12: #{_lambda_.6} parent=5 // pred_fallthru
      _
    %p224 = scmp.lt.s32.totalorder %s13, 2
    // Predicated region
    $region37: #{_lambda_.6} parent=5 // pred_check
      %p225 = pneg %p224
    $region38: #{_lambda_.6} parent=5 // pred_check_branch
      %227 = sbr.rel (%p225) target = $region40
    $region39: #{_lambda_.6} parent=5 // pred_region
      // Predicated region
      $region41: #{_lambda_.6} parent=39 // pred_check
        %p228 = pneg %p33
      $region42: #{_lambda_.6} parent=39 // pred_check_branch
        %230 = sbr.rel (%p228) target = $region44
      $region43: #{_lambda_.6} parent=39 // pred_region
        %p231 = scmp.lt.s32.totalorder %s13, 1
        %s232 = scalar_select %p231, %s13, 1
        %s233 = smul.addr %s232, 4
        %s234 = smul.addr %s233, 8
        %s235 = scalar_lea.vmem %s0, %s234
      $region44: #{_lambda_.6} parent=39 // pred_fallthru
        _
    $region40: #{_lambda_.6} parent=5 // pred_fallthru
      _
    %p236 = scmp.le.s32.totalorder 1, %s13
    %p237 = scmp.lt.s32.totalorder %s13, 3
    %p238 = pnand %p236, %p237
    %p239 = pneg %p238
    // Predicated region
    $region45: #{_lambda_.6} parent=5 // pred_check
      _
    $region46: #{_lambda_.6} parent=5 // pred_check_branch
      %241 = sbr.rel (%p238) target = $region48
    $region47: #{_lambda_.6} parent=5 // pred_region
      %s242 = ssub.s32 %s13, 1
      %p243 = scmp.lt.s32.totalorder %s18, 1
      %s244 = scalar_select %p243, %s18, 1
      %s245 = smul.addr %s244, 4
      %s246 = smul.addr %s245, 8
      %s247 = scalar_lea.vmem %s0, %s246
      %p248 = pneg %p39
      %p249 = pneg %p36
      %p250 = pneg %p60
      %p251 = pneg %p57
      %p252 = pneg %p81
      %p253 = pneg %p78
      %p254 = pneg %p102
      %p255 = pneg %p99
      %p256 = pneg %p123
      %p257 = pneg %p120
      %p258 = pneg %p144
      %p259 = pneg %p141
      %p260 = pneg %p165
      %p261 = pneg %p162
      %p262 = pneg %p191
      %p263 = pneg %p188
      %p264 = scmp.lt.s32.totalorder %s18, 1
      %s265 = scalar_select %p264, %s18, 1
      %s266 = smul.addr %s265, 4
      %s267 = smul.addr %s266, 8
      %s268 = scalar_lea.vmem %s7, %s267
      %p269 = scmp.lt.s32.totalorder %s18, 1
      %s270 = scalar_select %p269, %s18, 1
      %s271 = smul.addr %s270, 4
      %s272 = smul.addr %s271, 8
      %s273 = scalar_lea.vmem %s0, %s272
      %p274 = scmp.lt.s32.totalorder %s18, 1
      %s275 = scalar_select %p274, %s18, 1
      %s276 = smul.addr %s275, 4
      %s277 = smul.addr %s276, 8
      %s278 = scalar_lea.vmem %s7, %s277
      %v279 = vld [vmem:[%s273] sm:$0xff]
      %v280 = vld [vmem:[%s273 + $0x8] sm:$0xff]
      %v281 = vld [vmem:[%s273 + $0x10] sm:$0xff]
      %v282 = vld [vmem:[%s273 + $0x18] sm:$0xff]
      %v283 = vld [vmem:[%s1] sm:$0x3]
      %v284 = vld [vmem:[%s2] sm:$0x3]
      %v285 = vadd.f32 %v279, %v280
      %286 = vadd.xlane.f32.xlu0 %v285
      %v287 = vpop.xlane.xlu0 %286
      %v288 = vadd.f32 %v281, %v282
      %289 = vadd.xlane.f32.xlu0 %v288
      %v290 = vpop.xlane.xlu0 %289
      %v291 = vrcp.pop 256.0
      %v292 = vmul.f32 %v287, %v291
      %v293 = vmul.f32 %v290, %v291
      %v294 = vsub.f32 %v279, %v292
      %v295 = vsub.f32 %v280, %v292
      %v296 = vsub.f32 %v281, %v293
      %v297 = vsub.f32 %v282, %v293
      %v298 = vmul.f32 %v294, %v294
      %v299 = vmul.f32 %v295, %v295
      %v300 = vmul.f32 %v296, %v296
      %v301 = vmul.f32 %v297, %v297
      %v302 = vadd.f32 %v298, %v299
      %303 = vadd.xlane.f32.xlu0 %v302
      %v304 = vpop.xlane.xlu0 %303
      %v305 = vadd.f32 %v300, %v301
      %306 = vadd.xlane.f32.xlu0 %v305
      %v307 = vpop.xlane.xlu0 %306
      %v308 = vmul.f32 %v304, %v291
      %v309 = vmul.f32 %v307, %v291
      %v310 = vadd.f32 %v308, 1e-05
      %v311 = vadd.f32 %v309, 1e-05
      %v312 = vrsqrt.pop %v310
      %v313 = vrsqrt.pop %v311
      %v314 = vmul.f32 %v294, %v312
      %v315 = vmul.f32 %v295, %v312
      %v316 = vmul.f32 %v296, %v313
      %v317 = vmul.f32 %v297, %v313
      %v319 = vlaneseq
      %v320 = vshrl.u32 %v319, 7
      %v321 = vsub.s32 0, %v320
      %v322 = vrot.slane %v283, %v321
      %v323 = vlaneseq
      %v324 = vshrl.u32 %v323, 7
      %v325 = vsub.s32 1, %v324
      %v326 = vrot.slane %v283, %v325
      %v329 = vmul.f32 %v314, %v322
      %v330 = vmul.f32 %v315, %v326
      %v331 = vmul.f32 %v316, %v322
      %v332 = vmul.f32 %v317, %v326
      %v334 = vlaneseq
      %v335 = vshrl.u32 %v334, 7
      %v336 = vsub.s32 0, %v335
      %v337 = vrot.slane %v284, %v336
      %v338 = vlaneseq
      %v339 = vshrl.u32 %v338, 7
      %v340 = vsub.s32 1, %v339
      %v341 = vrot.slane %v284, %v340
      %v344 = vadd.f32 %v329, %v337
      %v345 = vadd.f32 %v330, %v341
      %v346 = vadd.f32 %v331, %v337
      %v347 = vadd.f32 %v332, %v341
      %v348 = vld [vmem:[%s3] sm:$0xff]
      %v349 = vld [vmem:[%s3 + $0x8] sm:$0xff]
      %v350 = vld [vmem:[%s3 + $0x10] sm:$0xff]
      %v351 = vld [vmem:[%s3 + $0x18] sm:$0xff]
      %v352 = vld [vmem:[%s3 + $0x20] sm:$0xff]
      %v353 = vld [vmem:[%s3 + $0x28] sm:$0xff]
      %v354 = vld [vmem:[%s3 + $0x30] sm:$0xff]
      %v355 = vld [vmem:[%s3 + $0x38] sm:$0xff]
      %v356 = vld [vmem:[%s3 + $0x40] sm:$0xff]
      %v357 = vld [vmem:[%s3 + $0x48] sm:$0xff]
      %v358 = vld [vmem:[%s3 + $0x50] sm:$0xff]
      %v359 = vld [vmem:[%s3 + $0x58] sm:$0xff]
      %v360 = vld [vmem:[%s3 + $0x60] sm:$0xff]
      %v361 = vld [vmem:[%s3 + $0x68] sm:$0xff]
      %v362 = vld [vmem:[%s3 + $0x70] sm:$0xff]
      %v363 = vld [vmem:[%s3 + $0x78] sm:$0xff]
      %v364 = vld [vmem:[%s3 + $0x80] sm:$0xff]
      %v365 = vld [vmem:[%s3 + $0x88] sm:$0xff]
      %v366 = vld [vmem:[%s3 + $0x90] sm:$0xff]
      %v367 = vld [vmem:[%s3 + $0x98] sm:$0xff]
      %v368 = vld [vmem:[%s3 + $0xa0] sm:$0xff]
      %v369 = vld [vmem:[%s3 + $0xa8] sm:$0xff]
      %v370 = vld [vmem:[%s3 + $0xb0] sm:$0xff]
      %v371 = vld [vmem:[%s3 + $0xb8] sm:$0xff]
      %v372 = vld [vmem:[%s3 + $0xc0] sm:$0xff]
      %v373 = vld [vmem:[%s3 + $0xc8] sm:$0xff]
      %v374 = vld [vmem:[%s3 + $0xd0] sm:$0xff]
      %v375 = vld [vmem:[%s3 + $0xd8] sm:$0xff]
      %v376 = vld [vmem:[%s3 + $0xe0] sm:$0xff]
      %v377 = vld [vmem:[%s3 + $0xe8] sm:$0xff]
      %v378 = vld [vmem:[%s3 + $0xf0] sm:$0xff]
      %v379 = vld [vmem:[%s3 + $0xf8] sm:$0xff]
      %v380 = vld [vmem:[%s3 + $0x100] sm:$0xff]
      %v381 = vld [vmem:[%s3 + $0x108] sm:$0xff]
      %v382 = vld [vmem:[%s3 + $0x110] sm:$0xff]
      %v383 = vld [vmem:[%s3 + $0x118] sm:$0xff]
      %v384 = vld [vmem:[%s3 + $0x120] sm:$0xff]
      %v385 = vld [vmem:[%s3 + $0x128] sm:$0xff]
      %v386 = vld [vmem:[%s3 + $0x130] sm:$0xff]
      %v387 = vld [vmem:[%s3 + $0x138] sm:$0xff]
      %v388 = vld [vmem:[%s3 + $0x140] sm:$0xff]
      %v389 = vld [vmem:[%s3 + $0x148] sm:$0xff]
      %v390 = vld [vmem:[%s3 + $0x150] sm:$0xff]
      %v391 = vld [vmem:[%s3 + $0x158] sm:$0xff]
      %v392 = vld [vmem:[%s3 + $0x160] sm:$0xff]
      %v393 = vld [vmem:[%s3 + $0x168] sm:$0xff]
      %v394 = vld [vmem:[%s3 + $0x170] sm:$0xff]
      %v395 = vld [vmem:[%s3 + $0x178] sm:$0xff]
      %v396 = vld [vmem:[%s3 + $0x180] sm:$0xff]
      %v397 = vld [vmem:[%s3 + $0x188] sm:$0xff]
      %v398 = vld [vmem:[%s3 + $0x190] sm:$0xff]
      %v399 = vld [vmem:[%s3 + $0x198] sm:$0xff]
      %v400 = vld [vmem:[%s3 + $0x1a0] sm:$0xff]
      %v401 = vld [vmem:[%s3 + $0x1a8] sm:$0xff]
      %v402 = vld [vmem:[%s3 + $0x1b0] sm:$0xff]
      %v403 = vld [vmem:[%s3 + $0x1b8] sm:$0xff]
      %v404 = vld [vmem:[%s3 + $0x1c0] sm:$0xff]
      %v405 = vld [vmem:[%s3 + $0x1c8] sm:$0xff]
      %v406 = vld [vmem:[%s3 + $0x1d0] sm:$0xff]
      %v407 = vld [vmem:[%s3 + $0x1d8] sm:$0xff]
      %v408 = vld [vmem:[%s3 + $0x1e0] sm:$0xff]
      %v409 = vld [vmem:[%s3 + $0x1e8] sm:$0xff]
      %v410 = vld [vmem:[%s3 + $0x1f0] sm:$0xff]
      %v411 = vld [vmem:[%s3 + $0x1f8] sm:$0xff]
      %v412 = vld [vmem:[%s3 + $0x200] sm:$0xff]
      %v413 = vld [vmem:[%s3 + $0x208] sm:$0xff]
      %v414 = vld [vmem:[%s3 + $0x210] sm:$0xff]
      %v415 = vld [vmem:[%s3 + $0x218] sm:$0xff]
      %v416 = vld [vmem:[%s3 + $0x220] sm:$0xff]
      %v417 = vld [vmem:[%s3 + $0x228] sm:$0xff]
      %v418 = vld [vmem:[%s3 + $0x230] sm:$0xff]
      %v419 = vld [vmem:[%s3 + $0x238] sm:$0xff]
      %v420 = vld [vmem:[%s3 + $0x240] sm:$0xff]
      %v421 = vld [vmem:[%s3 + $0x248] sm:$0xff]
      %v422 = vld [vmem:[%s3 + $0x250] sm:$0xff]
      %v423 = vld [vmem:[%s3 + $0x258] sm:$0xff]
      %v424 = vld [vmem:[%s3 + $0x260] sm:$0xff]
      %v425 = vld [vmem:[%s3 + $0x268] sm:$0xff]
      %v426 = vld [vmem:[%s3 + $0x270] sm:$0xff]
      %v427 = vld [vmem:[%s3 + $0x278] sm:$0xff]
      %v428 = vld [vmem:[%s3 + $0x280] sm:$0xff]
      %v429 = vld [vmem:[%s3 + $0x288] sm:$0xff]
      %v430 = vld [vmem:[%s3 + $0x290] sm:$0xff]
      %v431 = vld [vmem:[%s3 + $0x298] sm:$0xff]
      %v432 = vld [vmem:[%s3 + $0x2a0] sm:$0xff]
      %v433 = vld [vmem:[%s3 + $0x2a8] sm:$0xff]
      %v434 = vld [vmem:[%s3 + $0x2b0] sm:$0xff]
      %v435 = vld [vmem:[%s3 + $0x2b8] sm:$0xff]
      %v436 = vld [vmem:[%s3 + $0x2c0] sm:$0xff]
      %v437 = vld [vmem:[%s3 + $0x2c8] sm:$0xff]
      %v438 = vld [vmem:[%s3 + $0x2d0] sm:$0xff]
      %v439 = vld [vmem:[%s3 + $0x2d8] sm:$0xff]
      %v440 = vld [vmem:[%s3 + $0x2e0] sm:$0xff]
      %v441 = vld [vmem:[%s3 + $0x2e8] sm:$0xff]
      %v442 = vld [vmem:[%s3 + $0x2f0] sm:$0xff]
      %v443 = vld [vmem:[%s3 + $0x2f8] sm:$0xff]
      %v444 = vld [vmem:[%s3 + $0x300] sm:$0xff]
      %v445 = vld [vmem:[%s3 + $0x308] sm:$0xff]
      %v446 = vld [vmem:[%s3 + $0x310] sm:$0xff]
      %v447 = vld [vmem:[%s3 + $0x318] sm:$0xff]
      %v448 = vld [vmem:[%s3 + $0x320] sm:$0xff]
      %v449 = vld [vmem:[%s3 + $0x328] sm:$0xff]
      %v450 = vld [vmem:[%s3 + $0x330] sm:$0xff]
      %v451 = vld [vmem:[%s3 + $0x338] sm:$0xff]
      %v452 = vld [vmem:[%s3 + $0x340] sm:$0xff]
      %v453 = vld [vmem:[%s3 + $0x348] sm:$0xff]
      %v454 = vld [vmem:[%s3 + $0x350] sm:$0xff]
      %v455 = vld [vmem:[%s3 + $0x358] sm:$0xff]
      %v456 = vld [vmem:[%s3 + $0x360] sm:$0xff]
      %v457 = vld [vmem:[%s3 + $0x368] sm:$0xff]
      %v458 = vld [vmem:[%s3 + $0x370] sm:$0xff]
      %v459 = vld [vmem:[%s3 + $0x378] sm:$0xff]
      %v460 = vld [vmem:[%s3 + $0x380] sm:$0xff]
      %v461 = vld [vmem:[%s3 + $0x388] sm:$0xff]
      %v462 = vld [vmem:[%s3 + $0x390] sm:$0xff]
      %v463 = vld [vmem:[%s3 + $0x398] sm:$0xff]
      %v464 = vld [vmem:[%s3 + $0x3a0] sm:$0xff]
      %v465 = vld [vmem:[%s3 + $0x3a8] sm:$0xff]
      %v466 = vld [vmem:[%s3 + $0x3b0] sm:$0xff]
      %v467 = vld [vmem:[%s3 + $0x3b8] sm:$0xff]
      %v468 = vld [vmem:[%s3 + $0x3c0] sm:$0xff]
      %v469 = vld [vmem:[%s3 + $0x3c8] sm:$0xff]
      %v470 = vld [vmem:[%s3 + $0x3d0] sm:$0xff]
      %v471 = vld [vmem:[%s3 + $0x3d8] sm:$0xff]
      %v472 = vld [vmem:[%s3 + $0x3e0] sm:$0xff]
      %v473 = vld [vmem:[%s3 + $0x3e8] sm:$0xff]
      %v474 = vld [vmem:[%s3 + $0x3f0] sm:$0xff]
      %v475 = vld [vmem:[%s3 + $0x3f8] sm:$0xff]
      %v476 = vld [vmem:[%s3 + $0x400] sm:$0xff]
      %v477 = vld [vmem:[%s3 + $0x408] sm:$0xff]
      %v478 = vld [vmem:[%s3 + $0x410] sm:$0xff]
      %v479 = vld [vmem:[%s3 + $0x418] sm:$0xff]
      %v480 = vld [vmem:[%s3 + $0x420] sm:$0xff]
      %v481 = vld [vmem:[%s3 + $0x428] sm:$0xff]
      %v482 = vld [vmem:[%s3 + $0x430] sm:$0xff]
      %v483 = vld [vmem:[%s3 + $0x438] sm:$0xff]
      %v484 = vld [vmem:[%s3 + $0x440] sm:$0xff]
      %v485 = vld [vmem:[%s3 + $0x448] sm:$0xff]
      %v486 = vld [vmem:[%s3 + $0x450] sm:$0xff]
      %v487 = vld [vmem:[%s3 + $0x458] sm:$0xff]
      %v488 = vld [vmem:[%s3 + $0x460] sm:$0xff]
      %v489 = vld [vmem:[%s3 + $0x468] sm:$0xff]
      %v490 = vld [vmem:[%s3 + $0x470] sm:$0xff]
      %v491 = vld [vmem:[%s3 + $0x478] sm:$0xff]
      %v492 = vld [vmem:[%s3 + $0x480] sm:$0xff]
      %v493 = vld [vmem:[%s3 + $0x488] sm:$0xff]
      %v494 = vld [vmem:[%s3 + $0x490] sm:$0xff]
      %v495 = vld [vmem:[%s3 + $0x498] sm:$0xff]
      %v496 = vld [vmem:[%s3 + $0x4a0] sm:$0xff]
      %v497 = vld [vmem:[%s3 + $0x4a8] sm:$0xff]
      %v498 = vld [vmem:[%s3 + $0x4b0] sm:$0xff]
      %v499 = vld [vmem:[%s3 + $0x4b8] sm:$0xff]
      %v500 = vld [vmem:[%s3 + $0x4c0] sm:$0xff]
      %v501 = vld [vmem:[%s3 + $0x4c8] sm:$0xff]
      %v502 = vld [vmem:[%s3 + $0x4d0] sm:$0xff]
      %v503 = vld [vmem:[%s3 + $0x4d8] sm:$0xff]
      %v504 = vld [vmem:[%s3 + $0x4e0] sm:$0xff]
      %v505 = vld [vmem:[%s3 + $0x4e8] sm:$0xff]
      %v506 = vld [vmem:[%s3 + $0x4f0] sm:$0xff]
      %v507 = vld [vmem:[%s3 + $0x4f8] sm:$0xff]
      %v508 = vld [vmem:[%s3 + $0x500] sm:$0xff]
      %v509 = vld [vmem:[%s3 + $0x508] sm:$0xff]
      %v510 = vld [vmem:[%s3 + $0x510] sm:$0xff]
      %v511 = vld [vmem:[%s3 + $0x518] sm:$0xff]
      %v512 = vld [vmem:[%s3 + $0x520] sm:$0xff]
      %v513 = vld [vmem:[%s3 + $0x528] sm:$0xff]
      %v514 = vld [vmem:[%s3 + $0x530] sm:$0xff]
      %v515 = vld [vmem:[%s3 + $0x538] sm:$0xff]
      %v516 = vld [vmem:[%s3 + $0x540] sm:$0xff]
      %v517 = vld [vmem:[%s3 + $0x548] sm:$0xff]
      %v518 = vld [vmem:[%s3 + $0x550] sm:$0xff]
      %v519 = vld [vmem:[%s3 + $0x558] sm:$0xff]
      %v520 = vld [vmem:[%s3 + $0x560] sm:$0xff]
      %v521 = vld [vmem:[%s3 + $0x568] sm:$0xff]
      %v522 = vld [vmem:[%s3 + $0x570] sm:$0xff]
      %v523 = vld [vmem:[%s3 + $0x578] sm:$0xff]
      %v524 = vld [vmem:[%s3 + $0x580] sm:$0xff]
      %v525 = vld [vmem:[%s3 + $0x588] sm:$0xff]
      %v526 = vld [vmem:[%s3 + $0x590] sm:$0xff]
      %v527 = vld [vmem:[%s3 + $0x598] sm:$0xff]
      %v528 = vld [vmem:[%s3 + $0x5a0] sm:$0xff]
      %v529 = vld [vmem:[%s3 + $0x5a8] sm:$0xff]
      %v530 = vld [vmem:[%s3 + $0x5b0] sm:$0xff]
      %v531 = vld [vmem:[%s3 + $0x5b8] sm:$0xff]
      %v532 = vld [vmem:[%s3 + $0x5c0] sm:$0xff]
      %v533 = vld [vmem:[%s3 + $0x5c8] sm:$0xff]
      %v534 = vld [vmem:[%s3 + $0x5d0] sm:$0xff]
      %v535 = vld [vmem:[%s3 + $0x5d8] sm:$0xff]
      %v536 = vld [vmem:[%s3 + $0x5e0] sm:$0xff]
      %v537 = vld [vmem:[%s3 + $0x5e8] sm:$0xff]
      %v538 = vld [vmem:[%s3 + $0x5f0] sm:$0xff]
      %v539 = vld [vmem:[%s3 + $0x5f8] sm:$0xff]
      %v540 = vld [vmem:[%s4] sm:$0x3f]
      %v542 = vlaneseq
      %v543 = vshrl.u32 %v542, 7
      %v544 = vsub.s32 0, %v543
      %v545 = vrot.slane %v540, %v544
      %v546 = vlaneseq
      %v547 = vshrl.u32 %v546, 7
      %v548 = vsub.s32 1, %v547
      %v549 = vrot.slane %v540, %v548
      %v550 = vlaneseq
      %v551 = vshrl.u32 %v550, 7
      %v552 = vsub.s32 2, %v551
      %v553 = vrot.slane %v540, %v552
      %v554 = vlaneseq
      %v555 = vshrl.u32 %v554, 7
      %v556 = vsub.s32 3, %v555
      %v557 = vrot.slane %v540, %v556
      %v558 = vlaneseq
      %v559 = vshrl.u32 %v558, 7
      %v560 = vsub.s32 4, %v559
      %v561 = vrot.slane %v540, %v560
      %v562 = vlaneseq
      %v563 = vshrl.u32 %v562, 7
      %v564 = vsub.s32 5, %v563
      %v565 = vrot.slane %v540, %v564
      %572 = vmatprep.subr.mxu0 %v439
      %573 = vmatpush1.msra.mxu0 %v438
      %574 = vmatprep.subr.mxu0 %v433
      %575 = vmatpush1.msra.mxu0 %v432
      %576 = vmatprep.subr.mxu0 %v427
      %577 = vmatpush1.msra.mxu0 %v426
      %578 = vmatprep.subr.mxu0 %v421
      %579 = vmatpush1.msra.mxu0 %v420
      %580 = vmatprep.subr.mxu0 %v415
      %581 = vmatpush1.msra.mxu0 %v414
      %582 = vmatprep.subr.mxu0 %v409
      %583 = vmatpush1.msra.mxu0 %v408
      %584 = vmatprep.subr.mxu0 %v403
      %585 = vmatpush1.msra.mxu0 %v402
      %586 = vmatprep.subr.mxu0 %v397
      %587 = vmatpush1.msra.mxu0 %v396
      %588 = vmatprep.subr.mxu0 %v391
      %589 = vmatpush1.msra.mxu0 %v390
      %590 = vmatprep.subr.mxu0 %v385
      %591 = vmatpush1.msra.mxu0 %v384
      %592 = vmatprep.subr.mxu0 %v379
      %593 = vmatpush1.msra.mxu0 %v378
      %594 = vmatprep.subr.mxu0 %v373
      %595 = vmatpush1.msra.mxu0 %v372
      %596 = vmatprep.subr.mxu0 %v367
      %597 = vmatpush1.msra.mxu0 %v366
      %598 = vmatprep.subr.mxu0 %v361
      %599 = vmatpush1.msra.mxu0 %v360
      %600 = vmatprep.subr.mxu0 %v355
      %601 = vmatpush1.msra.mxu0 %v354
      %602 = vmatprep.subr.mxu0 %v349
      %603 = vmatpush1.msra.mxu0 %v348
      %604 = vmatprep.subr.mxu0 %v535
      %605 = vmatpush2.msra.mxu0 %v534
      %606 = vmatprep.subr.mxu0 %v529
      %607 = vmatpush2.msra.mxu0 %v528
      %608 = vmatprep.subr.mxu0 %v523
      %609 = vmatpush2.msra.mxu0 %v522
      %610 = vmatprep.subr.mxu0 %v517
      %611 = vmatpush2.msra.mxu0 %v516
      %612 = vmatprep.subr.mxu0 %v511
      %613 = vmatpush2.msra.mxu0 %v510
      %614 = vmatprep.subr.mxu0 %v505
      %615 = vmatpush2.msra.mxu0 %v504
      %616 = vmatprep.subr.mxu0 %v499
      %617 = vmatpush2.msra.mxu0 %v498
      %618 = vmatprep.subr.mxu0 %v493
      %619 = vmatpush2.msra.mxu0 %v492
      %620 = vmatprep.subr.mxu0 %v487
      %621 = vmatpush2.msra.mxu0 %v486
      %622 = vmatprep.subr.mxu0 %v481
      %623 = vmatpush2.msra.mxu0 %v480
      %624 = vmatprep.subr.mxu0 %v475
      %625 = vmatpush2.msra.mxu0 %v474
      %626 = vmatprep.subr.mxu0 %v469
      %627 = vmatpush2.msra.mxu0 %v468
      %628 = vmatprep.subr.mxu0 %v463
      %629 = vmatpush2.msra.mxu0 %v462
      %630 = vmatprep.subr.mxu0 %v457
      %631 = vmatpush2.msra.mxu0 %v456
      %632 = vmatprep.subr.mxu0 %v451
      %633 = vmatpush2.msra.mxu0 %v450
      %634 = vmatprep.subr.mxu0 %v445
      %635 = vmatpush2.msra.mxu0 %v444
      %636 = vmatprep.mubr.f32.mxu0 %v345
      %637 = vmatmul.mubr.f32.gmra.mxu0 %v344
      %v638 = vpop.f32.mrf.mxu0
      %v639 = vadd.f32 %v545, %v638
      %v640 = vpop.f32.mrf.mxu0
      %v641 = vadd.f32 %v549, %v640
      %642 = vmatprep.mubr.f32.mxu0 %v347
      %643 = vmatmul.mubr.f32.gmra.mxu0 %v346
      %v644 = vpop.f32.mrf.mxu0
      %v645 = vadd.f32 %v545, %v644
      %v646 = vpop.f32.mrf.mxu0
      %v647 = vadd.f32 %v549, %v646
      %648 = vdwg.mxu0
      %649 = vmatprep.subr.mxu0 %v441
      %650 = vmatpush1.msra.mxu0 %v440
      %651 = vmatprep.subr.mxu0 %v435
      %652 = vmatpush1.msra.mxu0 %v434
      %653 = vmatprep.subr.mxu0 %v429
      %654 = vmatpush1.msra.mxu0 %v428
      %655 = vmatprep.subr.mxu0 %v423
      %656 = vmatpush1.msra.mxu0 %v422
      %657 = vmatprep.subr.mxu0 %v417
      %658 = vmatpush1.msra.mxu0 %v416
      %659 = vmatprep.subr.mxu0 %v411
      %660 = vmatpush1.msra.mxu0 %v410
      %661 = vmatprep.subr.mxu0 %v405
      %662 = vmatpush1.msra.mxu0 %v404
      %663 = vmatprep.subr.mxu0 %v399
      %664 = vmatpush1.msra.mxu0 %v398
      %665 = vmatprep.subr.mxu0 %v393
      %666 = vmatpush1.msra.mxu0 %v392
      %667 = vmatprep.subr.mxu0 %v387
      %668 = vmatpush1.msra.mxu0 %v386
      %669 = vmatprep.subr.mxu0 %v381
      %670 = vmatpush1.msra.mxu0 %v380
      %671 = vmatprep.subr.mxu0 %v375
      %672 = vmatpush1.msra.mxu0 %v374
      %673 = vmatprep.subr.mxu0 %v369
      %674 = vmatpush1.msra.mxu0 %v368
      %675 = vmatprep.subr.mxu0 %v363
      %676 = vmatpush1.msra.mxu0 %v362
      %677 = vmatprep.subr.mxu0 %v357
      %678 = vmatpush1.msra.mxu0 %v356
      %679 = vmatprep.subr.mxu0 %v351
      %680 = vmatpush1.msra.mxu0 %v350
      %681 = vmatprep.subr.mxu0 %v537
      %682 = vmatpush2.msra.mxu0 %v536
      %683 = vmatprep.subr.mxu0 %v531
      %684 = vmatpush2.msra.mxu0 %v530
      %685 = vmatprep.subr.mxu0 %v525
      %686 = vmatpush2.msra.mxu0 %v524
      %687 = vmatprep.subr.mxu0 %v519
      %688 = vmatpush2.msra.mxu0 %v518
      %689 = vmatprep.subr.mxu0 %v513
      %690 = vmatpush2.msra.mxu0 %v512
      %691 = vmatprep.subr.mxu0 %v507
      %692 = vmatpush2.msra.mxu0 %v506
      %693 = vmatprep.subr.mxu0 %v501
      %694 = vmatpush2.msra.mxu0 %v500
      %695 = vmatprep.subr.mxu0 %v495
      %696 = vmatpush2.msra.mxu0 %v494
      %697 = vmatprep.subr.mxu0 %v489
      %698 = vmatpush2.msra.mxu0 %v488
      %699 = vmatprep.subr.mxu0 %v483
      %700 = vmatpush2.msra.mxu0 %v482
      %701 = vmatprep.subr.mxu0 %v477
      %702 = vmatpush2.msra.mxu0 %v476
      %703 = vmatprep.subr.mxu0 %v471
      %704 = vmatpush2.msra.mxu0 %v470
      %705 = vmatprep.subr.mxu0 %v465
      %706 = vmatpush2.msra.mxu0 %v464
      %707 = vmatprep.subr.mxu0 %v459
      %708 = vmatpush2.msra.mxu0 %v458
      %709 = vmatprep.subr.mxu0 %v453
      %710 = vmatpush2.msra.mxu0 %v452
      %711 = vmatprep.subr.mxu0 %v447
      %712 = vmatpush2.msra.mxu0 %v446
      %713 = vmatprep.mubr.f32.mxu0 %v345
      %714 = vmatmul.mubr.f32.gmra.mxu0 %v344
      %v715 = vpop.f32.mrf.mxu0
      %v716 = vadd.f32 %v553, %v715
      %v717 = vpop.f32.mrf.mxu0
      %v718 = vadd.f32 %v557, %v717
      %719 = vmatprep.mubr.f32.mxu0 %v347
      %720 = vmatmul.mubr.f32.gmra.mxu0 %v346
      %v721 = vpop.f32.mrf.mxu0
      %v722 = vadd.f32 %v553, %v721
      %v723 = vpop.f32.mrf.mxu0
      %v724 = vadd.f32 %v557, %v723
      %725 = vdwg.mxu0
      %726 = vmatprep.subr.mxu0 %v443
      %727 = vmatpush1.msra.mxu0 %v442
      %728 = vmatprep.subr.mxu0 %v437
      %729 = vmatpush1.msra.mxu0 %v436
      %730 = vmatprep.subr.mxu0 %v431
      %731 = vmatpush1.msra.mxu0 %v430
      %732 = vmatprep.subr.mxu0 %v425
      %733 = vmatpush1.msra.mxu0 %v424
      %734 = vmatprep.subr.mxu0 %v419
      %735 = vmatpush1.msra.mxu0 %v418
      %736 = vmatprep.subr.mxu0 %v413
      %737 = vmatpush1.msra.mxu0 %v412
      %738 = vmatprep.subr.mxu0 %v407
      %739 = vmatpush1.msra.mxu0 %v406
      %740 = vmatprep.subr.mxu0 %v401
      %741 = vmatpush1.msra.mxu0 %v400
      %742 = vmatprep.subr.mxu0 %v395
      %743 = vmatpush1.msra.mxu0 %v394
      %744 = vmatprep.subr.mxu0 %v389
      %745 = vmatpush1.msra.mxu0 %v388
      %746 = vmatprep.subr.mxu0 %v383
      %747 = vmatpush1.msra.mxu0 %v382
      %748 = vmatprep.subr.mxu0 %v377
      %749 = vmatpush1.msra.mxu0 %v376
      %750 = vmatprep.subr.mxu0 %v371
      %751 = vmatpush1.msra.mxu0 %v370
      %752 = vmatprep.subr.mxu0 %v365
      %753 = vmatpush1.msra.mxu0 %v364
      %754 = vmatprep.subr.mxu0 %v359
      %755 = vmatpush1.msra.mxu0 %v358
      %756 = vmatprep.subr.mxu0 %v353
      %757 = vmatpush1.msra.mxu0 %v352
      %758 = vmatprep.subr.mxu0 %v539
      %759 = vmatpush2.msra.mxu0 %v538
      %760 = vmatprep.subr.mxu0 %v533
      %761 = vmatpush2.msra.mxu0 %v532
      %762 = vmatprep.subr.mxu0 %v527
      %763 = vmatpush2.msra.mxu0 %v526
      %764 = vmatprep.subr.mxu0 %v521
      %765 = vmatpush2.msra.mxu0 %v520
      %766 = vmatprep.subr.mxu0 %v515
      %767 = vmatpush2.msra.mxu0 %v514
      %768 = vmatprep.subr.mxu0 %v509
      %769 = vmatpush2.msra.mxu0 %v508
      %770 = vmatprep.subr.mxu0 %v503
      %771 = vmatpush2.msra.mxu0 %v502
      %772 = vmatprep.subr.mxu0 %v497
      %773 = vmatpush2.msra.mxu0 %v496
      %774 = vmatprep.subr.mxu0 %v491
      %775 = vmatpush2.msra.mxu0 %v490
      %776 = vmatprep.subr.mxu0 %v485
      %777 = vmatpush2.msra.mxu0 %v484
      %778 = vmatprep.subr.mxu0 %v479
      %779 = vmatpush2.msra.mxu0 %v478
      %780 = vmatprep.subr.mxu0 %v473
      %781 = vmatpush2.msra.mxu0 %v472
      %782 = vmatprep.subr.mxu0 %v467
      %783 = vmatpush2.msra.mxu0 %v466
      %784 = vmatprep.subr.mxu0 %v461
      %785 = vmatpush2.msra.mxu0 %v460
      %786 = vmatprep.subr.mxu0 %v455
      %787 = vmatpush2.msra.mxu0 %v454
      %788 = vmatprep.subr.mxu0 %v449
      %789 = vmatpush2.msra.mxu0 %v448
      %790 = vmatprep.mubr.f32.mxu0 %v345
      %791 = vmatmul.mubr.f32.gmra.mxu0 %v344
      %v792 = vpop.f32.mrf.mxu0
      %v793 = vadd.f32 %v561, %v792
      %v794 = vpop.f32.mrf.mxu0
      %v795 = vadd.f32 %v565, %v794
      %796 = vmatprep.mubr.f32.mxu0 %v347
      %797 = vmatmul.mubr.f32.gmra.mxu0 %v346
      %v798 = vpop.f32.mrf.mxu0
      %v799 = vadd.f32 %v561, %v798
      %v800 = vpop.f32.mrf.mxu0
      %v801 = vadd.f32 %v565, %v800
      %802 = vdwg.mxu0
      %v803 = vld [vmem:[%s5] sm:$0xff]
      %v804 = vld [vmem:[%s5 + $0x8] sm:$0xff]
      %v805 = vld [vmem:[%s5 + $0x10] sm:$0xff]
      %v806 = vld [vmem:[%s5 + $0x18] sm:$0xff]
      %v807 = vld [vmem:[%s5 + $0x20] sm:$0xff]
      %v808 = vld [vmem:[%s5 + $0x28] sm:$0xff]
      %v809 = vld [vmem:[%s5 + $0x30] sm:$0xff]
      %v810 = vld [vmem:[%s5 + $0x38] sm:$0xff]
      %v811 = vld [vmem:[%s5 + $0x40] sm:$0xff]
      %v812 = vld [vmem:[%s5 + $0x48] sm:$0xff]
      %v813 = vld [vmem:[%s5 + $0x50] sm:$0xff]
      %v814 = vld [vmem:[%s5 + $0x58] sm:$0xff]
      %v815 = vld [vmem:[%s5 + $0x60] sm:$0xff]
      %v816 = vld [vmem:[%s5 + $0x68] sm:$0xff]
      %v817 = vld [vmem:[%s5 + $0x70] sm:$0xff]
      %v818 = vld [vmem:[%s5 + $0x78] sm:$0xff]
      %v819 = vld [vmem:[%s5 + $0x80] sm:$0xff]
      %v820 = vld [vmem:[%s5 + $0x88] sm:$0xff]
      %v821 = vld [vmem:[%s5 + $0x90] sm:$0xff]
      %v822 = vld [vmem:[%s5 + $0x98] sm:$0xff]
      %v823 = vld [vmem:[%s5 + $0xa0] sm:$0xff]
      %v824 = vld [vmem:[%s5 + $0xa8] sm:$0xff]
      %v825 = vld [vmem:[%s5 + $0xb0] sm:$0xff]
      %v826 = vld [vmem:[%s5 + $0xb8] sm:$0xff]
      %v827 = vld [vmem:[%s5 + $0xc0] sm:$0xff]
      %v828 = vld [vmem:[%s5 + $0xc8] sm:$0xff]
      %v829 = vld [vmem:[%s5 + $0xd0] sm:$0xff]
      %v830 = vld [vmem:[%s5 + $0xd8] sm:$0xff]
      %v831 = vld [vmem:[%s5 + $0xe0] sm:$0xff]
      %v832 = vld [vmem:[%s5 + $0xe8] sm:$0xff]
      %v833 = vld [vmem:[%s5 + $0xf0] sm:$0xff]
      %v834 = vld [vmem:[%s5 + $0xf8] sm:$0xff]
      %v835 = vld [vmem:[%s5 + $0x100] sm:$0xff]
      %v836 = vld [vmem:[%s5 + $0x108] sm:$0xff]
      %v837 = vld [vmem:[%s5 + $0x110] sm:$0xff]
      %v838 = vld [vmem:[%s5 + $0x118] sm:$0xff]
      %v839 = vld [vmem:[%s5 + $0x120] sm:$0xff]
      %v840 = vld [vmem:[%s5 + $0x128] sm:$0xff]
      %v841 = vld [vmem:[%s5 + $0x130] sm:$0xff]
      %v842 = vld [vmem:[%s5 + $0x138] sm:$0xff]
      %v843 = vld [vmem:[%s5 + $0x140] sm:$0xff]
      %v844 = vld [vmem:[%s5 + $0x148] sm:$0xff]
      %v845 = vld [vmem:[%s5 + $0x150] sm:$0xff]
      %v846 = vld [vmem:[%s5 + $0x158] sm:$0xff]
      %v847 = vld [vmem:[%s5 + $0x160] sm:$0xff]
      %v848 = vld [vmem:[%s5 + $0x168] sm:$0xff]
      %v849 = vld [vmem:[%s5 + $0x170] sm:$0xff]
      %v850 = vld [vmem:[%s5 + $0x178] sm:$0xff]
      %v851 = vld [vmem:[%s5 + $0x180] sm:$0xff]
      %v852 = vld [vmem:[%s5 + $0x188] sm:$0xff]
      %v853 = vld [vmem:[%s5 + $0x190] sm:$0xff]
      %v854 = vld [vmem:[%s5 + $0x198] sm:$0xff]
      %v855 = vld [vmem:[%s5 + $0x1a0] sm:$0xff]
      %v856 = vld [vmem:[%s5 + $0x1a8] sm:$0xff]
      %v857 = vld [vmem:[%s5 + $0x1b0] sm:$0xff]
      %v858 = vld [vmem:[%s5 + $0x1b8] sm:$0xff]
      %v859 = vld [vmem:[%s5 + $0x1c0] sm:$0xff]
      %v860 = vld [vmem:[%s5 + $0x1c8] sm:$0xff]
      %v861 = vld [vmem:[%s5 + $0x1d0] sm:$0xff]
      %v862 = vld [vmem:[%s5 + $0x1d8] sm:$0xff]
      %v863 = vld [vmem:[%s5 + $0x1e0] sm:$0xff]
      %v864 = vld [vmem:[%s5 + $0x1e8] sm:$0xff]
      %v865 = vld [vmem:[%s5 + $0x1f0] sm:$0xff]
      %v866 = vld [vmem:[%s5 + $0x1f8] sm:$0xff]
      %v867 = vld [vmem:[%s6] sm:$0x3]
      %v869 = vlaneseq
      %v870 = vshrl.u32 %v869, 7
      %v871 = vsub.s32 0, %v870
      %v872 = vrot.slane %v867, %v871
      %v873 = vlaneseq
      %v874 = vshrl.u32 %v873, 7
      %v875 = vsub.s32 1, %v874
      %v876 = vrot.slane %v867, %v875
      %v879 = vadd.f32 %v279, %v872
      %v880 = vadd.f32 %v280, %v876
      %v881 = vadd.f32 %v281, %v872
      %v882 = vadd.f32 %v282, %v876
      %883 = vmatprep.subr.mxu0 0.0
      %884 = vmatpush1.xpose.msra.mxu0 0.0
      %885 = vmatprep.subr.mxu0 0.0
      %886 = vmatpush1.xpose.msra.mxu0 0.0
      %887 = vmatprep.subr.mxu0 0.0
      %888 = vmatpush1.xpose.msra.mxu0 0.0
      %889 = vmatprep.subr.mxu0 0.0
      %890 = vmatpush1.xpose.msra.mxu0 0.0
      %891 = vmatprep.subr.mxu0 0.0
      %892 = vmatpush1.xpose.msra.mxu0 0.0
      %893 = vmatprep.subr.mxu0 0.0
      %894 = vmatpush1.xpose.msra.mxu0 0.0
      %895 = vmatprep.subr.mxu0 0.0
      %896 = vmatpush1.xpose.msra.mxu0 0.0
      %897 = vmatprep.subr.mxu0 0.0
      %898 = vmatpush1.xpose.msra.mxu0 0.0
      %899 = vmatprep.subr.mxu0 0.0
      %900 = vmatpush1.xpose.msra.mxu0 0.0
      %901 = vmatprep.subr.mxu0 0.0
      %902 = vmatpush1.xpose.msra.mxu0 0.0
      %903 = vmatprep.subr.mxu0 0.0
      %904 = vmatpush1.xpose.msra.mxu0 0.0
      %905 = vmatprep.subr.mxu0 0.0
      %906 = vmatpush1.xpose.msra.mxu0 0.0
      %907 = vmatprep.subr.mxu0 0.0
      %908 = vmatpush1.xpose.msra.mxu0 0.0
      %909 = vmatprep.subr.mxu0 0.0
      %910 = vmatpush1.xpose.msra.mxu0 0.0
      %911 = vmatprep.subr.mxu0 0.0
      %912 = vmatpush1.xpose.msra.mxu0 %v722
      %913 = vmatprep.subr.mxu0 0.0
      %914 = vmatpush1.xpose.msra.mxu0 %v716
      %915 = vmatprep.subr.mxu0 0.0
      %916 = vmatpush2.xpose.msra.mxu0 0.0
      %917 = vmatprep.subr.mxu0 0.0
      %918 = vmatpush2.xpose.msra.mxu0 0.0
      %919 = vmatprep.subr.mxu0 0.0
      %920 = vmatpush2.xpose.msra.mxu0 0.0
      %921 = vmatprep.subr.mxu0 0.0
      %922 = vmatpush2.xpose.msra.mxu0 0.0
      %923 = vmatprep.subr.mxu0 0.0
      %924 = vmatpush2.xpose.msra.mxu0 0.0
      %925 = vmatprep.subr.mxu0 0.0
      %926 = vmatpush2.xpose.msra.mxu0 0.0
      %927 = vmatprep.subr.mxu0 0.0
      %928 = vmatpush2.xpose.msra.mxu0 0.0
      %929 = vmatprep.subr.mxu0 0.0
      %930 = vmatpush2.xpose.msra.mxu0 0.0
      %931 = vmatprep.subr.mxu0 0.0
      %932 = vmatpush2.xpose.msra.mxu0 0.0
      %933 = vmatprep.subr.mxu0 0.0
      %934 = vmatpush2.xpose.msra.mxu0 0.0
      %935 = vmatprep.subr.mxu0 0.0
      %936 = vmatpush2.xpose.msra.mxu0 0.0
      %937 = vmatprep.subr.mxu0 0.0
      %938 = vmatpush2.xpose.msra.mxu0 0.0
      %939 = vmatprep.subr.mxu0 0.0
      %940 = vmatpush2.xpose.msra.mxu0 0.0
      %941 = vmatprep.subr.mxu0 0.0
      %942 = vmatpush2.xpose.msra.mxu0 0.0
      %943 = vmatprep.subr.mxu0 0.0
      %944 = vmatpush2.xpose.msra.mxu0 0.0
      %945 = vmatprep.subr.mxu0 0.0
      %946 = vmatpush2.xpose.msra.mxu0 0.0
      %947 = vmatprep.mubr.f32.mxu0 0.0
      %948 = vmatmul.mubr.f32.gmra.mxu0 %v639
      %v949 = vpop.f32.mrf.mxu0
      %v950 = vadd.f32 0.0, %v949
      %v951 = vpop.f32.mrf.mxu0
      %952 = vmatprep.mubr.f32.mxu0 0.0
      %953 = vmatmul.mubr.f32.gmra.mxu0 %v645
      %v954 = vpop.f32.mrf.mxu0
      %v955 = vadd.f32 0.0, %v954
      %v956 = vpop.f32.mrf.mxu0
      %957 = vdwg.mxu0
      %vm958 = vcmask 130048
      %v959 = vsel %vm958, %v950, -inf
      %960 = vmax.xlane.f32.xlu0 %v959
      %v961 = vpop.xlane.xlu0 %960
      %v962 = vsel %vm958, %v955, -inf
      %963 = vmax.xlane.f32.xlu0 %v962
      %v964 = vpop.xlane.xlu0 %963
      %v965 = vsub.f32 %v950, %v961
      %v966 = vsub.f32 %v955, %v964
      %v967 = vmul.f32 %v965, 1.442695
      %v968 = vpow.pop %v967
      %v969 = vmul.f32 %v966, 1.442695
      %v970 = vpow.pop %v969
      %v971 = vsel %vm958, %v968, 0.0
      %972 = vadd.xlane.f32.xlu0 %v971
      %v973 = vpop.xlane.xlu0 %972
      %v974 = vsel %vm958, %v970, 0.0
      %975 = vadd.xlane.f32.xlu0 %v974
      %v976 = vpop.xlane.xlu0 %975
      %v977 = vrcp.pop %v973
      %v978 = vrcp.pop %v976
      %v979 = vmul.f32 %v968, %v977
      %v980 = vmul.f32 %v970, %v978
      %v982 = vsel %vm958, %v979, 0
      %v985 = vsel %vm958, %v980, 0
      %987 = vmatprep.subr.mxu0 0.0
      %988 = vmatpush1.msra.mxu0 0.0
      %989 = vmatprep.subr.mxu0 0.0
      %990 = vmatpush1.msra.mxu0 0.0
      %991 = vmatprep.subr.mxu0 0.0
      %992 = vmatpush1.msra.mxu0 0.0
      %993 = vmatprep.subr.mxu0 0.0
      %994 = vmatpush1.msra.mxu0 0.0
      %995 = vmatprep.subr.mxu0 0.0
      %996 = vmatpush1.msra.mxu0 0.0
      %997 = vmatprep.subr.mxu0 0.0
      %998 = vmatpush1.msra.mxu0 0.0
      %999 = vmatprep.subr.mxu0 0.0
      %1000 = vmatpush1.msra.mxu0 0.0
      %1001 = vmatprep.subr.mxu0 0.0
      %1002 = vmatpush1.msra.mxu0 0.0
      %1003 = vmatprep.subr.mxu0 0.0
      %1004 = vmatpush1.msra.mxu0 0.0
      %1005 = vmatprep.subr.mxu0 0.0
      %1006 = vmatpush1.msra.mxu0 0.0
      %1007 = vmatprep.subr.mxu0 0.0
      %1008 = vmatpush1.msra.mxu0 0.0
      %1009 = vmatprep.subr.mxu0 0.0
      %1010 = vmatpush1.msra.mxu0 0.0
      %1011 = vmatprep.subr.mxu0 0.0
      %1012 = vmatpush1.msra.mxu0 0.0
      %1013 = vmatprep.subr.mxu0 0.0
      %1014 = vmatpush1.msra.mxu0 0.0
      %1015 = vmatprep.subr.mxu0 0.0
      %1016 = vmatpush1.msra.mxu0 %v799
      %1017 = vmatprep.subr.mxu0 0.0
      %1018 = vmatpush1.msra.mxu0 %v793
      %1019 = vmatprep.subr.mxu0 0.0
      %1020 = vmatpush2.msra.mxu0 0.0
      %1021 = vmatprep.subr.mxu0 0.0
      %1022 = vmatpush2.msra.mxu0 0.0
      %1023 = vmatprep.subr.mxu0 0.0
      %1024 = vmatpush2.msra.mxu0 0.0
      %1025 = vmatprep.subr.mxu0 0.0
      %1026 = vmatpush2.msra.mxu0 0.0
      %1027 = vmatprep.subr.mxu0 0.0
      %1028 = vmatpush2.msra.mxu0 0.0
      %1029 = vmatprep.subr.mxu0 0.0
      %1030 = vmatpush2.msra.mxu0 0.0
      %1031 = vmatprep.subr.mxu0 0.0
      %1032 = vmatpush2.msra.mxu0 0.0
      %1033 = vmatprep.subr.mxu0 0.0
      %1034 = vmatpush2.msra.mxu0 0.0
      %1035 = vmatprep.subr.mxu0 0.0
      %1036 = vmatpush2.msra.mxu0 0.0
      %1037 = vmatprep.subr.mxu0 0.0
      %1038 = vmatpush2.msra.mxu0 0.0
      %1039 = vmatprep.subr.mxu0 0.0
      %1040 = vmatpush2.msra.mxu0 0.0
      %1041 = vmatprep.subr.mxu0 0.0
      %1042 = vmatpush2.msra.mxu0 0.0
      %1043 = vmatprep.subr.mxu0 0.0
      %1044 = vmatpush2.msra.mxu0 0.0
      %1045 = vmatprep.subr.mxu0 0.0
      %1046 = vmatpush2.msra.mxu0 0.0
      %1047 = vmatprep.subr.mxu0 0.0
      %1048 = vmatpush2.msra.mxu0 0.0
      %1049 = vmatprep.subr.mxu0 0.0
      %1050 = vmatpush2.msra.mxu0 0.0
      %1051 = vmatprep.mubr.f32.mxu0 0.0
      %1052 = vmatmul.mubr.f32.gmra.mxu0 %v982
      %v1053 = vpop.f32.mrf.mxu0
      %v1054 = vadd.f32 0.0, %v1053
      %v1055 = vpop.f32.mrf.mxu0
      %1056 = vmatprep.mubr.f32.mxu0 0.0
      %1057 = vmatmul.mubr.f32.gmra.mxu0 %v985
      %v1058 = vpop.f32.mrf.mxu0
      %v1059 = vadd.f32 0.0, %v1058
      %v1060 = vpop.f32.mrf.mxu0
      %1061 = vdwg.mxu0
      %1062 = vmatprep.subr.mxu0 %v834
      %1063 = vmatpush1.msra.mxu0 %v833
      %1064 = vmatprep.subr.mxu0 %v832
      %1065 = vmatpush1.msra.mxu0 %v831
      %1066 = vmatprep.subr.mxu0 %v830
      %1067 = vmatpush1.msra.mxu0 %v829
      %1068 = vmatprep.subr.mxu0 %v828
      %1069 = vmatpush1.msra.mxu0 %v827
      %1070 = vmatprep.subr.mxu0 %v826
      %1071 = vmatpush1.msra.mxu0 %v825
      %1072 = vmatprep.subr.mxu0 %v824
      %1073 = vmatpush1.msra.mxu0 %v823
      %1074 = vmatprep.subr.mxu0 %v822
      %1075 = vmatpush1.msra.mxu0 %v821
      %1076 = vmatprep.subr.mxu0 %v820
      %1077 = vmatpush1.msra.mxu0 %v819
      %1078 = vmatprep.subr.mxu0 %v818
      %1079 = vmatpush1.msra.mxu0 %v817
      %1080 = vmatprep.subr.mxu0 %v816
      %1081 = vmatpush1.msra.mxu0 %v815
      %1082 = vmatprep.subr.mxu0 %v814
      %1083 = vmatpush1.msra.mxu0 %v813
      %1084 = vmatprep.subr.mxu0 %v812
      %1085 = vmatpush1.msra.mxu0 %v811
      %1086 = vmatprep.subr.mxu0 %v810
      %1087 = vmatpush1.msra.mxu0 %v809
      %1088 = vmatprep.subr.mxu0 %v808
      %1089 = vmatpush1.msra.mxu0 %v807
      %1090 = vmatprep.subr.mxu0 %v806
      %1091 = vmatpush1.msra.mxu0 %v805
      %1092 = vmatprep.subr.mxu0 %v804
      %1093 = vmatpush1.msra.mxu0 %v803
      %1094 = vmatprep.subr.mxu0 0.0
      %1095 = vmatpush2.msra.mxu0 0.0
      %1096 = vmatprep.subr.mxu0 0.0
      %1097 = vmatpush2.msra.mxu0 0.0
      %1098 = vmatprep.subr.mxu0 0.0
      %1099 = vmatpush2.msra.mxu0 0.0
      %1100 = vmatprep.subr.mxu0 0.0
      %1101 = vmatpush2.msra.mxu0 0.0
      %1102 = vmatprep.subr.mxu0 0.0
      %1103 = vmatpush2.msra.mxu0 0.0
      %1104 = vmatprep.subr.mxu0 0.0
      %1105 = vmatpush2.msra.mxu0 0.0
      %1106 = vmatprep.subr.mxu0 0.0
      %1107 = vmatpush2.msra.mxu0 0.0
      %1108 = vmatprep.subr.mxu0 0.0
      %1109 = vmatpush2.msra.mxu0 0.0
      %1110 = vmatprep.subr.mxu0 0.0
      %1111 = vmatpush2.msra.mxu0 0.0
      %1112 = vmatprep.subr.mxu0 0.0
      %1113 = vmatpush2.msra.mxu0 0.0
      %1114 = vmatprep.subr.mxu0 0.0
      %1115 = vmatpush2.msra.mxu0 0.0
      %1116 = vmatprep.subr.mxu0 0.0
      %1117 = vmatpush2.msra.mxu0 0.0
      %1118 = vmatprep.subr.mxu0 0.0
      %1119 = vmatpush2.msra.mxu0 0.0
      %1120 = vmatprep.subr.mxu0 0.0
      %1121 = vmatpush2.msra.mxu0 0.0
      %1122 = vmatprep.subr.mxu0 0.0
      %1123 = vmatpush2.msra.mxu0 0.0
      %1124 = vmatprep.subr.mxu0 0.0
      %1125 = vmatpush2.msra.mxu0 0.0
      %1126 = vmatprep.mubr.f32.mxu0 0.0
      %1127 = vmatmul.mubr.f32.gmra.mxu0 %v1054
      %v1128 = vpop.f32.mrf.mxu0
      %v1129 = vadd.f32 0.0, %v1128
      %v1130 = vpop.f32.mrf.mxu0
      %v1131 = vadd.f32 0.0, %v1130
      %1132 = vmatprep.mubr.f32.mxu0 0.0
      %1133 = vmatmul.mubr.f32.gmra.mxu0 %v1059
      %v1134 = vpop.f32.mrf.mxu0
      %v1135 = vadd.f32 0.0, %v1134
      %v1136 = vpop.f32.mrf.mxu0
      %v1137 = vadd.f32 0.0, %v1136
      %1138 = vdwg.mxu0
      %v1139 = vadd.f32 %v879, %v1129
      %v1140 = vadd.f32 %v880, %v1131
      %v1141 = vadd.f32 %v881, %v1135
      %v1142 = vadd.f32 %v882, %v1137
      %1143 = vmatprep.subr.mxu0 0.0
      %1144 = vmatpush1.xpose.msra.mxu0 0.0
      %1145 = vmatprep.subr.mxu0 0.0
      %1146 = vmatpush1.xpose.msra.mxu0 0.0
      %1147 = vmatprep.subr.mxu0 0.0
      %1148 = vmatpush1.xpose.msra.mxu0 0.0
      %1149 = vmatprep.subr.mxu0 0.0
      %1150 = vmatpush1.xpose.msra.mxu0 0.0
      %1151 = vmatprep.subr.mxu0 0.0
      %1152 = vmatpush1.xpose.msra.mxu0 0.0
      %1153 = vmatprep.subr.mxu0 0.0
      %1154 = vmatpush1.xpose.msra.mxu0 0.0
      %1155 = vmatprep.subr.mxu0 0.0
      %1156 = vmatpush1.xpose.msra.mxu0 0.0
      %1157 = vmatprep.subr.mxu0 0.0
      %1158 = vmatpush1.xpose.msra.mxu0 0.0
      %1159 = vmatprep.subr.mxu0 0.0
      %1160 = vmatpush1.xpose.msra.mxu0 0.0
      %1161 = vmatprep.subr.mxu0 0.0
      %1162 = vmatpush1.xpose.msra.mxu0 0.0
      %1163 = vmatprep.subr.mxu0 0.0
      %1164 = vmatpush1.xpose.msra.mxu0 0.0
      %1165 = vmatprep.subr.mxu0 0.0
      %1166 = vmatpush1.xpose.msra.mxu0 0.0
      %1167 = vmatprep.subr.mxu0 0.0
      %1168 = vmatpush1.xpose.msra.mxu0 0.0
      %1169 = vmatprep.subr.mxu0 0.0
      %1170 = vmatpush1.xpose.msra.mxu0 0.0
      %1171 = vmatprep.subr.mxu0 0.0
      %1172 = vmatpush1.xpose.msra.mxu0 %v724
      %1173 = vmatprep.subr.mxu0 0.0
      %1174 = vmatpush1.xpose.msra.mxu0 %v718
      %1175 = vmatprep.subr.mxu0 0.0
      %1176 = vmatpush2.xpose.msra.mxu0 0.0
      %1177 = vmatprep.subr.mxu0 0.0
      %1178 = vmatpush2.xpose.msra.mxu0 0.0
      %1179 = vmatprep.subr.mxu0 0.0
      %1180 = vmatpush2.xpose.msra.mxu0 0.0
      %1181 = vmatprep.subr.mxu0 0.0
      %1182 = vmatpush2.xpose.msra.mxu0 0.0
      %1183 = vmatprep.subr.mxu0 0.0
      %1184 = vmatpush2.xpose.msra.mxu0 0.0
      %1185 = vmatprep.subr.mxu0 0.0
      %1186 = vmatpush2.xpose.msra.mxu0 0.0
      %1187 = vmatprep.subr.mxu0 0.0
      %1188 = vmatpush2.xpose.msra.mxu0 0.0
      %1189 = vmatprep.subr.mxu0 0.0
      %1190 = vmatpush2.xpose.msra.mxu0 0.0
      %1191 = vmatprep.subr.mxu0 0.0
      %1192 = vmatpush2.xpose.msra.mxu0 0.0
      %1193 = vmatprep.subr.mxu0 0.0
      %1194 = vmatpush2.xpose.msra.mxu0 0.0
      %1195 = vmatprep.subr.mxu0 0.0
      %1196 = vmatpush2.xpose.msra.mxu0 0.0
      %1197 = vmatprep.subr.mxu0 0.0
      %1198 = vmatpush2.xpose.msra.mxu0 0.0
      %1199 = vmatprep.subr.mxu0 0.0
      %1200 = vmatpush2.xpose.msra.mxu0 0.0
      %1201 = vmatprep.subr.mxu0 0.0
      %1202 = vmatpush2.xpose.msra.mxu0 0.0
      %1203 = vmatprep.subr.mxu0 0.0
      %1204 = vmatpush2.xpose.msra.mxu0 0.0
      %1205 = vmatprep.subr.mxu0 0.0
      %1206 = vmatpush2.xpose.msra.mxu0 0.0
      %1207 = vmatprep.mubr.f32.mxu0 0.0
      %1208 = vmatmul.mubr.f32.gmra.mxu0 %v641
      %v1209 = vpop.f32.mrf.mxu0
      %v1210 = vadd.f32 0.0, %v1209
      %v1211 = vpop.f32.mrf.mxu0
      %1212 = vmatprep.mubr.f32.mxu0 0.0
      %1213 = vmatmul.mubr.f32.gmra.mxu0 %v647
      %v1214 = vpop.f32.mrf.mxu0
      %v1215 = vadd.f32 0.0, %v1214
      %v1216 = vpop.f32.mrf.mxu0
      %1217 = vdwg.mxu0
      %v1218 = vsel %vm958, %v1210, -inf
      %1219 = vmax.xlane.f32.xlu0 %v1218
      %v1220 = vpop.xlane.xlu0 %1219
      %v1221 = vsel %vm958, %v1215, -inf
      %1222 = vmax.xlane.f32.xlu0 %v1221
      %v1223 = vpop.xlane.xlu0 %1222
      %v1224 = vsub.f32 %v1210, %v1220
      %v1225 = vsub.f32 %v1215, %v1223
      %v1226 = vmul.f32 %v1224, 1.442695
      %v1227 = vpow.pop %v1226
      %v1228 = vmul.f32 %v1225, 1.442695
      %v1229 = vpow.pop %v1228
      %v1230 = vsel %vm958, %v1227, 0.0
      %1231 = vadd.xlane.f32.xlu0 %v1230
      %v1232 = vpop.xlane.xlu0 %1231
      %v1233 = vsel %vm958, %v1229, 0.0
      %1234 = vadd.xlane.f32.xlu0 %v1233
      %v1235 = vpop.xlane.xlu0 %1234
      %v1236 = vrcp.pop %v1232
      %v1237 = vrcp.pop %v1235
      %v1238 = vmul.f32 %v1227, %v1236
      %v1239 = vmul.f32 %v1229, %v1237
      %v1241 = vsel %vm958, %v1238, 0
      %v1244 = vsel %vm958, %v1239, 0
      %1246 = vmatprep.subr.mxu0 0.0
      %1247 = vmatpush1.msra.mxu0 0.0
      %1248 = vmatprep.subr.mxu0 0.0
      %1249 = vmatpush1.msra.mxu0 0.0
      %1250 = vmatprep.subr.mxu0 0.0
      %1251 = vmatpush1.msra.mxu0 0.0
      %1252 = vmatprep.subr.mxu0 0.0
      %1253 = vmatpush1.msra.mxu0 0.0
      %1254 = vmatprep.subr.mxu0 0.0
      %1255 = vmatpush1.msra.mxu0 0.0
      %1256 = vmatprep.subr.mxu0 0.0
      %1257 = vmatpush1.msra.mxu0 0.0
      %1258 = vmatprep.subr.mxu0 0.0
      %1259 = vmatpush1.msra.mxu0 0.0
      %1260 = vmatprep.subr.mxu0 0.0
      %1261 = vmatpush1.msra.mxu0 0.0
      %1262 = vmatprep.subr.mxu0 0.0
      %1263 = vmatpush1.msra.mxu0 0.0
      %1264 = vmatprep.subr.mxu0 0.0
      %1265 = vmatpush1.msra.mxu0 0.0
      %1266 = vmatprep.subr.mxu0 0.0
      %1267 = vmatpush1.msra.mxu0 0.0
      %1268 = vmatprep.subr.mxu0 0.0
      %1269 = vmatpush1.msra.mxu0 0.0
      %1270 = vmatprep.subr.mxu0 0.0
      %1271 = vmatpush1.msra.mxu0 0.0
      %1272 = vmatprep.subr.mxu0 0.0
      %1273 = vmatpush1.msra.mxu0 0.0
      %1274 = vmatprep.subr.mxu0 0.0
      %1275 = vmatpush1.msra.mxu0 %v801
      %1276 = vmatprep.subr.mxu0 0.0
      %1277 = vmatpush1.msra.mxu0 %v795
      %1278 = vmatprep.subr.mxu0 0.0
      %1279 = vmatpush2.msra.mxu0 0.0
      %1280 = vmatprep.subr.mxu0 0.0
      %1281 = vmatpush2.msra.mxu0 0.0
      %1282 = vmatprep.subr.mxu0 0.0
      %1283 = vmatpush2.msra.mxu0 0.0
      %1284 = vmatprep.subr.mxu0 0.0
      %1285 = vmatpush2.msra.mxu0 0.0
      %1286 = vmatprep.subr.mxu0 0.0
      %1287 = vmatpush2.msra.mxu0 0.0
      %1288 = vmatprep.subr.mxu0 0.0
      %1289 = vmatpush2.msra.mxu0 0.0
      %1290 = vmatprep.subr.mxu0 0.0
      %1291 = vmatpush2.msra.mxu0 0.0
      %1292 = vmatprep.subr.mxu0 0.0
      %1293 = vmatpush2.msra.mxu0 0.0
      %1294 = vmatprep.subr.mxu0 0.0
      %1295 = vmatpush2.msra.mxu0 0.0
      %1296 = vmatprep.subr.mxu0 0.0
      %1297 = vmatpush2.msra.mxu0 0.0
      %1298 = vmatprep.subr.mxu0 0.0
      %1299 = vmatpush2.msra.mxu0 0.0
      %1300 = vmatprep.subr.mxu0 0.0
      %1301 = vmatpush2.msra.mxu0 0.0
      %1302 = vmatprep.subr.mxu0 0.0
      %1303 = vmatpush2.msra.mxu0 0.0
      %1304 = vmatprep.subr.mxu0 0.0
      %1305 = vmatpush2.msra.mxu0 0.0
      %1306 = vmatprep.subr.mxu0 0.0
      %1307 = vmatpush2.msra.mxu0 0.0
      %1308 = vmatprep.subr.mxu0 0.0
      %1309 = vmatpush2.msra.mxu0 0.0
      %1310 = vmatprep.mubr.f32.mxu0 0.0
      %1311 = vmatmul.mubr.f32.gmra.mxu0 %v1241
      %v1312 = vpop.f32.mrf.mxu0
      %v1313 = vadd.f32 0.0, %v1312
      %v1314 = vpop.f32.mrf.mxu0
      %1315 = vmatprep.mubr.f32.mxu0 0.0
      %1316 = vmatmul.mubr.f32.gmra.mxu0 %v1244
      %v1317 = vpop.f32.mrf.mxu0
      %v1318 = vadd.f32 0.0, %v1317
      %v1319 = vpop.f32.mrf.mxu0
      %1320 = vdwg.mxu0
      %1321 = vmatprep.subr.mxu0 %v866
      %1322 = vmatpush1.msra.mxu0 %v865
      %1323 = vmatprep.subr.mxu0 %v864
      %1324 = vmatpush1.msra.mxu0 %v863
      %1325 = vmatprep.subr.mxu0 %v862
      %1326 = vmatpush1.msra.mxu0 %v861
      %1327 = vmatprep.subr.mxu0 %v860
      %1328 = vmatpush1.msra.mxu0 %v859
      %1329 = vmatprep.subr.mxu0 %v858
      %1330 = vmatpush1.msra.mxu0 %v857
      %1331 = vmatprep.subr.mxu0 %v856
      %1332 = vmatpush1.msra.mxu0 %v855
      %1333 = vmatprep.subr.mxu0 %v854
      %1334 = vmatpush1.msra.mxu0 %v853
      %1335 = vmatprep.subr.mxu0 %v852
      %1336 = vmatpush1.msra.mxu0 %v851
      %1337 = vmatprep.subr.mxu0 %v850
      %1338 = vmatpush1.msra.mxu0 %v849
      %1339 = vmatprep.subr.mxu0 %v848
      %1340 = vmatpush1.msra.mxu0 %v847
      %1341 = vmatprep.subr.mxu0 %v846
      %1342 = vmatpush1.msra.mxu0 %v845
      %1343 = vmatprep.subr.mxu0 %v844
      %1344 = vmatpush1.msra.mxu0 %v843
      %1345 = vmatprep.subr.mxu0 %v842
      %1346 = vmatpush1.msra.mxu0 %v841
      %1347 = vmatprep.subr.mxu0 %v840
      %1348 = vmatpush1.msra.mxu0 %v839
      %1349 = vmatprep.subr.mxu0 %v838
      %1350 = vmatpush1.msra.mxu0 %v837
      %1351 = vmatprep.subr.mxu0 %v836
      %1352 = vmatpush1.msra.mxu0 %v835
      %1353 = vmatprep.subr.mxu0 0.0
      %1354 = vmatpush2.msra.mxu0 0.0
      %1355 = vmatprep.subr.mxu0 0.0
      %1356 = vmatpush2.msra.mxu0 0.0
      %1357 = vmatprep.subr.mxu0 0.0
      %1358 = vmatpush2.msra.mxu0 0.0
      %1359 = vmatprep.subr.mxu0 0.0
      %1360 = vmatpush2.msra.mxu0 0.0
      %1361 = vmatprep.subr.mxu0 0.0
      %1362 = vmatpush2.msra.mxu0 0.0
      %1363 = vmatprep.subr.mxu0 0.0
      %1364 = vmatpush2.msra.mxu0 0.0
      %1365 = vmatprep.subr.mxu0 0.0
      %1366 = vmatpush2.msra.mxu0 0.0
      %1367 = vmatprep.subr.mxu0 0.0
      %1368 = vmatpush2.msra.mxu0 0.0
      %1369 = vmatprep.subr.mxu0 0.0
      %1370 = vmatpush2.msra.mxu0 0.0
      %1371 = vmatprep.subr.mxu0 0.0
      %1372 = vmatpush2.msra.mxu0 0.0
      %1373 = vmatprep.subr.mxu0 0.0
      %1374 = vmatpush2.msra.mxu0 0.0
      %1375 = vmatprep.subr.mxu0 0.0
      %1376 = vmatpush2.msra.mxu0 0.0
      %1377 = vmatprep.subr.mxu0 0.0
      %1378 = vmatpush2.msra.mxu0 0.0
      %1379 = vmatprep.subr.mxu0 0.0
      %1380 = vmatpush2.msra.mxu0 0.0
      %1381 = vmatprep.subr.mxu0 0.0
      %1382 = vmatpush2.msra.mxu0 0.0
      %1383 = vmatprep.subr.mxu0 0.0
      %1384 = vmatpush2.msra.mxu0 0.0
      %1385 = vmatprep.mubr.f32.mxu0 0.0
      %1386 = vmatmul.mubr.f32.gmra.mxu0 %v1313
      %v1387 = vpop.f32.mrf.mxu0
      %v1388 = vadd.f32 0.0, %v1387
      %v1389 = vpop.f32.mrf.mxu0
      %v1390 = vadd.f32 0.0, %v1389
      %1391 = vmatprep.mubr.f32.mxu0 0.0
      %1392 = vmatmul.mubr.f32.gmra.mxu0 %v1318
      %v1393 = vpop.f32.mrf.mxu0
      %v1394 = vadd.f32 0.0, %v1393
      %v1395 = vpop.f32.mrf.mxu0
      %v1396 = vadd.f32 0.0, %v1395
      %1397 = vdwg.mxu0
      %v1398 = vadd.f32 %v1139, %v1388
      %v1399 = vadd.f32 %v1140, %v1390
      %v1400 = vadd.f32 %v1141, %v1394
      %v1401 = vadd.f32 %v1142, %v1396
      %1402 = vst [vmem:[%s278] sm:$0xff] %v1398
      %1403 = vst [vmem:[%s278 + $0x8] sm:$0xff] %v1399
      %1404 = vst [vmem:[%s278 + $0x10] sm:$0xff] %v1400
      %1405 = vst [vmem:[%s278 + $0x18] sm:$0xff] %v1401
      %p1406 = scmp.lt.s32.totalorder %s18, 1
      %s1407 = scalar_select %p1406, %s18, 1
      %s1408 = smul.addr %s1407, 4
      %s1409 = smul.addr %s1408, 8
      %s1410 = scalar_lea.vmem %s7, %s1409
      // Predicated region
      $region49: #{_lambda_.6} parent=47 // pred_check
        %p1411 = pneg %p188
      $region50: #{_lambda_.6} parent=47 // pred_check_branch
        %1413 = sbr.rel (%p1411) target = $region52
      $region51: #{_lambda_.6} parent=47 // pred_region
        _
      $region52: #{_lambda_.6} parent=47 // pred_fallthru
        _
    $region48: #{_lambda_.6} parent=5 // pred_fallthru
      _
    %p1414 = scmp.le.s32.totalorder 2, %s13
    // Predicated region
    $region53: #{_lambda_.6} parent=5 // pred_check
      %p1415 = pneg %p1414
    $region54: #{_lambda_.6} parent=5 // pred_check_branch
      %1417 = sbr.rel (%p1415) target = $region56
    $region55: #{_lambda_.6} parent=5 // pred_region
      %s1418 = ssub.s32 %s13, 2
      // Predicated region
      $region57: #{_lambda_.6} parent=55 // pred_check
        %p1419 = pneg %p194
      $region58: #{_lambda_.6} parent=55 // pred_check_branch
        %1421 = sbr.rel (%p1419) target = $region60
      $region59: #{_lambda_.6} parent=55 // pred_region
        %p1422 = scmp.lt.s32.totalorder %s19, 1
        %s1423 = scalar_select %p1422, %s19, 1
        %s1424 = smul.addr %s1423, 4
        %s1425 = smul.addr %s1424, 8
        %s1426 = scalar_lea.vmem %s7, %s1425
      $region60: #{_lambda_.6} parent=55 // pred_fallthru
        _
    $region56: #{_lambda_.6} parent=5 // pred_fallthru
      _
  $region6: #{_lambda_.6} parent=0 // loop_footer
    %s17 = sadd.s32 1, %s13
  $region7: #{_lambda_.6} parent=0 // loop_footer_branch
    %12 = sbr.rel target = $region3
  $region8: #{_lambda_.6} parent=0 // loop_exit
    _

// kernel: _lambda_.7
$region0: #{_lambda_.7}
  #allocation0 [shape = 'u32[]', space=smem, size = 0x4, offset = 0x4, fixed_abs, tag = 'smem constant byte address 0x4 - core index']
  #allocation1 [shape = 'u32[144,128]{1,0:T(1,128)}', space=vmem, size = 0x12000, scoped, tag = 'internal scratch']
  %s0 = inlined_call_operand.vmem [shape: f32[32,256], index: 0, kind: input, shape index: {}]
  %s1 = inlined_call_operand.vmem [shape: f32[1,256], index: 1, kind: input, shape index: {}]
  %s2 = inlined_call_operand.vmem [shape: f32[1,256], index: 2, kind: input, shape index: {}]
  %s3 = inlined_call_operand.vmem [shape: f32[256,1024], index: 3, kind: input, shape index: {}]
  %s4 = inlined_call_operand.vmem [shape: f32[1,1024], index: 4, kind: input, shape index: {}]
  %s5 = inlined_call_operand.vmem [shape: f32[1024,256], index: 5, kind: input, shape index: {}]
  %s6 = inlined_call_operand.vmem [shape: f32[1,256], index: 6, kind: input, shape index: {}]
  %s7 = inlined_call_operand.vmem [shape: f32[32,256], index: 7, kind: output, shape index: {}]
  %s8 = sld [smem:[#allocation0]]
  $region38: #{_lambda_.7} parent=0
    _
  %s10 = ssub.s32 1, %s8
  %s11 = scalar_select 0, %s10, %s8
  // Predicated region
  $region2: #{_lambda_.7} parent=0 // pred_check
    _
  $region3: #{_lambda_.7} parent=0 // pred_check_branch
    %13 = sbr.rel (0) target = $region5
  $region4: #{_lambda_.7} parent=0 // pred_region
    _
  $region5: #{_lambda_.7} parent=0 // pred_fallthru
    _
  // Predicated region
  $region6: #{_lambda_.7} parent=0 // pred_check
    _
  $region7: #{_lambda_.7} parent=0 // pred_check_branch
    %15 = sbr.rel (0) target = $region9
  $region8: #{_lambda_.7} parent=0 // pred_region
    _
  $region9: #{_lambda_.7} parent=0 // pred_fallthru
    _
  // Predicated region
  $region10: #{_lambda_.7} parent=0 // pred_check
    _
  $region11: #{_lambda_.7} parent=0 // pred_check_branch
    %17 = sbr.rel (0) target = $region13
  $region12: #{_lambda_.7} parent=0 // pred_region
    _
  $region13: #{_lambda_.7} parent=0 // pred_fallthru
    _
  // Predicated region
  $region14: #{_lambda_.7} parent=0 // pred_check
    _
  $region15: #{_lambda_.7} parent=0 // pred_check_branch
    %19 = sbr.rel (0) target = $region17
  $region16: #{_lambda_.7} parent=0 // pred_region
    _
  $region17: #{_lambda_.7} parent=0 // pred_fallthru
    _
  // Predicated region
  $region18: #{_lambda_.7} parent=0 // pred_check
    _
  $region19: #{_lambda_.7} parent=0 // pred_check_branch
    %21 = sbr.rel (0) target = $region21
  $region20: #{_lambda_.7} parent=0 // pred_region
    _
  $region21: #{_lambda_.7} parent=0 // pred_fallthru
    _
  // Predicated region
  $region22: #{_lambda_.7} parent=0 // pred_check
    _
  $region23: #{_lambda_.7} parent=0 // pred_check_branch
    %23 = sbr.rel (0) target = $region25
  $region24: #{_lambda_.7} parent=0 // pred_region
    _
  $region25: #{_lambda_.7} parent=0 // pred_fallthru
    _
  // Predicated region
  $region26: #{_lambda_.7} parent=0 // pred_check
    _
  $region27: #{_lambda_.7} parent=0 // pred_check_branch
    %25 = sbr.rel (0) target = $region29
  $region28: #{_lambda_.7} parent=0 // pred_region
    _
  $region29: #{_lambda_.7} parent=0 // pred_fallthru
    _
  %v26 = vld [vmem:[%s0] sm:$0xff]
  %v27 = vld [vmem:[%s0 + $0x8] sm:$0xff]
  %v28 = vld [vmem:[%s0 + $0x10] sm:$0xff]
  %v29 = vld [vmem:[%s0 + $0x18] sm:$0xff]
  %v30 = vld [vmem:[%s0 + $0x20] sm:$0xff]
  %v31 = vld [vmem:[%s0 + $0x28] sm:$0xff]
  %v32 = vld [vmem:[%s0 + $0x30] sm:$0xff]
  %v33 = vld [vmem:[%s0 + $0x38] sm:$0xff]
  %v34 = vld [vmem:[%s1] sm:$0x3]
  %v35 = vld [vmem:[%s2] sm:$0x3]
  %v36 = vadd.f32 %v26, %v27
  %37 = vadd.xlane.f32.xlu0 %v36
  %v38 = vpop.xlane.xlu0 %37
  %v39 = vadd.f32 %v28, %v29
  %40 = vadd.xlane.f32.xlu0 %v39
  %v41 = vpop.xlane.xlu0 %40
  %v42 = vadd.f32 %v30, %v31
  %43 = vadd.xlane.f32.xlu0 %v42
  %v44 = vpop.xlane.xlu0 %43
  %v45 = vadd.f32 %v32, %v33
  %46 = vadd.xlane.f32.xlu0 %v45
  %v47 = vpop.xlane.xlu0 %46
  %v48 = vrcp.pop 256.0
  %v49 = vmul.f32 %v38, %v48
  %v50 = vmul.f32 %v41, %v48
  %v51 = vmul.f32 %v44, %v48
  %v52 = vmul.f32 %v47, %v48
  %v53 = vsub.f32 %v26, %v49
  %v54 = vsub.f32 %v27, %v49
  %v55 = vsub.f32 %v28, %v50
  %v56 = vsub.f32 %v29, %v50
  %v57 = vsub.f32 %v30, %v51
  %v58 = vsub.f32 %v31, %v51
  %v59 = vsub.f32 %v32, %v52
  %v60 = vsub.f32 %v33, %v52
  %v61 = vmul.f32 %v53, %v53
  %v62 = vmul.f32 %v54, %v54
  %v63 = vmul.f32 %v55, %v55
  %v64 = vmul.f32 %v56, %v56
  %v65 = vmul.f32 %v57, %v57
  %v66 = vmul.f32 %v58, %v58
  %v67 = vmul.f32 %v59, %v59
  %v68 = vmul.f32 %v60, %v60
  %v69 = vadd.f32 %v61, %v62
  %70 = vadd.xlane.f32.xlu0 %v69
  %v71 = vpop.xlane.xlu0 %70
  %v72 = vadd.f32 %v63, %v64
  %73 = vadd.xlane.f32.xlu0 %v72
  %v74 = vpop.xlane.xlu0 %73
  %v75 = vadd.f32 %v65, %v66
  %76 = vadd.xlane.f32.xlu0 %v75
  %v77 = vpop.xlane.xlu0 %76
  %v78 = vadd.f32 %v67, %v68
  %79 = vadd.xlane.f32.xlu0 %v78
  %v80 = vpop.xlane.xlu0 %79
  %v81 = vmul.f32 %v71, %v48
  %v82 = vmul.f32 %v74, %v48
  %v83 = vmul.f32 %v77, %v48
  %v84 = vmul.f32 %v80, %v48
  %v85 = vadd.f32 %v81, 1e-05
  %v86 = vadd.f32 %v82, 1e-05
  %v87 = vadd.f32 %v83, 1e-05
  %v88 = vadd.f32 %v84, 1e-05
  %v89 = vrsqrt.pop %v85
  %v90 = vrsqrt.pop %v86
  %v91 = vrsqrt.pop %v87
  %v92 = vrsqrt.pop %v88
  %v93 = vmul.f32 %v53, %v89
  %v94 = vmul.f32 %v54, %v89
  %v95 = vmul.f32 %v55, %v90
  %v96 = vmul.f32 %v56, %v90
  %v97 = vmul.f32 %v57, %v91
  %v98 = vmul.f32 %v58, %v91
  %v99 = vmul.f32 %v59, %v92
  %v100 = vmul.f32 %v60, %v92
  %v102 = vlaneseq
  %v103 = vshrl.u32 %v102, 7
  %v104 = vsub.s32 0, %v103
  %v105 = vrot.slane %v34, %v104
  %v106 = vlaneseq
  %v107 = vshrl.u32 %v106, 7
  %v108 = vsub.s32 1, %v107
  %v109 = vrot.slane %v34, %v108
  %v112 = vmul.f32 %v93, %v105
  %v113 = vmul.f32 %v94, %v109
  %v114 = vmul.f32 %v95, %v105
  %v115 = vmul.f32 %v96, %v109
  %v116 = vmul.f32 %v97, %v105
  %v117 = vmul.f32 %v98, %v109
  %v118 = vmul.f32 %v99, %v105
  %v119 = vmul.f32 %v100, %v109
  %v121 = vlaneseq
  %v122 = vshrl.u32 %v121, 7
  %v123 = vsub.s32 0, %v122
  %v124 = vrot.slane %v35, %v123
  %v125 = vlaneseq
  %v126 = vshrl.u32 %v125, 7
  %v127 = vsub.s32 1, %v126
  %v128 = vrot.slane %v35, %v127
  %v131 = vadd.f32 %v112, %v124
  %v132 = vadd.f32 %v113, %v128
  %v133 = vadd.f32 %v114, %v124
  %v134 = vadd.f32 %v115, %v128
  %v135 = vadd.f32 %v116, %v124
  %v136 = vadd.f32 %v117, %v128
  %v137 = vadd.f32 %v118, %v124
  %v138 = vadd.f32 %v119, %v128
  %v139 = vld [vmem:[%s3] sm:$0xff]
  %v140 = vld [vmem:[%s3 + $0x8] sm:$0xff]
  %v141 = vld [vmem:[%s3 + $0x10] sm:$0xff]
  %v142 = vld [vmem:[%s3 + $0x18] sm:$0xff]
  %v143 = vld [vmem:[%s3 + $0x20] sm:$0xff]
  %v144 = vld [vmem:[%s3 + $0x28] sm:$0xff]
  %v145 = vld [vmem:[%s3 + $0x30] sm:$0xff]
  %v146 = vld [vmem:[%s3 + $0x38] sm:$0xff]
  %v147 = vld [vmem:[%s3 + $0x40] sm:$0xff]
  %v148 = vld [vmem:[%s3 + $0x48] sm:$0xff]
  %v149 = vld [vmem:[%s3 + $0x50] sm:$0xff]
  %v150 = vld [vmem:[%s3 + $0x58] sm:$0xff]
  %v151 = vld [vmem:[%s3 + $0x60] sm:$0xff]
  %v152 = vld [vmem:[%s3 + $0x68] sm:$0xff]
  %v153 = vld [vmem:[%s3 + $0x70] sm:$0xff]
  %v154 = vld [vmem:[%s3 + $0x78] sm:$0xff]
  %v155 = vld [vmem:[%s3 + $0x80] sm:$0xff]
  %v156 = vld [vmem:[%s3 + $0x88] sm:$0xff]
  %v157 = vld [vmem:[%s3 + $0x90] sm:$0xff]
  %v158 = vld [vmem:[%s3 + $0x98] sm:$0xff]
  %v159 = vld [vmem:[%s3 + $0xa0] sm:$0xff]
  %v160 = vld [vmem:[%s3 + $0xa8] sm:$0xff]
  %v161 = vld [vmem:[%s3 + $0xb0] sm:$0xff]
  %v162 = vld [vmem:[%s3 + $0xb8] sm:$0xff]
  %v163 = vld [vmem:[%s3 + $0xc0] sm:$0xff]
  %v164 = vld [vmem:[%s3 + $0xc8] sm:$0xff]
  %v165 = vld [vmem:[%s3 + $0xd0] sm:$0xff]
  %v166 = vld [vmem:[%s3 + $0xd8] sm:$0xff]
  %v167 = vld [vmem:[%s3 + $0xe0] sm:$0xff]
  %v168 = vld [vmem:[%s3 + $0xe8] sm:$0xff]
  %v169 = vld [vmem:[%s3 + $0xf0] sm:$0xff]
  %v170 = vld [vmem:[%s3 + $0xf8] sm:$0xff]
  %v171 = vld [vmem:[%s3 + $0x100] sm:$0xff]
  %v172 = vld [vmem:[%s3 + $0x108] sm:$0xff]
  %v173 = vld [vmem:[%s3 + $0x110] sm:$0xff]
  %v174 = vld [vmem:[%s3 + $0x118] sm:$0xff]
  %v175 = vld [vmem:[%s3 + $0x120] sm:$0xff]
  %v176 = vld [vmem:[%s3 + $0x128] sm:$0xff]
  %v177 = vld [vmem:[%s3 + $0x130] sm:$0xff]
  %v178 = vld [vmem:[%s3 + $0x138] sm:$0xff]
  %v179 = vld [vmem:[%s3 + $0x140] sm:$0xff]
  %v180 = vld [vmem:[%s3 + $0x148] sm:$0xff]
  %v181 = vld [vmem:[%s3 + $0x150] sm:$0xff]
  %v182 = vld [vmem:[%s3 + $0x158] sm:$0xff]
  %v183 = vld [vmem:[%s3 + $0x160] sm:$0xff]
  %v184 = vld [vmem:[%s3 + $0x168] sm:$0xff]
  %v185 = vld [vmem:[%s3 + $0x170] sm:$0xff]
  %v186 = vld [vmem:[%s3 + $0x178] sm:$0xff]
  %v187 = vld [vmem:[%s3 + $0x180] sm:$0xff]
  %v188 = vld [vmem:[%s3 + $0x188] sm:$0xff]
  %v189 = vld [vmem:[%s3 + $0x190] sm:$0xff]
  %v190 = vld [vmem:[%s3 + $0x198] sm:$0xff]
  %v191 = vld [vmem:[%s3 + $0x1a0] sm:$0xff]
  %v192 = vld [vmem:[%s3 + $0x1a8] sm:$0xff]
  %v193 = vld [vmem:[%s3 + $0x1b0] sm:$0xff]
  %v194 = vld [vmem:[%s3 + $0x1b8] sm:$0xff]
  %v195 = vld [vmem:[%s3 + $0x1c0] sm:$0xff]
  %v196 = vld [vmem:[%s3 + $0x1c8] sm:$0xff]
  %v197 = vld [vmem:[%s3 + $0x1d0] sm:$0xff]
  %v198 = vld [vmem:[%s3 + $0x1d8] sm:$0xff]
  %v199 = vld [vmem:[%s3 + $0x1e0] sm:$0xff]
  %v200 = vld [vmem:[%s3 + $0x1e8] sm:$0xff]
  %v201 = vld [vmem:[%s3 + $0x1f0] sm:$0xff]
  %v202 = vld [vmem:[%s3 + $0x1f8] sm:$0xff]
  %v203 = vld [vmem:[%s3 + $0x200] sm:$0xff]
  %v204 = vld [vmem:[%s3 + $0x208] sm:$0xff]
  %v205 = vld [vmem:[%s3 + $0x210] sm:$0xff]
  %v206 = vld [vmem:[%s3 + $0x218] sm:$0xff]
  %v207 = vld [vmem:[%s3 + $0x220] sm:$0xff]
  %v208 = vld [vmem:[%s3 + $0x228] sm:$0xff]
  %v209 = vld [vmem:[%s3 + $0x230] sm:$0xff]
  %v210 = vld [vmem:[%s3 + $0x238] sm:$0xff]
  %v211 = vld [vmem:[%s3 + $0x240] sm:$0xff]
  %v212 = vld [vmem:[%s3 + $0x248] sm:$0xff]
  %v213 = vld [vmem:[%s3 + $0x250] sm:$0xff]
  %v214 = vld [vmem:[%s3 + $0x258] sm:$0xff]
  %v215 = vld [vmem:[%s3 + $0x260] sm:$0xff]
  %v216 = vld [vmem:[%s3 + $0x268] sm:$0xff]
  %v217 = vld [vmem:[%s3 + $0x270] sm:$0xff]
  %v218 = vld [vmem:[%s3 + $0x278] sm:$0xff]
  %v219 = vld [vmem:[%s3 + $0x280] sm:$0xff]
  %v220 = vld [vmem:[%s3 + $0x288] sm:$0xff]
  %v221 = vld [vmem:[%s3 + $0x290] sm:$0xff]
  %v222 = vld [vmem:[%s3 + $0x298] sm:$0xff]
  %v223 = vld [vmem:[%s3 + $0x2a0] sm:$0xff]
  %v224 = vld [vmem:[%s3 + $0x2a8] sm:$0xff]
  %v225 = vld [vmem:[%s3 + $0x2b0] sm:$0xff]
  %v226 = vld [vmem:[%s3 + $0x2b8] sm:$0xff]
  %v227 = vld [vmem:[%s3 + $0x2c0] sm:$0xff]
  %v228 = vld [vmem:[%s3 + $0x2c8] sm:$0xff]
  %v229 = vld [vmem:[%s3 + $0x2d0] sm:$0xff]
  %v230 = vld [vmem:[%s3 + $0x2d8] sm:$0xff]
  %v231 = vld [vmem:[%s3 + $0x2e0] sm:$0xff]
  %v232 = vld [vmem:[%s3 + $0x2e8] sm:$0xff]
  %v233 = vld [vmem:[%s3 + $0x2f0] sm:$0xff]
  %v234 = vld [vmem:[%s3 + $0x2f8] sm:$0xff]
  %v235 = vld [vmem:[%s3 + $0x300] sm:$0xff]
  %v236 = vld [vmem:[%s3 + $0x308] sm:$0xff]
  %v237 = vld [vmem:[%s3 + $0x310] sm:$0xff]
  %v238 = vld [vmem:[%s3 + $0x318] sm:$0xff]
  %v239 = vld [vmem:[%s3 + $0x320] sm:$0xff]
  %v240 = vld [vmem:[%s3 + $0x328] sm:$0xff]
  %v241 = vld [vmem:[%s3 + $0x330] sm:$0xff]
  %v242 = vld [vmem:[%s3 + $0x338] sm:$0xff]
  %v243 = vld [vmem:[%s3 + $0x340] sm:$0xff]
  %v244 = vld [vmem:[%s3 + $0x348] sm:$0xff]
  %v245 = vld [vmem:[%s3 + $0x350] sm:$0xff]
  %v246 = vld [vmem:[%s3 + $0x358] sm:$0xff]
  %v247 = vld [vmem:[%s3 + $0x360] sm:$0xff]
  %v248 = vld [vmem:[%s3 + $0x368] sm:$0xff]
  %v249 = vld [vmem:[%s3 + $0x370] sm:$0xff]
  %v250 = vld [vmem:[%s3 + $0x378] sm:$0xff]
  %v251 = vld [vmem:[%s3 + $0x380] sm:$0xff]
  %v252 = vld [vmem:[%s3 + $0x388] sm:$0xff]
  %v253 = vld [vmem:[%s3 + $0x390] sm:$0xff]
  %v254 = vld [vmem:[%s3 + $0x398] sm:$0xff]
  %v255 = vld [vmem:[%s3 + $0x3a0] sm:$0xff]
  %v256 = vld [vmem:[%s3 + $0x3a8] sm:$0xff]
  %v257 = vld [vmem:[%s3 + $0x3b0] sm:$0xff]
  %v258 = vld [vmem:[%s3 + $0x3b8] sm:$0xff]
  %v259 = vld [vmem:[%s3 + $0x3c0] sm:$0xff]
  %v260 = vld [vmem:[%s3 + $0x3c8] sm:$0xff]
  %v261 = vld [vmem:[%s3 + $0x3d0] sm:$0xff]
  %v262 = vld [vmem:[%s3 + $0x3d8] sm:$0xff]
  %v263 = vld [vmem:[%s3 + $0x3e0] sm:$0xff]
  %v264 = vld [vmem:[%s3 + $0x3e8] sm:$0xff]
  %v265 = vld [vmem:[%s3 + $0x3f0] sm:$0xff]
  %v266 = vld [vmem:[%s3 + $0x3f8] sm:$0xff]
  %v267 = vld [vmem:[%s3 + $0x400] sm:$0xff]
  %v268 = vld [vmem:[%s3 + $0x408] sm:$0xff]
  %v269 = vld [vmem:[%s3 + $0x410] sm:$0xff]
  %v270 = vld [vmem:[%s3 + $0x418] sm:$0xff]
  %v271 = vld [vmem:[%s3 + $0x420] sm:$0xff]
  %v272 = vld [vmem:[%s3 + $0x428] sm:$0xff]
  %v273 = vld [vmem:[%s3 + $0x430] sm:$0xff]
  %v274 = vld [vmem:[%s3 + $0x438] sm:$0xff]
  %v275 = vld [vmem:[%s3 + $0x440] sm:$0xff]
  %v276 = vld [vmem:[%s3 + $0x448] sm:$0xff]
  %v277 = vld [vmem:[%s3 + $0x450] sm:$0xff]
  %v278 = vld [vmem:[%s3 + $0x458] sm:$0xff]
  %v279 = vld [vmem:[%s3 + $0x460] sm:$0xff]
  %v280 = vld [vmem:[%s3 + $0x468] sm:$0xff]
  %v281 = vld [vmem:[%s3 + $0x470] sm:$0xff]
  %v282 = vld [vmem:[%s3 + $0x478] sm:$0xff]
  %v283 = vld [vmem:[%s3 + $0x480] sm:$0xff]
  %v284 = vld [vmem:[%s3 + $0x488] sm:$0xff]
  %v285 = vld [vmem:[%s3 + $0x490] sm:$0xff]
  %v286 = vld [vmem:[%s3 + $0x498] sm:$0xff]
  %v287 = vld [vmem:[%s3 + $0x4a0] sm:$0xff]
  %v288 = vld [vmem:[%s3 + $0x4a8] sm:$0xff]
  %v289 = vld [vmem:[%s3 + $0x4b0] sm:$0xff]
  %v290 = vld [vmem:[%s3 + $0x4b8] sm:$0xff]
  %v291 = vld [vmem:[%s3 + $0x4c0] sm:$0xff]
  %v292 = vld [vmem:[%s3 + $0x4c8] sm:$0xff]
  %v293 = vld [vmem:[%s3 + $0x4d0] sm:$0xff]
  %v294 = vld [vmem:[%s3 + $0x4d8] sm:$0xff]
  %v295 = vld [vmem:[%s3 + $0x4e0] sm:$0xff]
  %v296 = vld [vmem:[%s3 + $0x4e8] sm:$0xff]
  %v297 = vld [vmem:[%s3 + $0x4f0] sm:$0xff]
  %v298 = vld [vmem:[%s3 + $0x4f8] sm:$0xff]
  %v299 = vld [vmem:[%s3 + $0x500] sm:$0xff]
  %v300 = vld [vmem:[%s3 + $0x508] sm:$0xff]
  %v301 = vld [vmem:[%s3 + $0x510] sm:$0xff]
  %v302 = vld [vmem:[%s3 + $0x518] sm:$0xff]
  %v303 = vld [vmem:[%s3 + $0x520] sm:$0xff]
  %v304 = vld [vmem:[%s3 + $0x528] sm:$0xff]
  %v305 = vld [vmem:[%s3 + $0x530] sm:$0xff]
  %v306 = vld [vmem:[%s3 + $0x538] sm:$0xff]
  %v307 = vld [vmem:[%s3 + $0x540] sm:$0xff]
  %v308 = vld [vmem:[%s3 + $0x548] sm:$0xff]
  %v309 = vld [vmem:[%s3 + $0x550] sm:$0xff]
  %v310 = vld [vmem:[%s3 + $0x558] sm:$0xff]
  %v311 = vld [vmem:[%s3 + $0x560] sm:$0xff]
  %v312 = vld [vmem:[%s3 + $0x568] sm:$0xff]
  %v313 = vld [vmem:[%s3 + $0x570] sm:$0xff]
  %v314 = vld [vmem:[%s3 + $0x578] sm:$0xff]
  %v315 = vld [vmem:[%s3 + $0x580] sm:$0xff]
  %v316 = vld [vmem:[%s3 + $0x588] sm:$0xff]
  %v317 = vld [vmem:[%s3 + $0x590] sm:$0xff]
  %v318 = vld [vmem:[%s3 + $0x598] sm:$0xff]
  %v319 = vld [vmem:[%s3 + $0x5a0] sm:$0xff]
  %v320 = vld [vmem:[%s3 + $0x5a8] sm:$0xff]
  %v321 = vld [vmem:[%s3 + $0x5b0] sm:$0xff]
  %v322 = vld [vmem:[%s3 + $0x5b8] sm:$0xff]
  %v323 = vld [vmem:[%s3 + $0x5c0] sm:$0xff]
  %v324 = vld [vmem:[%s3 + $0x5c8] sm:$0xff]
  %v325 = vld [vmem:[%s3 + $0x5d0] sm:$0xff]
  %v326 = vld [vmem:[%s3 + $0x5d8] sm:$0xff]
  %v327 = vld [vmem:[%s3 + $0x5e0] sm:$0xff]
  %v328 = vld [vmem:[%s3 + $0x5e8] sm:$0xff]
  %v329 = vld [vmem:[%s3 + $0x5f0] sm:$0xff]
  %v330 = vld [vmem:[%s3 + $0x5f8] sm:$0xff]
  %v331 = vld [vmem:[%s3 + $0x600] sm:$0xff]
  %v332 = vld [vmem:[%s3 + $0x608] sm:$0xff]
  %v333 = vld [vmem:[%s3 + $0x610] sm:$0xff]
  %v334 = vld [vmem:[%s3 + $0x618] sm:$0xff]
  %v335 = vld [vmem:[%s3 + $0x620] sm:$0xff]
  %v336 = vld [vmem:[%s3 + $0x628] sm:$0xff]
  %v337 = vld [vmem:[%s3 + $0x630] sm:$0xff]
  %v338 = vld [vmem:[%s3 + $0x638] sm:$0xff]
  %v339 = vld [vmem:[%s3 + $0x640] sm:$0xff]
  %v340 = vld [vmem:[%s3 + $0x648] sm:$0xff]
  %v341 = vld [vmem:[%s3 + $0x650] sm:$0xff]
  %v342 = vld [vmem:[%s3 + $0x658] sm:$0xff]
  %v343 = vld [vmem:[%s3 + $0x660] sm:$0xff]
  %v344 = vld [vmem:[%s3 + $0x668] sm:$0xff]
  %v345 = vld [vmem:[%s3 + $0x670] sm:$0xff]
  %v346 = vld [vmem:[%s3 + $0x678] sm:$0xff]
  %v347 = vld [vmem:[%s3 + $0x680] sm:$0xff]
  %v348 = vld [vmem:[%s3 + $0x688] sm:$0xff]
  %v349 = vld [vmem:[%s3 + $0x690] sm:$0xff]
  %v350 = vld [vmem:[%s3 + $0x698] sm:$0xff]
  %v351 = vld [vmem:[%s3 + $0x6a0] sm:$0xff]
  %v352 = vld [vmem:[%s3 + $0x6a8] sm:$0xff]
  %v353 = vld [vmem:[%s3 + $0x6b0] sm:$0xff]
  %v354 = vld [vmem:[%s3 + $0x6b8] sm:$0xff]
  %v355 = vld [vmem:[%s3 + $0x6c0] sm:$0xff]
  %v356 = vld [vmem:[%s3 + $0x6c8] sm:$0xff]
  %v357 = vld [vmem:[%s3 + $0x6d0] sm:$0xff]
  %v358 = vld [vmem:[%s3 + $0x6d8] sm:$0xff]
  %v359 = vld [vmem:[%s3 + $0x6e0] sm:$0xff]
  %v360 = vld [vmem:[%s3 + $0x6e8] sm:$0xff]
  %v361 = vld [vmem:[%s3 + $0x6f0] sm:$0xff]
  %v362 = vld [vmem:[%s3 + $0x6f8] sm:$0xff]
  %v363 = vld [vmem:[%s3 + $0x700] sm:$0xff]
  %v364 = vld [vmem:[%s3 + $0x708] sm:$0xff]
  %v365 = vld [vmem:[%s3 + $0x710] sm:$0xff]
  %v366 = vld [vmem:[%s3 + $0x718] sm:$0xff]
  %v367 = vld [vmem:[%s3 + $0x720] sm:$0xff]
  %v368 = vld [vmem:[%s3 + $0x728] sm:$0xff]
  %v369 = vld [vmem:[%s3 + $0x730] sm:$0xff]
  %v370 = vld [vmem:[%s3 + $0x738] sm:$0xff]
  %v371 = vld [vmem:[%s3 + $0x740] sm:$0xff]
  %v372 = vld [vmem:[%s3 + $0x748] sm:$0xff]
  %v373 = vld [vmem:[%s3 + $0x750] sm:$0xff]
  %v374 = vld [vmem:[%s3 + $0x758] sm:$0xff]
  %v375 = vld [vmem:[%s3 + $0x760] sm:$0xff]
  %v376 = vld [vmem:[%s3 + $0x768] sm:$0xff]
  %v377 = vld [vmem:[%s3 + $0x770] sm:$0xff]
  %v378 = vld [vmem:[%s3 + $0x778] sm:$0xff]
  %v379 = vld [vmem:[%s3 + $0x780] sm:$0xff]
  %v380 = vld [vmem:[%s3 + $0x788] sm:$0xff]
  %v381 = vld [vmem:[%s3 + $0x790] sm:$0xff]
  %v382 = vld [vmem:[%s3 + $0x798] sm:$0xff]
  %v383 = vld [vmem:[%s3 + $0x7a0] sm:$0xff]
  %v384 = vld [vmem:[%s3 + $0x7a8] sm:$0xff]
  %v385 = vld [vmem:[%s3 + $0x7b0] sm:$0xff]
  %v386 = vld [vmem:[%s3 + $0x7b8] sm:$0xff]
  %v387 = vld [vmem:[%s3 + $0x7c0] sm:$0xff]
  %v388 = vld [vmem:[%s3 + $0x7c8] sm:$0xff]
  %v389 = vld [vmem:[%s3 + $0x7d0] sm:$0xff]
  %v390 = vld [vmem:[%s3 + $0x7d8] sm:$0xff]
  %v391 = vld [vmem:[%s3 + $0x7e0] sm:$0xff]
  %v392 = vld [vmem:[%s3 + $0x7e8] sm:$0xff]
  %v393 = vld [vmem:[%s3 + $0x7f0] sm:$0xff]
  %v394 = vld [vmem:[%s3 + $0x7f8] sm:$0xff]
  %v395 = vld [vmem:[%s4] sm:$0xff]
  %v397 = vlaneseq
  %v398 = vshrl.u32 %v397, 7
  %v399 = vsub.s32 0, %v398
  %v400 = vrot.slane %v395, %v399
  %v401 = vlaneseq
  %v402 = vshrl.u32 %v401, 7
  %v403 = vsub.s32 1, %v402
  %v404 = vrot.slane %v395, %v403
  %v405 = vlaneseq
  %v406 = vshrl.u32 %v405, 7
  %v407 = vsub.s32 2, %v406
  %v408 = vrot.slane %v395, %v407
  %v409 = vlaneseq
  %v410 = vshrl.u32 %v409, 7
  %v411 = vsub.s32 3, %v410
  %v412 = vrot.slane %v395, %v411
  %v413 = vlaneseq
  %v414 = vshrl.u32 %v413, 7
  %v415 = vsub.s32 4, %v414
  %v416 = vrot.slane %v395, %v415
  %v417 = vlaneseq
  %v418 = vshrl.u32 %v417, 7
  %v419 = vsub.s32 5, %v418
  %v420 = vrot.slane %v395, %v419
  %v421 = vlaneseq
  %v422 = vshrl.u32 %v421, 7
  %v423 = vsub.s32 6, %v422
  %v424 = vrot.slane %v395, %v423
  %v425 = vlaneseq
  %v426 = vshrl.u32 %v425, 7
  %v427 = vsub.s32 7, %v426
  %v428 = vrot.slane %v395, %v427
  %437 = vmatprep.subr.mxu0 %v260
  %438 = vmatpush1.msra.mxu0 %v259
  %439 = vmatprep.subr.mxu0 %v252
  %440 = vmatpush1.msra.mxu0 %v251
  %441 = vmatprep.subr.mxu0 %v244
  %442 = vmatpush1.msra.mxu0 %v243
  %443 = vmatprep.subr.mxu0 %v236
  %444 = vmatpush1.msra.mxu0 %v235
  %445 = vmatprep.subr.mxu0 %v228
  %446 = vmatpush1.msra.mxu0 %v227
  %447 = vmatprep.subr.mxu0 %v220
  %448 = vmatpush1.msra.mxu0 %v219
  %449 = vmatprep.subr.mxu0 %v212
  %450 = vmatpush1.msra.mxu0 %v211
  %451 = vmatprep.subr.mxu0 %v204
  %452 = vmatpush1.msra.mxu0 %v203
  %453 = vmatprep.subr.mxu0 %v196
  %454 = vmatpush1.msra.mxu0 %v195
  %455 = vmatprep.subr.mxu0 %v188
  %456 = vmatpush1.msra.mxu0 %v187
  %457 = vmatprep.subr.mxu0 %v180
  %458 = vmatpush1.msra.mxu0 %v179
  %459 = vmatprep.subr.mxu0 %v172
  %460 = vmatpush1.msra.mxu0 %v171
  %461 = vmatprep.subr.mxu0 %v164
  %462 = vmatpush1.msra.mxu0 %v163
  %463 = vmatprep.subr.mxu0 %v156
  %464 = vmatpush1.msra.mxu0 %v155
  %465 = vmatprep.subr.mxu0 %v148
  %466 = vmatpush1.msra.mxu0 %v147
  %467 = vmatprep.subr.mxu0 %v140
  %468 = vmatpush1.msra.mxu0 %v139
  %469 = vmatprep.subr.mxu0 %v388
  %470 = vmatpush2.msra.mxu0 %v387
  %471 = vmatprep.subr.mxu0 %v380
  %472 = vmatpush2.msra.mxu0 %v379
  %473 = vmatprep.subr.mxu0 %v372
  %474 = vmatpush2.msra.mxu0 %v371
  %475 = vmatprep.subr.mxu0 %v364
  %476 = vmatpush2.msra.mxu0 %v363
  %477 = vmatprep.subr.mxu0 %v356
  %478 = vmatpush2.msra.mxu0 %v355
  %479 = vmatprep.subr.mxu0 %v348
  %480 = vmatpush2.msra.mxu0 %v347
  %481 = vmatprep.subr.mxu0 %v340
  %482 = vmatpush2.msra.mxu0 %v339
  %483 = vmatprep.subr.mxu0 %v332
  %484 = vmatpush2.msra.mxu0 %v331
  %485 = vmatprep.subr.mxu0 %v324
  %486 = vmatpush2.msra.mxu0 %v323
  %487 = vmatprep.subr.mxu0 %v316
  %488 = vmatpush2.msra.mxu0 %v315
  %489 = vmatprep.subr.mxu0 %v308
  %490 = vmatpush2.msra.mxu0 %v307
  %491 = vmatprep.subr.mxu0 %v300
  %492 = vmatpush2.msra.mxu0 %v299
  %493 = vmatprep.subr.mxu0 %v292
  %494 = vmatpush2.msra.mxu0 %v291
  %495 = vmatprep.subr.mxu0 %v284
  %496 = vmatpush2.msra.mxu0 %v283
  %497 = vmatprep.subr.mxu0 %v276
  %498 = vmatpush2.msra.mxu0 %v275
  %499 = vmatprep.subr.mxu0 %v268
  %500 = vmatpush2.msra.mxu0 %v267
  %501 = vmatprep.mubr.f32.mxu0 %v132
  %502 = vmatmul.mubr.f32.gmra.mxu0 %v131
  %v503 = vpop.f32.mrf.mxu0
  %v504 = vadd.f32 %v400, %v503
  %v505 = vpop.f32.mrf.mxu0
  %v506 = vadd.f32 %v404, %v505
  %507 = vmatprep.mubr.f32.mxu0 %v134
  %508 = vmatmul.mubr.f32.gmra.mxu0 %v133
  %v509 = vpop.f32.mrf.mxu0
  %v510 = vadd.f32 %v400, %v509
  %v511 = vpop.f32.mrf.mxu0
  %v512 = vadd.f32 %v404, %v511
  %513 = vmatprep.mubr.f32.mxu0 %v136
  %514 = vmatmul.mubr.f32.gmra.mxu0 %v135
  %v515 = vpop.f32.mrf.mxu0
  %v516 = vadd.f32 %v400, %v515
  %v517 = vpop.f32.mrf.mxu0
  %v518 = vadd.f32 %v404, %v517
  %519 = vmatprep.mubr.f32.mxu0 %v138
  %520 = vmatmul.mubr.f32.gmra.mxu0 %v137
  %v521 = vpop.f32.mrf.mxu0
  %v522 = vadd.f32 %v400, %v521
  %v523 = vpop.f32.mrf.mxu0
  %v524 = vadd.f32 %v404, %v523
  %525 = vdwg.mxu0
  %526 = vmatprep.subr.mxu0 %v262
  %527 = vmatpush1.msra.mxu0 %v261
  %528 = vmatprep.subr.mxu0 %v254
  %529 = vmatpush1.msra.mxu0 %v253
  %530 = vmatprep.subr.mxu0 %v246
  %531 = vmatpush1.msra.mxu0 %v245
  %532 = vmatprep.subr.mxu0 %v238
  %533 = vmatpush1.msra.mxu0 %v237
  %534 = vmatprep.subr.mxu0 %v230
  %535 = vmatpush1.msra.mxu0 %v229
  %536 = vmatprep.subr.mxu0 %v222
  %537 = vmatpush1.msra.mxu0 %v221
  %538 = vmatprep.subr.mxu0 %v214
  %539 = vmatpush1.msra.mxu0 %v213
  %540 = vmatprep.subr.mxu0 %v206
  %541 = vmatpush1.msra.mxu0 %v205
  %542 = vmatprep.subr.mxu0 %v198
  %543 = vmatpush1.msra.mxu0 %v197
  %544 = vmatprep.subr.mxu0 %v190
  %545 = vmatpush1.msra.mxu0 %v189
  %546 = vmatprep.subr.mxu0 %v182
  %547 = vmatpush1.msra.mxu0 %v181
  %548 = vmatprep.subr.mxu0 %v174
  %549 = vmatpush1.msra.mxu0 %v173
  %550 = vmatprep.subr.mxu0 %v166
  %551 = vmatpush1.msra.mxu0 %v165
  %552 = vmatprep.subr.mxu0 %v158
  %553 = vmatpush1.msra.mxu0 %v157
  %554 = vmatprep.subr.mxu0 %v150
  %555 = vmatpush1.msra.mxu0 %v149
  %556 = vmatprep.subr.mxu0 %v142
  %557 = vmatpush1.msra.mxu0 %v141
  %558 = vmatprep.subr.mxu0 %v390
  %559 = vmatpush2.msra.mxu0 %v389
  %560 = vmatprep.subr.mxu0 %v382
  %561 = vmatpush2.msra.mxu0 %v381
  %562 = vmatprep.subr.mxu0 %v374
  %563 = vmatpush2.msra.mxu0 %v373
  %564 = vmatprep.subr.mxu0 %v366
  %565 = vmatpush2.msra.mxu0 %v365
  %566 = vmatprep.subr.mxu0 %v358
  %567 = vmatpush2.msra.mxu0 %v357
  %568 = vmatprep.subr.mxu0 %v350
  %569 = vmatpush2.msra.mxu0 %v349
  %570 = vmatprep.subr.mxu0 %v342
  %571 = vmatpush2.msra.mxu0 %v341
  %572 = vmatprep.subr.mxu0 %v334
  %573 = vmatpush2.msra.mxu0 %v333
  %574 = vmatprep.subr.mxu0 %v326
  %575 = vmatpush2.msra.mxu0 %v325
  %576 = vmatprep.subr.mxu0 %v318
  %577 = vmatpush2.msra.mxu0 %v317
  %578 = vmatprep.subr.mxu0 %v310
  %579 = vmatpush2.msra.mxu0 %v309
  %580 = vmatprep.subr.mxu0 %v302
  %581 = vmatpush2.msra.mxu0 %v301
  %582 = vmatprep.subr.mxu0 %v294
  %583 = vmatpush2.msra.mxu0 %v293
  %584 = vmatprep.subr.mxu0 %v286
  %585 = vmatpush2.msra.mxu0 %v285
  %586 = vmatprep.subr.mxu0 %v278
  %587 = vmatpush2.msra.mxu0 %v277
  %588 = vmatprep.subr.mxu0 %v270
  %589 = vmatpush2.msra.mxu0 %v269
  %590 = vmatprep.mubr.f32.mxu0 %v132
  %591 = vmatmul.mubr.f32.gmra.mxu0 %v131
  %v592 = vpop.f32.mrf.mxu0
  %v593 = vadd.f32 %v408, %v592
  %v594 = vpop.f32.mrf.mxu0
  %v595 = vadd.f32 %v412, %v594
  %596 = vmatprep.mubr.f32.mxu0 %v134
  %597 = vmatmul.mubr.f32.gmra.mxu0 %v133
  %v598 = vpop.f32.mrf.mxu0
  %v599 = vadd.f32 %v408, %v598
  %v600 = vpop.f32.mrf.mxu0
  %v601 = vadd.f32 %v412, %v600
  %602 = vmatprep.mubr.f32.mxu0 %v136
  %603 = vmatmul.mubr.f32.gmra.mxu0 %v135
  %v604 = vpop.f32.mrf.mxu0
  %v605 = vadd.f32 %v408, %v604
  %v606 = vpop.f32.mrf.mxu0
  %v607 = vadd.f32 %v412, %v606
  %608 = vmatprep.mubr.f32.mxu0 %v138
  %609 = vmatmul.mubr.f32.gmra.mxu0 %v137
  %v610 = vpop.f32.mrf.mxu0
  %v611 = vadd.f32 %v408, %v610
  %v612 = vpop.f32.mrf.mxu0
  %v613 = vadd.f32 %v412, %v612
  %614 = vdwg.mxu0
  %615 = vmatprep.subr.mxu0 %v264
  %616 = vmatpush1.msra.mxu0 %v263
  %617 = vmatprep.subr.mxu0 %v256
  %618 = vmatpush1.msra.mxu0 %v255
  %619 = vmatprep.subr.mxu0 %v248
  %620 = vmatpush1.msra.mxu0 %v247
  %621 = vmatprep.subr.mxu0 %v240
  %622 = vmatpush1.msra.mxu0 %v239
  %623 = vmatprep.subr.mxu0 %v232
  %624 = vmatpush1.msra.mxu0 %v231
  %625 = vmatprep.subr.mxu0 %v224
  %626 = vmatpush1.msra.mxu0 %v223
  %627 = vmatprep.subr.mxu0 %v216
  %628 = vmatpush1.msra.mxu0 %v215
  %629 = vmatprep.subr.mxu0 %v208
  %630 = vmatpush1.msra.mxu0 %v207
  %631 = vmatprep.subr.mxu0 %v200
  %632 = vmatpush1.msra.mxu0 %v199
  %633 = vmatprep.subr.mxu0 %v192
  %634 = vmatpush1.msra.mxu0 %v191
  %635 = vmatprep.subr.mxu0 %v184
  %636 = vmatpush1.msra.mxu0 %v183
  %637 = vmatprep.subr.mxu0 %v176
  %638 = vmatpush1.msra.mxu0 %v175
  %639 = vmatprep.subr.mxu0 %v168
  %640 = vmatpush1.msra.mxu0 %v167
  %641 = vmatprep.subr.mxu0 %v160
  %642 = vmatpush1.msra.mxu0 %v159
  %643 = vmatprep.subr.mxu0 %v152
  %644 = vmatpush1.msra.mxu0 %v151
  %645 = vmatprep.subr.mxu0 %v144
  %646 = vmatpush1.msra.mxu0 %v143
  %647 = vmatprep.subr.mxu0 %v392
  %648 = vmatpush2.msra.mxu0 %v391
  %649 = vmatprep.subr.mxu0 %v384
  %650 = vmatpush2.msra.mxu0 %v383
  %651 = vmatprep.subr.mxu0 %v376
  %652 = vmatpush2.msra.mxu0 %v375
  %653 = vmatprep.subr.mxu0 %v368
  %654 = vmatpush2.msra.mxu0 %v367
  %655 = vmatprep.subr.mxu0 %v360
  %656 = vmatpush2.msra.mxu0 %v359
  %657 = vmatprep.subr.mxu0 %v352
  %658 = vmatpush2.msra.mxu0 %v351
  %659 = vmatprep.subr.mxu0 %v344
  %660 = vmatpush2.msra.mxu0 %v343
  %661 = vmatprep.subr.mxu0 %v336
  %662 = vmatpush2.msra.mxu0 %v335
  %663 = vmatprep.subr.mxu0 %v328
  %664 = vmatpush2.msra.mxu0 %v327
  %665 = vmatprep.subr.mxu0 %v320
  %666 = vmatpush2.msra.mxu0 %v319
  %667 = vmatprep.subr.mxu0 %v312
  %668 = vmatpush2.msra.mxu0 %v311
  %669 = vmatprep.subr.mxu0 %v304
  %670 = vmatpush2.msra.mxu0 %v303
  %671 = vmatprep.subr.mxu0 %v296
  %672 = vmatpush2.msra.mxu0 %v295
  %673 = vmatprep.subr.mxu0 %v288
  %674 = vmatpush2.msra.mxu0 %v287
  %675 = vmatprep.subr.mxu0 %v280
  %676 = vmatpush2.msra.mxu0 %v279
  %677 = vmatprep.subr.mxu0 %v272
  %678 = vmatpush2.msra.mxu0 %v271
  %679 = vmatprep.mubr.f32.mxu0 %v132
  %680 = vmatmul.mubr.f32.gmra.mxu0 %v131
  %v681 = vpop.f32.mrf.mxu0
  %v682 = vadd.f32 %v416, %v681
  %v683 = vpop.f32.mrf.mxu0
  %v684 = vadd.f32 %v420, %v683
  %685 = vmatprep.mubr.f32.mxu0 %v134
  %686 = vmatmul.mubr.f32.gmra.mxu0 %v133
  %v687 = vpop.f32.mrf.mxu0
  %v688 = vadd.f32 %v416, %v687
  %v689 = vpop.f32.mrf.mxu0
  %v690 = vadd.f32 %v420, %v689
  %691 = vmatprep.mubr.f32.mxu0 %v136
  %692 = vmatmul.mubr.f32.gmra.mxu0 %v135
  %v693 = vpop.f32.mrf.mxu0
  %v694 = vadd.f32 %v416, %v693
  %v695 = vpop.f32.mrf.mxu0
  %v696 = vadd.f32 %v420, %v695
  %697 = vmatprep.mubr.f32.mxu0 %v138
  %698 = vmatmul.mubr.f32.gmra.mxu0 %v137
  %v699 = vpop.f32.mrf.mxu0
  %v700 = vadd.f32 %v416, %v699
  %v701 = vpop.f32.mrf.mxu0
  %v702 = vadd.f32 %v420, %v701
  %703 = vdwg.mxu0
  %704 = vmatprep.subr.mxu0 %v266
  %705 = vmatpush1.msra.mxu0 %v265
  %706 = vmatprep.subr.mxu0 %v258
  %707 = vmatpush1.msra.mxu0 %v257
  %708 = vmatprep.subr.mxu0 %v250
  %709 = vmatpush1.msra.mxu0 %v249
  %710 = vmatprep.subr.mxu0 %v242
  %711 = vmatpush1.msra.mxu0 %v241
  %712 = vmatprep.subr.mxu0 %v234
  %713 = vmatpush1.msra.mxu0 %v233
  %714 = vmatprep.subr.mxu0 %v226
  %715 = vmatpush1.msra.mxu0 %v225
  %716 = vmatprep.subr.mxu0 %v218
  %717 = vmatpush1.msra.mxu0 %v217
  %718 = vmatprep.subr.mxu0 %v210
  %719 = vmatpush1.msra.mxu0 %v209
  %720 = vmatprep.subr.mxu0 %v202
  %721 = vmatpush1.msra.mxu0 %v201
  %722 = vmatprep.subr.mxu0 %v194
  %723 = vmatpush1.msra.mxu0 %v193
  %724 = vmatprep.subr.mxu0 %v186
  %725 = vmatpush1.msra.mxu0 %v185
  %726 = vmatprep.subr.mxu0 %v178
  %727 = vmatpush1.msra.mxu0 %v177
  %728 = vmatprep.subr.mxu0 %v170
  %729 = vmatpush1.msra.mxu0 %v169
  %730 = vmatprep.subr.mxu0 %v162
  %731 = vmatpush1.msra.mxu0 %v161
  %732 = vmatprep.subr.mxu0 %v154
  %733 = vmatpush1.msra.mxu0 %v153
  %734 = vmatprep.subr.mxu0 %v146
  %735 = vmatpush1.msra.mxu0 %v145
  %736 = vmatprep.subr.mxu0 %v394
  %737 = vmatpush2.msra.mxu0 %v393
  %738 = vmatprep.subr.mxu0 %v386
  %739 = vmatpush2.msra.mxu0 %v385
  %740 = vmatprep.subr.mxu0 %v378
  %741 = vmatpush2.msra.mxu0 %v377
  %742 = vmatprep.subr.mxu0 %v370
  %743 = vmatpush2.msra.mxu0 %v369
  %744 = vmatprep.subr.mxu0 %v362
  %745 = vmatpush2.msra.mxu0 %v361
  %746 = vmatprep.subr.mxu0 %v354
  %747 = vmatpush2.msra.mxu0 %v353
  %748 = vmatprep.subr.mxu0 %v346
  %749 = vmatpush2.msra.mxu0 %v345
  %750 = vmatprep.subr.mxu0 %v338
  %751 = vmatpush2.msra.mxu0 %v337
  %752 = vmatprep.subr.mxu0 %v330
  %753 = vmatpush2.msra.mxu0 %v329
  %754 = vmatprep.subr.mxu0 %v322
  %755 = vmatpush2.msra.mxu0 %v321
  %756 = vmatprep.subr.mxu0 %v314
  %757 = vmatpush2.msra.mxu0 %v313
  %758 = vmatprep.subr.mxu0 %v306
  %759 = vmatpush2.msra.mxu0 %v305
  %760 = vmatprep.subr.mxu0 %v298
  %761 = vmatpush2.msra.mxu0 %v297
  %762 = vmatprep.subr.mxu0 %v290
  %763 = vmatpush2.msra.mxu0 %v289
  %764 = vmatprep.subr.mxu0 %v282
  %765 = vmatpush2.msra.mxu0 %v281
  %766 = vmatprep.subr.mxu0 %v274
  %767 = vmatpush2.msra.mxu0 %v273
  %768 = vmatprep.mubr.f32.mxu0 %v132
  %769 = vmatmul.mubr.f32.gmra.mxu0 %v131
  %v770 = vpop.f32.mrf.mxu0
  %v771 = vadd.f32 %v424, %v770
  %v772 = vpop.f32.mrf.mxu0
  %v773 = vadd.f32 %v428, %v772
  %774 = vmatprep.mubr.f32.mxu0 %v134
  %775 = vmatmul.mubr.f32.gmra.mxu0 %v133
  %v776 = vpop.f32.mrf.mxu0
  %v777 = vadd.f32 %v424, %v776
  %v778 = vpop.f32.mrf.mxu0
  %v779 = vadd.f32 %v428, %v778
  %780 = vmatprep.mubr.f32.mxu0 %v136
  %781 = vmatmul.mubr.f32.gmra.mxu0 %v135
  %v782 = vpop.f32.mrf.mxu0
  %v783 = vadd.f32 %v424, %v782
  %v784 = vpop.f32.mrf.mxu0
  %v785 = vadd.f32 %v428, %v784
  %786 = vmatprep.mubr.f32.mxu0 %v138
  %787 = vmatmul.mubr.f32.gmra.mxu0 %v137
  %v788 = vpop.f32.mrf.mxu0
  %v789 = vadd.f32 %v424, %v788
  %v790 = vpop.f32.mrf.mxu0
  %v791 = vadd.f32 %v428, %v790
  %792 = vdwg.mxu0
  %v793 = vmul.f32 %v504, 1.702
  %v794 = vmul.f32 %v506, 1.702
  %v795 = vmul.f32 %v593, 1.702
  %v796 = vmul.f32 %v595, 1.702
  %v797 = vmul.f32 %v682, 1.702
  %v798 = vmul.f32 %v684, 1.702
  %v799 = vmul.f32 %v771, 1.702
  %v800 = vmul.f32 %v773, 1.702
  %v801 = vmul.f32 %v510, 1.702
  %v802 = vmul.f32 %v512, 1.702
  %v803 = vmul.f32 %v599, 1.702
  %v804 = vmul.f32 %v601, 1.702
  %v805 = vmul.f32 %v688, 1.702
  %v806 = vmul.f32 %v690, 1.702
  %v807 = vmul.f32 %v777, 1.702
  %v808 = vmul.f32 %v779, 1.702
  %v809 = vmul.f32 %v516, 1.702
  %v810 = vmul.f32 %v518, 1.702
  %v811 = vmul.f32 %v605, 1.702
  %v812 = vmul.f32 %v607, 1.702
  %v813 = vmul.f32 %v694, 1.702
  %v814 = vmul.f32 %v696, 1.702
  %v815 = vmul.f32 %v783, 1.702
  %v816 = vmul.f32 %v785, 1.702
  %v817 = vmul.f32 %v522, 1.702
  %v818 = vmul.f32 %v524, 1.702
  %v819 = vmul.f32 %v611, 1.702
  %v820 = vmul.f32 %v613, 1.702
  %v821 = vmul.f32 %v700, 1.702
  %v822 = vmul.f32 %v702, 1.702
  %v823 = vmul.f32 %v789, 1.702
  %v824 = vmul.f32 %v791, 1.702
  %v825 = vxor.u32 %v793, 2147483648
  %v826 = vxor.u32 %v794, 2147483648
  %v827 = vxor.u32 %v795, 2147483648
  %v828 = vxor.u32 %v796, 2147483648
  %v829 = vxor.u32 %v797, 2147483648
  %v830 = vxor.u32 %v798, 2147483648
  %v831 = vxor.u32 %v799, 2147483648
  %v832 = vxor.u32 %v800, 2147483648
  %v833 = vxor.u32 %v801, 2147483648
  %v834 = vxor.u32 %v802, 2147483648
  %v835 = vxor.u32 %v803, 2147483648
  %v836 = vxor.u32 %v804, 2147483648
  %v837 = vxor.u32 %v805, 2147483648
  %v838 = vxor.u32 %v806, 2147483648
  %v839 = vxor.u32 %v807, 2147483648
  %v840 = vxor.u32 %v808, 2147483648
  %v841 = vxor.u32 %v809, 2147483648
  %v842 = vxor.u32 %v810, 2147483648
  %v843 = vxor.u32 %v811, 2147483648
  %v844 = vxor.u32 %v812, 2147483648
  %v845 = vxor.u32 %v813, 2147483648
  %v846 = vxor.u32 %v814, 2147483648
  %v847 = vxor.u32 %v815, 2147483648
  %v848 = vxor.u32 %v816, 2147483648
  %v849 = vxor.u32 %v817, 2147483648
  %v850 = vxor.u32 %v818, 2147483648
  %v851 = vxor.u32 %v819, 2147483648
  %v852 = vxor.u32 %v820, 2147483648
  %v853 = vxor.u32 %v821, 2147483648
  %v854 = vxor.u32 %v822, 2147483648
  %v855 = vxor.u32 %v823, 2147483648
  %v856 = vxor.u32 %v824, 2147483648
  %v857 = vmul.f32 %v825, 1.442695
  %v858 = vpow.pop %v857
  %v859 = vmul.f32 %v826, 1.442695
  %v860 = vpow.pop %v859
  %v861 = vmul.f32 %v827, 1.442695
  %v862 = vpow.pop %v861
  %v863 = vmul.f32 %v828, 1.442695
  %v864 = vpow.pop %v863
  %v865 = vmul.f32 %v829, 1.442695
  %v866 = vpow.pop %v865
  %v867 = vmul.f32 %v830, 1.442695
  %v868 = vpow.pop %v867
  %v869 = vmul.f32 %v831, 1.442695
  %v870 = vpow.pop %v869
  %v871 = vmul.f32 %v832, 1.442695
  %v872 = vpow.pop %v871
  %v873 = vmul.f32 %v833, 1.442695
  %v874 = vpow.pop %v873
  %v875 = vmul.f32 %v834, 1.442695
  %v876 = vpow.pop %v875
  %v877 = vmul.f32 %v835, 1.442695
  %v878 = vpow.pop %v877
  %v879 = vmul.f32 %v836, 1.442695
  %v880 = vpow.pop %v879
  %v881 = vmul.f32 %v837, 1.442695
  %v882 = vpow.pop %v881
  %v883 = vmul.f32 %v838, 1.442695
  %v884 = vpow.pop %v883
  %v885 = vmul.f32 %v839, 1.442695
  %v886 = vpow.pop %v885
  %v887 = vmul.f32 %v840, 1.442695
  %v888 = vpow.pop %v887
  %v889 = vmul.f32 %v841, 1.442695
  %v890 = vpow.pop %v889
  %v891 = vmul.f32 %v842, 1.442695
  %v892 = vpow.pop %v891
  %v893 = vmul.f32 %v843, 1.442695
  %v894 = vpow.pop %v893
  %v895 = vmul.f32 %v844, 1.442695
  %v896 = vpow.pop %v895
  %v897 = vmul.f32 %v845, 1.442695
  %v898 = vpow.pop %v897
  %v899 = vmul.f32 %v846, 1.442695
  %v900 = vpow.pop %v899
  %v901 = vmul.f32 %v847, 1.442695
  %v902 = vpow.pop %v901
  %v903 = vmul.f32 %v848, 1.442695
  %v904 = vpow.pop %v903
  %v905 = vmul.f32 %v849, 1.442695
  %v906 = vpow.pop %v905
  %v907 = vmul.f32 %v850, 1.442695
  %v908 = vpow.pop %v907
  %v909 = vmul.f32 %v851, 1.442695
  %v910 = vpow.pop %v909
  %v911 = vmul.f32 %v852, 1.442695
  %v912 = vpow.pop %v911
  %v913 = vmul.f32 %v853, 1.442695
  %v914 = vpow.pop %v913
  %v915 = vmul.f32 %v854, 1.442695
  %v916 = vpow.pop %v915
  %v917 = vmul.f32 %v855, 1.442695
  %v918 = vpow.pop %v917
  %v919 = vmul.f32 %v856, 1.442695
  %v920 = vpow.pop %v919
  %v921 = vadd.f32 %v858, 1.0
  %v922 = vadd.f32 %v860, 1.0
  %v923 = vadd.f32 %v862, 1.0
  %v924 = vadd.f32 %v864, 1.0
  %v925 = vadd.f32 %v866, 1.0
  %v926 = vadd.f32 %v868, 1.0
  %v927 = vadd.f32 %v870, 1.0
  %v928 = vadd.f32 %v872, 1.0
  %v929 = vadd.f32 %v874, 1.0
  %v930 = vadd.f32 %v876, 1.0
  %v931 = vadd.f32 %v878, 1.0
  %v932 = vadd.f32 %v880, 1.0
  %v933 = vadd.f32 %v882, 1.0
  %v934 = vadd.f32 %v884, 1.0
  %v935 = vadd.f32 %v886, 1.0
  %v936 = vadd.f32 %v888, 1.0
  %v937 = vadd.f32 %v890, 1.0
  %v938 = vadd.f32 %v892, 1.0
  %v939 = vadd.f32 %v894, 1.0
  %v940 = vadd.f32 %v896, 1.0
  %v941 = vadd.f32 %v898, 1.0
  %v942 = vadd.f32 %v900, 1.0
  %v943 = vadd.f32 %v902, 1.0
  %v944 = vadd.f32 %v904, 1.0
  %v945 = vadd.f32 %v906, 1.0
  %v946 = vadd.f32 %v908, 1.0
  %v947 = vadd.f32 %v910, 1.0
  %v948 = vadd.f32 %v912, 1.0
  %v949 = vadd.f32 %v914, 1.0
  %v950 = vadd.f32 %v916, 1.0
  %v951 = vadd.f32 %v918, 1.0
  %v952 = vadd.f32 %v920, 1.0
  %v953 = vrcp.pop %v921
  %v954 = vmul.f32 1.0, %v953
  %v955 = vrcp.pop %v922
  %v956 = vmul.f32 1.0, %v955
  %v957 = vrcp.pop %v923
  %v958 = vmul.f32 1.0, %v957
  %v959 = vrcp.pop %v924
  %v960 = vmul.f32 1.0, %v959
  %v961 = vrcp.pop %v925
  %v962 = vmul.f32 1.0, %v961
  %v963 = vrcp.pop %v926
  %v964 = vmul.f32 1.0, %v963
  %v965 = vrcp.pop %v927
  %v966 = vmul.f32 1.0, %v965
  %v967 = vrcp.pop %v928
  %v968 = vmul.f32 1.0, %v967
  %v969 = vrcp.pop %v929
  %v970 = vmul.f32 1.0, %v969
  %v971 = vrcp.pop %v930
  %v972 = vmul.f32 1.0, %v971
  %v973 = vrcp.pop %v931
  %v974 = vmul.f32 1.0, %v973
  %v975 = vrcp.pop %v932
  %v976 = vmul.f32 1.0, %v975
  %v977 = vrcp.pop %v933
  %v978 = vmul.f32 1.0, %v977
  %v979 = vrcp.pop %v934
  %v980 = vmul.f32 1.0, %v979
  %v981 = vrcp.pop %v935
  %v982 = vmul.f32 1.0, %v981
  %v983 = vrcp.pop %v936
  %v984 = vmul.f32 1.0, %v983
  %v985 = vrcp.pop %v937
  %v986 = vmul.f32 1.0, %v985
  %v987 = vrcp.pop %v938
  %v988 = vmul.f32 1.0, %v987
  %v989 = vrcp.pop %v939
  %v990 = vmul.f32 1.0, %v989
  %v991 = vrcp.pop %v940
  %v992 = vmul.f32 1.0, %v991
  %v993 = vrcp.pop %v941
  %v994 = vmul.f32 1.0, %v993
  %v995 = vrcp.pop %v942
  %v996 = vmul.f32 1.0, %v995
  %v997 = vrcp.pop %v943
  %v998 = vmul.f32 1.0, %v997
  %v999 = vrcp.pop %v944
  %v1000 = vmul.f32 1.0, %v999
  %v1001 = vrcp.pop %v945
  %v1002 = vmul.f32 1.0, %v1001
  %v1003 = vrcp.pop %v946
  %v1004 = vmul.f32 1.0, %v1003
  %v1005 = vrcp.pop %v947
  %v1006 = vmul.f32 1.0, %v1005
  %v1007 = vrcp.pop %v948
  %v1008 = vmul.f32 1.0, %v1007
  %v1009 = vrcp.pop %v949
  %v1010 = vmul.f32 1.0, %v1009
  %v1011 = vrcp.pop %v950
  %v1012 = vmul.f32 1.0, %v1011
  %v1013 = vrcp.pop %v951
  %v1014 = vmul.f32 1.0, %v1013
  %v1015 = vrcp.pop %v952
  %v1016 = vmul.f32 1.0, %v1015
  %v1017 = vmul.f32 %v504, %v954
  %v1018 = vmul.f32 %v506, %v956
  %v1019 = vmul.f32 %v593, %v958
  %v1020 = vmul.f32 %v595, %v960
  %v1021 = vmul.f32 %v682, %v962
  %v1022 = vmul.f32 %v684, %v964
  %v1023 = vmul.f32 %v771, %v966
  %v1024 = vmul.f32 %v773, %v968
  %v1025 = vmul.f32 %v510, %v970
  %v1026 = vmul.f32 %v512, %v972
  %v1027 = vmul.f32 %v599, %v974
  %v1028 = vmul.f32 %v601, %v976
  %v1029 = vmul.f32 %v688, %v978
  %v1030 = vmul.f32 %v690, %v980
  %v1031 = vmul.f32 %v777, %v982
  %v1032 = vmul.f32 %v779, %v984
  %v1033 = vmul.f32 %v516, %v986
  %v1034 = vmul.f32 %v518, %v988
  %v1035 = vmul.f32 %v605, %v990
  %v1036 = vmul.f32 %v607, %v992
  %v1037 = vmul.f32 %v694, %v994
  %v1038 = vmul.f32 %v696, %v996
  %v1039 = vmul.f32 %v783, %v998
  %v1040 = vmul.f32 %v785, %v1000
  %v1041 = vmul.f32 %v522, %v1002
  %v1042 = vmul.f32 %v524, %v1004
  %v1043 = vmul.f32 %v611, %v1006
  %v1044 = vmul.f32 %v613, %v1008
  %v1045 = vmul.f32 %v700, %v1010
  %v1046 = vmul.f32 %v702, %v1012
  %v1047 = vmul.f32 %v789, %v1014
  %v1048 = vmul.f32 %v791, %v1016
  %v1049 = vld [vmem:[%s5] sm:$0xff]
  %v1050 = vld [vmem:[%s5 + $0x8] sm:$0xff]
  %v1051 = vld [vmem:[%s5 + $0x10] sm:$0xff]
  %v1052 = vld [vmem:[%s5 + $0x18] sm:$0xff]
  %v1053 = vld [vmem:[%s5 + $0x20] sm:$0xff]
  %v1054 = vld [vmem:[%s5 + $0x28] sm:$0xff]
  %v1055 = vld [vmem:[%s5 + $0x30] sm:$0xff]
  %v1056 = vld [vmem:[%s5 + $0x38] sm:$0xff]
  %v1057 = vld [vmem:[%s5 + $0x40] sm:$0xff]
  %v1058 = vld [vmem:[%s5 + $0x48] sm:$0xff]
  %v1059 = vld [vmem:[%s5 + $0x50] sm:$0xff]
  %v1060 = vld [vmem:[%s5 + $0x58] sm:$0xff]
  %v1061 = vld [vmem:[%s5 + $0x60] sm:$0xff]
  %v1062 = vld [vmem:[%s5 + $0x68] sm:$0xff]
  %v1063 = vld [vmem:[%s5 + $0x70] sm:$0xff]
  %v1064 = vld [vmem:[%s5 + $0x78] sm:$0xff]
  %v1065 = vld [vmem:[%s5 + $0x80] sm:$0xff]
  %v1066 = vld [vmem:[%s5 + $0x88] sm:$0xff]
  %v1067 = vld [vmem:[%s5 + $0x90] sm:$0xff]
  %v1068 = vld [vmem:[%s5 + $0x98] sm:$0xff]
  %v1069 = vld [vmem:[%s5 + $0xa0] sm:$0xff]
  %v1070 = vld [vmem:[%s5 + $0xa8] sm:$0xff]
  %v1071 = vld [vmem:[%s5 + $0xb0] sm:$0xff]
  %v1072 = vld [vmem:[%s5 + $0xb8] sm:$0xff]
  %v1073 = vld [vmem:[%s5 + $0xc0] sm:$0xff]
  %v1074 = vld [vmem:[%s5 + $0xc8] sm:$0xff]
  %v1075 = vld [vmem:[%s5 + $0xd0] sm:$0xff]
  %v1076 = vld [vmem:[%s5 + $0xd8] sm:$0xff]
  %v1077 = vld [vmem:[%s5 + $0xe0] sm:$0xff]
  %v1078 = vld [vmem:[%s5 + $0xe8] sm:$0xff]
  %v1079 = vld [vmem:[%s5 + $0xf0] sm:$0xff]
  %v1080 = vld [vmem:[%s5 + $0xf8] sm:$0xff]
  %v1081 = vld [vmem:[%s5 + $0x100] sm:$0xff]
  %v1082 = vld [vmem:[%s5 + $0x108] sm:$0xff]
  %v1083 = vld [vmem:[%s5 + $0x110] sm:$0xff]
  %v1084 = vld [vmem:[%s5 + $0x118] sm:$0xff]
  %v1085 = vld [vmem:[%s5 + $0x120] sm:$0xff]
  %v1086 = vld [vmem:[%s5 + $0x128] sm:$0xff]
  %v1087 = vld [vmem:[%s5 + $0x130] sm:$0xff]
  %v1088 = vld [vmem:[%s5 + $0x138] sm:$0xff]
  %v1089 = vld [vmem:[%s5 + $0x140] sm:$0xff]
  %v1090 = vld [vmem:[%s5 + $0x148] sm:$0xff]
  %v1091 = vld [vmem:[%s5 + $0x150] sm:$0xff]
  %v1092 = vld [vmem:[%s5 + $0x158] sm:$0xff]
  %v1093 = vld [vmem:[%s5 + $0x160] sm:$0xff]
  %v1094 = vld [vmem:[%s5 + $0x168] sm:$0xff]
  %v1095 = vld [vmem:[%s5 + $0x170] sm:$0xff]
  %v1096 = vld [vmem:[%s5 + $0x178] sm:$0xff]
  %v1097 = vld [vmem:[%s5 + $0x180] sm:$0xff]
  %v1098 = vld [vmem:[%s5 + $0x188] sm:$0xff]
  %v1099 = vld [vmem:[%s5 + $0x190] sm:$0xff]
  %v1100 = vld [vmem:[%s5 + $0x198] sm:$0xff]
  %v1101 = vld [vmem:[%s5 + $0x1a0] sm:$0xff]
  %v1102 = vld [vmem:[%s5 + $0x1a8] sm:$0xff]
  %v1103 = vld [vmem:[%s5 + $0x1b0] sm:$0xff]
  %v1104 = vld [vmem:[%s5 + $0x1b8] sm:$0xff]
  %v1105 = vld [vmem:[%s5 + $0x1c0] sm:$0xff]
  %v1106 = vld [vmem:[%s5 + $0x1c8] sm:$0xff]
  %v1107 = vld [vmem:[%s5 + $0x1d0] sm:$0xff]
  %v1108 = vld [vmem:[%s5 + $0x1d8] sm:$0xff]
  %v1109 = vld [vmem:[%s5 + $0x1e0] sm:$0xff]
  %v1110 = vld [vmem:[%s5 + $0x1e8] sm:$0xff]
  %v1111 = vld [vmem:[%s5 + $0x1f0] sm:$0xff]
  %v1112 = vld [vmem:[%s5 + $0x1f8] sm:$0xff]
  %v1113 = vld [vmem:[%s5 + $0x200] sm:$0xff]
  %v1114 = vld [vmem:[%s5 + $0x208] sm:$0xff]
  %v1115 = vld [vmem:[%s5 + $0x210] sm:$0xff]
  %v1116 = vld [vmem:[%s5 + $0x218] sm:$0xff]
  %v1117 = vld [vmem:[%s5 + $0x220] sm:$0xff]
  %v1118 = vld [vmem:[%s5 + $0x228] sm:$0xff]
  %v1119 = vld [vmem:[%s5 + $0x230] sm:$0xff]
  %v1120 = vld [vmem:[%s5 + $0x238] sm:$0xff]
  %v1121 = vld [vmem:[%s5 + $0x240] sm:$0xff]
  %v1122 = vld [vmem:[%s5 + $0x248] sm:$0xff]
  %v1123 = vld [vmem:[%s5 + $0x250] sm:$0xff]
  %v1124 = vld [vmem:[%s5 + $0x258] sm:$0xff]
  %v1125 = vld [vmem:[%s5 + $0x260] sm:$0xff]
  %v1126 = vld [vmem:[%s5 + $0x268] sm:$0xff]
  %v1127 = vld [vmem:[%s5 + $0x270] sm:$0xff]
  %v1128 = vld [vmem:[%s5 + $0x278] sm:$0xff]
  %v1129 = vld [vmem:[%s5 + $0x280] sm:$0xff]
  %v1130 = vld [vmem:[%s5 + $0x288] sm:$0xff]
  %v1131 = vld [vmem:[%s5 + $0x290] sm:$0xff]
  %v1132 = vld [vmem:[%s5 + $0x298] sm:$0xff]
  %v1133 = vld [vmem:[%s5 + $0x2a0] sm:$0xff]
  %v1134 = vld [vmem:[%s5 + $0x2a8] sm:$0xff]
  %v1135 = vld [vmem:[%s5 + $0x2b0] sm:$0xff]
  %v1136 = vld [vmem:[%s5 + $0x2b8] sm:$0xff]
  %v1137 = vld [vmem:[%s5 + $0x2c0] sm:$0xff]
  %v1138 = vld [vmem:[%s5 + $0x2c8] sm:$0xff]
  %v1139 = vld [vmem:[%s5 + $0x2d0] sm:$0xff]
  %v1140 = vld [vmem:[%s5 + $0x2d8] sm:$0xff]
  %v1141 = vld [vmem:[%s5 + $0x2e0] sm:$0xff]
  %v1142 = vld [vmem:[%s5 + $0x2e8] sm:$0xff]
  %v1143 = vld [vmem:[%s5 + $0x2f0] sm:$0xff]
  %v1144 = vld [vmem:[%s5 + $0x2f8] sm:$0xff]
  %v1145 = vld [vmem:[%s5 + $0x300] sm:$0xff]
  %v1146 = vld [vmem:[%s5 + $0x308] sm:$0xff]
  %v1147 = vld [vmem:[%s5 + $0x310] sm:$0xff]
  %v1148 = vld [vmem:[%s5 + $0x318] sm:$0xff]
  %v1149 = vld [vmem:[%s5 + $0x320] sm:$0xff]
  %v1150 = vld [vmem:[%s5 + $0x328] sm:$0xff]
  %v1151 = vld [vmem:[%s5 + $0x330] sm:$0xff]
  %v1152 = vld [vmem:[%s5 + $0x338] sm:$0xff]
  %v1153 = vld [vmem:[%s5 + $0x340] sm:$0xff]
  %v1154 = vld [vmem:[%s5 + $0x348] sm:$0xff]
  %v1155 = vld [vmem:[%s5 + $0x350] sm:$0xff]
  %v1156 = vld [vmem:[%s5 + $0x358] sm:$0xff]
  %v1157 = vld [vmem:[%s5 + $0x360] sm:$0xff]
  %v1158 = vld [vmem:[%s5 + $0x368] sm:$0xff]
  %v1159 = vld [vmem:[%s5 + $0x370] sm:$0xff]
  %v1160 = vld [vmem:[%s5 + $0x378] sm:$0xff]
  %v1161 = vld [vmem:[%s5 + $0x380] sm:$0xff]
  %v1162 = vld [vmem:[%s5 + $0x388] sm:$0xff]
  %v1163 = vld [vmem:[%s5 + $0x390] sm:$0xff]
  %v1164 = vld [vmem:[%s5 + $0x398] sm:$0xff]
  %v1165 = vld [vmem:[%s5 + $0x3a0] sm:$0xff]
  %v1166 = vld [vmem:[%s5 + $0x3a8] sm:$0xff]
  %v1167 = vld [vmem:[%s5 + $0x3b0] sm:$0xff]
  %v1168 = vld [vmem:[%s5 + $0x3b8] sm:$0xff]
  %v1169 = vld [vmem:[%s5 + $0x3c0] sm:$0xff]
  %v1170 = vld [vmem:[%s5 + $0x3c8] sm:$0xff]
  %v1171 = vld [vmem:[%s5 + $0x3d0] sm:$0xff]
  %v1172 = vld [vmem:[%s5 + $0x3d8] sm:$0xff]
  %v1173 = vld [vmem:[%s5 + $0x3e0] sm:$0xff]
  %v1174 = vld [vmem:[%s5 + $0x3e8] sm:$0xff]
  %v1175 = vld [vmem:[%s5 + $0x3f0] sm:$0xff]
  %v1176 = vld [vmem:[%s5 + $0x3f8] sm:$0xff]
  %v1177 = vld [vmem:[%s5 + $0x400] sm:$0xff]
  %v1178 = vld [vmem:[%s5 + $0x408] sm:$0xff]
  %v1179 = vld [vmem:[%s5 + $0x410] sm:$0xff]
  %v1180 = vld [vmem:[%s5 + $0x418] sm:$0xff]
  %v1181 = vld [vmem:[%s5 + $0x420] sm:$0xff]
  %v1182 = vld [vmem:[%s5 + $0x428] sm:$0xff]
  %v1183 = vld [vmem:[%s5 + $0x430] sm:$0xff]
  %v1184 = vld [vmem:[%s5 + $0x438] sm:$0xff]
  %v1185 = vld [vmem:[%s5 + $0x440] sm:$0xff]
  %v1186 = vld [vmem:[%s5 + $0x448] sm:$0xff]
  %v1187 = vld [vmem:[%s5 + $0x450] sm:$0xff]
  %v1188 = vld [vmem:[%s5 + $0x458] sm:$0xff]
  %v1189 = vld [vmem:[%s5 + $0x460] sm:$0xff]
  %v1190 = vld [vmem:[%s5 + $0x468] sm:$0xff]
  %v1191 = vld [vmem:[%s5 + $0x470] sm:$0xff]
  %v1192 = vld [vmem:[%s5 + $0x478] sm:$0xff]
  %v1193 = vld [vmem:[%s5 + $0x480] sm:$0xff]
  %v1194 = vld [vmem:[%s5 + $0x488] sm:$0xff]
  %v1195 = vld [vmem:[%s5 + $0x490] sm:$0xff]
  %v1196 = vld [vmem:[%s5 + $0x498] sm:$0xff]
  %v1197 = vld [vmem:[%s5 + $0x4a0] sm:$0xff]
  %v1198 = vld [vmem:[%s5 + $0x4a8] sm:$0xff]
  %v1199 = vld [vmem:[%s5 + $0x4b0] sm:$0xff]
  %v1200 = vld [vmem:[%s5 + $0x4b8] sm:$0xff]
  %v1201 = vld [vmem:[%s5 + $0x4c0] sm:$0xff]
  %v1202 = vld [vmem:[%s5 + $0x4c8] sm:$0xff]
  %v1203 = vld [vmem:[%s5 + $0x4d0] sm:$0xff]
  %v1204 = vld [vmem:[%s5 + $0x4d8] sm:$0xff]
  %v1205 = vld [vmem:[%s5 + $0x4e0] sm:$0xff]
  %v1206 = vld [vmem:[%s5 + $0x4e8] sm:$0xff]
  %v1207 = vld [vmem:[%s5 + $0x4f0] sm:$0xff]
  %v1208 = vld [vmem:[%s5 + $0x4f8] sm:$0xff]
  %v1209 = vld [vmem:[%s5 + $0x500] sm:$0xff]
  %v1210 = vld [vmem:[%s5 + $0x508] sm:$0xff]
  %v1211 = vld [vmem:[%s5 + $0x510] sm:$0xff]
  %v1212 = vld [vmem:[%s5 + $0x518] sm:$0xff]
  %v1213 = vld [vmem:[%s5 + $0x520] sm:$0xff]
  %v1214 = vld [vmem:[%s5 + $0x528] sm:$0xff]
  %v1215 = vld [vmem:[%s5 + $0x530] sm:$0xff]
  %v1216 = vld [vmem:[%s5 + $0x538] sm:$0xff]
  %v1217 = vld [vmem:[%s5 + $0x540] sm:$0xff]
  %v1218 = vld [vmem:[%s5 + $0x548] sm:$0xff]
  %v1219 = vld [vmem:[%s5 + $0x550] sm:$0xff]
  %v1220 = vld [vmem:[%s5 + $0x558] sm:$0xff]
  %v1221 = vld [vmem:[%s5 + $0x560] sm:$0xff]
  %v1222 = vld [vmem:[%s5 + $0x568] sm:$0xff]
  %v1223 = vld [vmem:[%s5 + $0x570] sm:$0xff]
  %v1224 = vld [vmem:[%s5 + $0x578] sm:$0xff]
  %v1225 = vld [vmem:[%s5 + $0x580] sm:$0xff]
  %v1226 = vld [vmem:[%s5 + $0x588] sm:$0xff]
  %v1227 = vld [vmem:[%s5 + $0x590] sm:$0xff]
  %v1228 = vld [vmem:[%s5 + $0x598] sm:$0xff]
  %v1229 = vld [vmem:[%s5 + $0x5a0] sm:$0xff]
  %v1230 = vld [vmem:[%s5 + $0x5a8] sm:$0xff]
  %v1231 = vld [vmem:[%s5 + $0x5b0] sm:$0xff]
  %v1232 = vld [vmem:[%s5 + $0x5b8] sm:$0xff]
  %v1233 = vld [vmem:[%s5 + $0x5c0] sm:$0xff]
  %v1234 = vld [vmem:[%s5 + $0x5c8] sm:$0xff]
  %v1235 = vld [vmem:[%s5 + $0x5d0] sm:$0xff]
  %v1236 = vld [vmem:[%s5 + $0x5d8] sm:$0xff]
  %v1237 = vld [vmem:[%s5 + $0x5e0] sm:$0xff]
  %v1238 = vld [vmem:[%s5 + $0x5e8] sm:$0xff]
  %v1239 = vld [vmem:[%s5 + $0x5f0] sm:$0xff]
  %v1240 = vld [vmem:[%s5 + $0x5f8] sm:$0xff]
  %v1241 = vld [vmem:[%s5 + $0x600] sm:$0xff]
  %v1242 = vld [vmem:[%s5 + $0x608] sm:$0xff]
  %v1243 = vld [vmem:[%s5 + $0x610] sm:$0xff]
  %v1244 = vld [vmem:[%s5 + $0x618] sm:$0xff]
  %v1245 = vld [vmem:[%s5 + $0x620] sm:$0xff]
  %v1246 = vld [vmem:[%s5 + $0x628] sm:$0xff]
  %v1247 = vld [vmem:[%s5 + $0x630] sm:$0xff]
  %v1248 = vld [vmem:[%s5 + $0x638] sm:$0xff]
  %v1249 = vld [vmem:[%s5 + $0x640] sm:$0xff]
  %v1250 = vld [vmem:[%s5 + $0x648] sm:$0xff]
  %v1251 = vld [vmem:[%s5 + $0x650] sm:$0xff]
  %v1252 = vld [vmem:[%s5 + $0x658] sm:$0xff]
  %v1253 = vld [vmem:[%s5 + $0x660] sm:$0xff]
  %v1254 = vld [vmem:[%s5 + $0x668] sm:$0xff]
  %v1255 = vld [vmem:[%s5 + $0x670] sm:$0xff]
  %v1256 = vld [vmem:[%s5 + $0x678] sm:$0xff]
  %v1257 = vld [vmem:[%s5 + $0x680] sm:$0xff]
  %v1258 = vld [vmem:[%s5 + $0x688] sm:$0xff]
  %v1259 = vld [vmem:[%s5 + $0x690] sm:$0xff]
  %v1260 = vld [vmem:[%s5 + $0x698] sm:$0xff]
  %v1261 = vld [vmem:[%s5 + $0x6a0] sm:$0xff]
  %v1262 = vld [vmem:[%s5 + $0x6a8] sm:$0xff]
  %v1263 = vld [vmem:[%s5 + $0x6b0] sm:$0xff]
  %v1264 = vld [vmem:[%s5 + $0x6b8] sm:$0xff]
  %v1265 = vld [vmem:[%s5 + $0x6c0] sm:$0xff]
  %v1266 = vld [vmem:[%s5 + $0x6c8] sm:$0xff]
  %v1267 = vld [vmem:[%s5 + $0x6d0] sm:$0xff]
  %v1268 = vld [vmem:[%s5 + $0x6d8] sm:$0xff]
  %v1269 = vld [vmem:[%s5 + $0x6e0] sm:$0xff]
  %v1270 = vld [vmem:[%s5 + $0x6e8] sm:$0xff]
  %v1271 = vld [vmem:[%s5 + $0x6f0] sm:$0xff]
  %v1272 = vld [vmem:[%s5 + $0x6f8] sm:$0xff]
  %v1273 = vld [vmem:[%s5 + $0x700] sm:$0xff]
  %v1274 = vld [vmem:[%s5 + $0x708] sm:$0xff]
  %v1275 = vld [vmem:[%s5 + $0x710] sm:$0xff]
  %v1276 = vld [vmem:[%s5 + $0x718] sm:$0xff]
  %v1277 = vld [vmem:[%s5 + $0x720] sm:$0xff]
  %v1278 = vld [vmem:[%s5 + $0x728] sm:$0xff]
  %v1279 = vld [vmem:[%s5 + $0x730] sm:$0xff]
  %v1280 = vld [vmem:[%s5 + $0x738] sm:$0xff]
  %v1281 = vld [vmem:[%s5 + $0x740] sm:$0xff]
  %v1282 = vld [vmem:[%s5 + $0x748] sm:$0xff]
  %v1283 = vld [vmem:[%s5 + $0x750] sm:$0xff]
  %v1284 = vld [vmem:[%s5 + $0x758] sm:$0xff]
  %v1285 = vld [vmem:[%s5 + $0x760] sm:$0xff]
  %v1286 = vld [vmem:[%s5 + $0x768] sm:$0xff]
  %v1287 = vld [vmem:[%s5 + $0x770] sm:$0xff]
  %v1288 = vld [vmem:[%s5 + $0x778] sm:$0xff]
  %v1289 = vld [vmem:[%s5 + $0x780] sm:$0xff]
  %v1290 = vld [vmem:[%s5 + $0x788] sm:$0xff]
  %v1291 = vld [vmem:[%s5 + $0x790] sm:$0xff]
  %v1292 = vld [vmem:[%s5 + $0x798] sm:$0xff]
  %v1293 = vld [vmem:[%s5 + $0x7a0] sm:$0xff]
  %v1294 = vld [vmem:[%s5 + $0x7a8] sm:$0xff]
  %v1295 = vld [vmem:[%s5 + $0x7b0] sm:$0xff]
  %v1296 = vld [vmem:[%s5 + $0x7b8] sm:$0xff]
  %v1297 = vld [vmem:[%s5 + $0x7c0] sm:$0xff]
  %v1298 = vld [vmem:[%s5 + $0x7c8] sm:$0xff]
  %v1299 = vld [vmem:[%s5 + $0x7d0] sm:$0xff]
  %v1300 = vld [vmem:[%s5 + $0x7d8] sm:$0xff]
  %v1301 = vld [vmem:[%s5 + $0x7e0] sm:$0xff]
  %v1302 = vld [vmem:[%s5 + $0x7e8] sm:$0xff]
  %v1303 = vld [vmem:[%s5 + $0x7f0] sm:$0xff]
  %v1304 = vld [vmem:[%s5 + $0x7f8] sm:$0xff]
  %v1305 = vld [vmem:[%s6] sm:$0x3]
  %v1307 = vlaneseq
  %v1308 = vshrl.u32 %v1307, 7
  %v1309 = vsub.s32 0, %v1308
  %v1310 = vrot.slane %v1305, %v1309
  %v1311 = vlaneseq
  %v1312 = vshrl.u32 %v1311, 7
  %v1313 = vsub.s32 1, %v1312
  %v1314 = vrot.slane %v1305, %v1313
  %1317 = vmatprep.subr.mxu0 %v1080
  %1318 = vmatpush1.msra.mxu0 %v1079
  %1319 = vmatprep.subr.mxu0 %v1078
  %1320 = vmatpush1.msra.mxu0 %v1077
  %1321 = vmatprep.subr.mxu0 %v1076
  %1322 = vmatpush1.msra.mxu0 %v1075
  %1323 = vmatprep.subr.mxu0 %v1074
  %1324 = vmatpush1.msra.mxu0 %v1073
  %1325 = vmatprep.subr.mxu0 %v1072
  %1326 = vmatpush1.msra.mxu0 %v1071
  %1327 = vmatprep.subr.mxu0 %v1070
  %1328 = vmatpush1.msra.mxu0 %v1069
  %1329 = vmatprep.subr.mxu0 %v1068
  %1330 = vmatpush1.msra.mxu0 %v1067
  %1331 = vmatprep.subr.mxu0 %v1066
  %1332 = vmatpush1.msra.mxu0 %v1065
  %1333 = vmatprep.subr.mxu0 %v1064
  %1334 = vmatpush1.msra.mxu0 %v1063
  %1335 = vmatprep.subr.mxu0 %v1062
  %1336 = vmatpush1.msra.mxu0 %v1061
  %1337 = vmatprep.subr.mxu0 %v1060
  %1338 = vmatpush1.msra.mxu0 %v1059
  %1339 = vmatprep.subr.mxu0 %v1058
  %1340 = vmatpush1.msra.mxu0 %v1057
  %1341 = vmatprep.subr.mxu0 %v1056
  %1342 = vmatpush1.msra.mxu0 %v1055
  %1343 = vmatprep.subr.mxu0 %v1054
  %1344 = vmatpush1.msra.mxu0 %v1053
  %1345 = vmatprep.subr.mxu0 %v1052
  %1346 = vmatpush1.msra.mxu0 %v1051
  %1347 = vmatprep.subr.mxu0 %v1050
  %1348 = vmatpush1.msra.mxu0 %v1049
  %1349 = vmatprep.subr.mxu0 %v1112
  %1350 = vmatpush2.msra.mxu0 %v1111
  %1351 = vmatprep.subr.mxu0 %v1110
  %1352 = vmatpush2.msra.mxu0 %v1109
  %1353 = vmatprep.subr.mxu0 %v1108
  %1354 = vmatpush2.msra.mxu0 %v1107
  %1355 = vmatprep.subr.mxu0 %v1106
  %1356 = vmatpush2.msra.mxu0 %v1105
  %1357 = vmatprep.subr.mxu0 %v1104
  %1358 = vmatpush2.msra.mxu0 %v1103
  %1359 = vmatprep.subr.mxu0 %v1102
  %1360 = vmatpush2.msra.mxu0 %v1101
  %1361 = vmatprep.subr.mxu0 %v1100
  %1362 = vmatpush2.msra.mxu0 %v1099
  %1363 = vmatprep.subr.mxu0 %v1098
  %1364 = vmatpush2.msra.mxu0 %v1097
  %1365 = vmatprep.subr.mxu0 %v1096
  %1366 = vmatpush2.msra.mxu0 %v1095
  %1367 = vmatprep.subr.mxu0 %v1094
  %1368 = vmatpush2.msra.mxu0 %v1093
  %1369 = vmatprep.subr.mxu0 %v1092
  %1370 = vmatpush2.msra.mxu0 %v1091
  %1371 = vmatprep.subr.mxu0 %v1090
  %1372 = vmatpush2.msra.mxu0 %v1089
  %1373 = vmatprep.subr.mxu0 %v1088
  %1374 = vmatpush2.msra.mxu0 %v1087
  %1375 = vmatprep.subr.mxu0 %v1086
  %1376 = vmatpush2.msra.mxu0 %v1085
  %1377 = vmatprep.subr.mxu0 %v1084
  %1378 = vmatpush2.msra.mxu0 %v1083
  %1379 = vmatprep.subr.mxu0 %v1082
  %1380 = vmatpush2.msra.mxu0 %v1081
  %1381 = vmatprep.mubr.f32.mxu0 %v1018
  %1382 = vmatmul.mubr.f32.gmra.mxu0 %v1017
  %v1383 = vpop.f32.mrf.mxu0
  %v1384 = vadd.f32 %v1310, %v1383
  %v1385 = vpop.f32.mrf.mxu0
  %v1386 = vadd.f32 %v1314, %v1385
  %1387 = vmatprep.mubr.f32.mxu0 %v1026
  %1388 = vmatmul.mubr.f32.gmra.mxu0 %v1025
  %v1389 = vpop.f32.mrf.mxu0
  %v1390 = vadd.f32 %v1310, %v1389
  %v1391 = vpop.f32.mrf.mxu0
  %v1392 = vadd.f32 %v1314, %v1391
  %1393 = vmatprep.mubr.f32.mxu0 %v1034
  %1394 = vmatmul.mubr.f32.gmra.mxu0 %v1033
  %v1395 = vpop.f32.mrf.mxu0
  %v1396 = vadd.f32 %v1310, %v1395
  %v1397 = vpop.f32.mrf.mxu0
  %v1398 = vadd.f32 %v1314, %v1397
  %1399 = vmatprep.mubr.f32.mxu0 %v1042
  %1400 = vmatmul.mubr.f32.gmra.mxu0 %v1041
  %v1401 = vpop.f32.mrf.mxu0
  %v1402 = vadd.f32 %v1310, %v1401
  %v1403 = vpop.f32.mrf.mxu0
  %v1404 = vadd.f32 %v1314, %v1403
  %1405 = vdwg.mxu0
  %1406 = vmatprep.subr.mxu0 %v1144
  %1407 = vmatpush1.msra.mxu0 %v1143
  %1408 = vmatprep.subr.mxu0 %v1142
  %1409 = vmatpush1.msra.mxu0 %v1141
  %1410 = vmatprep.subr.mxu0 %v1140
  %1411 = vmatpush1.msra.mxu0 %v1139
  %1412 = vmatprep.subr.mxu0 %v1138
  %1413 = vmatpush1.msra.mxu0 %v1137
  %1414 = vmatprep.subr.mxu0 %v1136
  %1415 = vmatpush1.msra.mxu0 %v1135
  %1416 = vmatprep.subr.mxu0 %v1134
  %1417 = vmatpush1.msra.mxu0 %v1133
  %1418 = vmatprep.subr.mxu0 %v1132
  %1419 = vmatpush1.msra.mxu0 %v1131
  %1420 = vmatprep.subr.mxu0 %v1130
  %1421 = vmatpush1.msra.mxu0 %v1129
  %1422 = vmatprep.subr.mxu0 %v1128
  %1423 = vmatpush1.msra.mxu0 %v1127
  %1424 = vmatprep.subr.mxu0 %v1126
  %1425 = vmatpush1.msra.mxu0 %v1125
  %1426 = vmatprep.subr.mxu0 %v1124
  %1427 = vmatpush1.msra.mxu0 %v1123
  %1428 = vmatprep.subr.mxu0 %v1122
  %1429 = vmatpush1.msra.mxu0 %v1121
  %1430 = vmatprep.subr.mxu0 %v1120
  %1431 = vmatpush1.msra.mxu0 %v1119
  %1432 = vmatprep.subr.mxu0 %v1118
  %1433 = vmatpush1.msra.mxu0 %v1117
  %1434 = vmatprep.subr.mxu0 %v1116
  %1435 = vmatpush1.msra.mxu0 %v1115
  %1436 = vmatprep.subr.mxu0 %v1114
  %1437 = vmatpush1.msra.mxu0 %v1113
  %1438 = vmatprep.subr.mxu0 %v1176
  %1439 = vmatpush2.msra.mxu0 %v1175
  %1440 = vmatprep.subr.mxu0 %v1174
  %1441 = vmatpush2.msra.mxu0 %v1173
  %1442 = vmatprep.subr.mxu0 %v1172
  %1443 = vmatpush2.msra.mxu0 %v1171
  %1444 = vmatprep.subr.mxu0 %v1170
  %1445 = vmatpush2.msra.mxu0 %v1169
  %1446 = vmatprep.subr.mxu0 %v1168
  %1447 = vmatpush2.msra.mxu0 %v1167
  %1448 = vmatprep.subr.mxu0 %v1166
  %1449 = vmatpush2.msra.mxu0 %v1165
  %1450 = vmatprep.subr.mxu0 %v1164
  %1451 = vmatpush2.msra.mxu0 %v1163
  %1452 = vmatprep.subr.mxu0 %v1162
  %1453 = vmatpush2.msra.mxu0 %v1161
  %1454 = vmatprep.subr.mxu0 %v1160
  %1455 = vmatpush2.msra.mxu0 %v1159
  %1456 = vmatprep.subr.mxu0 %v1158
  %1457 = vmatpush2.msra.mxu0 %v1157
  %1458 = vmatprep.subr.mxu0 %v1156
  %1459 = vmatpush2.msra.mxu0 %v1155
  %1460 = vmatprep.subr.mxu0 %v1154
  %1461 = vmatpush2.msra.mxu0 %v1153
  %1462 = vmatprep.subr.mxu0 %v1152
  %1463 = vmatpush2.msra.mxu0 %v1151
  %1464 = vmatprep.subr.mxu0 %v1150
  %1465 = vmatpush2.msra.mxu0 %v1149
  %1466 = vmatprep.subr.mxu0 %v1148
  %1467 = vmatpush2.msra.mxu0 %v1147
  %1468 = vmatprep.subr.mxu0 %v1146
  %1469 = vmatpush2.msra.mxu0 %v1145
  %1470 = vmatprep.mubr.f32.mxu0 %v1020
  %1471 = vmatmul.mubr.f32.gmra.mxu0 %v1019
  %v1472 = vpop.f32.mrf.mxu0
  %v1473 = vadd.f32 %v1384, %v1472
  %v1474 = vpop.f32.mrf.mxu0
  %v1475 = vadd.f32 %v1386, %v1474
  %1476 = vmatprep.mubr.f32.mxu0 %v1028
  %1477 = vmatmul.mubr.f32.gmra.mxu0 %v1027
  %v1478 = vpop.f32.mrf.mxu0
  %v1479 = vadd.f32 %v1390, %v1478
  %v1480 = vpop.f32.mrf.mxu0
  %v1481 = vadd.f32 %v1392, %v1480
  %1482 = vmatprep.mubr.f32.mxu0 %v1036
  %1483 = vmatmul.mubr.f32.gmra.mxu0 %v1035
  %v1484 = vpop.f32.mrf.mxu0
  %v1485 = vadd.f32 %v1396, %v1484
  %v1486 = vpop.f32.mrf.mxu0
  %v1487 = vadd.f32 %v1398, %v1486
  %1488 = vmatprep.mubr.f32.mxu0 %v1044
  %1489 = vmatmul.mubr.f32.gmra.mxu0 %v1043
  %v1490 = vpop.f32.mrf.mxu0
  %v1491 = vadd.f32 %v1402, %v1490
  %v1492 = vpop.f32.mrf.mxu0
  %v1493 = vadd.f32 %v1404, %v1492
  %1494 = vdwg.mxu0
  %1495 = vmatprep.subr.mxu0 %v1208
  %1496 = vmatpush1.msra.mxu0 %v1207
  %1497 = vmatprep.subr.mxu0 %v1206
  %1498 = vmatpush1.msra.mxu0 %v1205
  %1499 = vmatprep.subr.mxu0 %v1204
  %1500 = vmatpush1.msra.mxu0 %v1203
  %1501 = vmatprep.subr.mxu0 %v1202
  %1502 = vmatpush1.msra.mxu0 %v1201
  %1503 = vmatprep.subr.mxu0 %v1200
  %1504 = vmatpush1.msra.mxu0 %v1199
  %1505 = vmatprep.subr.mxu0 %v1198
  %1506 = vmatpush1.msra.mxu0 %v1197
  %1507 = vmatprep.subr.mxu0 %v1196
  %1508 = vmatpush1.msra.mxu0 %v1195
  %1509 = vmatprep.subr.mxu0 %v1194
  %1510 = vmatpush1.msra.mxu0 %v1193
  %1511 = vmatprep.subr.mxu0 %v1192
  %1512 = vmatpush1.msra.mxu0 %v1191
  %1513 = vmatprep.subr.mxu0 %v1190
  %1514 = vmatpush1.msra.mxu0 %v1189
  %1515 = vmatprep.subr.mxu0 %v1188
  %1516 = vmatpush1.msra.mxu0 %v1187
  %1517 = vmatprep.subr.mxu0 %v1186
  %1518 = vmatpush1.msra.mxu0 %v1185
  %1519 = vmatprep.subr.mxu0 %v1184
  %1520 = vmatpush1.msra.mxu0 %v1183
  %1521 = vmatprep.subr.mxu0 %v1182
  %1522 = vmatpush1.msra.mxu0 %v1181
  %1523 = vmatprep.subr.mxu0 %v1180
  %1524 = vmatpush1.msra.mxu0 %v1179
  %1525 = vmatprep.subr.mxu0 %v1178
  %1526 = vmatpush1.msra.mxu0 %v1177
  %1527 = vmatprep.subr.mxu0 %v1240
  %1528 = vmatpush2.msra.mxu0 %v1239
  %1529 = vmatprep.subr.mxu0 %v1238
  %1530 = vmatpush2.msra.mxu0 %v1237
  %1531 = vmatprep.subr.mxu0 %v1236
  %1532 = vmatpush2.msra.mxu0 %v1235
  %1533 = vmatprep.subr.mxu0 %v1234
  %1534 = vmatpush2.msra.mxu0 %v1233
  %1535 = vmatprep.subr.mxu0 %v1232
  %1536 = vmatpush2.msra.mxu0 %v1231
  %1537 = vmatprep.subr.mxu0 %v1230
  %1538 = vmatpush2.msra.mxu0 %v1229
  %1539 = vmatprep.subr.mxu0 %v1228
  %1540 = vmatpush2.msra.mxu0 %v1227
  %1541 = vmatprep.subr.mxu0 %v1226
  %1542 = vmatpush2.msra.mxu0 %v1225
  %1543 = vmatprep.subr.mxu0 %v1224
  %1544 = vmatpush2.msra.mxu0 %v1223
  %1545 = vmatprep.subr.mxu0 %v1222
  %1546 = vmatpush2.msra.mxu0 %v1221
  %1547 = vmatprep.subr.mxu0 %v1220
  %1548 = vmatpush2.msra.mxu0 %v1219
  %1549 = vmatprep.subr.mxu0 %v1218
  %1550 = vmatpush2.msra.mxu0 %v1217
  %1551 = vmatprep.subr.mxu0 %v1216
  %1552 = vmatpush2.msra.mxu0 %v1215
  %1553 = vmatprep.subr.mxu0 %v1214
  %1554 = vmatpush2.msra.mxu0 %v1213
  %1555 = vmatprep.subr.mxu0 %v1212
  %1556 = vmatpush2.msra.mxu0 %v1211
  %1557 = vmatprep.subr.mxu0 %v1210
  %1558 = vmatpush2.msra.mxu0 %v1209
  %1559 = vmatprep.mubr.f32.mxu0 %v1022
  %1560 = vmatmul.mubr.f32.gmra.mxu0 %v1021
  %v1561 = vpop.f32.mrf.mxu0
  %v1562 = vadd.f32 %v1473, %v1561
  %v1563 = vpop.f32.mrf.mxu0
  %v1564 = vadd.f32 %v1475, %v1563
  %1565 = vmatprep.mubr.f32.mxu0 %v1030
  %1566 = vmatmul.mubr.f32.gmra.mxu0 %v1029
  %v1567 = vpop.f32.mrf.mxu0
  %v1568 = vadd.f32 %v1479, %v1567
  %v1569 = vpop.f32.mrf.mxu0
  %v1570 = vadd.f32 %v1481, %v1569
  %1571 = vmatprep.mubr.f32.mxu0 %v1038
  %1572 = vmatmul.mubr.f32.gmra.mxu0 %v1037
  %v1573 = vpop.f32.mrf.mxu0
  %v1574 = vadd.f32 %v1485, %v1573
  %v1575 = vpop.f32.mrf.mxu0
  %v1576 = vadd.f32 %v1487, %v1575
  %1577 = vmatprep.mubr.f32.mxu0 %v1046
  %1578 = vmatmul.mubr.f32.gmra.mxu0 %v1045
  %v1579 = vpop.f32.mrf.mxu0
  %v1580 = vadd.f32 %v1491, %v1579
  %v1581 = vpop.f32.mrf.mxu0
  %v1582 = vadd.f32 %v1493, %v1581
  %1583 = vdwg.mxu0
  %1584 = vmatprep.subr.mxu0 %v1272
  %1585 = vmatpush1.msra.mxu0 %v1271
  %1586 = vmatprep.subr.mxu0 %v1270
  %1587 = vmatpush1.msra.mxu0 %v1269
  %1588 = vmatprep.subr.mxu0 %v1268
  %1589 = vmatpush1.msra.mxu0 %v1267
  %1590 = vmatprep.subr.mxu0 %v1266
  %1591 = vmatpush1.msra.mxu0 %v1265
  %1592 = vmatprep.subr.mxu0 %v1264
  %1593 = vmatpush1.msra.mxu0 %v1263
  %1594 = vmatprep.subr.mxu0 %v1262
  %1595 = vmatpush1.msra.mxu0 %v1261
  %1596 = vmatprep.subr.mxu0 %v1260
  %1597 = vmatpush1.msra.mxu0 %v1259
  %1598 = vmatprep.subr.mxu0 %v1258
  %1599 = vmatpush1.msra.mxu0 %v1257
  %1600 = vmatprep.subr.mxu0 %v1256
  %1601 = vmatpush1.msra.mxu0 %v1255
  %1602 = vmatprep.subr.mxu0 %v1254
  %1603 = vmatpush1.msra.mxu0 %v1253
  %1604 = vmatprep.subr.mxu0 %v1252
  %1605 = vmatpush1.msra.mxu0 %v1251
  %1606 = vmatprep.subr.mxu0 %v1250
  %1607 = vmatpush1.msra.mxu0 %v1249
  %1608 = vmatprep.subr.mxu0 %v1248
  %1609 = vmatpush1.msra.mxu0 %v1247
  %1610 = vmatprep.subr.mxu0 %v1246
  %1611 = vmatpush1.msra.mxu0 %v1245
  %1612 = vmatprep.subr.mxu0 %v1244
  %1613 = vmatpush1.msra.mxu0 %v1243
  %1614 = vmatprep.subr.mxu0 %v1242
  %1615 = vmatpush1.msra.mxu0 %v1241
  %1616 = vmatprep.subr.mxu0 %v1304
  %1617 = vmatpush2.msra.mxu0 %v1303
  %1618 = vmatprep.subr.mxu0 %v1302
  %1619 = vmatpush2.msra.mxu0 %v1301
  %1620 = vmatprep.subr.mxu0 %v1300
  %1621 = vmatpush2.msra.mxu0 %v1299
  %1622 = vmatprep.subr.mxu0 %v1298
  %1623 = vmatpush2.msra.mxu0 %v1297
  %1624 = vmatprep.subr.mxu0 %v1296
  %1625 = vmatpush2.msra.mxu0 %v1295
  %1626 = vmatprep.subr.mxu0 %v1294
  %1627 = vmatpush2.msra.mxu0 %v1293
  %1628 = vmatprep.subr.mxu0 %v1292
  %1629 = vmatpush2.msra.mxu0 %v1291
  %1630 = vmatprep.subr.mxu0 %v1290
  %1631 = vmatpush2.msra.mxu0 %v1289
  %1632 = vmatprep.subr.mxu0 %v1288
  %1633 = vmatpush2.msra.mxu0 %v1287
  %1634 = vmatprep.subr.mxu0 %v1286
  %1635 = vmatpush2.msra.mxu0 %v1285
  %1636 = vmatprep.subr.mxu0 %v1284
  %1637 = vmatpush2.msra.mxu0 %v1283
  %1638 = vmatprep.subr.mxu0 %v1282
  %1639 = vmatpush2.msra.mxu0 %v1281
  %1640 = vmatprep.subr.mxu0 %v1280
  %1641 = vmatpush2.msra.mxu0 %v1279
  %1642 = vmatprep.subr.mxu0 %v1278
  %1643 = vmatpush2.msra.mxu0 %v1277
  %1644 = vmatprep.subr.mxu0 %v1276
  %1645 = vmatpush2.msra.mxu0 %v1275
  %1646 = vmatprep.subr.mxu0 %v1274
  %1647 = vmatpush2.msra.mxu0 %v1273
  %1648 = vmatprep.mubr.f32.mxu0 %v1024
  %1649 = vmatmul.mubr.f32.gmra.mxu0 %v1023
  %v1650 = vpop.f32.mrf.mxu0
  %v1651 = vadd.f32 %v1562, %v1650
  %v1652 = vpop.f32.mrf.mxu0
  %v1653 = vadd.f32 %v1564, %v1652
  %1654 = vmatprep.mubr.f32.mxu0 %v1032
  %1655 = vmatmul.mubr.f32.gmra.mxu0 %v1031
  %v1656 = vpop.f32.mrf.mxu0
  %v1657 = vadd.f32 %v1568, %v1656
  %v1658 = vpop.f32.mrf.mxu0
  %v1659 = vadd.f32 %v1570, %v1658
  %1660 = vmatprep.mubr.f32.mxu0 %v1040
  %1661 = vmatmul.mubr.f32.gmra.mxu0 %v1039
  %v1662 = vpop.f32.mrf.mxu0
  %v1663 = vadd.f32 %v1574, %v1662
  %v1664 = vpop.f32.mrf.mxu0
  %v1665 = vadd.f32 %v1576, %v1664
  %1666 = vmatprep.mubr.f32.mxu0 %v1048
  %1667 = vmatmul.mubr.f32.gmra.mxu0 %v1047
  %v1668 = vpop.f32.mrf.mxu0
  %v1669 = vadd.f32 %v1580, %v1668
  %v1670 = vpop.f32.mrf.mxu0
  %v1671 = vadd.f32 %v1582, %v1670
  %1672 = vdwg.mxu0
  %v1673 = vadd.f32 %v26, %v1651
  %v1674 = vadd.f32 %v27, %v1653
  %v1675 = vadd.f32 %v28, %v1657
  %v1676 = vadd.f32 %v29, %v1659
  %v1677 = vadd.f32 %v30, %v1663
  %v1678 = vadd.f32 %v31, %v1665
  %v1679 = vadd.f32 %v32, %v1669
  %v1680 = vadd.f32 %v33, %v1671
  %1681 = vst [vmem:[%s7] sm:$0xff] %v1673
  %1682 = vst [vmem:[%s7 + $0x8] sm:$0xff] %v1674
  %1683 = vst [vmem:[%s7 + $0x10] sm:$0xff] %v1675
  %1684 = vst [vmem:[%s7 + $0x18] sm:$0xff] %v1676
  %1685 = vst [vmem:[%s7 + $0x20] sm:$0xff] %v1677
  %1686 = vst [vmem:[%s7 + $0x28] sm:$0xff] %v1678
  %1687 = vst [vmem:[%s7 + $0x30] sm:$0xff] %v1679
  %1688 = vst [vmem:[%s7 + $0x38] sm:$0xff] %v1680
  // Predicated region
  $region30: #{_lambda_.7} parent=0 // pred_check
    _
  $region31: #{_lambda_.7} parent=0 // pred_check_branch
    %1690 = sbr.rel (0) target = $region33
  $region32: #{_lambda_.7} parent=0 // pred_region
    _
  $region33: #{_lambda_.7} parent=0 // pred_fallthru
    _
  // Predicated region
  $region34: #{_lambda_.7} parent=0 // pred_check
    _
  $region35: #{_lambda_.7} parent=0 // pred_check_branch
    %1692 = sbr.rel (0) target = $region37
  $region36: #{_lambda_.7} parent=0 // pred_region
    _
  $region37: #{_lambda_.7} parent=0 // pred_fallthru
    _

</llo_original>
